<compile_context>
chip_gen: v6e
topology: v6e:2x2x1
jax: 0.10.0
libtpu: 0.0.40
codegen_flags: <defaults>
</compile_context>

<pallas_src>
import functools

import numpy as np

import jax
import jax.numpy as jnp
from jax.experimental import pallas as pl
from jax.experimental.pallas import tpu as pltpu

LANES = 128  # channel padding / lane width


# ---------------------------------------------------------------------------
# In-kernel building blocks (operate on VMEM refs)
# ---------------------------------------------------------------------------

def _conv3x3_relu(src_ref, w_ref, b_ref, dst_ref, H, W):
    """3x3 'same' conv + bias + ReLU on a zero-padded, row-flattened activation.

    src_ref: ((H+2)*(W+2), 128)  input, padding rows/cols contain exact zeros
    w_ref:   (9, 128, 128)       bf16 weights, tap-major (dy, dx)
    b_ref:   (1, 128)            f32 bias
    dst_ref: ((H+2)*(W+2), 128)  f32 output, same padded layout
    """
    Wp = W + 2
    L = (H - 1) * Wp + W          # contiguous span covering all interior pixels
    base = Wp + 1                 # flat index of interior pixel (0, 0)

    acc = jnp.zeros((L, LANES), jnp.float32)
    t = 0
    for dy in (-1, 0, 1):
        for dx in (-1, 0, 1):
            tap = src_ref[pl.ds(base + dy * Wp + dx, L), :].astype(jnp.bfloat16)
            acc = acc + jnp.dot(tap, w_ref[t], preferred_element_type=jnp.float32)
            t += 1
    y = jnp.maximum(acc + b_ref[...], 0.0)

    # Keep the whole buffer finite: the pool/upsample selection matmuls read every
    # row, and 0-coefficient * uninitialised-garbage could still produce NaN.
    dst_ref[...] = jnp.zeros(dst_ref.shape, dst_ref.dtype)
    dst_ref[pl.ds(base, L), :] = y.astype(dst_ref.dtype)


def _maxpool2x2(src_ref, sel_ref, emb_ref, dst_ref, hw_out):
    """2x2 stride-2 max pool via constant 0/1 selection + embedding matmuls.

    sel_ref: (4*hw_out, Bs) gathers the 4 pooling-window phases (interior pixels only)
    emb_ref: (Bd, hw_out)   scatters pooled pixels into the next resolution's padded
                            layout (its pad rows are all-zero -> exact zero padding)
    """
    g = jnp.dot(sel_ref[...], src_ref[...].astype(jnp.bfloat16),
                preferred_element_type=jnp.float32)                 # (4*hw, 128)
    m = jnp.maximum(jnp.maximum(g[0:hw_out], g[hw_out:2 * hw_out]),
                    jnp.maximum(g[2 * hw_out:3 * hw_out], g[3 * hw_out:4 * hw_out]))
    dst_ref[...] = jnp.dot(emb_ref[...], m.astype(jnp.bfloat16),
                           preferred_element_type=jnp.float32).astype(dst_ref.dtype)


def _suimnet_kernel(x_ref, w1, b1, w2, b2, w3, b3, w4, b4, w5, b5,
                    sel1, emb1, sel2, emb2, u1, u2, o_ref,
                    e1, p1, e2, p2, d1, up1, d2, *, H, W):
    H2, W2 = H // 2, W // 2
    H4, W4 = H // 4, W // 4

    # ---- encoder ----
    _conv3x3_relu(x_ref, w1, b1, e1, H, W)
    _maxpool2x2(e1, sel1, emb1, p1, H2 * W2)
    _conv3x3_relu(p1, w2, b2, e2, H2, W2)
    _maxpool2x2(e2, sel2, emb2, p2, H4 * W4)

    # ---- decoder ----
    _conv3x3_relu(p2, w3, b3, d1, H4, W4)
    # 2x nearest upsample (H/4 -> H/2) into the padded layout (pads stay exactly 0).
    up1[...] = jnp.dot(u1[...], d1[...].astype(jnp.bfloat16),
                       preferred_element_type=jnp.float32).astype(up1.dtype)
    _conv3x3_relu(up1, w4, b4, d2, H2, W2)
    # 2x nearest upsample (H/2 -> H) directly to dense H*W rows ...
    up2 = jnp.dot(u2[...], d2[...].astype(jnp.bfloat16),
                  preferred_element_type=jnp.float32)                # (H*W, 128)
    # ... fused with the 1x1 conv + sigmoid mask head (lane-dense 128-wide store).
    z = jnp.dot(up2.astype(jnp.bfloat16), w5[...],
                preferred_element_type=jnp.float32) + b5[...]
    o_ref[...] = (1.0 / (1.0 + jnp.exp(-z))).astype(o_ref.dtype)


# ---------------------------------------------------------------------------
# Host-side packing glue (layout only; all compute is in the kernel)
# ---------------------------------------------------------------------------

def _pad_flat(y, x, W):
    """Flat index of pixel (y, x) in the zero-padded (H+2, W+2) row-major layout."""
    return (y + 1) * (W + 2) + (x + 1)


def _pool_matrices(H, W):
    Hd, Wd = H // 2, W // 2
    Bs, Bd = (H + 2) * (W + 2), (Hd + 2) * (Wd + 2)
    hw = Hd * Wd
    sel = np.zeros((4 * hw, Bs), np.float32)
    for q, (ry, rx) in enumerate(((0, 0), (0, 1), (1, 0), (1, 1))):
        for y in range(Hd):
            for x in range(Wd):
                sel[q * hw + y * Wd + x, _pad_flat(2 * y + ry, 2 * x + rx, W)] = 1.0
    emb = np.zeros((Bd, hw), np.float32)
    for y in range(Hd):
        for x in range(Wd):
            emb[_pad_flat(y, x, Wd), y * Wd + x] = 1.0
    return jnp.asarray(sel, jnp.bfloat16), jnp.asarray(emb, jnp.bfloat16)


def _upsample_matrix(Hs, Ws, to_padded):
    Hd, Wd = 2 * Hs, 2 * Ws
    Bs = (Hs + 2) * (Ws + 2)
    rows = (Hd + 2) * (Wd + 2) if to_padded else Hd * Wd
    u = np.zeros((rows, Bs), np.float32)
    for y in range(Hd):
        for x in range(Wd):
            r = _pad_flat(y, x, Wd) if to_padded else y * Wd + x
            u[r, _pad_flat(y // 2, x // 2, Ws)] = 1.0
    return jnp.asarray(u, jnp.bfloat16)


def _pack_input(x_nchw):
    n, cin, h, w = x_nchw.shape
    x = jnp.transpose(x_nchw, (0, 2, 3, 1))                         # NHWC
    x = jnp.pad(x, ((0, 0), (1, 1), (1, 1), (0, LANES - cin)))      # zero pad
    return x.reshape(n, (h + 2) * (w + 2), LANES).astype(jnp.float32)


def _pack_conv3x3(w, b):
    kh, kw, cin, cout = w.shape
    wp = jnp.zeros((kh * kw, LANES, LANES), jnp.float32)
    wp = wp.at[:, :cin, :cout].set(w.reshape(kh * kw, cin, cout))
    bp = jnp.zeros((1, LANES), jnp.float32).at[0, :cout].set(b)
    return wp.astype(jnp.bfloat16), bp


def _pack_conv1x1(w, b):
    _, _, cin, cout = w.shape
    wp = jnp.zeros((LANES, LANES), jnp.float32).at[:cin, :cout].set(
        w.reshape(cin, cout))
    bp = jnp.zeros((1, LANES), jnp.float32).at[0, :cout].set(b)
    return wp.astype(jnp.bfloat16), bp


# ---------------------------------------------------------------------------
# SuimNet: encoder -> decoder, fused into one pallas_call
# ---------------------------------------------------------------------------

def init_params(key, cin=4, n_classes=3):
    keys = jax.random.split(key, 5)

    def conv_init(k, kh, kw, ci, co):
        scale = 1.0 / jnp.sqrt(jnp.float32(kh * kw * ci))
        w = jax.random.uniform(k, (kh, kw, ci, co), jnp.float32, -scale, scale)
        b = jnp.zeros((co,), jnp.float32)
        return w, b

    return {
        "enc1": conv_init(keys[0], 3, 3, cin, 8),
        "enc2": conv_init(keys[1], 3, 3, 8, 16),
        "dec1": conv_init(keys[2], 3, 3, 16, 8),
        "dec2": conv_init(keys[3], 3, 3, 8, 8),
        "out":  conv_init(keys[4], 1, 1, 8, n_classes),
    }


def suimnet_forward(x_nchw, params):
    n, cin, H, W = x_nchw.shape
    assert H % 4 == 0 and W % 4 == 0, "spatial dims must be divisible by 4"
    H2, W2, H4, W4 = H // 2, W // 2, H // 4, W // 4
    B1 = (H + 2) * (W + 2)
    B2 = (H2 + 2) * (W2 + 2)
    B3 = (H4 + 2) * (W4 + 2)

    # -- pack operands into the kernel's padded, lane-dense layout (glue) --
    x_flat = _pack_input(x_nchw)
    w1, b1 = _pack_conv3x3(*params["enc1"])
    w2, b2 = _pack_conv3x3(*params["enc2"])
    w3, b3 = _pack_conv3x3(*params["dec1"])
    w4, b4 = _pack_conv3x3(*params["dec2"])
    w5, b5 = _pack_conv1x1(*params["out"])
    sel1, emb1 = _pool_matrices(H, W)
    sel2, emb2 = _pool_matrices(H2, W2)
    u1 = _upsample_matrix(H4, W4, to_padded=True)    # H/4 -> padded H/2 layout
    u2 = _upsample_matrix(H2, W2, to_padded=False)   # H/2 -> dense H*W rows

    consts = (w1, b1, w2, b2, w3, b3, w4, b4, w5, b5,
              sel1, emb1, sel2, emb2, u1, u2)

    def _const_spec(a):
        nd = a.ndim
        return pl.BlockSpec(a.shape, lambda i: (0,) * nd)

    in_specs = [pl.BlockSpec((None, B1, LANES), lambda i: (i, 0, 0))]
    in_specs += [_const_spec(a) for a in consts]

    out = pl.pallas_call(
        functools.partial(_suimnet_kernel, H=H, W=W),
        out_shape=jax.ShapeDtypeStruct((n, H * W, LANES), jnp.float32),
        grid=(n,),
        in_specs=in_specs,
        out_specs=pl.BlockSpec((None, H * W, LANES), lambda i: (i, 0, 0)),
        scratch_shapes=[
            pltpu.VMEM((B1, LANES), jnp.float32),   # enc1 conv out   (H,   W)
            pltpu.VMEM((B2, LANES), jnp.float32),   # pool1 out       (H/2, W/2)
            pltpu.VMEM((B2, LANES), jnp.float32),   # enc2 conv out
            pltpu.VMEM((B3, LANES), jnp.float32),   # pool2 out       (H/4, W/4)
            pltpu.VMEM((B3, LANES), jnp.float32),   # dec1 conv out
            pltpu.VMEM((B2, LANES), jnp.float32),   # upsample1 out
            pltpu.VMEM((B2, LANES), jnp.float32),   # dec2 conv out
        ],
        compiler_params=pltpu.CompilerParams(
            dimension_semantics=("parallel",)),
    )(x_flat, *consts)

    n_classes = params["out"][0].shape[-1]
    out = out[:, :, :n_classes].reshape(n, H, W, n_classes)
    return jnp.transpose(out, (0, 3, 1, 2))                         # NCHW


# ---------------------------------------------------------------------------
# Pure-XLA reference (same stand-in architecture) for a correctness check
# ---------------------------------------------------------------------------

def _ref_forward(x_nchw, params):
    def conv(x, wb, act):
        w, b = wb
        y = jax.lax.conv_general_dilated(
            x, w, (1, 1), "SAME", dimension_numbers=("NHWC", "HWIO", "NHWC")) + b
        return jnp.maximum(y, 0.0) if act == "relu" else jax.nn.sigmoid(y)

    def pool(x):
        return jax.lax.reduce_window(x, -jnp.inf, jax.lax.max,
                                     (1, 2, 2, 1), (1, 2, 2, 1), "VALID")

    def up(x):
        return jnp.repeat(jnp.repeat(x, 2, axis=1), 2, axis=2)

    x = jnp.transpose(x_nchw, (0, 2, 3, 1))
    e = pool(conv(x, params["enc1"], "relu"))
    e = pool(conv(e, params["enc2"], "relu"))
    d = up(conv(e, params["dec1"], "relu"))
    d = up(conv(d, params["dec2"], "relu"))
    o = conv(d, params["out"], "sigmoid")
    return jnp.transpose(o, (0, 3, 1, 2))


if __name__ == "__main__":
    key = jax.random.PRNGKey(0)
    kx, kp = jax.random.split(key)
    x = jax.random.normal(kx, (2, 4, 16, 16), jnp.float32)   # NCHW, like PyTorch
    params = init_params(kp, cin=4, n_classes=3)

    out = jax.block_until_ready(jax.jit(suimnet_forward)(x, params))
    assert out.shape == (2, 3, 16, 16), out.shape
    assert bool(jnp.all(jnp.isfinite(out)))

    ref = jax.block_until_ready(jax.jit(_ref_forward)(x, params))
    max_err = float(jnp.max(jnp.abs(out - ref)))
    assert max_err < 5e-2, f"mismatch vs XLA reference: {max_err}"

    print("KERNEL_OK")
</pallas_src>

<mosaic_0001>
module attributes {stable_mosaic.version = 11 : i64} {
  func.func @_suimnet_kernel(%arg0: i32, %arg1: memref<1x324x128xf32, #tpu.memory_space<vmem>>, %arg2: memref<9x128x128xbf16, #tpu.memory_space<vmem>>, %arg3: memref<1x128xf32, #tpu.memory_space<vmem>>, %arg4: memref<9x128x128xbf16, #tpu.memory_space<vmem>>, %arg5: memref<1x128xf32, #tpu.memory_space<vmem>>, %arg6: memref<9x128x128xbf16, #tpu.memory_space<vmem>>, %arg7: memref<1x128xf32, #tpu.memory_space<vmem>>, %arg8: memref<9x128x128xbf16, #tpu.memory_space<vmem>>, %arg9: memref<1x128xf32, #tpu.memory_space<vmem>>, %arg10: memref<128x128xbf16, #tpu.memory_space<vmem>>, %arg11: memref<1x128xf32, #tpu.memory_space<vmem>>, %arg12: memref<256x324xbf16, #tpu.memory_space<vmem>>, %arg13: memref<100x64xbf16, #tpu.memory_space<vmem>>, %arg14: memref<64x100xbf16, #tpu.memory_space<vmem>>, %arg15: memref<36x16xbf16, #tpu.memory_space<vmem>>, %arg16: memref<100x36xbf16, #tpu.memory_space<vmem>>, %arg17: memref<256x100xbf16, #tpu.memory_space<vmem>>, %arg18: memref<1x256x128xf32, #tpu.memory_space<vmem>>, %arg19: memref<324x128xf32, #tpu.memory_space<vmem>>, %arg20: memref<100x128xf32, #tpu.memory_space<vmem>>, %arg21: memref<100x128xf32, #tpu.memory_space<vmem>>, %arg22: memref<36x128xf32, #tpu.memory_space<vmem>>, %arg23: memref<36x128xf32, #tpu.memory_space<vmem>>, %arg24: memref<100x128xf32, #tpu.memory_space<vmem>>, %arg25: memref<100x128xf32, #tpu.memory_space<vmem>>) attributes {dimension_semantics = [#tpu.dimension_semantics<parallel>], iteration_bounds = array<i64: 2>, scalar_prefetch = 0 : i64, scratch_operands = 7 : i64, tpu.core_type = #tpu.core_type<tc>, window_params = [{transform_indices = @transform_0, window_bounds = array<i64: 1, 324, 128>}, {pipeline_mode = #tpu.pipeline_mode<synchronous>, transform_indices = @transform_1, window_bounds = array<i64: 9, 128, 128>}, {pipeline_mode = #tpu.pipeline_mode<synchronous>, transform_indices = @transform_2, window_bounds = array<i64: 1, 128>}, {pipeline_mode = #tpu.pipeline_mode<synchronous>, transform_indices = @transform_3, window_bounds = array<i64: 9, 128, 128>}, {pipeline_mode = #tpu.pipeline_mode<synchronous>, transform_indices = @transform_4, window_bounds = array<i64: 1, 128>}, {pipeline_mode = #tpu.pipeline_mode<synchronous>, transform_indices = @transform_5, window_bounds = array<i64: 9, 128, 128>}, {pipeline_mode = #tpu.pipeline_mode<synchronous>, transform_indices = @transform_6, window_bounds = array<i64: 1, 128>}, {pipeline_mode = #tpu.pipeline_mode<synchronous>, transform_indices = @transform_7, window_bounds = array<i64: 9, 128, 128>}, {pipeline_mode = #tpu.pipeline_mode<synchronous>, transform_indices = @transform_8, window_bounds = array<i64: 1, 128>}, {pipeline_mode = #tpu.pipeline_mode<synchronous>, transform_indices = @transform_9, window_bounds = array<i64: 128, 128>}, {pipeline_mode = #tpu.pipeline_mode<synchronous>, transform_indices = @transform_10, window_bounds = array<i64: 1, 128>}, {pipeline_mode = #tpu.pipeline_mode<synchronous>, transform_indices = @transform_11, window_bounds = array<i64: 256, 324>}, {pipeline_mode = #tpu.pipeline_mode<synchronous>, transform_indices = @transform_12, window_bounds = array<i64: 100, 64>}, {pipeline_mode = #tpu.pipeline_mode<synchronous>, transform_indices = @transform_13, window_bounds = array<i64: 64, 100>}, {pipeline_mode = #tpu.pipeline_mode<synchronous>, transform_indices = @transform_14, window_bounds = array<i64: 36, 16>}, {pipeline_mode = #tpu.pipeline_mode<synchronous>, transform_indices = @transform_15, window_bounds = array<i64: 100, 36>}, {pipeline_mode = #tpu.pipeline_mode<synchronous>, transform_indices = @transform_16, window_bounds = array<i64: 256, 100>}, {transform_indices = @transform_17, window_bounds = array<i64: 1, 256, 128>}]} {
    %cst = arith.constant 0.000000e+00 : f32
    %0 = vector.broadcast %cst : f32 to vector<286x128xf32>
    %c0 = arith.constant 0 : index
    %c0_0 = arith.constant 0 : index
    %c0_1 = arith.constant 0 : index
    %1 = vector.load %arg1[%c0, %c0_0, %c0_1] : memref<1x324x128xf32, #tpu.memory_space<vmem>>, vector<1x286x128xf32>
    %2 = vector.shape_cast %1 : vector<1x286x128xf32> to vector<286x128xf32>
    %3 = arith.truncf %2 : vector<286x128xf32> to vector<286x128xbf16>
    %c0_2 = arith.constant 0 : index
    %c0_3 = arith.constant 0 : index
    %c0_4 = arith.constant 0 : index
    %4 = vector.load %arg2[%c0_2, %c0_3, %c0_4] : memref<9x128x128xbf16, #tpu.memory_space<vmem>>, vector<1x128x128xbf16>
    %5 = vector.shape_cast %4 : vector<1x128x128xbf16> to vector<128x128xbf16>
    %cst_5 = arith.constant dense<0.000000e+00> : vector<286x128xf32>
    %6 = tpu.matmul %3, %5, %cst_5 {dimension_numbers = #tpu.dot_dimension_numbers<[1], [0], [0], [1], [0, 0, 1, 1], [], []>} : vector<286x128xbf16>, vector<128x128xbf16>, vector<286x128xf32> -> vector<286x128xf32>
    %7 = arith.addf %0, %6 : vector<286x128xf32>
    %c0_6 = arith.constant 0 : index
    %c1 = arith.constant 1 : index
    %c0_7 = arith.constant 0 : index
    %8 = vector.load %arg1[%c0_6, %c1, %c0_7] : memref<1x324x128xf32, #tpu.memory_space<vmem>>, vector<1x286x128xf32>
    %9 = vector.shape_cast %8 : vector<1x286x128xf32> to vector<286x128xf32>
    %10 = arith.truncf %9 : vector<286x128xf32> to vector<286x128xbf16>
    %c1_8 = arith.constant 1 : index
    %c0_9 = arith.constant 0 : index
    %c0_10 = arith.constant 0 : index
    %11 = vector.load %arg2[%c1_8, %c0_9, %c0_10] : memref<9x128x128xbf16, #tpu.memory_space<vmem>>, vector<1x128x128xbf16>
    %12 = vector.shape_cast %11 : vector<1x128x128xbf16> to vector<128x128xbf16>
    %cst_11 = arith.constant dense<0.000000e+00> : vector<286x128xf32>
    %13 = tpu.matmul %10, %12, %cst_11 {dimension_numbers = #tpu.dot_dimension_numbers<[1], [0], [0], [1], [0, 0, 1, 1], [], []>} : vector<286x128xbf16>, vector<128x128xbf16>, vector<286x128xf32> -> vector<286x128xf32>
    %14 = arith.addf %7, %13 : vector<286x128xf32>
    %c0_12 = arith.constant 0 : index
    %c2 = arith.constant 2 : index
    %c0_13 = arith.constant 0 : index
    %15 = vector.load %arg1[%c0_12, %c2, %c0_13] : memref<1x324x128xf32, #tpu.memory_space<vmem>>, vector<1x286x128xf32>
    %16 = vector.shape_cast %15 : vector<1x286x128xf32> to vector<286x128xf32>
    %17 = arith.truncf %16 : vector<286x128xf32> to vector<286x128xbf16>
    %c2_14 = arith.constant 2 : index
    %c0_15 = arith.constant 0 : index
    %c0_16 = arith.constant 0 : index
    %18 = vector.load %arg2[%c2_14, %c0_15, %c0_16] : memref<9x128x128xbf16, #tpu.memory_space<vmem>>, vector<1x128x128xbf16>
    %19 = vector.shape_cast %18 : vector<1x128x128xbf16> to vector<128x128xbf16>
    %cst_17 = arith.constant dense<0.000000e+00> : vector<286x128xf32>
    %20 = tpu.matmul %17, %19, %cst_17 {dimension_numbers = #tpu.dot_dimension_numbers<[1], [0], [0], [1], [0, 0, 1, 1], [], []>} : vector<286x128xbf16>, vector<128x128xbf16>, vector<286x128xf32> -> vector<286x128xf32>
    %21 = arith.addf %14, %20 : vector<286x128xf32>
    %c0_18 = arith.constant 0 : index
    %c18 = arith.constant 18 : index
    %c0_19 = arith.constant 0 : index
    %22 = vector.load %arg1[%c0_18, %c18, %c0_19] : memref<1x324x128xf32, #tpu.memory_space<vmem>>, vector<1x286x128xf32>
    %23 = vector.shape_cast %22 : vector<1x286x128xf32> to vector<286x128xf32>
    %24 = arith.truncf %23 : vector<286x128xf32> to vector<286x128xbf16>
    %c3 = arith.constant 3 : index
    %c0_20 = arith.constant 0 : index
    %c0_21 = arith.constant 0 : index
    %25 = vector.load %arg2[%c3, %c0_20, %c0_21] : memref<9x128x128xbf16, #tpu.memory_space<vmem>>, vector<1x128x128xbf16>
    %26 = vector.shape_cast %25 : vector<1x128x128xbf16> to vector<128x128xbf16>
    %cst_22 = arith.constant dense<0.000000e+00> : vector<286x128xf32>
    %27 = tpu.matmul %24, %26, %cst_22 {dimension_numbers = #tpu.dot_dimension_numbers<[1], [0], [0], [1], [0, 0, 1, 1], [], []>} : vector<286x128xbf16>, vector<128x128xbf16>, vector<286x128xf32> -> vector<286x128xf32>
    %28 = arith.addf %21, %27 : vector<286x128xf32>
    %c0_23 = arith.constant 0 : index
    %c19 = arith.constant 19 : index
    %c0_24 = arith.constant 0 : index
    %29 = vector.load %arg1[%c0_23, %c19, %c0_24] : memref<1x324x128xf32, #tpu.memory_space<vmem>>, vector<1x286x128xf32>
    %30 = vector.shape_cast %29 : vector<1x286x128xf32> to vector<286x128xf32>
    %31 = arith.truncf %30 : vector<286x128xf32> to vector<286x128xbf16>
    %c4 = arith.constant 4 : index
    %c0_25 = arith.constant 0 : index
    %c0_26 = arith.constant 0 : index
    %32 = vector.load %arg2[%c4, %c0_25, %c0_26] : memref<9x128x128xbf16, #tpu.memory_space<vmem>>, vector<1x128x128xbf16>
    %33 = vector.shape_cast %32 : vector<1x128x128xbf16> to vector<128x128xbf16>
    %cst_27 = arith.constant dense<0.000000e+00> : vector<286x128xf32>
    %34 = tpu.matmul %31, %33, %cst_27 {dimension_numbers = #tpu.dot_dimension_numbers<[1], [0], [0], [1], [0, 0, 1, 1], [], []>} : vector<286x128xbf16>, vector<128x128xbf16>, vector<286x128xf32> -> vector<286x128xf32>
    %35 = arith.addf %28, %34 : vector<286x128xf32>
    %c0_28 = arith.constant 0 : index
    %c20 = arith.constant 20 : index
    %c0_29 = arith.constant 0 : index
    %36 = vector.load %arg1[%c0_28, %c20, %c0_29] : memref<1x324x128xf32, #tpu.memory_space<vmem>>, vector<1x286x128xf32>
    %37 = vector.shape_cast %36 : vector<1x286x128xf32> to vector<286x128xf32>
    %38 = arith.truncf %37 : vector<286x128xf32> to vector<286x128xbf16>
    %c5 = arith.constant 5 : index
    %c0_30 = arith.constant 0 : index
    %c0_31 = arith.constant 0 : index
    %39 = vector.load %arg2[%c5, %c0_30, %c0_31] : memref<9x128x128xbf16, #tpu.memory_space<vmem>>, vector<1x128x128xbf16>
    %40 = vector.shape_cast %39 : vector<1x128x128xbf16> to vector<128x128xbf16>
    %cst_32 = arith.constant dense<0.000000e+00> : vector<286x128xf32>
    %41 = tpu.matmul %38, %40, %cst_32 {dimension_numbers = #tpu.dot_dimension_numbers<[1], [0], [0], [1], [0, 0, 1, 1], [], []>} : vector<286x128xbf16>, vector<128x128xbf16>, vector<286x128xf32> -> vector<286x128xf32>
    %42 = arith.addf %35, %41 : vector<286x128xf32>
    %c0_33 = arith.constant 0 : index
    %c36 = arith.constant 36 : index
    %c0_34 = arith.constant 0 : index
    %43 = vector.load %arg1[%c0_33, %c36, %c0_34] : memref<1x324x128xf32, #tpu.memory_space<vmem>>, vector<1x286x128xf32>
    %44 = vector.shape_cast %43 : vector<1x286x128xf32> to vector<286x128xf32>
    %45 = arith.truncf %44 : vector<286x128xf32> to vector<286x128xbf16>
    %c6 = arith.constant 6 : index
    %c0_35 = arith.constant 0 : index
    %c0_36 = arith.constant 0 : index
    %46 = vector.load %arg2[%c6, %c0_35, %c0_36] : memref<9x128x128xbf16, #tpu.memory_space<vmem>>, vector<1x128x128xbf16>
    %47 = vector.shape_cast %46 : vector<1x128x128xbf16> to vector<128x128xbf16>
    %cst_37 = arith.constant dense<0.000000e+00> : vector<286x128xf32>
    %48 = tpu.matmul %45, %47, %cst_37 {dimension_numbers = #tpu.dot_dimension_numbers<[1], [0], [0], [1], [0, 0, 1, 1], [], []>} : vector<286x128xbf16>, vector<128x128xbf16>, vector<286x128xf32> -> vector<286x128xf32>
    %49 = arith.addf %42, %48 : vector<286x128xf32>
    %c0_38 = arith.constant 0 : index
    %c37 = arith.constant 37 : index
    %c0_39 = arith.constant 0 : index
    %50 = vector.load %arg1[%c0_38, %c37, %c0_39] : memref<1x324x128xf32, #tpu.memory_space<vmem>>, vector<1x286x128xf32>
    %51 = vector.shape_cast %50 : vector<1x286x128xf32> to vector<286x128xf32>
    %52 = arith.truncf %51 : vector<286x128xf32> to vector<286x128xbf16>
    %c7 = arith.constant 7 : index
    %c0_40 = arith.constant 0 : index
    %c0_41 = arith.constant 0 : index
    %53 = vector.load %arg2[%c7, %c0_40, %c0_41] : memref<9x128x128xbf16, #tpu.memory_space<vmem>>, vector<1x128x128xbf16>
    %54 = vector.shape_cast %53 : vector<1x128x128xbf16> to vector<128x128xbf16>
    %cst_42 = arith.constant dense<0.000000e+00> : vector<286x128xf32>
    %55 = tpu.matmul %52, %54, %cst_42 {dimension_numbers = #tpu.dot_dimension_numbers<[1], [0], [0], [1], [0, 0, 1, 1], [], []>} : vector<286x128xbf16>, vector<128x128xbf16>, vector<286x128xf32> -> vector<286x128xf32>
    %56 = arith.addf %49, %55 : vector<286x128xf32>
    %c0_43 = arith.constant 0 : index
    %c38 = arith.constant 38 : index
    %c0_44 = arith.constant 0 : index
    %57 = vector.load %arg1[%c0_43, %c38, %c0_44] : memref<1x324x128xf32, #tpu.memory_space<vmem>>, vector<1x286x128xf32>
    %58 = vector.shape_cast %57 : vector<1x286x128xf32> to vector<286x128xf32>
    %59 = arith.truncf %58 : vector<286x128xf32> to vector<286x128xbf16>
    %c8 = arith.constant 8 : index
    %c0_45 = arith.constant 0 : index
    %c0_46 = arith.constant 0 : index
    %60 = vector.load %arg2[%c8, %c0_45, %c0_46] : memref<9x128x128xbf16, #tpu.memory_space<vmem>>, vector<1x128x128xbf16>
    %61 = vector.shape_cast %60 : vector<1x128x128xbf16> to vector<128x128xbf16>
    %cst_47 = arith.constant dense<0.000000e+00> : vector<286x128xf32>
    %62 = tpu.matmul %59, %61, %cst_47 {dimension_numbers = #tpu.dot_dimension_numbers<[1], [0], [0], [1], [0, 0, 1, 1], [], []>} : vector<286x128xbf16>, vector<128x128xbf16>, vector<286x128xf32> -> vector<286x128xf32>
    %63 = arith.addf %56, %62 : vector<286x128xf32>
    %c0_48 = arith.constant 0 : index
    %c0_49 = arith.constant 0 : index
    %64 = vector.load %arg3[%c0_48, %c0_49] : memref<1x128xf32, #tpu.memory_space<vmem>>, vector<1x128xf32>
    %65 = vector.broadcast %64 : vector<1x128xf32> to vector<286x128xf32>
    %66 = arith.addf %63, %65 : vector<286x128xf32>
    %cst_50 = arith.constant 0.000000e+00 : f32
    %67 = vector.broadcast %cst_50 : f32 to vector<286x128xf32>
    %68 = arith.maximumf %66, %67 : vector<286x128xf32>
    %cst_51 = arith.constant 0.000000e+00 : f32
    %69 = vector.broadcast %cst_51 : f32 to vector<324x128xf32>
    %c0_52 = arith.constant 0 : index
    %c0_53 = arith.constant 0 : index
    %70 = vector.load %arg19[%c0_52, %c0_53] : memref<324x128xf32, #tpu.memory_space<vmem>>, vector<324x128xf32>
    tpu.vector_store %arg19[%c0_52, %c0_53], %69 {strides = array<i32>} : memref<324x128xf32, #tpu.memory_space<vmem>>, vector<324x128xf32>,
    %c19_54 = arith.constant 19 : index
    %c0_55 = arith.constant 0 : index
    %71 = vector.load %arg19[%c19_54, %c0_55] : memref<324x128xf32, #tpu.memory_space<vmem>>, vector<286x128xf32>
    tpu.vector_store %arg19[%c19_54, %c0_55], %68 {strides = array<i32>} : memref<324x128xf32, #tpu.memory_space<vmem>>, vector<286x128xf32>,
    %c0_56 = arith.constant 0 : index
    %c0_57 = arith.constant 0 : index
    %72 = vector.load %arg12[%c0_56, %c0_57] : memref<256x324xbf16, #tpu.memory_space<vmem>>, vector<256x324xbf16>
    %c0_58 = arith.constant 0 : index
    %c0_59 = arith.constant 0 : index
    %73 = vector.load %arg19[%c0_58, %c0_59] : memref<324x128xf32, #tpu.memory_space<vmem>>, vector<324x128xf32>
    %74 = arith.truncf %73 : vector<324x128xf32> to vector<324x128xbf16>
    %cst_60 = arith.constant dense<0.000000e+00> : vector<256x128xf32>
    %75 = tpu.matmul %72, %74, %cst_60 {dimension_numbers = #tpu.dot_dimension_numbers<[1], [0], [0], [1], [0, 0, 1, 1], [], []>} : vector<256x324xbf16>, vector<324x128xbf16>, vector<256x128xf32> -> vector<256x128xf32>
    %76 = vector.extract_strided_slice %75 {offsets = [0, 0], sizes = [64, 128], strides = [1, 1]} : vector<256x128xf32> to vector<64x128xf32>
    %77 = vector.extract_strided_slice %75 {offsets = [64, 0], sizes = [64, 128], strides = [1, 1]} : vector<256x128xf32> to vector<64x128xf32>
    %78 = arith.maximumf %76, %77 : vector<64x128xf32>
    %79 = vector.extract_strided_slice %75 {offsets = [128, 0], sizes = [64, 128], strides = [1, 1]} : vector<256x128xf32> to vector<64x128xf32>
    %80 = vector.extract_strided_slice %75 {offsets = [192, 0], sizes = [64, 128], strides = [1, 1]} : vector<256x128xf32> to vector<64x128xf32>
    %81 = arith.maximumf %79, %80 : vector<64x128xf32>
    %82 = arith.maximumf %78, %81 : vector<64x128xf32>
    %c0_61 = arith.constant 0 : index
    %c0_62 = arith.constant 0 : index
    %83 = vector.load %arg13[%c0_61, %c0_62] : memref<100x64xbf16, #tpu.memory_space<vmem>>, vector<100x64xbf16>
    %84 = arith.truncf %82 : vector<64x128xf32> to vector<64x128xbf16>
    %cst_63 = arith.constant dense<0.000000e+00> : vector<100x128xf32>
    %85 = tpu.matmul %83, %84, %cst_63 {dimension_numbers = #tpu.dot_dimension_numbers<[1], [0], [0], [1], [0, 0, 1, 1], [], []>} : vector<100x64xbf16>, vector<64x128xbf16>, vector<100x128xf32> -> vector<100x128xf32>
    %c0_64 = arith.constant 0 : index
    %c0_65 = arith.constant 0 : index
    %86 = vector.load %arg20[%c0_64, %c0_65] : memref<100x128xf32, #tpu.memory_space<vmem>>, vector<100x128xf32>
    tpu.vector_store %arg20[%c0_64, %c0_65], %85 {strides = array<i32>} : memref<100x128xf32, #tpu.memory_space<vmem>>, vector<100x128xf32>,
    %cst_66 = arith.constant 0.000000e+00 : f32
    %87 = vector.broadcast %cst_66 : f32 to vector<78x128xf32>
    %c0_67 = arith.constant 0 : index
    %c0_68 = arith.constant 0 : index
    %88 = vector.load %arg20[%c0_67, %c0_68] : memref<100x128xf32, #tpu.memory_space<vmem>>, vector<78x128xf32>
    %89 = arith.truncf %88 : vector<78x128xf32> to vector<78x128xbf16>
    %c0_69 = arith.constant 0 : index
    %c0_70 = arith.constant 0 : index
    %c0_71 = arith.constant 0 : index
    %90 = vector.load %arg4[%c0_69, %c0_70, %c0_71] : memref<9x128x128xbf16, #tpu.memory_space<vmem>>, vector<1x128x128xbf16>
    %91 = vector.shape_cast %90 : vector<1x128x128xbf16> to vector<128x128xbf16>
    %cst_72 = arith.constant dense<0.000000e+00> : vector<78x128xf32>
    %92 = tpu.matmul %89, %91, %cst_72 {dimension_numbers = #tpu.dot_dimension_numbers<[1], [0], [0], [1], [0, 0, 1, 1], [], []>} : vector<78x128xbf16>, vector<128x128xbf16>, vector<78x128xf32> -> vector<78x128xf32>
    %93 = arith.addf %87, %92 : vector<78x128xf32>
    %c1_73 = arith.constant 1 : index
    %c0_74 = arith.constant 0 : index
    %94 = vector.load %arg20[%c1_73, %c0_74] : memref<100x128xf32, #tpu.memory_space<vmem>>, vector<78x128xf32>
    %95 = arith.truncf %94 : vector<78x128xf32> to vector<78x128xbf16>
    %c1_75 = arith.constant 1 : index
    %c0_76 = arith.constant 0 : index
    %c0_77 = arith.constant 0 : index
    %96 = vector.load %arg4[%c1_75, %c0_76, %c0_77] : memref<9x128x128xbf16, #tpu.memory_space<vmem>>, vector<1x128x128xbf16>
    %97 = vector.shape_cast %96 : vector<1x128x128xbf16> to vector<128x128xbf16>
    %cst_78 = arith.constant dense<0.000000e+00> : vector<78x128xf32>
    %98 = tpu.matmul %95, %97, %cst_78 {dimension_numbers = #tpu.dot_dimension_numbers<[1], [0], [0], [1], [0, 0, 1, 1], [], []>} : vector<78x128xbf16>, vector<128x128xbf16>, vector<78x128xf32> -> vector<78x128xf32>
    %99 = arith.addf %93, %98 : vector<78x128xf32>
    %c2_79 = arith.constant 2 : index
    %c0_80 = arith.constant 0 : index
    %100 = vector.load %arg20[%c2_79, %c0_80] : memref<100x128xf32, #tpu.memory_space<vmem>>, vector<78x128xf32>
    %101 = arith.truncf %100 : vector<78x128xf32> to vector<78x128xbf16>
    %c2_81 = arith.constant 2 : index
    %c0_82 = arith.constant 0 : index
    %c0_83 = arith.constant 0 : index
    %102 = vector.load %arg4[%c2_81, %c0_82, %c0_83] : memref<9x128x128xbf16, #tpu.memory_space<vmem>>, vector<1x128x128xbf16>
    %103 = vector.shape_cast %102 : vector<1x128x128xbf16> to vector<128x128xbf16>
    %cst_84 = arith.constant dense<0.000000e+00> : vector<78x128xf32>
    %104 = tpu.matmul %101, %103, %cst_84 {dimension_numbers = #tpu.dot_dimension_numbers<[1], [0], [0], [1], [0, 0, 1, 1], [], []>} : vector<78x128xbf16>, vector<128x128xbf16>, vector<78x128xf32> -> vector<78x128xf32>
    %105 = arith.addf %99, %104 : vector<78x128xf32>
    %c10 = arith.constant 10 : index
    %c0_85 = arith.constant 0 : index
    %106 = vector.load %arg20[%c10, %c0_85] : memref<100x128xf32, #tpu.memory_space<vmem>>, vector<78x128xf32>
    %107 = arith.truncf %106 : vector<78x128xf32> to vector<78x128xbf16>
    %c3_86 = arith.constant 3 : index
    %c0_87 = arith.constant 0 : index
    %c0_88 = arith.constant 0 : index
    %108 = vector.load %arg4[%c3_86, %c0_87, %c0_88] : memref<9x128x128xbf16, #tpu.memory_space<vmem>>, vector<1x128x128xbf16>
    %109 = vector.shape_cast %108 : vector<1x128x128xbf16> to vector<128x128xbf16>
    %cst_89 = arith.constant dense<0.000000e+00> : vector<78x128xf32>
    %110 = tpu.matmul %107, %109, %cst_89 {dimension_numbers = #tpu.dot_dimension_numbers<[1], [0], [0], [1], [0, 0, 1, 1], [], []>} : vector<78x128xbf16>, vector<128x128xbf16>, vector<78x128xf32> -> vector<78x128xf32>
    %111 = arith.addf %105, %110 : vector<78x128xf32>
    %c11 = arith.constant 11 : index
    %c0_90 = arith.constant 0 : index
    %112 = vector.load %arg20[%c11, %c0_90] : memref<100x128xf32, #tpu.memory_space<vmem>>, vector<78x128xf32>
    %113 = arith.truncf %112 : vector<78x128xf32> to vector<78x128xbf16>
    %c4_91 = arith.constant 4 : index
    %c0_92 = arith.constant 0 : index
    %c0_93 = arith.constant 0 : index
    %114 = vector.load %arg4[%c4_91, %c0_92, %c0_93] : memref<9x128x128xbf16, #tpu.memory_space<vmem>>, vector<1x128x128xbf16>
    %115 = vector.shape_cast %114 : vector<1x128x128xbf16> to vector<128x128xbf16>
    %cst_94 = arith.constant dense<0.000000e+00> : vector<78x128xf32>
    %116 = tpu.matmul %113, %115, %cst_94 {dimension_numbers = #tpu.dot_dimension_numbers<[1], [0], [0], [1], [0, 0, 1, 1], [], []>} : vector<78x128xbf16>, vector<128x128xbf16>, vector<78x128xf32> -> vector<78x128xf32>
    %117 = arith.addf %111, %116 : vector<78x128xf32>
    %c12 = arith.constant 12 : index
    %c0_95 = arith.constant 0 : index
    %118 = vector.load %arg20[%c12, %c0_95] : memref<100x128xf32, #tpu.memory_space<vmem>>, vector<78x128xf32>
    %119 = arith.truncf %118 : vector<78x128xf32> to vector<78x128xbf16>
    %c5_96 = arith.constant 5 : index
    %c0_97 = arith.constant 0 : index
    %c0_98 = arith.constant 0 : index
    %120 = vector.load %arg4[%c5_96, %c0_97, %c0_98] : memref<9x128x128xbf16, #tpu.memory_space<vmem>>, vector<1x128x128xbf16>
    %121 = vector.shape_cast %120 : vector<1x128x128xbf16> to vector<128x128xbf16>
    %cst_99 = arith.constant dense<0.000000e+00> : vector<78x128xf32>
    %122 = tpu.matmul %119, %121, %cst_99 {dimension_numbers = #tpu.dot_dimension_numbers<[1], [0], [0], [1], [0, 0, 1, 1], [], []>} : vector<78x128xbf16>, vector<128x128xbf16>, vector<78x128xf32> -> vector<78x128xf32>
    %123 = arith.addf %117, %122 : vector<78x128xf32>
    %c20_100 = arith.constant 20 : index
    %c0_101 = arith.constant 0 : index
    %124 = vector.load %arg20[%c20_100, %c0_101] : memref<100x128xf32, #tpu.memory_space<vmem>>, vector<78x128xf32>
    %125 = arith.truncf %124 : vector<78x128xf32> to vector<78x128xbf16>
    %c6_102 = arith.constant 6 : index
    %c0_103 = arith.constant 0 : index
    %c0_104 = arith.constant 0 : index
    %126 = vector.load %arg4[%c6_102, %c0_103, %c0_104] : memref<9x128x128xbf16, #tpu.memory_space<vmem>>, vector<1x128x128xbf16>
    %127 = vector.shape_cast %126 : vector<1x128x128xbf16> to vector<128x128xbf16>
    %cst_105 = arith.constant dense<0.000000e+00> : vector<78x128xf32>
    %128 = tpu.matmul %125, %127, %cst_105 {dimension_numbers = #tpu.dot_dimension_numbers<[1], [0], [0], [1], [0, 0, 1, 1], [], []>} : vector<78x128xbf16>, vector<128x128xbf16>, vector<78x128xf32> -> vector<78x128xf32>
    %129 = arith.addf %123, %128 : vector<78x128xf32>
    %c21 = arith.constant 21 : index
    %c0_106 = arith.constant 0 : index
    %130 = vector.load %arg20[%c21, %c0_106] : memref<100x128xf32, #tpu.memory_space<vmem>>, vector<78x128xf32>
    %131 = arith.truncf %130 : vector<78x128xf32> to vector<78x128xbf16>
    %c7_107 = arith.constant 7 : index
    %c0_108 = arith.constant 0 : index
    %c0_109 = arith.constant 0 : index
    %132 = vector.load %arg4[%c7_107, %c0_108, %c0_109] : memref<9x128x128xbf16, #tpu.memory_space<vmem>>, vector<1x128x128xbf16>
    %133 = vector.shape_cast %132 : vector<1x128x128xbf16> to vector<128x128xbf16>
    %cst_110 = arith.constant dense<0.000000e+00> : vector<78x128xf32>
    %134 = tpu.matmul %131, %133, %cst_110 {dimension_numbers = #tpu.dot_dimension_numbers<[1], [0], [0], [1], [0, 0, 1, 1], [], []>} : vector<78x128xbf16>, vector<128x128xbf16>, vector<78x128xf32> -> vector<78x128xf32>
    %135 = arith.addf %129, %134 : vector<78x128xf32>
    %c22 = arith.constant 22 : index
    %c0_111 = arith.constant 0 : index
    %136 = vector.load %arg20[%c22, %c0_111] : memref<100x128xf32, #tpu.memory_space<vmem>>, vector<78x128xf32>
    %137 = arith.truncf %136 : vector<78x128xf32> to vector<78x128xbf16>
    %c8_112 = arith.constant 8 : index
    %c0_113 = arith.constant 0 : index
    %c0_114 = arith.constant 0 : index
    %138 = vector.load %arg4[%c8_112, %c0_113, %c0_114] : memref<9x128x128xbf16, #tpu.memory_space<vmem>>, vector<1x128x128xbf16>
    %139 = vector.shape_cast %138 : vector<1x128x128xbf16> to vector<128x128xbf16>
    %cst_115 = arith.constant dense<0.000000e+00> : vector<78x128xf32>
    %140 = tpu.matmul %137, %139, %cst_115 {dimension_numbers = #tpu.dot_dimension_numbers<[1], [0], [0], [1], [0, 0, 1, 1], [], []>} : vector<78x128xbf16>, vector<128x128xbf16>, vector<78x128xf32> -> vector<78x128xf32>
    %141 = arith.addf %135, %140 : vector<78x128xf32>
    %c0_116 = arith.constant 0 : index
    %c0_117 = arith.constant 0 : index
    %142 = vector.load %arg5[%c0_116, %c0_117] : memref<1x128xf32, #tpu.memory_space<vmem>>, vector<1x128xf32>
    %143 = vector.broadcast %142 : vector<1x128xf32> to vector<78x128xf32>
    %144 = arith.addf %141, %143 : vector<78x128xf32>
    %cst_118 = arith.constant 0.000000e+00 : f32
    %145 = vector.broadcast %cst_118 : f32 to vector<78x128xf32>
    %146 = arith.maximumf %144, %145 : vector<78x128xf32>
    %cst_119 = arith.constant 0.000000e+00 : f32
    %147 = vector.broadcast %cst_119 : f32 to vector<100x128xf32>
    %c0_120 = arith.constant 0 : index
    %c0_121 = arith.constant 0 : index
    %148 = vector.load %arg21[%c0_120, %c0_121] : memref<100x128xf32, #tpu.memory_space<vmem>>, vector<100x128xf32>
    tpu.vector_store %arg21[%c0_120, %c0_121], %147 {strides = array<i32>} : memref<100x128xf32, #tpu.memory_space<vmem>>, vector<100x128xf32>,
    %c11_122 = arith.constant 11 : index
    %c0_123 = arith.constant 0 : index
    %149 = vector.load %arg21[%c11_122, %c0_123] : memref<100x128xf32, #tpu.memory_space<vmem>>, vector<78x128xf32>
    tpu.vector_store %arg21[%c11_122, %c0_123], %146 {strides = array<i32>} : memref<100x128xf32, #tpu.memory_space<vmem>>, vector<78x128xf32>,
    %c0_124 = arith.constant 0 : index
    %c0_125 = arith.constant 0 : index
    %150 = vector.load %arg14[%c0_124, %c0_125] : memref<64x100xbf16, #tpu.memory_space<vmem>>, vector<64x100xbf16>
    %c0_126 = arith.constant 0 : index
    %c0_127 = arith.constant 0 : index
    %151 = vector.load %arg21[%c0_126, %c0_127] : memref<100x128xf32, #tpu.memory_space<vmem>>, vector<100x128xf32>
    %152 = arith.truncf %151 : vector<100x128xf32> to vector<100x128xbf16>
    %cst_128 = arith.constant dense<0.000000e+00> : vector<64x128xf32>
    %153 = tpu.matmul %150, %152, %cst_128 {dimension_numbers = #tpu.dot_dimension_numbers<[1], [0], [0], [1], [0, 0, 1, 1], [], []>} : vector<64x100xbf16>, vector<100x128xbf16>, vector<64x128xf32> -> vector<64x128xf32>
    %154 = vector.extract_strided_slice %153 {offsets = [0, 0], sizes = [16, 128], strides = [1, 1]} : vector<64x128xf32> to vector<16x128xf32>
    %155 = vector.extract_strided_slice %153 {offsets = [16, 0], sizes = [16, 128], strides = [1, 1]} : vector<64x128xf32> to vector<16x128xf32>
    %156 = arith.maximumf %154, %155 : vector<16x128xf32>
    %157 = vector.extract_strided_slice %153 {offsets = [32, 0], sizes = [16, 128], strides = [1, 1]} : vector<64x128xf32> to vector<16x128xf32>
    %158 = vector.extract_strided_slice %153 {offsets = [48, 0], sizes = [16, 128], strides = [1, 1]} : vector<64x128xf32> to vector<16x128xf32>
    %159 = arith.maximumf %157, %158 : vector<16x128xf32>
    %160 = arith.maximumf %156, %159 : vector<16x128xf32>
    %c0_129 = arith.constant 0 : index
    %c0_130 = arith.constant 0 : index
    %161 = vector.load %arg15[%c0_129, %c0_130] : memref<36x16xbf16, #tpu.memory_space<vmem>>, vector<36x16xbf16>
    %162 = arith.truncf %160 : vector<16x128xf32> to vector<16x128xbf16>
    %cst_131 = arith.constant dense<0.000000e+00> : vector<36x128xf32>
    %163 = tpu.matmul %161, %162, %cst_131 {dimension_numbers = #tpu.dot_dimension_numbers<[1], [0], [0], [1], [0, 0, 1, 1], [], []>} : vector<36x16xbf16>, vector<16x128xbf16>, vector<36x128xf32> -> vector<36x128xf32>
    %c0_132 = arith.constant 0 : index
    %c0_133 = arith.constant 0 : index
    %164 = vector.load %arg22[%c0_132, %c0_133] : memref<36x128xf32, #tpu.memory_space<vmem>>, vector<36x128xf32>
    tpu.vector_store %arg22[%c0_132, %c0_133], %163 {strides = array<i32>} : memref<36x128xf32, #tpu.memory_space<vmem>>, vector<36x128xf32>,
    %cst_134 = arith.constant 0.000000e+00 : f32
    %165 = vector.broadcast %cst_134 : f32 to vector<22x128xf32>
    %c0_135 = arith.constant 0 : index
    %c0_136 = arith.constant 0 : index
    %166 = vector.load %arg22[%c0_135, %c0_136] : memref<36x128xf32, #tpu.memory_space<vmem>>, vector<22x128xf32>
    %167 = arith.truncf %166 : vector<22x128xf32> to vector<22x128xbf16>
    %c0_137 = arith.constant 0 : index
    %c0_138 = arith.constant 0 : index
    %c0_139 = arith.constant 0 : index
    %168 = vector.load %arg6[%c0_137, %c0_138, %c0_139] : memref<9x128x128xbf16, #tpu.memory_space<vmem>>, vector<1x128x128xbf16>
    %169 = vector.shape_cast %168 : vector<1x128x128xbf16> to vector<128x128xbf16>
    %cst_140 = arith.constant dense<0.000000e+00> : vector<22x128xf32>
    %170 = tpu.matmul %167, %169, %cst_140 {dimension_numbers = #tpu.dot_dimension_numbers<[1], [0], [0], [1], [0, 0, 1, 1], [], []>} : vector<22x128xbf16>, vector<128x128xbf16>, vector<22x128xf32> -> vector<22x128xf32>
    %171 = arith.addf %165, %170 : vector<22x128xf32>
    %c1_141 = arith.constant 1 : index
    %c0_142 = arith.constant 0 : index
    %172 = vector.load %arg22[%c1_141, %c0_142] : memref<36x128xf32, #tpu.memory_space<vmem>>, vector<22x128xf32>
    %173 = arith.truncf %172 : vector<22x128xf32> to vector<22x128xbf16>
    %c1_143 = arith.constant 1 : index
    %c0_144 = arith.constant 0 : index
    %c0_145 = arith.constant 0 : index
    %174 = vector.load %arg6[%c1_143, %c0_144, %c0_145] : memref<9x128x128xbf16, #tpu.memory_space<vmem>>, vector<1x128x128xbf16>
    %175 = vector.shape_cast %174 : vector<1x128x128xbf16> to vector<128x128xbf16>
    %cst_146 = arith.constant dense<0.000000e+00> : vector<22x128xf32>
    %176 = tpu.matmul %173, %175, %cst_146 {dimension_numbers = #tpu.dot_dimension_numbers<[1], [0], [0], [1], [0, 0, 1, 1], [], []>} : vector<22x128xbf16>, vector<128x128xbf16>, vector<22x128xf32> -> vector<22x128xf32>
    %177 = arith.addf %171, %176 : vector<22x128xf32>
    %c2_147 = arith.constant 2 : index
    %c0_148 = arith.constant 0 : index
    %178 = vector.load %arg22[%c2_147, %c0_148] : memref<36x128xf32, #tpu.memory_space<vmem>>, vector<22x128xf32>
    %179 = arith.truncf %178 : vector<22x128xf32> to vector<22x128xbf16>
    %c2_149 = arith.constant 2 : index
    %c0_150 = arith.constant 0 : index
    %c0_151 = arith.constant 0 : index
    %180 = vector.load %arg6[%c2_149, %c0_150, %c0_151] : memref<9x128x128xbf16, #tpu.memory_space<vmem>>, vector<1x128x128xbf16>
    %181 = vector.shape_cast %180 : vector<1x128x128xbf16> to vector<128x128xbf16>
    %cst_152 = arith.constant dense<0.000000e+00> : vector<22x128xf32>
    %182 = tpu.matmul %179, %181, %cst_152 {dimension_numbers = #tpu.dot_dimension_numbers<[1], [0], [0], [1], [0, 0, 1, 1], [], []>} : vector<22x128xbf16>, vector<128x128xbf16>, vector<22x128xf32> -> vector<22x128xf32>
    %183 = arith.addf %177, %182 : vector<22x128xf32>
    %c6_153 = arith.constant 6 : index
    %c0_154 = arith.constant 0 : index
    %184 = vector.load %arg22[%c6_153, %c0_154] : memref<36x128xf32, #tpu.memory_space<vmem>>, vector<22x128xf32>
    %185 = arith.truncf %184 : vector<22x128xf32> to vector<22x128xbf16>
    %c3_155 = arith.constant 3 : index
    %c0_156 = arith.constant 0 : index
    %c0_157 = arith.constant 0 : index
    %186 = vector.load %arg6[%c3_155, %c0_156, %c0_157] : memref<9x128x128xbf16, #tpu.memory_space<vmem>>, vector<1x128x128xbf16>
    %187 = vector.shape_cast %186 : vector<1x128x128xbf16> to vector<128x128xbf16>
    %cst_158 = arith.constant dense<0.000000e+00> : vector<22x128xf32>
    %188 = tpu.matmul %185, %187, %cst_158 {dimension_numbers = #tpu.dot_dimension_numbers<[1], [0], [0], [1], [0, 0, 1, 1], [], []>} : vector<22x128xbf16>, vector<128x128xbf16>, vector<22x128xf32> -> vector<22x128xf32>
    %189 = arith.addf %183, %188 : vector<22x128xf32>
    %c7_159 = arith.constant 7 : index
    %c0_160 = arith.constant 0 : index
    %190 = vector.load %arg22[%c7_159, %c0_160] : memref<36x128xf32, #tpu.memory_space<vmem>>, vector<22x128xf32>
    %191 = arith.truncf %190 : vector<22x128xf32> to vector<22x128xbf16>
    %c4_161 = arith.constant 4 : index
    %c0_162 = arith.constant 0 : index
    %c0_163 = arith.constant 0 : index
    %192 = vector.load %arg6[%c4_161, %c0_162, %c0_163] : memref<9x128x128xbf16, #tpu.memory_space<vmem>>, vector<1x128x128xbf16>
    %193 = vector.shape_cast %192 : vector<1x128x128xbf16> to vector<128x128xbf16>
    %cst_164 = arith.constant dense<0.000000e+00> : vector<22x128xf32>
    %194 = tpu.matmul %191, %193, %cst_164 {dimension_numbers = #tpu.dot_dimension_numbers<[1], [0], [0], [1], [0, 0, 1, 1], [], []>} : vector<22x128xbf16>, vector<128x128xbf16>, vector<22x128xf32> -> vector<22x128xf32>
    %195 = arith.addf %189, %194 : vector<22x128xf32>
    %c8_165 = arith.constant 8 : index
    %c0_166 = arith.constant 0 : index
    %196 = vector.load %arg22[%c8_165, %c0_166] : memref<36x128xf32, #tpu.memory_space<vmem>>, vector<22x128xf32>
    %197 = arith.truncf %196 : vector<22x128xf32> to vector<22x128xbf16>
    %c5_167 = arith.constant 5 : index
    %c0_168 = arith.constant 0 : index
    %c0_169 = arith.constant 0 : index
    %198 = vector.load %arg6[%c5_167, %c0_168, %c0_169] : memref<9x128x128xbf16, #tpu.memory_space<vmem>>, vector<1x128x128xbf16>
    %199 = vector.shape_cast %198 : vector<1x128x128xbf16> to vector<128x128xbf16>
    %cst_170 = arith.constant dense<0.000000e+00> : vector<22x128xf32>
    %200 = tpu.matmul %197, %199, %cst_170 {dimension_numbers = #tpu.dot_dimension_numbers<[1], [0], [0], [1], [0, 0, 1, 1], [], []>} : vector<22x128xbf16>, vector<128x128xbf16>, vector<22x128xf32> -> vector<22x128xf32>
    %201 = arith.addf %195, %200 : vector<22x128xf32>
    %c12_171 = arith.constant 12 : index
    %c0_172 = arith.constant 0 : index
    %202 = vector.load %arg22[%c12_171, %c0_172] : memref<36x128xf32, #tpu.memory_space<vmem>>, vector<22x128xf32>
    %203 = arith.truncf %202 : vector<22x128xf32> to vector<22x128xbf16>
    %c6_173 = arith.constant 6 : index
    %c0_174 = arith.constant 0 : index
    %c0_175 = arith.constant 0 : index
    %204 = vector.load %arg6[%c6_173, %c0_174, %c0_175] : memref<9x128x128xbf16, #tpu.memory_space<vmem>>, vector<1x128x128xbf16>
    %205 = vector.shape_cast %204 : vector<1x128x128xbf16> to vector<128x128xbf16>
    %cst_176 = arith.constant dense<0.000000e+00> : vector<22x128xf32>
    %206 = tpu.matmul %203, %205, %cst_176 {dimension_numbers = #tpu.dot_dimension_numbers<[1], [0], [0], [1], [0, 0, 1, 1], [], []>} : vector<22x128xbf16>, vector<128x128xbf16>, vector<22x128xf32> -> vector<22x128xf32>
    %207 = arith.addf %201, %206 : vector<22x128xf32>
    %c13 = arith.constant 13 : index
    %c0_177 = arith.constant 0 : index
    %208 = vector.load %arg22[%c13, %c0_177] : memref<36x128xf32, #tpu.memory_space<vmem>>, vector<22x128xf32>
    %209 = arith.truncf %208 : vector<22x128xf32> to vector<22x128xbf16>
    %c7_178 = arith.constant 7 : index
    %c0_179 = arith.constant 0 : index
    %c0_180 = arith.constant 0 : index
    %210 = vector.load %arg6[%c7_178, %c0_179, %c0_180] : memref<9x128x128xbf16, #tpu.memory_space<vmem>>, vector<1x128x128xbf16>
    %211 = vector.shape_cast %210 : vector<1x128x128xbf16> to vector<128x128xbf16>
    %cst_181 = arith.constant dense<0.000000e+00> : vector<22x128xf32>
    %212 = tpu.matmul %209, %211, %cst_181 {dimension_numbers = #tpu.dot_dimension_numbers<[1], [0], [0], [1], [0, 0, 1, 1], [], []>} : vector<22x128xbf16>, vector<128x128xbf16>, vector<22x128xf32> -> vector<22x128xf32>
    %213 = arith.addf %207, %212 : vector<22x128xf32>
    %c14 = arith.constant 14 : index
    %c0_182 = arith.constant 0 : index
    %214 = vector.load %arg22[%c14, %c0_182] : memref<36x128xf32, #tpu.memory_space<vmem>>, vector<22x128xf32>
    %215 = arith.truncf %214 : vector<22x128xf32> to vector<22x128xbf16>
    %c8_183 = arith.constant 8 : index
    %c0_184 = arith.constant 0 : index
    %c0_185 = arith.constant 0 : index
    %216 = vector.load %arg6[%c8_183, %c0_184, %c0_185] : memref<9x128x128xbf16, #tpu.memory_space<vmem>>, vector<1x128x128xbf16>
    %217 = vector.shape_cast %216 : vector<1x128x128xbf16> to vector<128x128xbf16>
    %cst_186 = arith.constant dense<0.000000e+00> : vector<22x128xf32>
    %218 = tpu.matmul %215, %217, %cst_186 {dimension_numbers = #tpu.dot_dimension_numbers<[1], [0], [0], [1], [0, 0, 1, 1], [], []>} : vector<22x128xbf16>, vector<128x128xbf16>, vector<22x128xf32> -> vector<22x128xf32>
    %219 = arith.addf %213, %218 : vector<22x128xf32>
    %c0_187 = arith.constant 0 : index
    %c0_188 = arith.constant 0 : index
    %220 = vector.load %arg7[%c0_187, %c0_188] : memref<1x128xf32, #tpu.memory_space<vmem>>, vector<1x128xf32>
    %221 = vector.broadcast %220 : vector<1x128xf32> to vector<22x128xf32>
    %222 = arith.addf %219, %221 : vector<22x128xf32>
    %cst_189 = arith.constant 0.000000e+00 : f32
    %223 = vector.broadcast %cst_189 : f32 to vector<22x128xf32>
    %224 = arith.maximumf %222, %223 : vector<22x128xf32>
    %cst_190 = arith.constant 0.000000e+00 : f32
    %225 = vector.broadcast %cst_190 : f32 to vector<36x128xf32>
    %c0_191 = arith.constant 0 : index
    %c0_192 = arith.constant 0 : index
    %226 = vector.load %arg23[%c0_191, %c0_192] : memref<36x128xf32, #tpu.memory_space<vmem>>, vector<36x128xf32>
    tpu.vector_store %arg23[%c0_191, %c0_192], %225 {strides = array<i32>} : memref<36x128xf32, #tpu.memory_space<vmem>>, vector<36x128xf32>,
    %c7_193 = arith.constant 7 : index
    %c0_194 = arith.constant 0 : index
    %227 = vector.load %arg23[%c7_193, %c0_194] : memref<36x128xf32, #tpu.memory_space<vmem>>, vector<22x128xf32>
    tpu.vector_store %arg23[%c7_193, %c0_194], %224 {strides = array<i32>} : memref<36x128xf32, #tpu.memory_space<vmem>>, vector<22x128xf32>,
    %c0_195 = arith.constant 0 : index
    %c0_196 = arith.constant 0 : index
    %228 = vector.load %arg16[%c0_195, %c0_196] : memref<100x36xbf16, #tpu.memory_space<vmem>>, vector<100x36xbf16>
    %c0_197 = arith.constant 0 : index
    %c0_198 = arith.constant 0 : index
    %229 = vector.load %arg23[%c0_197, %c0_198] : memref<36x128xf32, #tpu.memory_space<vmem>>, vector<36x128xf32>
    %230 = arith.truncf %229 : vector<36x128xf32> to vector<36x128xbf16>
    %cst_199 = arith.constant dense<0.000000e+00> : vector<100x128xf32>
    %231 = tpu.matmul %228, %230, %cst_199 {dimension_numbers = #tpu.dot_dimension_numbers<[1], [0], [0], [1], [0, 0, 1, 1], [], []>} : vector<100x36xbf16>, vector<36x128xbf16>, vector<100x128xf32> -> vector<100x128xf32>
    %c0_200 = arith.constant 0 : index
    %c0_201 = arith.constant 0 : index
    %232 = vector.load %arg24[%c0_200, %c0_201] : memref<100x128xf32, #tpu.memory_space<vmem>>, vector<100x128xf32>
    tpu.vector_store %arg24[%c0_200, %c0_201], %231 {strides = array<i32>} : memref<100x128xf32, #tpu.memory_space<vmem>>, vector<100x128xf32>,
    %cst_202 = arith.constant 0.000000e+00 : f32
    %233 = vector.broadcast %cst_202 : f32 to vector<78x128xf32>
    %c0_203 = arith.constant 0 : index
    %c0_204 = arith.constant 0 : index
    %234 = vector.load %arg24[%c0_203, %c0_204] : memref<100x128xf32, #tpu.memory_space<vmem>>, vector<78x128xf32>
    %235 = arith.truncf %234 : vector<78x128xf32> to vector<78x128xbf16>
    %c0_205 = arith.constant 0 : index
    %c0_206 = arith.constant 0 : index
    %c0_207 = arith.constant 0 : index
    %236 = vector.load %arg8[%c0_205, %c0_206, %c0_207] : memref<9x128x128xbf16, #tpu.memory_space<vmem>>, vector<1x128x128xbf16>
    %237 = vector.shape_cast %236 : vector<1x128x128xbf16> to vector<128x128xbf16>
    %cst_208 = arith.constant dense<0.000000e+00> : vector<78x128xf32>
    %238 = tpu.matmul %235, %237, %cst_208 {dimension_numbers = #tpu.dot_dimension_numbers<[1], [0], [0], [1], [0, 0, 1, 1], [], []>} : vector<78x128xbf16>, vector<128x128xbf16>, vector<78x128xf32> -> vector<78x128xf32>
    %239 = arith.addf %233, %238 : vector<78x128xf32>
    %c1_209 = arith.constant 1 : index
    %c0_210 = arith.constant 0 : index
    %240 = vector.load %arg24[%c1_209, %c0_210] : memref<100x128xf32, #tpu.memory_space<vmem>>, vector<78x128xf32>
    %241 = arith.truncf %240 : vector<78x128xf32> to vector<78x128xbf16>
    %c1_211 = arith.constant 1 : index
    %c0_212 = arith.constant 0 : index
    %c0_213 = arith.constant 0 : index
    %242 = vector.load %arg8[%c1_211, %c0_212, %c0_213] : memref<9x128x128xbf16, #tpu.memory_space<vmem>>, vector<1x128x128xbf16>
    %243 = vector.shape_cast %242 : vector<1x128x128xbf16> to vector<128x128xbf16>
    %cst_214 = arith.constant dense<0.000000e+00> : vector<78x128xf32>
    %244 = tpu.matmul %241, %243, %cst_214 {dimension_numbers = #tpu.dot_dimension_numbers<[1], [0], [0], [1], [0, 0, 1, 1], [], []>} : vector<78x128xbf16>, vector<128x128xbf16>, vector<78x128xf32> -> vector<78x128xf32>
    %245 = arith.addf %239, %244 : vector<78x128xf32>
    %c2_215 = arith.constant 2 : index
    %c0_216 = arith.constant 0 : index
    %246 = vector.load %arg24[%c2_215, %c0_216] : memref<100x128xf32, #tpu.memory_space<vmem>>, vector<78x128xf32>
    %247 = arith.truncf %246 : vector<78x128xf32> to vector<78x128xbf16>
    %c2_217 = arith.constant 2 : index
    %c0_218 = arith.constant 0 : index
    %c0_219 = arith.constant 0 : index
    %248 = vector.load %arg8[%c2_217, %c0_218, %c0_219] : memref<9x128x128xbf16, #tpu.memory_space<vmem>>, vector<1x128x128xbf16>
    %249 = vector.shape_cast %248 : vector<1x128x128xbf16> to vector<128x128xbf16>
    %cst_220 = arith.constant dense<0.000000e+00> : vector<78x128xf32>
    %250 = tpu.matmul %247, %249, %cst_220 {dimension_numbers = #tpu.dot_dimension_numbers<[1], [0], [0], [1], [0, 0, 1, 1], [], []>} : vector<78x128xbf16>, vector<128x128xbf16>, vector<78x128xf32> -> vector<78x128xf32>
    %251 = arith.addf %245, %250 : vector<78x128xf32>
    %c10_221 = arith.constant 10 : index
    %c0_222 = arith.constant 0 : index
    %252 = vector.load %arg24[%c10_221, %c0_222] : memref<100x128xf32, #tpu.memory_space<vmem>>, vector<78x128xf32>
    %253 = arith.truncf %252 : vector<78x128xf32> to vector<78x128xbf16>
    %c3_223 = arith.constant 3 : index
    %c0_224 = arith.constant 0 : index
    %c0_225 = arith.constant 0 : index
    %254 = vector.load %arg8[%c3_223, %c0_224, %c0_225] : memref<9x128x128xbf16, #tpu.memory_space<vmem>>, vector<1x128x128xbf16>
    %255 = vector.shape_cast %254 : vector<1x128x128xbf16> to vector<128x128xbf16>
    %cst_226 = arith.constant dense<0.000000e+00> : vector<78x128xf32>
    %256 = tpu.matmul %253, %255, %cst_226 {dimension_numbers = #tpu.dot_dimension_numbers<[1], [0], [0], [1], [0, 0, 1, 1], [], []>} : vector<78x128xbf16>, vector<128x128xbf16>, vector<78x128xf32> -> vector<78x128xf32>
    %257 = arith.addf %251, %256 : vector<78x128xf32>
    %c11_227 = arith.constant 11 : index
    %c0_228 = arith.constant 0 : index
    %258 = vector.load %arg24[%c11_227, %c0_228] : memref<100x128xf32, #tpu.memory_space<vmem>>, vector<78x128xf32>
    %259 = arith.truncf %258 : vector<78x128xf32> to vector<78x128xbf16>
    %c4_229 = arith.constant 4 : index
    %c0_230 = arith.constant 0 : index
    %c0_231 = arith.constant 0 : index
    %260 = vector.load %arg8[%c4_229, %c0_230, %c0_231] : memref<9x128x128xbf16, #tpu.memory_space<vmem>>, vector<1x128x128xbf16>
    %261 = vector.shape_cast %260 : vector<1x128x128xbf16> to vector<128x128xbf16>
    %cst_232 = arith.constant dense<0.000000e+00> : vector<78x128xf32>
    %262 = tpu.matmul %259, %261, %cst_232 {dimension_numbers = #tpu.dot_dimension_numbers<[1], [0], [0], [1], [0, 0, 1, 1], [], []>} : vector<78x128xbf16>, vector<128x128xbf16>, vector<78x128xf32> -> vector<78x128xf32>
    %263 = arith.addf %257, %262 : vector<78x128xf32>
    %c12_233 = arith.constant 12 : index
    %c0_234 = arith.constant 0 : index
    %264 = vector.load %arg24[%c12_233, %c0_234] : memref<100x128xf32, #tpu.memory_space<vmem>>, vector<78x128xf32>
    %265 = arith.truncf %264 : vector<78x128xf32> to vector<78x128xbf16>
    %c5_235 = arith.constant 5 : index
    %c0_236 = arith.constant 0 : index
    %c0_237 = arith.constant 0 : index
    %266 = vector.load %arg8[%c5_235, %c0_236, %c0_237] : memref<9x128x128xbf16, #tpu.memory_space<vmem>>, vector<1x128x128xbf16>
    %267 = vector.shape_cast %266 : vector<1x128x128xbf16> to vector<128x128xbf16>
    %cst_238 = arith.constant dense<0.000000e+00> : vector<78x128xf32>
    %268 = tpu.matmul %265, %267, %cst_238 {dimension_numbers = #tpu.dot_dimension_numbers<[1], [0], [0], [1], [0, 0, 1, 1], [], []>} : vector<78x128xbf16>, vector<128x128xbf16>, vector<78x128xf32> -> vector<78x128xf32>
    %269 = arith.addf %263, %268 : vector<78x128xf32>
    %c20_239 = arith.constant 20 : index
    %c0_240 = arith.constant 0 : index
    %270 = vector.load %arg24[%c20_239, %c0_240] : memref<100x128xf32, #tpu.memory_space<vmem>>, vector<78x128xf32>
    %271 = arith.truncf %270 : vector<78x128xf32> to vector<78x128xbf16>
    %c6_241 = arith.constant 6 : index
    %c0_242 = arith.constant 0 : index
    %c0_243 = arith.constant 0 : index
    %272 = vector.load %arg8[%c6_241, %c0_242, %c0_243] : memref<9x128x128xbf16, #tpu.memory_space<vmem>>, vector<1x128x128xbf16>
    %273 = vector.shape_cast %272 : vector<1x128x128xbf16> to vector<128x128xbf16>
    %cst_244 = arith.constant dense<0.000000e+00> : vector<78x128xf32>
    %274 = tpu.matmul %271, %273, %cst_244 {dimension_numbers = #tpu.dot_dimension_numbers<[1], [0], [0], [1], [0, 0, 1, 1], [], []>} : vector<78x128xbf16>, vector<128x128xbf16>, vector<78x128xf32> -> vector<78x128xf32>
    %275 = arith.addf %269, %274 : vector<78x128xf32>
    %c21_245 = arith.constant 21 : index
    %c0_246 = arith.constant 0 : index
    %276 = vector.load %arg24[%c21_245, %c0_246] : memref<100x128xf32, #tpu.memory_space<vmem>>, vector<78x128xf32>
    %277 = arith.truncf %276 : vector<78x128xf32> to vector<78x128xbf16>
    %c7_247 = arith.constant 7 : index
    %c0_248 = arith.constant 0 : index
    %c0_249 = arith.constant 0 : index
    %278 = vector.load %arg8[%c7_247, %c0_248, %c0_249] : memref<9x128x128xbf16, #tpu.memory_space<vmem>>, vector<1x128x128xbf16>
    %279 = vector.shape_cast %278 : vector<1x128x128xbf16> to vector<128x128xbf16>
    %cst_250 = arith.constant dense<0.000000e+00> : vector<78x128xf32>
    %280 = tpu.matmul %277, %279, %cst_250 {dimension_numbers = #tpu.dot_dimension_numbers<[1], [0], [0], [1], [0, 0, 1, 1], [], []>} : vector<78x128xbf16>, vector<128x128xbf16>, vector<78x128xf32> -> vector<78x128xf32>
    %281 = arith.addf %275, %280 : vector<78x128xf32>
    %c22_251 = arith.constant 22 : index
    %c0_252 = arith.constant 0 : index
    %282 = vector.load %arg24[%c22_251, %c0_252] : memref<100x128xf32, #tpu.memory_space<vmem>>, vector<78x128xf32>
    %283 = arith.truncf %282 : vector<78x128xf32> to vector<78x128xbf16>
    %c8_253 = arith.constant 8 : index
    %c0_254 = arith.constant 0 : index
    %c0_255 = arith.constant 0 : index
    %284 = vector.load %arg8[%c8_253, %c0_254, %c0_255] : memref<9x128x128xbf16, #tpu.memory_space<vmem>>, vector<1x128x128xbf16>
    %285 = vector.shape_cast %284 : vector<1x128x128xbf16> to vector<128x128xbf16>
    %cst_256 = arith.constant dense<0.000000e+00> : vector<78x128xf32>
    %286 = tpu.matmul %283, %285, %cst_256 {dimension_numbers = #tpu.dot_dimension_numbers<[1], [0], [0], [1], [0, 0, 1, 1], [], []>} : vector<78x128xbf16>, vector<128x128xbf16>, vector<78x128xf32> -> vector<78x128xf32>
    %287 = arith.addf %281, %286 : vector<78x128xf32>
    %c0_257 = arith.constant 0 : index
    %c0_258 = arith.constant 0 : index
    %288 = vector.load %arg9[%c0_257, %c0_258] : memref<1x128xf32, #tpu.memory_space<vmem>>, vector<1x128xf32>
    %289 = vector.broadcast %288 : vector<1x128xf32> to vector<78x128xf32>
    %290 = arith.addf %287, %289 : vector<78x128xf32>
    %cst_259 = arith.constant 0.000000e+00 : f32
    %291 = vector.broadcast %cst_259 : f32 to vector<78x128xf32>
    %292 = arith.maximumf %290, %291 : vector<78x128xf32>
    %cst_260 = arith.constant 0.000000e+00 : f32
    %293 = vector.broadcast %cst_260 : f32 to vector<100x128xf32>
    %c0_261 = arith.constant 0 : index
    %c0_262 = arith.constant 0 : index
    %294 = vector.load %arg25[%c0_261, %c0_262] : memref<100x128xf32, #tpu.memory_space<vmem>>, vector<100x128xf32>
    tpu.vector_store %arg25[%c0_261, %c0_262], %293 {strides = array<i32>} : memref<100x128xf32, #tpu.memory_space<vmem>>, vector<100x128xf32>,
    %c11_263 = arith.constant 11 : index
    %c0_264 = arith.constant 0 : index
    %295 = vector.load %arg25[%c11_263, %c0_264] : memref<100x128xf32, #tpu.memory_space<vmem>>, vector<78x128xf32>
    tpu.vector_store %arg25[%c11_263, %c0_264], %292 {strides = array<i32>} : memref<100x128xf32, #tpu.memory_space<vmem>>, vector<78x128xf32>,
    %c0_265 = arith.constant 0 : index
    %c0_266 = arith.constant 0 : index
    %296 = vector.load %arg17[%c0_265, %c0_266] : memref<256x100xbf16, #tpu.memory_space<vmem>>, vector<256x100xbf16>
    %c0_267 = arith.constant 0 : index
    %c0_268 = arith.constant 0 : index
    %297 = vector.load %arg25[%c0_267, %c0_268] : memref<100x128xf32, #tpu.memory_space<vmem>>, vector<100x128xf32>
    %298 = arith.truncf %297 : vector<100x128xf32> to vector<100x128xbf16>
    %cst_269 = arith.constant dense<0.000000e+00> : vector<256x128xf32>
    %299 = tpu.matmul %296, %298, %cst_269 {dimension_numbers = #tpu.dot_dimension_numbers<[1], [0], [0], [1], [0, 0, 1, 1], [], []>} : vector<256x100xbf16>, vector<100x128xbf16>, vector<256x128xf32> -> vector<256x128xf32>
    %300 = arith.truncf %299 : vector<256x128xf32> to vector<256x128xbf16>
    %c0_270 = arith.constant 0 : index
    %c0_271 = arith.constant 0 : index
    %301 = vector.load %arg10[%c0_270, %c0_271] : memref<128x128xbf16, #tpu.memory_space<vmem>>, vector<128x128xbf16>
    %cst_272 = arith.constant dense<0.000000e+00> : vector<256x128xf32>
    %302 = tpu.matmul %300, %301, %cst_272 {dimension_numbers = #tpu.dot_dimension_numbers<[1], [0], [0], [1], [0, 0, 1, 1], [], []>} : vector<256x128xbf16>, vector<128x128xbf16>, vector<256x128xf32> -> vector<256x128xf32>
    %c0_273 = arith.constant 0 : index
    %c0_274 = arith.constant 0 : index
    %303 = vector.load %arg11[%c0_273, %c0_274] : memref<1x128xf32, #tpu.memory_space<vmem>>, vector<1x128xf32>
    %304 = vector.broadcast %303 : vector<1x128xf32> to vector<256x128xf32>
    %305 = arith.addf %302, %304 : vector<256x128xf32>
    %cst_275 = arith.constant 0.000000e+00 : f32
    %306 = vector.broadcast %cst_275 : f32 to vector<256x128xf32>
    %307 = arith.subf %306, %305 : vector<256x128xf32>
    %308 = math.exp %307 : vector<256x128xf32>
    %cst_276 = arith.constant 1.000000e+00 : f32
    %309 = vector.broadcast %cst_276 : f32 to vector<256x128xf32>
    %310 = arith.addf %309, %308 : vector<256x128xf32>
    %cst_277 = arith.constant 1.000000e+00 : f32
    %311 = vector.broadcast %cst_277 : f32 to vector<256x128xf32>
    %312 = arith.divf %311, %310 : vector<256x128xf32>
    %c0_278 = arith.constant 0 : index
    %c0_279 = arith.constant 0 : index
    %c0_280 = arith.constant 0 : index
    %313 = vector.load %arg18[%c0_278, %c0_279, %c0_280] : memref<1x256x128xf32, #tpu.memory_space<vmem>>, vector<1x256x128xf32>
    %314 = vector.shape_cast %313 : vector<1x256x128xf32> to vector<256x128xf32>
    %315 = vector.shape_cast %312 : vector<256x128xf32> to vector<1x256x128xf32>
    tpu.vector_store %arg18[%c0_278, %c0_279, %c0_280], %315 {strides = array<i32>} : memref<1x256x128xf32, #tpu.memory_space<vmem>>, vector<1x256x128xf32>,
    return
  }
  func.func @transform_0(%arg0: i32) -> (i32, i32, i32) {
    %c0_i32 = arith.constant 0 : i32
    %c0_i32_0 = arith.constant 0 : i32
    %c0_i32_1 = arith.constant 0 : i32
    return %arg0, %c0_i32, %c0_i32_0 : i32, i32, i32
  }
  func.func @transform_1(%arg0: i32) -> (i32, i32, i32) {
    %c0_i32 = arith.constant 0 : i32
    %c0_i32_0 = arith.constant 0 : i32
    %c0_i32_1 = arith.constant 0 : i32
    %c0_i32_2 = arith.constant 0 : i32
    return %c0_i32, %c0_i32_0, %c0_i32_1 : i32, i32, i32
  }
  func.func @transform_2(%arg0: i32) -> (i32, i32) {
    %c0_i32 = arith.constant 0 : i32
    %c0_i32_0 = arith.constant 0 : i32
    %c0_i32_1 = arith.constant 0 : i32
    return %c0_i32, %c0_i32_0 : i32, i32
  }
  func.func @transform_3(%arg0: i32) -> (i32, i32, i32) {
    %c0_i32 = arith.constant 0 : i32
    %c0_i32_0 = arith.constant 0 : i32
    %c0_i32_1 = arith.constant 0 : i32
    %c0_i32_2 = arith.constant 0 : i32
    return %c0_i32, %c0_i32_0, %c0_i32_1 : i32, i32, i32
  }
  func.func @transform_4(%arg0: i32) -> (i32, i32) {
    %c0_i32 = arith.constant 0 : i32
    %c0_i32_0 = arith.constant 0 : i32
    %c0_i32_1 = arith.constant 0 : i32
    return %c0_i32, %c0_i32_0 : i32, i32
  }
  func.func @transform_5(%arg0: i32) -> (i32, i32, i32) {
    %c0_i32 = arith.constant 0 : i32
    %c0_i32_0 = arith.constant 0 : i32
    %c0_i32_1 = arith.constant 0 : i32
    %c0_i32_2 = arith.constant 0 : i32
    return %c0_i32, %c0_i32_0, %c0_i32_1 : i32, i32, i32
  }
  func.func @transform_6(%arg0: i32) -> (i32, i32) {
    %c0_i32 = arith.constant 0 : i32
    %c0_i32_0 = arith.constant 0 : i32
    %c0_i32_1 = arith.constant 0 : i32
    return %c0_i32, %c0_i32_0 : i32, i32
  }
  func.func @transform_7(%arg0: i32) -> (i32, i32, i32) {
    %c0_i32 = arith.constant 0 : i32
    %c0_i32_0 = arith.constant 0 : i32
    %c0_i32_1 = arith.constant 0 : i32
    %c0_i32_2 = arith.constant 0 : i32
    return %c0_i32, %c0_i32_0, %c0_i32_1 : i32, i32, i32
  }
  func.func @transform_8(%arg0: i32) -> (i32, i32) {
    %c0_i32 = arith.constant 0 : i32
    %c0_i32_0 = arith.constant 0 : i32
    %c0_i32_1 = arith.constant 0 : i32
    return %c0_i32, %c0_i32_0 : i32, i32
  }
  func.func @transform_9(%arg0: i32) -> (i32, i32) {
    %c0_i32 = arith.constant 0 : i32
    %c0_i32_0 = arith.constant 0 : i32
    %c0_i32_1 = arith.constant 0 : i32
    return %c0_i32, %c0_i32_0 : i32, i32
  }
  func.func @transform_10(%arg0: i32) -> (i32, i32) {
    %c0_i32 = arith.constant 0 : i32
    %c0_i32_0 = arith.constant 0 : i32
    %c0_i32_1 = arith.constant 0 : i32
    return %c0_i32, %c0_i32_0 : i32, i32
  }
  func.func @transform_11(%arg0: i32) -> (i32, i32) {
    %c0_i32 = arith.constant 0 : i32
    %c0_i32_0 = arith.constant 0 : i32
    %c0_i32_1 = arith.constant 0 : i32
    return %c0_i32, %c0_i32_0 : i32, i32
  }
  func.func @transform_12(%arg0: i32) -> (i32, i32) {
    %c0_i32 = arith.constant 0 : i32
    %c0_i32_0 = arith.constant 0 : i32
    %c0_i32_1 = arith.constant 0 : i32
    return %c0_i32, %c0_i32_0 : i32, i32
  }
  func.func @transform_13(%arg0: i32) -> (i32, i32) {
    %c0_i32 = arith.constant 0 : i32
    %c0_i32_0 = arith.constant 0 : i32
    %c0_i32_1 = arith.constant 0 : i32
    return %c0_i32, %c0_i32_0 : i32, i32
  }
  func.func @transform_14(%arg0: i32) -> (i32, i32) {
    %c0_i32 = arith.constant 0 : i32
    %c0_i32_0 = arith.constant 0 : i32
    %c0_i32_1 = arith.constant 0 : i32
    return %c0_i32, %c0_i32_0 : i32, i32
  }
  func.func @transform_15(%arg0: i32) -> (i32, i32) {
    %c0_i32 = arith.constant 0 : i32
    %c0_i32_0 = arith.constant 0 : i32
    %c0_i32_1 = arith.constant 0 : i32
    return %c0_i32, %c0_i32_0 : i32, i32
  }
  func.func @transform_16(%arg0: i32) -> (i32, i32) {
    %c0_i32 = arith.constant 0 : i32
    %c0_i32_0 = arith.constant 0 : i32
    %c0_i32_1 = arith.constant 0 : i32
    return %c0_i32, %c0_i32_0 : i32, i32
  }
  func.func @transform_17(%arg0: i32) -> (i32, i32, i32) {
    %c0_i32 = arith.constant 0 : i32
    %c0_i32_0 = arith.constant 0 : i32
    %c0_i32_1 = arith.constant 0 : i32
    return %arg0, %c0_i32, %c0_i32_0 : i32, i32, i32
  }
}

</mosaic_0001>

<llo_original>
// kernel: suimnet_forward.1
$region0: #{suimnet_forward.1}
  #allocation0 [shape = 'u32[]', space=smem, size = 0x4, offset = 0x4, fixed_abs, tag = 'smem constant byte address 0x4 - core index']
  #allocation1 [shape = 'u32[144,128]{1,0:T(1,128)}', space=vmem, size = 0x12000, scoped, tag = 'internal scratch']
  #allocation2 [shape = 'f32[324,128]{1,0:T(8,128)}', space=vmem, size = 0x29000, scoped, tag = 'scratch operand']
  #allocation3 [shape = 'f32[100,128]{1,0:T(8,128)}', space=vmem, size = 0xd000, scoped, tag = 'scratch operand']
  #allocation4 [shape = 'f32[100,128]{1,0:T(8,128)}', space=vmem, size = 0xd000, scoped, tag = 'scratch operand']
  #allocation5 [shape = 'f32[36,128]{1,0:T(8,128)}', space=vmem, size = 0x5000, scoped, tag = 'scratch operand']
  #allocation6 [shape = 'f32[36,128]{1,0:T(8,128)}', space=vmem, size = 0x5000, scoped, tag = 'scratch operand']
  #allocation7 [shape = 'f32[100,128]{1,0:T(8,128)}', space=vmem, size = 0xd000, scoped, tag = 'scratch operand']
  #allocation8 [shape = 'f32[100,128]{1,0:T(8,128)}', space=vmem, size = 0xd000, scoped, tag = 'scratch operand']
  %s0 = inlined_call_operand.vmem [shape: f32[2,324,128], index: 0, kind: input, shape index: {}]
  %s1 = inlined_call_operand.vmem [shape: bf16[9,128,128], index: 1, kind: input, shape index: {}]
  %s2 = inlined_call_operand.vmem [shape: f32[1,128], index: 2, kind: input, shape index: {}]
  %s3 = inlined_call_operand.vmem [shape: bf16[9,128,128], index: 3, kind: input, shape index: {}]
  %s4 = inlined_call_operand.vmem [shape: f32[1,128], index: 4, kind: input, shape index: {}]
  %s5 = inlined_call_operand.vmem [shape: bf16[9,128,128], index: 5, kind: input, shape index: {}]
  %s6 = inlined_call_operand.vmem [shape: f32[1,128], index: 6, kind: input, shape index: {}]
  %s7 = inlined_call_operand.vmem [shape: bf16[9,128,128], index: 7, kind: input, shape index: {}]
  %s8 = inlined_call_operand.vmem [shape: f32[1,128], index: 8, kind: input, shape index: {}]
  %s9 = inlined_call_operand.vmem [shape: bf16[128,128], index: 9, kind: input, shape index: {}]
  %s10 = inlined_call_operand.vmem [shape: f32[1,128], index: 10, kind: input, shape index: {}]
  %s11 = inlined_call_operand.vmem [shape: bf16[256,324], index: 11, kind: input, shape index: {}]
  %s12 = inlined_call_operand.vmem [shape: bf16[100,64], index: 12, kind: input, shape index: {}]
  %s13 = inlined_call_operand.vmem [shape: bf16[64,100], index: 13, kind: input, shape index: {}]
  %s14 = inlined_call_operand.vmem [shape: bf16[36,16], index: 14, kind: input, shape index: {}]
  %s15 = inlined_call_operand.vmem [shape: bf16[100,36], index: 15, kind: input, shape index: {}]
  %s16 = inlined_call_operand.vmem [shape: bf16[256,100], index: 16, kind: input, shape index: {}]
  %s17 = inlined_call_operand.vmem [shape: f32[2,256,128], index: 17, kind: output, shape index: {}]
  %s18 = sld [smem:[#allocation0]]
  $region101: #{suimnet_forward.1} parent=0
    _
  %s20 = ssub.s32 1, %s18
  %s21 = scalar_select 0, %s20, %s18
  loop: start=0, step=1, limit=4
  $region2: #{suimnet_forward.1} parent=0 // loop_pre_header
    _
  $region3: #{suimnet_forward.1} parent=0 // loop_header
    %s23 = sphi 0, %s27
    %p24 = scmp.ge.s32.totalorder %s23, 4
    %s33 = sphi 0, %s35
    %s36 = sphi 0, %s33
    %s37 = sphi 0, %s36
    %s53 = sphi 0, %s37
    %s57 = sphi 0, %s57
    %s59 = sphi 0, %s57
    %s60 = sphi 0, %s59
    %s74 = sphi 0, %s60
    %s78 = sphi 0, %s78
    %s80 = sphi 0, %s78
    %s81 = sphi 0, %s80
    %s95 = sphi 0, %s81
    %s99 = sphi 0, %s99
    %s101 = sphi 0, %s99
    %s102 = sphi 0, %s101
    %s116 = sphi 0, %s102
    %s120 = sphi 0, %s120
    %s122 = sphi 0, %s120
    %s123 = sphi 0, %s122
    %s137 = sphi 0, %s123
    %s141 = sphi 0, %s141
    %s143 = sphi 0, %s141
    %s144 = sphi 0, %s143
    %s158 = sphi 0, %s144
    %s162 = sphi 0, %s162
    %s164 = sphi 0, %s162
    %s165 = sphi 0, %s164
    %s179 = sphi 0, %s165
    %s183 = sphi 0, %s183
    %s185 = sphi 0, %s183
    %s186 = sphi 0, %s185
    %s200 = sphi 0, %s186
    %s204 = sphi 0, %s204
    %s206 = sphi 0, %s204
    %s207 = sphi 0, %s206
    %s221 = sphi 0, %s207
    %s225 = sphi 0, %s225
    %s227 = sphi 0, %s225
    %s228 = sphi 0, %s227
    %s242 = sphi 0, %s228
    %s246 = sphi 0, %s246
    %s248 = sphi 0, %s246
    %s249 = sphi 0, %s248
    %s263 = sphi 0, %s249
    %s267 = sphi 0, %s267
    %s269 = sphi 0, %s267
    %s270 = sphi 0, %s269
    %s284 = sphi 0, %s270
    %s288 = sphi 0, %s288
    %s290 = sphi 0, %s288
    %s291 = sphi 0, %s290
    %s305 = sphi 0, %s291
    %s309 = sphi 0, %s309
    %s311 = sphi 0, %s309
    %s312 = sphi 0, %s311
    %s326 = sphi 0, %s312
    %s330 = sphi 0, %s330
    %s332 = sphi 0, %s330
    %s333 = sphi 0, %s332
    %s347 = sphi 0, %s333
    %s351 = sphi 0, %s351
    %s353 = sphi 0, %s351
    %s354 = sphi 0, %s353
    %s368 = sphi 0, %s354
    %s372 = sphi 0, %s372
    %s374 = sphi 0, %s372
    %s375 = sphi 0, %s374
    %s389 = sphi 0, %s375
    %s395 = sphi 0, %s397
    %s398 = sphi 0, %s395
    %s399 = sphi 0, %s398
    %s415 = sphi 0, %s399
  $region4: #{suimnet_forward.1} parent=0 // loop_header_branch
    %26 = sbr.rel (%p24) target = $region8
  $region5: #{suimnet_forward.1} parent=0 // loop_body
    %s28 = ssub.s32 %s23, 1
    %s29 = ssub.s32 %s23, 2
    %s30 = sadd.s32 %s23, 1
    %s31 = ssub.s32 %s23, %s30
    %p32 = scmp.eq.s32.totalorder %s31, 0
    %s34 = sadd.s32 %s33, 1
    %s35 = scalar_select %p32, %s33, %s34
    %p38 = pneg %p32
    %p39 = scmp.eq.s32.totalorder %s23, 1
    %p40 = por %p38, %p39
    %p41 = scmp.ne.s32.totalorder %s33, %s36
    %p42 = scmp.eq.s32.totalorder %s23, 0
    %p43 = por %p41, %p42
    %p44 = scmp.ne.s32.totalorder %s33, %s36
    %p45 = scmp.eq.s32.totalorder %s28, 1
    %p46 = por %p44, %p45
    %p47 = scmp.ne.s32.totalorder %s36, %s37
    %p48 = scmp.eq.s32.totalorder %s28, 0
    %p49 = por %p47, %p48
    %p50 = scmp.ne.s32.totalorder %s36, %s37
    %p51 = scmp.eq.s32.totalorder %s29, 1
    %p52 = por %p50, %p51
    %p54 = scmp.ne.s32.totalorder %s37, %s53
    %p55 = scmp.eq.s32.totalorder %s29, 0
    %p56 = por %p54, %p55
    %s58 = sadd.s32 %s57, 1
    %p61 = scmp.eq.s32.totalorder %s23, 1
    %p62 = scmp.ne.s32.totalorder %s57, %s59
    %p63 = scmp.eq.s32.totalorder %s23, 0
    %p64 = por %p62, %p63
    %p65 = scmp.ne.s32.totalorder %s57, %s59
    %p66 = scmp.eq.s32.totalorder %s28, 1
    %p67 = por %p65, %p66
    %p68 = scmp.ne.s32.totalorder %s59, %s60
    %p69 = scmp.eq.s32.totalorder %s28, 0
    %p70 = por %p68, %p69
    %p71 = scmp.ne.s32.totalorder %s59, %s60
    %p72 = scmp.eq.s32.totalorder %s29, 1
    %p73 = por %p71, %p72
    %p75 = scmp.ne.s32.totalorder %s60, %s74
    %p76 = scmp.eq.s32.totalorder %s29, 0
    %p77 = por %p75, %p76
    %s79 = sadd.s32 %s78, 1
    %p82 = scmp.eq.s32.totalorder %s23, 1
    %p83 = scmp.ne.s32.totalorder %s78, %s80
    %p84 = scmp.eq.s32.totalorder %s23, 0
    %p85 = por %p83, %p84
    %p86 = scmp.ne.s32.totalorder %s78, %s80
    %p87 = scmp.eq.s32.totalorder %s28, 1
    %p88 = por %p86, %p87
    %p89 = scmp.ne.s32.totalorder %s80, %s81
    %p90 = scmp.eq.s32.totalorder %s28, 0
    %p91 = por %p89, %p90
    %p92 = scmp.ne.s32.totalorder %s80, %s81
    %p93 = scmp.eq.s32.totalorder %s29, 1
    %p94 = por %p92, %p93
    %p96 = scmp.ne.s32.totalorder %s81, %s95
    %p97 = scmp.eq.s32.totalorder %s29, 0
    %p98 = por %p96, %p97
    %s100 = sadd.s32 %s99, 1
    %p103 = scmp.eq.s32.totalorder %s23, 1
    %p104 = scmp.ne.s32.totalorder %s99, %s101
    %p105 = scmp.eq.s32.totalorder %s23, 0
    %p106 = por %p104, %p105
    %p107 = scmp.ne.s32.totalorder %s99, %s101
    %p108 = scmp.eq.s32.totalorder %s28, 1
    %p109 = por %p107, %p108
    %p110 = scmp.ne.s32.totalorder %s101, %s102
    %p111 = scmp.eq.s32.totalorder %s28, 0
    %p112 = por %p110, %p111
    %p113 = scmp.ne.s32.totalorder %s101, %s102
    %p114 = scmp.eq.s32.totalorder %s29, 1
    %p115 = por %p113, %p114
    %p117 = scmp.ne.s32.totalorder %s102, %s116
    %p118 = scmp.eq.s32.totalorder %s29, 0
    %p119 = por %p117, %p118
    %s121 = sadd.s32 %s120, 1
    %p124 = scmp.eq.s32.totalorder %s23, 1
    %p125 = scmp.ne.s32.totalorder %s120, %s122
    %p126 = scmp.eq.s32.totalorder %s23, 0
    %p127 = por %p125, %p126
    %p128 = scmp.ne.s32.totalorder %s120, %s122
    %p129 = scmp.eq.s32.totalorder %s28, 1
    %p130 = por %p128, %p129
    %p131 = scmp.ne.s32.totalorder %s122, %s123
    %p132 = scmp.eq.s32.totalorder %s28, 0
    %p133 = por %p131, %p132
    %p134 = scmp.ne.s32.totalorder %s122, %s123
    %p135 = scmp.eq.s32.totalorder %s29, 1
    %p136 = por %p134, %p135
    %p138 = scmp.ne.s32.totalorder %s123, %s137
    %p139 = scmp.eq.s32.totalorder %s29, 0
    %p140 = por %p138, %p139
    %s142 = sadd.s32 %s141, 1
    %p145 = scmp.eq.s32.totalorder %s23, 1
    %p146 = scmp.ne.s32.totalorder %s141, %s143
    %p147 = scmp.eq.s32.totalorder %s23, 0
    %p148 = por %p146, %p147
    %p149 = scmp.ne.s32.totalorder %s141, %s143
    %p150 = scmp.eq.s32.totalorder %s28, 1
    %p151 = por %p149, %p150
    %p152 = scmp.ne.s32.totalorder %s143, %s144
    %p153 = scmp.eq.s32.totalorder %s28, 0
    %p154 = por %p152, %p153
    %p155 = scmp.ne.s32.totalorder %s143, %s144
    %p156 = scmp.eq.s32.totalorder %s29, 1
    %p157 = por %p155, %p156
    %p159 = scmp.ne.s32.totalorder %s144, %s158
    %p160 = scmp.eq.s32.totalorder %s29, 0
    %p161 = por %p159, %p160
    %s163 = sadd.s32 %s162, 1
    %p166 = scmp.eq.s32.totalorder %s23, 1
    %p167 = scmp.ne.s32.totalorder %s162, %s164
    %p168 = scmp.eq.s32.totalorder %s23, 0
    %p169 = por %p167, %p168
    %p170 = scmp.ne.s32.totalorder %s162, %s164
    %p171 = scmp.eq.s32.totalorder %s28, 1
    %p172 = por %p170, %p171
    %p173 = scmp.ne.s32.totalorder %s164, %s165
    %p174 = scmp.eq.s32.totalorder %s28, 0
    %p175 = por %p173, %p174
    %p176 = scmp.ne.s32.totalorder %s164, %s165
    %p177 = scmp.eq.s32.totalorder %s29, 1
    %p178 = por %p176, %p177
    %p180 = scmp.ne.s32.totalorder %s165, %s179
    %p181 = scmp.eq.s32.totalorder %s29, 0
    %p182 = por %p180, %p181
    %s184 = sadd.s32 %s183, 1
    %p187 = scmp.eq.s32.totalorder %s23, 1
    %p188 = scmp.ne.s32.totalorder %s183, %s185
    %p189 = scmp.eq.s32.totalorder %s23, 0
    %p190 = por %p188, %p189
    %p191 = scmp.ne.s32.totalorder %s183, %s185
    %p192 = scmp.eq.s32.totalorder %s28, 1
    %p193 = por %p191, %p192
    %p194 = scmp.ne.s32.totalorder %s185, %s186
    %p195 = scmp.eq.s32.totalorder %s28, 0
    %p196 = por %p194, %p195
    %p197 = scmp.ne.s32.totalorder %s185, %s186
    %p198 = scmp.eq.s32.totalorder %s29, 1
    %p199 = por %p197, %p198
    %p201 = scmp.ne.s32.totalorder %s186, %s200
    %p202 = scmp.eq.s32.totalorder %s29, 0
    %p203 = por %p201, %p202
    %s205 = sadd.s32 %s204, 1
    %p208 = scmp.eq.s32.totalorder %s23, 1
    %p209 = scmp.ne.s32.totalorder %s204, %s206
    %p210 = scmp.eq.s32.totalorder %s23, 0
    %p211 = por %p209, %p210
    %p212 = scmp.ne.s32.totalorder %s204, %s206
    %p213 = scmp.eq.s32.totalorder %s28, 1
    %p214 = por %p212, %p213
    %p215 = scmp.ne.s32.totalorder %s206, %s207
    %p216 = scmp.eq.s32.totalorder %s28, 0
    %p217 = por %p215, %p216
    %p218 = scmp.ne.s32.totalorder %s206, %s207
    %p219 = scmp.eq.s32.totalorder %s29, 1
    %p220 = por %p218, %p219
    %p222 = scmp.ne.s32.totalorder %s207, %s221
    %p223 = scmp.eq.s32.totalorder %s29, 0
    %p224 = por %p222, %p223
    %s226 = sadd.s32 %s225, 1
    %p229 = scmp.eq.s32.totalorder %s23, 1
    %p230 = scmp.ne.s32.totalorder %s225, %s227
    %p231 = scmp.eq.s32.totalorder %s23, 0
    %p232 = por %p230, %p231
    %p233 = scmp.ne.s32.totalorder %s225, %s227
    %p234 = scmp.eq.s32.totalorder %s28, 1
    %p235 = por %p233, %p234
    %p236 = scmp.ne.s32.totalorder %s227, %s228
    %p237 = scmp.eq.s32.totalorder %s28, 0
    %p238 = por %p236, %p237
    %p239 = scmp.ne.s32.totalorder %s227, %s228
    %p240 = scmp.eq.s32.totalorder %s29, 1
    %p241 = por %p239, %p240
    %p243 = scmp.ne.s32.totalorder %s228, %s242
    %p244 = scmp.eq.s32.totalorder %s29, 0
    %p245 = por %p243, %p244
    %s247 = sadd.s32 %s246, 1
    %p250 = scmp.eq.s32.totalorder %s23, 1
    %p251 = scmp.ne.s32.totalorder %s246, %s248
    %p252 = scmp.eq.s32.totalorder %s23, 0
    %p253 = por %p251, %p252
    %p254 = scmp.ne.s32.totalorder %s246, %s248
    %p255 = scmp.eq.s32.totalorder %s28, 1
    %p256 = por %p254, %p255
    %p257 = scmp.ne.s32.totalorder %s248, %s249
    %p258 = scmp.eq.s32.totalorder %s28, 0
    %p259 = por %p257, %p258
    %p260 = scmp.ne.s32.totalorder %s248, %s249
    %p261 = scmp.eq.s32.totalorder %s29, 1
    %p262 = por %p260, %p261
    %p264 = scmp.ne.s32.totalorder %s249, %s263
    %p265 = scmp.eq.s32.totalorder %s29, 0
    %p266 = por %p264, %p265
    %s268 = sadd.s32 %s267, 1
    %p271 = scmp.eq.s32.totalorder %s23, 1
    %p272 = scmp.ne.s32.totalorder %s267, %s269
    %p273 = scmp.eq.s32.totalorder %s23, 0
    %p274 = por %p272, %p273
    %p275 = scmp.ne.s32.totalorder %s267, %s269
    %p276 = scmp.eq.s32.totalorder %s28, 1
    %p277 = por %p275, %p276
    %p278 = scmp.ne.s32.totalorder %s269, %s270
    %p279 = scmp.eq.s32.totalorder %s28, 0
    %p280 = por %p278, %p279
    %p281 = scmp.ne.s32.totalorder %s269, %s270
    %p282 = scmp.eq.s32.totalorder %s29, 1
    %p283 = por %p281, %p282
    %p285 = scmp.ne.s32.totalorder %s270, %s284
    %p286 = scmp.eq.s32.totalorder %s29, 0
    %p287 = por %p285, %p286
    %s289 = sadd.s32 %s288, 1
    %p292 = scmp.eq.s32.totalorder %s23, 1
    %p293 = scmp.ne.s32.totalorder %s288, %s290
    %p294 = scmp.eq.s32.totalorder %s23, 0
    %p295 = por %p293, %p294
    %p296 = scmp.ne.s32.totalorder %s288, %s290
    %p297 = scmp.eq.s32.totalorder %s28, 1
    %p298 = por %p296, %p297
    %p299 = scmp.ne.s32.totalorder %s290, %s291
    %p300 = scmp.eq.s32.totalorder %s28, 0
    %p301 = por %p299, %p300
    %p302 = scmp.ne.s32.totalorder %s290, %s291
    %p303 = scmp.eq.s32.totalorder %s29, 1
    %p304 = por %p302, %p303
    %p306 = scmp.ne.s32.totalorder %s291, %s305
    %p307 = scmp.eq.s32.totalorder %s29, 0
    %p308 = por %p306, %p307
    %s310 = sadd.s32 %s309, 1
    %p313 = scmp.eq.s32.totalorder %s23, 1
    %p314 = scmp.ne.s32.totalorder %s309, %s311
    %p315 = scmp.eq.s32.totalorder %s23, 0
    %p316 = por %p314, %p315
    %p317 = scmp.ne.s32.totalorder %s309, %s311
    %p318 = scmp.eq.s32.totalorder %s28, 1
    %p319 = por %p317, %p318
    %p320 = scmp.ne.s32.totalorder %s311, %s312
    %p321 = scmp.eq.s32.totalorder %s28, 0
    %p322 = por %p320, %p321
    %p323 = scmp.ne.s32.totalorder %s311, %s312
    %p324 = scmp.eq.s32.totalorder %s29, 1
    %p325 = por %p323, %p324
    %p327 = scmp.ne.s32.totalorder %s312, %s326
    %p328 = scmp.eq.s32.totalorder %s29, 0
    %p329 = por %p327, %p328
    %s331 = sadd.s32 %s330, 1
    %p334 = scmp.eq.s32.totalorder %s23, 1
    %p335 = scmp.ne.s32.totalorder %s330, %s332
    %p336 = scmp.eq.s32.totalorder %s23, 0
    %p337 = por %p335, %p336
    %p338 = scmp.ne.s32.totalorder %s330, %s332
    %p339 = scmp.eq.s32.totalorder %s28, 1
    %p340 = por %p338, %p339
    %p341 = scmp.ne.s32.totalorder %s332, %s333
    %p342 = scmp.eq.s32.totalorder %s28, 0
    %p343 = por %p341, %p342
    %p344 = scmp.ne.s32.totalorder %s332, %s333
    %p345 = scmp.eq.s32.totalorder %s29, 1
    %p346 = por %p344, %p345
    %p348 = scmp.ne.s32.totalorder %s333, %s347
    %p349 = scmp.eq.s32.totalorder %s29, 0
    %p350 = por %p348, %p349
    %s352 = sadd.s32 %s351, 1
    %p355 = scmp.eq.s32.totalorder %s23, 1
    %p356 = scmp.ne.s32.totalorder %s351, %s353
    %p357 = scmp.eq.s32.totalorder %s23, 0
    %p358 = por %p356, %p357
    %p359 = scmp.ne.s32.totalorder %s351, %s353
    %p360 = scmp.eq.s32.totalorder %s28, 1
    %p361 = por %p359, %p360
    %p362 = scmp.ne.s32.totalorder %s353, %s354
    %p363 = scmp.eq.s32.totalorder %s28, 0
    %p364 = por %p362, %p363
    %p365 = scmp.ne.s32.totalorder %s353, %s354
    %p366 = scmp.eq.s32.totalorder %s29, 1
    %p367 = por %p365, %p366
    %p369 = scmp.ne.s32.totalorder %s354, %s368
    %p370 = scmp.eq.s32.totalorder %s29, 0
    %p371 = por %p369, %p370
    %s373 = sadd.s32 %s372, 1
    %p376 = scmp.eq.s32.totalorder %s23, 1
    %p377 = scmp.ne.s32.totalorder %s372, %s374
    %p378 = scmp.eq.s32.totalorder %s23, 0
    %p379 = por %p377, %p378
    %p380 = scmp.ne.s32.totalorder %s372, %s374
    %p381 = scmp.eq.s32.totalorder %s28, 1
    %p382 = por %p380, %p381
    %p383 = scmp.ne.s32.totalorder %s374, %s375
    %p384 = scmp.eq.s32.totalorder %s28, 0
    %p385 = por %p383, %p384
    %p386 = scmp.ne.s32.totalorder %s374, %s375
    %p387 = scmp.eq.s32.totalorder %s29, 1
    %p388 = por %p386, %p387
    %p390 = scmp.ne.s32.totalorder %s375, %s389
    %p391 = scmp.eq.s32.totalorder %s29, 0
    %p392 = por %p390, %p391
    %s393 = ssub.s32 %s23, %s30
    %p394 = scmp.eq.s32.totalorder %s393, 0
    %s396 = sadd.s32 %s395, 1
    %s397 = scalar_select %p394, %s395, %s396
    %p400 = pneg %p394
    %p401 = scmp.eq.s32.totalorder %s23, 1
    %p402 = por %p400, %p401
    %p403 = scmp.ne.s32.totalorder %s395, %s398
    %p404 = scmp.eq.s32.totalorder %s23, 0
    %p405 = por %p403, %p404
    %p406 = scmp.ne.s32.totalorder %s395, %s398
    %p407 = scmp.eq.s32.totalorder %s28, 1
    %p408 = por %p406, %p407
    %p409 = scmp.ne.s32.totalorder %s398, %s399
    %p410 = scmp.eq.s32.totalorder %s28, 0
    %p411 = por %p409, %p410
    %p412 = scmp.ne.s32.totalorder %s398, %s399
    %p413 = scmp.eq.s32.totalorder %s29, 1
    %p414 = por %p412, %p413
    %p416 = scmp.ne.s32.totalorder %s399, %s415
    %p417 = scmp.eq.s32.totalorder %s29, 0
    %p418 = por %p416, %p417
    %p419 = scmp.le.s32.totalorder 1, %s23
    %p420 = scmp.lt.s32.totalorder %s23, 3
    %p421 = pnand %p419, %p420
    %p422 = pneg %p421
    // Predicated region
    $region9: #{suimnet_forward.1} parent=5 // pred_check
      _
    $region10: #{suimnet_forward.1} parent=5 // pred_check_branch
      %424 = sbr.rel (%p421) target = $region12
    $region11: #{suimnet_forward.1} parent=5 // pred_region
      %s425 = ssub.s32 %s23, 1
      // Predicated region
      $region13: #{suimnet_forward.1} parent=11 // pred_check
        %p426 = pneg %p70
      $region14: #{suimnet_forward.1} parent=11 // pred_check_branch
        %428 = sbr.rel (%p426) target = $region16
      $region15: #{suimnet_forward.1} parent=11 // pred_region
        _
      $region16: #{suimnet_forward.1} parent=11 // pred_fallthru
        _
      // Predicated region
      $region17: #{suimnet_forward.1} parent=11 // pred_check
        %p429 = pneg %p91
      $region18: #{suimnet_forward.1} parent=11 // pred_check_branch
        %431 = sbr.rel (%p429) target = $region20
      $region19: #{suimnet_forward.1} parent=11 // pred_region
        _
      $region20: #{suimnet_forward.1} parent=11 // pred_fallthru
        _
      // Predicated region
      $region21: #{suimnet_forward.1} parent=11 // pred_check
        %p432 = pneg %p112
      $region22: #{suimnet_forward.1} parent=11 // pred_check_branch
        %434 = sbr.rel (%p432) target = $region24
      $region23: #{suimnet_forward.1} parent=11 // pred_region
        _
      $region24: #{suimnet_forward.1} parent=11 // pred_fallthru
        _
      // Predicated region
      $region25: #{suimnet_forward.1} parent=11 // pred_check
        %p435 = pneg %p133
      $region26: #{suimnet_forward.1} parent=11 // pred_check_branch
        %437 = sbr.rel (%p435) target = $region28
      $region27: #{suimnet_forward.1} parent=11 // pred_region
        _
      $region28: #{suimnet_forward.1} parent=11 // pred_fallthru
        _
      // Predicated region
      $region29: #{suimnet_forward.1} parent=11 // pred_check
        %p438 = pneg %p154
      $region30: #{suimnet_forward.1} parent=11 // pred_check_branch
        %440 = sbr.rel (%p438) target = $region32
      $region31: #{suimnet_forward.1} parent=11 // pred_region
        _
      $region32: #{suimnet_forward.1} parent=11 // pred_fallthru
        _
      // Predicated region
      $region33: #{suimnet_forward.1} parent=11 // pred_check
        %p441 = pneg %p175
      $region34: #{suimnet_forward.1} parent=11 // pred_check_branch
        %443 = sbr.rel (%p441) target = $region36
      $region35: #{suimnet_forward.1} parent=11 // pred_region
        _
      $region36: #{suimnet_forward.1} parent=11 // pred_fallthru
        _
      // Predicated region
      $region37: #{suimnet_forward.1} parent=11 // pred_check
        %p444 = pneg %p196
      $region38: #{suimnet_forward.1} parent=11 // pred_check_branch
        %446 = sbr.rel (%p444) target = $region40
      $region39: #{suimnet_forward.1} parent=11 // pred_region
        _
      $region40: #{suimnet_forward.1} parent=11 // pred_fallthru
        _
      // Predicated region
      $region41: #{suimnet_forward.1} parent=11 // pred_check
        %p447 = pneg %p217
      $region42: #{suimnet_forward.1} parent=11 // pred_check_branch
        %449 = sbr.rel (%p447) target = $region44
      $region43: #{suimnet_forward.1} parent=11 // pred_region
        _
      $region44: #{suimnet_forward.1} parent=11 // pred_fallthru
        _
      // Predicated region
      $region45: #{suimnet_forward.1} parent=11 // pred_check
        %p450 = pneg %p238
      $region46: #{suimnet_forward.1} parent=11 // pred_check_branch
        %452 = sbr.rel (%p450) target = $region48
      $region47: #{suimnet_forward.1} parent=11 // pred_region
        _
      $region48: #{suimnet_forward.1} parent=11 // pred_fallthru
        _
      // Predicated region
      $region49: #{suimnet_forward.1} parent=11 // pred_check
        %p453 = pneg %p259
      $region50: #{suimnet_forward.1} parent=11 // pred_check_branch
        %455 = sbr.rel (%p453) target = $region52
      $region51: #{suimnet_forward.1} parent=11 // pred_region
        _
      $region52: #{suimnet_forward.1} parent=11 // pred_fallthru
        _
      // Predicated region
      $region53: #{suimnet_forward.1} parent=11 // pred_check
        %p456 = pneg %p280
      $region54: #{suimnet_forward.1} parent=11 // pred_check_branch
        %458 = sbr.rel (%p456) target = $region56
      $region55: #{suimnet_forward.1} parent=11 // pred_region
        _
      $region56: #{suimnet_forward.1} parent=11 // pred_fallthru
        _
      // Predicated region
      $region57: #{suimnet_forward.1} parent=11 // pred_check
        %p459 = pneg %p301
      $region58: #{suimnet_forward.1} parent=11 // pred_check_branch
        %461 = sbr.rel (%p459) target = $region60
      $region59: #{suimnet_forward.1} parent=11 // pred_region
        _
      $region60: #{suimnet_forward.1} parent=11 // pred_fallthru
        _
      // Predicated region
      $region61: #{suimnet_forward.1} parent=11 // pred_check
        %p462 = pneg %p322
      $region62: #{suimnet_forward.1} parent=11 // pred_check_branch
        %464 = sbr.rel (%p462) target = $region64
      $region63: #{suimnet_forward.1} parent=11 // pred_region
        _
      $region64: #{suimnet_forward.1} parent=11 // pred_fallthru
        _
      // Predicated region
      $region65: #{suimnet_forward.1} parent=11 // pred_check
        %p465 = pneg %p343
      $region66: #{suimnet_forward.1} parent=11 // pred_check_branch
        %467 = sbr.rel (%p465) target = $region68
      $region67: #{suimnet_forward.1} parent=11 // pred_region
        _
      $region68: #{suimnet_forward.1} parent=11 // pred_fallthru
        _
      // Predicated region
      $region69: #{suimnet_forward.1} parent=11 // pred_check
        %p468 = pneg %p364
      $region70: #{suimnet_forward.1} parent=11 // pred_check_branch
        %470 = sbr.rel (%p468) target = $region72
      $region71: #{suimnet_forward.1} parent=11 // pred_region
        _
      $region72: #{suimnet_forward.1} parent=11 // pred_fallthru
        _
      // Predicated region
      $region73: #{suimnet_forward.1} parent=11 // pred_check
        %p471 = pneg %p385
      $region74: #{suimnet_forward.1} parent=11 // pred_check_branch
        %473 = sbr.rel (%p471) target = $region76
      $region75: #{suimnet_forward.1} parent=11 // pred_region
        _
      $region76: #{suimnet_forward.1} parent=11 // pred_fallthru
        _
    $region12: #{suimnet_forward.1} parent=5 // pred_fallthru
      _
    %p474 = scmp.lt.s32.totalorder %s23, 2
    // Predicated region
    $region77: #{suimnet_forward.1} parent=5 // pred_check
      %p475 = pneg %p474
    $region78: #{suimnet_forward.1} parent=5 // pred_check_branch
      %477 = sbr.rel (%p475) target = $region80
    $region79: #{suimnet_forward.1} parent=5 // pred_region
      // Predicated region
      $region81: #{suimnet_forward.1} parent=79 // pred_check
        %p478 = pneg %p43
      $region82: #{suimnet_forward.1} parent=79 // pred_check_branch
        %480 = sbr.rel (%p478) target = $region84
      $region83: #{suimnet_forward.1} parent=79 // pred_region
        %p481 = scmp.lt.s32.totalorder %s23, 1
        %s482 = scalar_select %p481, %s23, 1
        %s483 = smul.addr %s482, 41
        %s484 = smul.addr %s483, 8
        %s485 = scalar_lea.vmem %s0, %s484
      $region84: #{suimnet_forward.1} parent=79 // pred_fallthru
        _
    $region80: #{suimnet_forward.1} parent=5 // pred_fallthru
      _
    %p486 = scmp.le.s32.totalorder 1, %s23
    %p487 = scmp.lt.s32.totalorder %s23, 3
    %p488 = pnand %p486, %p487
    %p489 = pneg %p488
    // Predicated region
    $region85: #{suimnet_forward.1} parent=5 // pred_check
      _
    $region86: #{suimnet_forward.1} parent=5 // pred_check_branch
      %491 = sbr.rel (%p488) target = $region88
    $region87: #{suimnet_forward.1} parent=5 // pred_region
      %s492 = ssub.s32 %s23, 1
      %p493 = scmp.lt.s32.totalorder %s28, 1
      %s494 = scalar_select %p493, %s28, 1
      %s495 = smul.addr %s494, 41
      %s496 = smul.addr %s495, 8
      %s497 = scalar_lea.vmem %s0, %s496
      %p498 = pneg %p49
      %p499 = pneg %p46
      %p500 = pneg %p70
      %p501 = pneg %p67
      %p502 = pneg %p91
      %p503 = pneg %p88
      %p504 = pneg %p112
      %p505 = pneg %p109
      %p506 = pneg %p133
      %p507 = pneg %p130
      %p508 = pneg %p154
      %p509 = pneg %p151
      %p510 = pneg %p175
      %p511 = pneg %p172
      %p512 = pneg %p196
      %p513 = pneg %p193
      %p514 = pneg %p217
      %p515 = pneg %p214
      %p516 = pneg %p238
      %p517 = pneg %p235
      %p518 = pneg %p259
      %p519 = pneg %p256
      %p520 = pneg %p280
      %p521 = pneg %p277
      %p522 = pneg %p301
      %p523 = pneg %p298
      %p524 = pneg %p322
      %p525 = pneg %p319
      %p526 = pneg %p343
      %p527 = pneg %p340
      %p528 = pneg %p364
      %p529 = pneg %p361
      %p530 = pneg %p385
      %p531 = pneg %p382
      %p532 = pneg %p411
      %p533 = pneg %p408
      %p534 = scmp.lt.s32.totalorder %s28, 1
      %s535 = scalar_select %p534, %s28, 1
      %s536 = smul.addr %s535, 32
      %s537 = smul.addr %s536, 8
      %s538 = scalar_lea.vmem %s17, %s537
      %p539 = scmp.lt.s32.totalorder %s28, 1
      %s540 = scalar_select %p539, %s28, 1
      %s541 = smul.addr %s540, 41
      %s542 = smul.addr %s541, 8
      %s543 = scalar_lea.vmem %s0, %s542
      %p544 = scmp.lt.s32.totalorder %s28, 1
      %s545 = scalar_select %p544, %s28, 1
      %s546 = smul.addr %s545, 32
      %s547 = smul.addr %s546, 8
      %s548 = scalar_lea.vmem %s17, %s547
      %v550 = vld [vmem:[%s543] sm:$0xff]
      %v551 = vld [vmem:[%s543 + $0x8] sm:$0xff]
      %v552 = vld [vmem:[%s543 + $0x10] sm:$0xff]
      %v553 = vld [vmem:[%s543 + $0x18] sm:$0xff]
      %v554 = vld [vmem:[%s543 + $0x20] sm:$0xff]
      %v555 = vld [vmem:[%s543 + $0x28] sm:$0xff]
      %v556 = vld [vmem:[%s543 + $0x30] sm:$0xff]
      %v557 = vld [vmem:[%s543 + $0x38] sm:$0xff]
      %v558 = vld [vmem:[%s543 + $0x40] sm:$0xff]
      %v559 = vld [vmem:[%s543 + $0x48] sm:$0xff]
      %v560 = vld [vmem:[%s543 + $0x50] sm:$0xff]
      %v561 = vld [vmem:[%s543 + $0x58] sm:$0xff]
      %v562 = vld [vmem:[%s543 + $0x60] sm:$0xff]
      %v563 = vld [vmem:[%s543 + $0x68] sm:$0xff]
      %v564 = vld [vmem:[%s543 + $0x70] sm:$0xff]
      %v565 = vld [vmem:[%s543 + $0x78] sm:$0xff]
      %v566 = vld [vmem:[%s543 + $0x80] sm:$0xff]
      %v567 = vld [vmem:[%s543 + $0x88] sm:$0xff]
      %v568 = vld [vmem:[%s543 + $0x90] sm:$0xff]
      %v569 = vld [vmem:[%s543 + $0x98] sm:$0xff]
      %v570 = vld [vmem:[%s543 + $0xa0] sm:$0xff]
      %v571 = vld [vmem:[%s543 + $0xa8] sm:$0xff]
      %v572 = vld [vmem:[%s543 + $0xb0] sm:$0xff]
      %v573 = vld [vmem:[%s543 + $0xb8] sm:$0xff]
      %v574 = vld [vmem:[%s543 + $0xc0] sm:$0xff]
      %v575 = vld [vmem:[%s543 + $0xc8] sm:$0xff]
      %v576 = vld [vmem:[%s543 + $0xd0] sm:$0xff]
      %v577 = vld [vmem:[%s543 + $0xd8] sm:$0xff]
      %v578 = vld [vmem:[%s543 + $0xe0] sm:$0xff]
      %v579 = vld [vmem:[%s543 + $0xe8] sm:$0xff]
      %v580 = vld [vmem:[%s543 + $0xf0] sm:$0xff]
      %v581 = vld [vmem:[%s543 + $0xf8] sm:$0xff]
      %v582 = vld [vmem:[%s543 + $0x100] sm:$0xff]
      %v583 = vld [vmem:[%s543 + $0x108] sm:$0xff]
      %v584 = vld [vmem:[%s543 + $0x110] sm:$0xff]
      %v585 = vld [vmem:[%s543 + $0x118] sm:$0x3f]
      %v586 = vpack.c.bf16 %v551, %v550
      %v587 = vpack.c.bf16 %v553, %v552
      %v588 = vpack.c.bf16 %v555, %v554
      %v589 = vpack.c.bf16 %v557, %v556
      %v590 = vpack.c.bf16 %v559, %v558
      %v591 = vpack.c.bf16 %v561, %v560
      %v592 = vpack.c.bf16 %v563, %v562
      %v593 = vpack.c.bf16 %v565, %v564
      %v594 = vpack.c.bf16 %v567, %v566
      %v595 = vpack.c.bf16 %v569, %v568
      %v596 = vpack.c.bf16 %v571, %v570
      %v597 = vpack.c.bf16 %v573, %v572
      %v598 = vpack.c.bf16 %v575, %v574
      %v599 = vpack.c.bf16 %v577, %v576
      %v600 = vpack.c.bf16 %v579, %v578
      %v601 = vpack.c.bf16 %v581, %v580
      %v602 = vpack.c.bf16 %v583, %v582
      %v603 = vpack.c.bf16 %v585, %v584
      %v604 = vld [vmem:[%s1] sm:$0xf]
      %v605 = vld [vmem:[%s1 + $0x4] sm:$0xf]
      %v606 = vld [vmem:[%s1 + $0x8] sm:$0xf]
      %v607 = vld [vmem:[%s1 + $0xc] sm:$0xf]
      %v608 = vld [vmem:[%s1 + $0x10] sm:$0xf]
      %v609 = vld [vmem:[%s1 + $0x14] sm:$0xf]
      %v610 = vld [vmem:[%s1 + $0x18] sm:$0xf]
      %v611 = vld [vmem:[%s1 + $0x1c] sm:$0xf]
      %v612 = vld [vmem:[%s1 + $0x20] sm:$0xf]
      %v613 = vld [vmem:[%s1 + $0x24] sm:$0xf]
      %v614 = vld [vmem:[%s1 + $0x28] sm:$0xf]
      %v615 = vld [vmem:[%s1 + $0x2c] sm:$0xf]
      %v616 = vld [vmem:[%s1 + $0x30] sm:$0xf]
      %v617 = vld [vmem:[%s1 + $0x34] sm:$0xf]
      %v618 = vld [vmem:[%s1 + $0x38] sm:$0xf]
      %v619 = vld [vmem:[%s1 + $0x3c] sm:$0xf]
      %v620 = vld [vmem:[%s543 + $0x1] sm:$0xff]
      %v621 = vld [vmem:[%s543 + $0x9] sm:$0xff]
      %v622 = vld [vmem:[%s543 + $0x11] sm:$0xff]
      %v623 = vld [vmem:[%s543 + $0x19] sm:$0xff]
      %v624 = vld [vmem:[%s543 + $0x21] sm:$0xff]
      %v625 = vld [vmem:[%s543 + $0x29] sm:$0xff]
      %v626 = vld [vmem:[%s543 + $0x31] sm:$0xff]
      %v627 = vld [vmem:[%s543 + $0x39] sm:$0xff]
      %v628 = vld [vmem:[%s543 + $0x41] sm:$0xff]
      %v629 = vld [vmem:[%s543 + $0x49] sm:$0xff]
      %v630 = vld [vmem:[%s543 + $0x51] sm:$0xff]
      %v631 = vld [vmem:[%s543 + $0x59] sm:$0xff]
      %v632 = vld [vmem:[%s543 + $0x61] sm:$0xff]
      %v633 = vld [vmem:[%s543 + $0x69] sm:$0xff]
      %v634 = vld [vmem:[%s543 + $0x71] sm:$0xff]
      %v635 = vld [vmem:[%s543 + $0x79] sm:$0xff]
      %v636 = vld [vmem:[%s543 + $0x81] sm:$0xff]
      %v637 = vld [vmem:[%s543 + $0x89] sm:$0xff]
      %v638 = vld [vmem:[%s543 + $0x91] sm:$0xff]
      %v639 = vld [vmem:[%s543 + $0x99] sm:$0xff]
      %v640 = vld [vmem:[%s543 + $0xa1] sm:$0xff]
      %v641 = vld [vmem:[%s543 + $0xa9] sm:$0xff]
      %v642 = vld [vmem:[%s543 + $0xb1] sm:$0xff]
      %v643 = vld [vmem:[%s543 + $0xb9] sm:$0xff]
      %v644 = vld [vmem:[%s543 + $0xc1] sm:$0xff]
      %v645 = vld [vmem:[%s543 + $0xc9] sm:$0xff]
      %v646 = vld [vmem:[%s543 + $0xd1] sm:$0xff]
      %v647 = vld [vmem:[%s543 + $0xd9] sm:$0xff]
      %v648 = vld [vmem:[%s543 + $0xe1] sm:$0xff]
      %v649 = vld [vmem:[%s543 + $0xe9] sm:$0xff]
      %v650 = vld [vmem:[%s543 + $0xf1] sm:$0xff]
      %v651 = vld [vmem:[%s543 + $0xf9] sm:$0xff]
      %v652 = vld [vmem:[%s543 + $0x101] sm:$0xff]
      %v653 = vld [vmem:[%s543 + $0x109] sm:$0xff]
      %v654 = vld [vmem:[%s543 + $0x111] sm:$0xff]
      %v655 = vld [vmem:[%s543 + $0x119] sm:$0x3f]
      %v656 = vpack.c.bf16 %v621, %v620
      %v657 = vpack.c.bf16 %v623, %v622
      %v658 = vpack.c.bf16 %v625, %v624
      %v659 = vpack.c.bf16 %v627, %v626
      %v660 = vpack.c.bf16 %v629, %v628
      %v661 = vpack.c.bf16 %v631, %v630
      %v662 = vpack.c.bf16 %v633, %v632
      %v663 = vpack.c.bf16 %v635, %v634
      %v664 = vpack.c.bf16 %v637, %v636
      %v665 = vpack.c.bf16 %v639, %v638
      %v666 = vpack.c.bf16 %v641, %v640
      %v667 = vpack.c.bf16 %v643, %v642
      %v668 = vpack.c.bf16 %v645, %v644
      %v669 = vpack.c.bf16 %v647, %v646
      %v670 = vpack.c.bf16 %v649, %v648
      %v671 = vpack.c.bf16 %v651, %v650
      %v672 = vpack.c.bf16 %v653, %v652
      %v673 = vpack.c.bf16 %v655, %v654
      %s674 = scalar_lea.vmem %s1, 64
      %v675 = vld [vmem:[%s674] sm:$0xf]
      %v676 = vld [vmem:[%s674 + $0x4] sm:$0xf]
      %v677 = vld [vmem:[%s674 + $0x8] sm:$0xf]
      %v678 = vld [vmem:[%s674 + $0xc] sm:$0xf]
      %v679 = vld [vmem:[%s674 + $0x10] sm:$0xf]
      %v680 = vld [vmem:[%s674 + $0x14] sm:$0xf]
      %v681 = vld [vmem:[%s674 + $0x18] sm:$0xf]
      %v682 = vld [vmem:[%s674 + $0x1c] sm:$0xf]
      %v683 = vld [vmem:[%s674 + $0x20] sm:$0xf]
      %v684 = vld [vmem:[%s674 + $0x24] sm:$0xf]
      %v685 = vld [vmem:[%s674 + $0x28] sm:$0xf]
      %v686 = vld [vmem:[%s674 + $0x2c] sm:$0xf]
      %v687 = vld [vmem:[%s674 + $0x30] sm:$0xf]
      %v688 = vld [vmem:[%s674 + $0x34] sm:$0xf]
      %v689 = vld [vmem:[%s674 + $0x38] sm:$0xf]
      %v690 = vld [vmem:[%s674 + $0x3c] sm:$0xf]
      %v707 = vunpack.c.l.b16 %v675
      %v708 = vunpack.c.l.b16 %v676
      %v709 = vunpack.c.l.b16 %v677
      %v710 = vunpack.c.l.b16 %v678
      %v711 = vunpack.c.l.b16 %v679
      %v712 = vunpack.c.l.b16 %v680
      %v713 = vunpack.c.l.b16 %v681
      %v714 = vunpack.c.l.b16 %v682
      %v715 = vunpack.c.l.b16 %v683
      %v716 = vunpack.c.l.b16 %v684
      %v717 = vunpack.c.l.b16 %v685
      %v718 = vunpack.c.l.b16 %v686
      %v719 = vunpack.c.l.b16 %v687
      %v720 = vunpack.c.l.b16 %v688
      %v721 = vunpack.c.l.b16 %v689
      %v722 = vunpack.c.l.b16 %v690
      %v723 = vpack.c.b16 %v708, %v707
      %v724 = vpack.c.b16 %v710, %v709
      %v725 = vpack.c.b16 %v712, %v711
      %v726 = vpack.c.b16 %v714, %v713
      %v727 = vpack.c.b16 %v716, %v715
      %v728 = vpack.c.b16 %v718, %v717
      %v729 = vpack.c.b16 %v720, %v719
      %v730 = vpack.c.b16 %v722, %v721
      %739 = vmatprep.subr.bf16.mxu0 0
      %740 = vmatpush1.bf16.msra.mxu0 %v730
      %741 = vmatprep.subr.bf16.mxu0 0
      %742 = vmatpush1.bf16.msra.mxu0 %v729
      %743 = vmatprep.subr.bf16.mxu0 0
      %744 = vmatpush1.bf16.msra.mxu0 %v728
      %745 = vmatprep.subr.bf16.mxu0 0
      %746 = vmatpush1.bf16.msra.mxu0 %v727
      %747 = vmatprep.subr.bf16.mxu0 0
      %748 = vmatpush1.bf16.msra.mxu0 %v726
      %749 = vmatprep.subr.bf16.mxu0 0
      %750 = vmatpush1.bf16.msra.mxu0 %v725
      %751 = vmatprep.subr.bf16.mxu0 0
      %752 = vmatpush1.bf16.msra.mxu0 %v724
      %753 = vmatprep.subr.bf16.mxu0 0
      %754 = vmatpush1.bf16.msra.mxu0 %v723
      %755 = vmatprep.subr.bf16.mxu0 0
      %756 = vmatpush2.bf16.msra.mxu0 0
      %757 = vmatprep.subr.bf16.mxu0 0
      %758 = vmatpush2.bf16.msra.mxu0 0
      %759 = vmatprep.subr.bf16.mxu0 0
      %760 = vmatpush2.bf16.msra.mxu0 0
      %761 = vmatprep.subr.bf16.mxu0 0
      %762 = vmatpush2.bf16.msra.mxu0 0
      %763 = vmatprep.subr.bf16.mxu0 0
      %764 = vmatpush2.bf16.msra.mxu0 0
      %765 = vmatprep.subr.bf16.mxu0 0
      %766 = vmatpush2.bf16.msra.mxu0 0
      %767 = vmatprep.subr.bf16.mxu0 0
      %768 = vmatpush2.bf16.msra.mxu0 0
      %769 = vmatprep.subr.bf16.mxu0 0
      %770 = vmatpush2.bf16.msra.mxu0 0
      %771 = vmatprep.mubr.bf16.mxu0 0
      %772 = vmatmul.mubr.bf16.gmra.mxu0 %v656
      %v773 = vpop.f32.mrf.mxu0
      %v774 = vadd.f32 0.0, %v773
      %v775 = vpop.f32.mrf.mxu0
      %v776 = vpop.f32.mrf.mxu0
      %v777 = vadd.f32 0.0, %v776
      %v778 = vpop.f32.mrf.mxu0
      %779 = vmatprep.mubr.bf16.mxu0 0
      %780 = vmatmul.mubr.bf16.gmra.mxu0 %v657
      %v781 = vpop.f32.mrf.mxu0
      %v782 = vadd.f32 0.0, %v781
      %v783 = vpop.f32.mrf.mxu0
      %v784 = vpop.f32.mrf.mxu0
      %v785 = vadd.f32 0.0, %v784
      %v786 = vpop.f32.mrf.mxu0
      %787 = vmatprep.mubr.bf16.mxu0 0
      %788 = vmatmul.mubr.bf16.gmra.mxu0 %v658
      %v789 = vpop.f32.mrf.mxu0
      %v790 = vadd.f32 0.0, %v789
      %v791 = vpop.f32.mrf.mxu0
      %v792 = vpop.f32.mrf.mxu0
      %v793 = vadd.f32 0.0, %v792
      %v794 = vpop.f32.mrf.mxu0
      %795 = vmatprep.mubr.bf16.mxu0 0
      %796 = vmatmul.mubr.bf16.gmra.mxu0 %v659
      %v797 = vpop.f32.mrf.mxu0
      %v798 = vadd.f32 0.0, %v797
      %v799 = vpop.f32.mrf.mxu0
      %v800 = vpop.f32.mrf.mxu0
      %v801 = vadd.f32 0.0, %v800
      %v802 = vpop.f32.mrf.mxu0
      %803 = vmatprep.mubr.bf16.mxu0 0
      %804 = vmatmul.mubr.bf16.gmra.mxu0 %v660
      %v805 = vpop.f32.mrf.mxu0
      %v806 = vadd.f32 0.0, %v805
      %v807 = vpop.f32.mrf.mxu0
      %v808 = vpop.f32.mrf.mxu0
      %v809 = vadd.f32 0.0, %v808
      %v810 = vpop.f32.mrf.mxu0
      %811 = vmatprep.mubr.bf16.mxu0 0
      %812 = vmatmul.mubr.bf16.gmra.mxu0 %v661
      %v813 = vpop.f32.mrf.mxu0
      %v814 = vadd.f32 0.0, %v813
      %v815 = vpop.f32.mrf.mxu0
      %v816 = vpop.f32.mrf.mxu0
      %v817 = vadd.f32 0.0, %v816
      %v818 = vpop.f32.mrf.mxu0
      %819 = vmatprep.mubr.bf16.mxu0 0
      %820 = vmatmul.mubr.bf16.gmra.mxu0 %v662
      %v821 = vpop.f32.mrf.mxu0
      %v822 = vadd.f32 0.0, %v821
      %v823 = vpop.f32.mrf.mxu0
      %v824 = vpop.f32.mrf.mxu0
      %v825 = vadd.f32 0.0, %v824
      %v826 = vpop.f32.mrf.mxu0
      %827 = vmatprep.mubr.bf16.mxu0 0
      %828 = vmatmul.mubr.bf16.gmra.mxu0 %v663
      %v829 = vpop.f32.mrf.mxu0
      %v830 = vadd.f32 0.0, %v829
      %v831 = vpop.f32.mrf.mxu0
      %v832 = vpop.f32.mrf.mxu0
      %v833 = vadd.f32 0.0, %v832
      %v834 = vpop.f32.mrf.mxu0
      %835 = vmatprep.mubr.bf16.mxu0 0
      %836 = vmatmul.mubr.bf16.gmra.mxu0 %v664
      %v837 = vpop.f32.mrf.mxu0
      %v838 = vadd.f32 0.0, %v837
      %v839 = vpop.f32.mrf.mxu0
      %v840 = vpop.f32.mrf.mxu0
      %v841 = vadd.f32 0.0, %v840
      %v842 = vpop.f32.mrf.mxu0
      %843 = vmatprep.mubr.bf16.mxu0 0
      %844 = vmatmul.mubr.bf16.gmra.mxu0 %v665
      %v845 = vpop.f32.mrf.mxu0
      %v846 = vadd.f32 0.0, %v845
      %v847 = vpop.f32.mrf.mxu0
      %v848 = vpop.f32.mrf.mxu0
      %v849 = vadd.f32 0.0, %v848
      %v850 = vpop.f32.mrf.mxu0
      %851 = vmatprep.mubr.bf16.mxu0 0
      %852 = vmatmul.mubr.bf16.gmra.mxu0 %v666
      %v853 = vpop.f32.mrf.mxu0
      %v854 = vadd.f32 0.0, %v853
      %v855 = vpop.f32.mrf.mxu0
      %v856 = vpop.f32.mrf.mxu0
      %v857 = vadd.f32 0.0, %v856
      %v858 = vpop.f32.mrf.mxu0
      %859 = vmatprep.mubr.bf16.mxu0 0
      %860 = vmatmul.mubr.bf16.gmra.mxu0 %v667
      %v861 = vpop.f32.mrf.mxu0
      %v862 = vadd.f32 0.0, %v861
      %v863 = vpop.f32.mrf.mxu0
      %v864 = vpop.f32.mrf.mxu0
      %v865 = vadd.f32 0.0, %v864
      %v866 = vpop.f32.mrf.mxu0
      %867 = vmatprep.mubr.bf16.mxu0 0
      %868 = vmatmul.mubr.bf16.gmra.mxu0 %v668
      %v869 = vpop.f32.mrf.mxu0
      %v870 = vadd.f32 0.0, %v869
      %v871 = vpop.f32.mrf.mxu0
      %v872 = vpop.f32.mrf.mxu0
      %v873 = vadd.f32 0.0, %v872
      %v874 = vpop.f32.mrf.mxu0
      %875 = vmatprep.mubr.bf16.mxu0 0
      %876 = vmatmul.mubr.bf16.gmra.mxu0 %v669
      %v877 = vpop.f32.mrf.mxu0
      %v878 = vadd.f32 0.0, %v877
      %v879 = vpop.f32.mrf.mxu0
      %v880 = vpop.f32.mrf.mxu0
      %v881 = vadd.f32 0.0, %v880
      %v882 = vpop.f32.mrf.mxu0
      %883 = vmatprep.mubr.bf16.mxu0 0
      %884 = vmatmul.mubr.bf16.gmra.mxu0 %v670
      %v885 = vpop.f32.mrf.mxu0
      %v886 = vadd.f32 0.0, %v885
      %v887 = vpop.f32.mrf.mxu0
      %v888 = vpop.f32.mrf.mxu0
      %v889 = vadd.f32 0.0, %v888
      %v890 = vpop.f32.mrf.mxu0
      %891 = vmatprep.mubr.bf16.mxu0 0
      %892 = vmatmul.mubr.bf16.gmra.mxu0 %v671
      %v893 = vpop.f32.mrf.mxu0
      %v894 = vadd.f32 0.0, %v893
      %v895 = vpop.f32.mrf.mxu0
      %v896 = vpop.f32.mrf.mxu0
      %v897 = vadd.f32 0.0, %v896
      %v898 = vpop.f32.mrf.mxu0
      %899 = vmatprep.mubr.bf16.mxu0 0
      %900 = vmatmul.mubr.bf16.gmra.mxu0 %v672
      %v901 = vpop.f32.mrf.mxu0
      %v902 = vadd.f32 0.0, %v901
      %v903 = vpop.f32.mrf.mxu0
      %v904 = vpop.f32.mrf.mxu0
      %v905 = vadd.f32 0.0, %v904
      %v906 = vpop.f32.mrf.mxu0
      %907 = vmatprep.mubr.bf16.mxu0 0
      %908 = vmatmul.mubr.bf16.gmra.mxu0 %v673
      %v909 = vpop.f32.mrf.mxu0
      %v910 = vadd.f32 0.0, %v909
      %v911 = vpop.f32.mrf.mxu0
      %v912 = vpop.f32.mrf.mxu0
      %v913 = vadd.f32 0.0, %v912
      %v914 = vpop.f32.mrf.mxu0
      %915 = vdwg.mxu0
      %v932 = vunpack.c.l.b16 %v604
      %v933 = vunpack.c.l.b16 %v605
      %v934 = vunpack.c.l.b16 %v606
      %v935 = vunpack.c.l.b16 %v607
      %v936 = vunpack.c.l.b16 %v608
      %v937 = vunpack.c.l.b16 %v609
      %v938 = vunpack.c.l.b16 %v610
      %v939 = vunpack.c.l.b16 %v611
      %v940 = vunpack.c.l.b16 %v612
      %v941 = vunpack.c.l.b16 %v613
      %v942 = vunpack.c.l.b16 %v614
      %v943 = vunpack.c.l.b16 %v615
      %v944 = vunpack.c.l.b16 %v616
      %v945 = vunpack.c.l.b16 %v617
      %v946 = vunpack.c.l.b16 %v618
      %v947 = vunpack.c.l.b16 %v619
      %v948 = vpack.c.b16 %v933, %v932
      %v949 = vpack.c.b16 %v935, %v934
      %v950 = vpack.c.b16 %v937, %v936
      %v951 = vpack.c.b16 %v939, %v938
      %v952 = vpack.c.b16 %v941, %v940
      %v953 = vpack.c.b16 %v943, %v942
      %v954 = vpack.c.b16 %v945, %v944
      %v955 = vpack.c.b16 %v947, %v946
      %964 = vmatprep.subr.bf16.mxu0 0
      %965 = vmatpush1.bf16.msra.mxu0 %v955
      %966 = vmatprep.subr.bf16.mxu0 0
      %967 = vmatpush1.bf16.msra.mxu0 %v954
      %968 = vmatprep.subr.bf16.mxu0 0
      %969 = vmatpush1.bf16.msra.mxu0 %v953
      %970 = vmatprep.subr.bf16.mxu0 0
      %971 = vmatpush1.bf16.msra.mxu0 %v952
      %972 = vmatprep.subr.bf16.mxu0 0
      %973 = vmatpush1.bf16.msra.mxu0 %v951
      %974 = vmatprep.subr.bf16.mxu0 0
      %975 = vmatpush1.bf16.msra.mxu0 %v950
      %976 = vmatprep.subr.bf16.mxu0 0
      %977 = vmatpush1.bf16.msra.mxu0 %v949
      %978 = vmatprep.subr.bf16.mxu0 0
      %979 = vmatpush1.bf16.msra.mxu0 %v948
      %980 = vmatprep.subr.bf16.mxu0 0
      %981 = vmatpush2.bf16.msra.mxu0 0
      %982 = vmatprep.subr.bf16.mxu0 0
      %983 = vmatpush2.bf16.msra.mxu0 0
      %984 = vmatprep.subr.bf16.mxu0 0
      %985 = vmatpush2.bf16.msra.mxu0 0
      %986 = vmatprep.subr.bf16.mxu0 0
      %987 = vmatpush2.bf16.msra.mxu0 0
      %988 = vmatprep.subr.bf16.mxu0 0
      %989 = vmatpush2.bf16.msra.mxu0 0
      %990 = vmatprep.subr.bf16.mxu0 0
      %991 = vmatpush2.bf16.msra.mxu0 0
      %992 = vmatprep.subr.bf16.mxu0 0
      %993 = vmatpush2.bf16.msra.mxu0 0
      %994 = vmatprep.subr.bf16.mxu0 0
      %995 = vmatpush2.bf16.msra.mxu0 0
      %996 = vmatprep.mubr.bf16.mxu0 0
      %997 = vmatmul.mubr.bf16.gmra.mxu0 %v586
      %v998 = vpop.f32.mrf.mxu0
      %v999 = vadd.f32 %v774, %v998
      %v1000 = vpop.f32.mrf.mxu0
      %v1001 = vpop.f32.mrf.mxu0
      %v1002 = vadd.f32 %v777, %v1001
      %v1003 = vpop.f32.mrf.mxu0
      %1004 = vmatprep.mubr.bf16.mxu0 0
      %1005 = vmatmul.mubr.bf16.gmra.mxu0 %v587
      %v1006 = vpop.f32.mrf.mxu0
      %v1007 = vadd.f32 %v782, %v1006
      %v1008 = vpop.f32.mrf.mxu0
      %v1009 = vpop.f32.mrf.mxu0
      %v1010 = vadd.f32 %v785, %v1009
      %v1011 = vpop.f32.mrf.mxu0
      %1012 = vmatprep.mubr.bf16.mxu0 0
      %1013 = vmatmul.mubr.bf16.gmra.mxu0 %v588
      %v1014 = vpop.f32.mrf.mxu0
      %v1015 = vadd.f32 %v790, %v1014
      %v1016 = vpop.f32.mrf.mxu0
      %v1017 = vpop.f32.mrf.mxu0
      %v1018 = vadd.f32 %v793, %v1017
      %v1019 = vpop.f32.mrf.mxu0
      %1020 = vmatprep.mubr.bf16.mxu0 0
      %1021 = vmatmul.mubr.bf16.gmra.mxu0 %v589
      %v1022 = vpop.f32.mrf.mxu0
      %v1023 = vadd.f32 %v798, %v1022
      %v1024 = vpop.f32.mrf.mxu0
      %v1025 = vpop.f32.mrf.mxu0
      %v1026 = vadd.f32 %v801, %v1025
      %v1027 = vpop.f32.mrf.mxu0
      %1028 = vmatprep.mubr.bf16.mxu0 0
      %1029 = vmatmul.mubr.bf16.gmra.mxu0 %v590
      %v1030 = vpop.f32.mrf.mxu0
      %v1031 = vadd.f32 %v806, %v1030
      %v1032 = vpop.f32.mrf.mxu0
      %v1033 = vpop.f32.mrf.mxu0
      %v1034 = vadd.f32 %v809, %v1033
      %v1035 = vpop.f32.mrf.mxu0
      %1036 = vmatprep.mubr.bf16.mxu0 0
      %1037 = vmatmul.mubr.bf16.gmra.mxu0 %v591
      %v1038 = vpop.f32.mrf.mxu0
      %v1039 = vadd.f32 %v814, %v1038
      %v1040 = vpop.f32.mrf.mxu0
      %v1041 = vpop.f32.mrf.mxu0
      %v1042 = vadd.f32 %v817, %v1041
      %v1043 = vpop.f32.mrf.mxu0
      %1044 = vmatprep.mubr.bf16.mxu0 0
      %1045 = vmatmul.mubr.bf16.gmra.mxu0 %v592
      %v1046 = vpop.f32.mrf.mxu0
      %v1047 = vadd.f32 %v822, %v1046
      %v1048 = vpop.f32.mrf.mxu0
      %v1049 = vpop.f32.mrf.mxu0
      %v1050 = vadd.f32 %v825, %v1049
      %v1051 = vpop.f32.mrf.mxu0
      %1052 = vmatprep.mubr.bf16.mxu0 0
      %1053 = vmatmul.mubr.bf16.gmra.mxu0 %v593
      %v1054 = vpop.f32.mrf.mxu0
      %v1055 = vadd.f32 %v830, %v1054
      %v1056 = vpop.f32.mrf.mxu0
      %v1057 = vpop.f32.mrf.mxu0
      %v1058 = vadd.f32 %v833, %v1057
      %v1059 = vpop.f32.mrf.mxu0
      %1060 = vmatprep.mubr.bf16.mxu0 0
      %1061 = vmatmul.mubr.bf16.gmra.mxu0 %v594
      %v1062 = vpop.f32.mrf.mxu0
      %v1063 = vadd.f32 %v838, %v1062
      %v1064 = vpop.f32.mrf.mxu0
      %v1065 = vpop.f32.mrf.mxu0
      %v1066 = vadd.f32 %v841, %v1065
      %v1067 = vpop.f32.mrf.mxu0
      %1068 = vmatprep.mubr.bf16.mxu0 0
      %1069 = vmatmul.mubr.bf16.gmra.mxu0 %v595
      %v1070 = vpop.f32.mrf.mxu0
      %v1071 = vadd.f32 %v846, %v1070
      %v1072 = vpop.f32.mrf.mxu0
      %v1073 = vpop.f32.mrf.mxu0
      %v1074 = vadd.f32 %v849, %v1073
      %v1075 = vpop.f32.mrf.mxu0
      %1076 = vmatprep.mubr.bf16.mxu0 0
      %1077 = vmatmul.mubr.bf16.gmra.mxu0 %v596
      %v1078 = vpop.f32.mrf.mxu0
      %v1079 = vadd.f32 %v854, %v1078
      %v1080 = vpop.f32.mrf.mxu0
      %v1081 = vpop.f32.mrf.mxu0
      %v1082 = vadd.f32 %v857, %v1081
      %v1083 = vpop.f32.mrf.mxu0
      %1084 = vmatprep.mubr.bf16.mxu0 0
      %1085 = vmatmul.mubr.bf16.gmra.mxu0 %v597
      %v1086 = vpop.f32.mrf.mxu0
      %v1087 = vadd.f32 %v862, %v1086
      %v1088 = vpop.f32.mrf.mxu0
      %v1089 = vpop.f32.mrf.mxu0
      %v1090 = vadd.f32 %v865, %v1089
      %v1091 = vpop.f32.mrf.mxu0
      %1092 = vmatprep.mubr.bf16.mxu0 0
      %1093 = vmatmul.mubr.bf16.gmra.mxu0 %v598
      %v1094 = vpop.f32.mrf.mxu0
      %v1095 = vadd.f32 %v870, %v1094
      %v1096 = vpop.f32.mrf.mxu0
      %v1097 = vpop.f32.mrf.mxu0
      %v1098 = vadd.f32 %v873, %v1097
      %v1099 = vpop.f32.mrf.mxu0
      %1100 = vmatprep.mubr.bf16.mxu0 0
      %1101 = vmatmul.mubr.bf16.gmra.mxu0 %v599
      %v1102 = vpop.f32.mrf.mxu0
      %v1103 = vadd.f32 %v878, %v1102
      %v1104 = vpop.f32.mrf.mxu0
      %v1105 = vpop.f32.mrf.mxu0
      %v1106 = vadd.f32 %v881, %v1105
      %v1107 = vpop.f32.mrf.mxu0
      %1108 = vmatprep.mubr.bf16.mxu0 0
      %1109 = vmatmul.mubr.bf16.gmra.mxu0 %v600
      %v1110 = vpop.f32.mrf.mxu0
      %v1111 = vadd.f32 %v886, %v1110
      %v1112 = vpop.f32.mrf.mxu0
      %v1113 = vpop.f32.mrf.mxu0
      %v1114 = vadd.f32 %v889, %v1113
      %v1115 = vpop.f32.mrf.mxu0
      %1116 = vmatprep.mubr.bf16.mxu0 0
      %1117 = vmatmul.mubr.bf16.gmra.mxu0 %v601
      %v1118 = vpop.f32.mrf.mxu0
      %v1119 = vadd.f32 %v894, %v1118
      %v1120 = vpop.f32.mrf.mxu0
      %v1121 = vpop.f32.mrf.mxu0
      %v1122 = vadd.f32 %v897, %v1121
      %v1123 = vpop.f32.mrf.mxu0
      %1124 = vmatprep.mubr.bf16.mxu0 0
      %1125 = vmatmul.mubr.bf16.gmra.mxu0 %v602
      %v1126 = vpop.f32.mrf.mxu0
      %v1127 = vadd.f32 %v902, %v1126
      %v1128 = vpop.f32.mrf.mxu0
      %v1129 = vpop.f32.mrf.mxu0
      %v1130 = vadd.f32 %v905, %v1129
      %v1131 = vpop.f32.mrf.mxu0
      %1132 = vmatprep.mubr.bf16.mxu0 0
      %1133 = vmatmul.mubr.bf16.gmra.mxu0 %v603
      %v1134 = vpop.f32.mrf.mxu0
      %v1135 = vadd.f32 %v910, %v1134
      %v1136 = vpop.f32.mrf.mxu0
      %v1137 = vpop.f32.mrf.mxu0
      %v1138 = vadd.f32 %v913, %v1137
      %v1139 = vpop.f32.mrf.mxu0
      %1140 = vdwg.mxu0
      %v1141 = vld [vmem:[%s543 + $0x2] sm:$0xff]
      %v1142 = vld [vmem:[%s543 + $0xa] sm:$0xff]
      %v1143 = vld [vmem:[%s543 + $0x12] sm:$0xff]
      %v1144 = vld [vmem:[%s543 + $0x1a] sm:$0xff]
      %v1145 = vld [vmem:[%s543 + $0x22] sm:$0xff]
      %v1146 = vld [vmem:[%s543 + $0x2a] sm:$0xff]
      %v1147 = vld [vmem:[%s543 + $0x32] sm:$0xff]
      %v1148 = vld [vmem:[%s543 + $0x3a] sm:$0xff]
      %v1149 = vld [vmem:[%s543 + $0x42] sm:$0xff]
      %v1150 = vld [vmem:[%s543 + $0x4a] sm:$0xff]
      %v1151 = vld [vmem:[%s543 + $0x52] sm:$0xff]
      %v1152 = vld [vmem:[%s543 + $0x5a] sm:$0xff]
      %v1153 = vld [vmem:[%s543 + $0x62] sm:$0xff]
      %v1154 = vld [vmem:[%s543 + $0x6a] sm:$0xff]
      %v1155 = vld [vmem:[%s543 + $0x72] sm:$0xff]
      %v1156 = vld [vmem:[%s543 + $0x7a] sm:$0xff]
      %v1157 = vld [vmem:[%s543 + $0x82] sm:$0xff]
      %v1158 = vld [vmem:[%s543 + $0x8a] sm:$0xff]
      %v1159 = vld [vmem:[%s543 + $0x92] sm:$0xff]
      %v1160 = vld [vmem:[%s543 + $0x9a] sm:$0xff]
      %v1161 = vld [vmem:[%s543 + $0xa2] sm:$0xff]
      %v1162 = vld [vmem:[%s543 + $0xaa] sm:$0xff]
      %v1163 = vld [vmem:[%s543 + $0xb2] sm:$0xff]
      %v1164 = vld [vmem:[%s543 + $0xba] sm:$0xff]
      %v1165 = vld [vmem:[%s543 + $0xc2] sm:$0xff]
      %v1166 = vld [vmem:[%s543 + $0xca] sm:$0xff]
      %v1167 = vld [vmem:[%s543 + $0xd2] sm:$0xff]
      %v1168 = vld [vmem:[%s543 + $0xda] sm:$0xff]
      %v1169 = vld [vmem:[%s543 + $0xe2] sm:$0xff]
      %v1170 = vld [vmem:[%s543 + $0xea] sm:$0xff]
      %v1171 = vld [vmem:[%s543 + $0xf2] sm:$0xff]
      %v1172 = vld [vmem:[%s543 + $0xfa] sm:$0xff]
      %v1173 = vld [vmem:[%s543 + $0x102] sm:$0xff]
      %v1174 = vld [vmem:[%s543 + $0x10a] sm:$0xff]
      %v1175 = vld [vmem:[%s543 + $0x112] sm:$0xff]
      %v1176 = vld [vmem:[%s543 + $0x11a] sm:$0x3f]
      %v1177 = vpack.c.bf16 %v1142, %v1141
      %v1178 = vpack.c.bf16 %v1144, %v1143
      %v1179 = vpack.c.bf16 %v1146, %v1145
      %v1180 = vpack.c.bf16 %v1148, %v1147
      %v1181 = vpack.c.bf16 %v1150, %v1149
      %v1182 = vpack.c.bf16 %v1152, %v1151
      %v1183 = vpack.c.bf16 %v1154, %v1153
      %v1184 = vpack.c.bf16 %v1156, %v1155
      %v1185 = vpack.c.bf16 %v1158, %v1157
      %v1186 = vpack.c.bf16 %v1160, %v1159
      %v1187 = vpack.c.bf16 %v1162, %v1161
      %v1188 = vpack.c.bf16 %v1164, %v1163
      %v1189 = vpack.c.bf16 %v1166, %v1165
      %v1190 = vpack.c.bf16 %v1168, %v1167
      %v1191 = vpack.c.bf16 %v1170, %v1169
      %v1192 = vpack.c.bf16 %v1172, %v1171
      %v1193 = vpack.c.bf16 %v1174, %v1173
      %v1194 = vpack.c.bf16 %v1176, %v1175
      %s1195 = scalar_lea.vmem %s1, 128
      %v1196 = vld [vmem:[%s1195] sm:$0xf]
      %v1197 = vld [vmem:[%s1195 + $0x4] sm:$0xf]
      %v1198 = vld [vmem:[%s1195 + $0x8] sm:$0xf]
      %v1199 = vld [vmem:[%s1195 + $0xc] sm:$0xf]
      %v1200 = vld [vmem:[%s1195 + $0x10] sm:$0xf]
      %v1201 = vld [vmem:[%s1195 + $0x14] sm:$0xf]
      %v1202 = vld [vmem:[%s1195 + $0x18] sm:$0xf]
      %v1203 = vld [vmem:[%s1195 + $0x1c] sm:$0xf]
      %v1204 = vld [vmem:[%s1195 + $0x20] sm:$0xf]
      %v1205 = vld [vmem:[%s1195 + $0x24] sm:$0xf]
      %v1206 = vld [vmem:[%s1195 + $0x28] sm:$0xf]
      %v1207 = vld [vmem:[%s1195 + $0x2c] sm:$0xf]
      %v1208 = vld [vmem:[%s1195 + $0x30] sm:$0xf]
      %v1209 = vld [vmem:[%s1195 + $0x34] sm:$0xf]
      %v1210 = vld [vmem:[%s1195 + $0x38] sm:$0xf]
      %v1211 = vld [vmem:[%s1195 + $0x3c] sm:$0xf]
      %v1228 = vunpack.c.l.b16 %v1196
      %v1229 = vunpack.c.l.b16 %v1197
      %v1230 = vunpack.c.l.b16 %v1198
      %v1231 = vunpack.c.l.b16 %v1199
      %v1232 = vunpack.c.l.b16 %v1200
      %v1233 = vunpack.c.l.b16 %v1201
      %v1234 = vunpack.c.l.b16 %v1202
      %v1235 = vunpack.c.l.b16 %v1203
      %v1236 = vunpack.c.l.b16 %v1204
      %v1237 = vunpack.c.l.b16 %v1205
      %v1238 = vunpack.c.l.b16 %v1206
      %v1239 = vunpack.c.l.b16 %v1207
      %v1240 = vunpack.c.l.b16 %v1208
      %v1241 = vunpack.c.l.b16 %v1209
      %v1242 = vunpack.c.l.b16 %v1210
      %v1243 = vunpack.c.l.b16 %v1211
      %v1244 = vpack.c.b16 %v1229, %v1228
      %v1245 = vpack.c.b16 %v1231, %v1230
      %v1246 = vpack.c.b16 %v1233, %v1232
      %v1247 = vpack.c.b16 %v1235, %v1234
      %v1248 = vpack.c.b16 %v1237, %v1236
      %v1249 = vpack.c.b16 %v1239, %v1238
      %v1250 = vpack.c.b16 %v1241, %v1240
      %v1251 = vpack.c.b16 %v1243, %v1242
      %1260 = vmatprep.subr.bf16.mxu0 0
      %1261 = vmatpush1.bf16.msra.mxu0 %v1251
      %1262 = vmatprep.subr.bf16.mxu0 0
      %1263 = vmatpush1.bf16.msra.mxu0 %v1250
      %1264 = vmatprep.subr.bf16.mxu0 0
      %1265 = vmatpush1.bf16.msra.mxu0 %v1249
      %1266 = vmatprep.subr.bf16.mxu0 0
      %1267 = vmatpush1.bf16.msra.mxu0 %v1248
      %1268 = vmatprep.subr.bf16.mxu0 0
      %1269 = vmatpush1.bf16.msra.mxu0 %v1247
      %1270 = vmatprep.subr.bf16.mxu0 0
      %1271 = vmatpush1.bf16.msra.mxu0 %v1246
      %1272 = vmatprep.subr.bf16.mxu0 0
      %1273 = vmatpush1.bf16.msra.mxu0 %v1245
      %1274 = vmatprep.subr.bf16.mxu0 0
      %1275 = vmatpush1.bf16.msra.mxu0 %v1244
      %1276 = vmatprep.subr.bf16.mxu0 0
      %1277 = vmatpush2.bf16.msra.mxu0 0
      %1278 = vmatprep.subr.bf16.mxu0 0
      %1279 = vmatpush2.bf16.msra.mxu0 0
      %1280 = vmatprep.subr.bf16.mxu0 0
      %1281 = vmatpush2.bf16.msra.mxu0 0
      %1282 = vmatprep.subr.bf16.mxu0 0
      %1283 = vmatpush2.bf16.msra.mxu0 0
      %1284 = vmatprep.subr.bf16.mxu0 0
      %1285 = vmatpush2.bf16.msra.mxu0 0
      %1286 = vmatprep.subr.bf16.mxu0 0
      %1287 = vmatpush2.bf16.msra.mxu0 0
      %1288 = vmatprep.subr.bf16.mxu0 0
      %1289 = vmatpush2.bf16.msra.mxu0 0
      %1290 = vmatprep.subr.bf16.mxu0 0
      %1291 = vmatpush2.bf16.msra.mxu0 0
      %1292 = vmatprep.mubr.bf16.mxu0 0
      %1293 = vmatmul.mubr.bf16.gmra.mxu0 %v1177
      %v1294 = vpop.f32.mrf.mxu0
      %v1295 = vadd.f32 0.0, %v1294
      %v1296 = vpop.f32.mrf.mxu0
      %v1297 = vpop.f32.mrf.mxu0
      %v1298 = vadd.f32 0.0, %v1297
      %v1299 = vpop.f32.mrf.mxu0
      %1300 = vmatprep.mubr.bf16.mxu0 0
      %1301 = vmatmul.mubr.bf16.gmra.mxu0 %v1178
      %v1302 = vpop.f32.mrf.mxu0
      %v1303 = vadd.f32 0.0, %v1302
      %v1304 = vpop.f32.mrf.mxu0
      %v1305 = vpop.f32.mrf.mxu0
      %v1306 = vadd.f32 0.0, %v1305
      %v1307 = vpop.f32.mrf.mxu0
      %1308 = vmatprep.mubr.bf16.mxu0 0
      %1309 = vmatmul.mubr.bf16.gmra.mxu0 %v1179
      %v1310 = vpop.f32.mrf.mxu0
      %v1311 = vadd.f32 0.0, %v1310
      %v1312 = vpop.f32.mrf.mxu0
      %v1313 = vpop.f32.mrf.mxu0
      %v1314 = vadd.f32 0.0, %v1313
      %v1315 = vpop.f32.mrf.mxu0
      %1316 = vmatprep.mubr.bf16.mxu0 0
      %1317 = vmatmul.mubr.bf16.gmra.mxu0 %v1180
      %v1318 = vpop.f32.mrf.mxu0
      %v1319 = vadd.f32 0.0, %v1318
      %v1320 = vpop.f32.mrf.mxu0
      %v1321 = vpop.f32.mrf.mxu0
      %v1322 = vadd.f32 0.0, %v1321
      %v1323 = vpop.f32.mrf.mxu0
      %1324 = vmatprep.mubr.bf16.mxu0 0
      %1325 = vmatmul.mubr.bf16.gmra.mxu0 %v1181
      %v1326 = vpop.f32.mrf.mxu0
      %v1327 = vadd.f32 0.0, %v1326
      %v1328 = vpop.f32.mrf.mxu0
      %v1329 = vpop.f32.mrf.mxu0
      %v1330 = vadd.f32 0.0, %v1329
      %v1331 = vpop.f32.mrf.mxu0
      %1332 = vmatprep.mubr.bf16.mxu0 0
      %1333 = vmatmul.mubr.bf16.gmra.mxu0 %v1182
      %v1334 = vpop.f32.mrf.mxu0
      %v1335 = vadd.f32 0.0, %v1334
      %v1336 = vpop.f32.mrf.mxu0
      %v1337 = vpop.f32.mrf.mxu0
      %v1338 = vadd.f32 0.0, %v1337
      %v1339 = vpop.f32.mrf.mxu0
      %1340 = vmatprep.mubr.bf16.mxu0 0
      %1341 = vmatmul.mubr.bf16.gmra.mxu0 %v1183
      %v1342 = vpop.f32.mrf.mxu0
      %v1343 = vadd.f32 0.0, %v1342
      %v1344 = vpop.f32.mrf.mxu0
      %v1345 = vpop.f32.mrf.mxu0
      %v1346 = vadd.f32 0.0, %v1345
      %v1347 = vpop.f32.mrf.mxu0
      %1348 = vmatprep.mubr.bf16.mxu0 0
      %1349 = vmatmul.mubr.bf16.gmra.mxu0 %v1184
      %v1350 = vpop.f32.mrf.mxu0
      %v1351 = vadd.f32 0.0, %v1350
      %v1352 = vpop.f32.mrf.mxu0
      %v1353 = vpop.f32.mrf.mxu0
      %v1354 = vadd.f32 0.0, %v1353
      %v1355 = vpop.f32.mrf.mxu0
      %1356 = vmatprep.mubr.bf16.mxu0 0
      %1357 = vmatmul.mubr.bf16.gmra.mxu0 %v1185
      %v1358 = vpop.f32.mrf.mxu0
      %v1359 = vadd.f32 0.0, %v1358
      %v1360 = vpop.f32.mrf.mxu0
      %v1361 = vpop.f32.mrf.mxu0
      %v1362 = vadd.f32 0.0, %v1361
      %v1363 = vpop.f32.mrf.mxu0
      %1364 = vmatprep.mubr.bf16.mxu0 0
      %1365 = vmatmul.mubr.bf16.gmra.mxu0 %v1186
      %v1366 = vpop.f32.mrf.mxu0
      %v1367 = vadd.f32 0.0, %v1366
      %v1368 = vpop.f32.mrf.mxu0
      %v1369 = vpop.f32.mrf.mxu0
      %v1370 = vadd.f32 0.0, %v1369
      %v1371 = vpop.f32.mrf.mxu0
      %1372 = vmatprep.mubr.bf16.mxu0 0
      %1373 = vmatmul.mubr.bf16.gmra.mxu0 %v1187
      %v1374 = vpop.f32.mrf.mxu0
      %v1375 = vadd.f32 0.0, %v1374
      %v1376 = vpop.f32.mrf.mxu0
      %v1377 = vpop.f32.mrf.mxu0
      %v1378 = vadd.f32 0.0, %v1377
      %v1379 = vpop.f32.mrf.mxu0
      %1380 = vmatprep.mubr.bf16.mxu0 0
      %1381 = vmatmul.mubr.bf16.gmra.mxu0 %v1188
      %v1382 = vpop.f32.mrf.mxu0
      %v1383 = vadd.f32 0.0, %v1382
      %v1384 = vpop.f32.mrf.mxu0
      %v1385 = vpop.f32.mrf.mxu0
      %v1386 = vadd.f32 0.0, %v1385
      %v1387 = vpop.f32.mrf.mxu0
      %1388 = vmatprep.mubr.bf16.mxu0 0
      %1389 = vmatmul.mubr.bf16.gmra.mxu0 %v1189
      %v1390 = vpop.f32.mrf.mxu0
      %v1391 = vadd.f32 0.0, %v1390
      %v1392 = vpop.f32.mrf.mxu0
      %v1393 = vpop.f32.mrf.mxu0
      %v1394 = vadd.f32 0.0, %v1393
      %v1395 = vpop.f32.mrf.mxu0
      %1396 = vmatprep.mubr.bf16.mxu0 0
      %1397 = vmatmul.mubr.bf16.gmra.mxu0 %v1190
      %v1398 = vpop.f32.mrf.mxu0
      %v1399 = vadd.f32 0.0, %v1398
      %v1400 = vpop.f32.mrf.mxu0
      %v1401 = vpop.f32.mrf.mxu0
      %v1402 = vadd.f32 0.0, %v1401
      %v1403 = vpop.f32.mrf.mxu0
      %1404 = vmatprep.mubr.bf16.mxu0 0
      %1405 = vmatmul.mubr.bf16.gmra.mxu0 %v1191
      %v1406 = vpop.f32.mrf.mxu0
      %v1407 = vadd.f32 0.0, %v1406
      %v1408 = vpop.f32.mrf.mxu0
      %v1409 = vpop.f32.mrf.mxu0
      %v1410 = vadd.f32 0.0, %v1409
      %v1411 = vpop.f32.mrf.mxu0
      %1412 = vmatprep.mubr.bf16.mxu0 0
      %1413 = vmatmul.mubr.bf16.gmra.mxu0 %v1192
      %v1414 = vpop.f32.mrf.mxu0
      %v1415 = vadd.f32 0.0, %v1414
      %v1416 = vpop.f32.mrf.mxu0
      %v1417 = vpop.f32.mrf.mxu0
      %v1418 = vadd.f32 0.0, %v1417
      %v1419 = vpop.f32.mrf.mxu0
      %1420 = vmatprep.mubr.bf16.mxu0 0
      %1421 = vmatmul.mubr.bf16.gmra.mxu0 %v1193
      %v1422 = vpop.f32.mrf.mxu0
      %v1423 = vadd.f32 0.0, %v1422
      %v1424 = vpop.f32.mrf.mxu0
      %v1425 = vpop.f32.mrf.mxu0
      %v1426 = vadd.f32 0.0, %v1425
      %v1427 = vpop.f32.mrf.mxu0
      %1428 = vmatprep.mubr.bf16.mxu0 0
      %1429 = vmatmul.mubr.bf16.gmra.mxu0 %v1194
      %v1430 = vpop.f32.mrf.mxu0
      %v1431 = vadd.f32 0.0, %v1430
      %v1432 = vpop.f32.mrf.mxu0
      %v1433 = vpop.f32.mrf.mxu0
      %v1434 = vadd.f32 0.0, %v1433
      %v1435 = vpop.f32.mrf.mxu0
      %1436 = vdwg.mxu0
      %v1437 = vadd.f32 %v999, %v1295
      %v1438 = vadd.f32 %v1002, %v1298
      %v1439 = vadd.f32 %v1007, %v1303
      %v1440 = vadd.f32 %v1010, %v1306
      %v1441 = vadd.f32 %v1015, %v1311
      %v1442 = vadd.f32 %v1018, %v1314
      %v1443 = vadd.f32 %v1023, %v1319
      %v1444 = vadd.f32 %v1026, %v1322
      %v1445 = vadd.f32 %v1031, %v1327
      %v1446 = vadd.f32 %v1034, %v1330
      %v1447 = vadd.f32 %v1039, %v1335
      %v1448 = vadd.f32 %v1042, %v1338
      %v1449 = vadd.f32 %v1047, %v1343
      %v1450 = vadd.f32 %v1050, %v1346
      %v1451 = vadd.f32 %v1055, %v1351
      %v1452 = vadd.f32 %v1058, %v1354
      %v1453 = vadd.f32 %v1063, %v1359
      %v1454 = vadd.f32 %v1066, %v1362
      %v1455 = vadd.f32 %v1071, %v1367
      %v1456 = vadd.f32 %v1074, %v1370
      %v1457 = vadd.f32 %v1079, %v1375
      %v1458 = vadd.f32 %v1082, %v1378
      %v1459 = vadd.f32 %v1087, %v1383
      %v1460 = vadd.f32 %v1090, %v1386
      %v1461 = vadd.f32 %v1095, %v1391
      %v1462 = vadd.f32 %v1098, %v1394
      %v1463 = vadd.f32 %v1103, %v1399
      %v1464 = vadd.f32 %v1106, %v1402
      %v1465 = vadd.f32 %v1111, %v1407
      %v1466 = vadd.f32 %v1114, %v1410
      %v1467 = vadd.f32 %v1119, %v1415
      %v1468 = vadd.f32 %v1122, %v1418
      %v1469 = vadd.f32 %v1127, %v1423
      %v1470 = vadd.f32 %v1130, %v1426
      %v1471 = vadd.f32 %v1135, %v1431
      %v1472 = vadd.f32 %v1138, %v1434
      %v1473 = vld [vmem:[%s543 + $0x12] sm:$0xff]
      %v1474 = vld [vmem:[%s543 + $0x1a] sm:$0xff]
      %v1475 = vld [vmem:[%s543 + $0x22] sm:$0xff]
      %v1476 = vld [vmem:[%s543 + $0x2a] sm:$0xff]
      %v1477 = vld [vmem:[%s543 + $0x32] sm:$0xff]
      %v1478 = vld [vmem:[%s543 + $0x3a] sm:$0xff]
      %v1479 = vld [vmem:[%s543 + $0x42] sm:$0xff]
      %v1480 = vld [vmem:[%s543 + $0x4a] sm:$0xff]
      %v1481 = vld [vmem:[%s543 + $0x52] sm:$0xff]
      %v1482 = vld [vmem:[%s543 + $0x5a] sm:$0xff]
      %v1483 = vld [vmem:[%s543 + $0x62] sm:$0xff]
      %v1484 = vld [vmem:[%s543 + $0x6a] sm:$0xff]
      %v1485 = vld [vmem:[%s543 + $0x72] sm:$0xff]
      %v1486 = vld [vmem:[%s543 + $0x7a] sm:$0xff]
      %v1487 = vld [vmem:[%s543 + $0x82] sm:$0xff]
      %v1488 = vld [vmem:[%s543 + $0x8a] sm:$0xff]
      %v1489 = vld [vmem:[%s543 + $0x92] sm:$0xff]
      %v1490 = vld [vmem:[%s543 + $0x9a] sm:$0xff]
      %v1491 = vld [vmem:[%s543 + $0xa2] sm:$0xff]
      %v1492 = vld [vmem:[%s543 + $0xaa] sm:$0xff]
      %v1493 = vld [vmem:[%s543 + $0xb2] sm:$0xff]
      %v1494 = vld [vmem:[%s543 + $0xba] sm:$0xff]
      %v1495 = vld [vmem:[%s543 + $0xc2] sm:$0xff]
      %v1496 = vld [vmem:[%s543 + $0xca] sm:$0xff]
      %v1497 = vld [vmem:[%s543 + $0xd2] sm:$0xff]
      %v1498 = vld [vmem:[%s543 + $0xda] sm:$0xff]
      %v1499 = vld [vmem:[%s543 + $0xe2] sm:$0xff]
      %v1500 = vld [vmem:[%s543 + $0xea] sm:$0xff]
      %v1501 = vld [vmem:[%s543 + $0xf2] sm:$0xff]
      %v1502 = vld [vmem:[%s543 + $0xfa] sm:$0xff]
      %v1503 = vld [vmem:[%s543 + $0x102] sm:$0xff]
      %v1504 = vld [vmem:[%s543 + $0x10a] sm:$0xff]
      %v1505 = vld [vmem:[%s543 + $0x112] sm:$0xff]
      %v1506 = vld [vmem:[%s543 + $0x11a] sm:$0xff]
      %v1507 = vld [vmem:[%s543 + $0x122] sm:$0xff]
      %v1508 = vld [vmem:[%s543 + $0x12a] sm:$0x3f]
      %v1509 = vpack.c.bf16 %v1474, %v1473
      %v1510 = vpack.c.bf16 %v1476, %v1475
      %v1511 = vpack.c.bf16 %v1478, %v1477
      %v1512 = vpack.c.bf16 %v1480, %v1479
      %v1513 = vpack.c.bf16 %v1482, %v1481
      %v1514 = vpack.c.bf16 %v1484, %v1483
      %v1515 = vpack.c.bf16 %v1486, %v1485
      %v1516 = vpack.c.bf16 %v1488, %v1487
      %v1517 = vpack.c.bf16 %v1490, %v1489
      %v1518 = vpack.c.bf16 %v1492, %v1491
      %v1519 = vpack.c.bf16 %v1494, %v1493
      %v1520 = vpack.c.bf16 %v1496, %v1495
      %v1521 = vpack.c.bf16 %v1498, %v1497
      %v1522 = vpack.c.bf16 %v1500, %v1499
      %v1523 = vpack.c.bf16 %v1502, %v1501
      %v1524 = vpack.c.bf16 %v1504, %v1503
      %v1525 = vpack.c.bf16 %v1506, %v1505
      %v1526 = vpack.c.bf16 %v1508, %v1507
      %s1527 = scalar_lea.vmem %s1, 192
      %v1528 = vld [vmem:[%s1527] sm:$0xf]
      %v1529 = vld [vmem:[%s1527 + $0x4] sm:$0xf]
      %v1530 = vld [vmem:[%s1527 + $0x8] sm:$0xf]
      %v1531 = vld [vmem:[%s1527 + $0xc] sm:$0xf]
      %v1532 = vld [vmem:[%s1527 + $0x10] sm:$0xf]
      %v1533 = vld [vmem:[%s1527 + $0x14] sm:$0xf]
      %v1534 = vld [vmem:[%s1527 + $0x18] sm:$0xf]
      %v1535 = vld [vmem:[%s1527 + $0x1c] sm:$0xf]
      %v1536 = vld [vmem:[%s1527 + $0x20] sm:$0xf]
      %v1537 = vld [vmem:[%s1527 + $0x24] sm:$0xf]
      %v1538 = vld [vmem:[%s1527 + $0x28] sm:$0xf]
      %v1539 = vld [vmem:[%s1527 + $0x2c] sm:$0xf]
      %v1540 = vld [vmem:[%s1527 + $0x30] sm:$0xf]
      %v1541 = vld [vmem:[%s1527 + $0x34] sm:$0xf]
      %v1542 = vld [vmem:[%s1527 + $0x38] sm:$0xf]
      %v1543 = vld [vmem:[%s1527 + $0x3c] sm:$0xf]
      %v1560 = vunpack.c.l.b16 %v1528
      %v1561 = vunpack.c.l.b16 %v1529
      %v1562 = vunpack.c.l.b16 %v1530
      %v1563 = vunpack.c.l.b16 %v1531
      %v1564 = vunpack.c.l.b16 %v1532
      %v1565 = vunpack.c.l.b16 %v1533
      %v1566 = vunpack.c.l.b16 %v1534
      %v1567 = vunpack.c.l.b16 %v1535
      %v1568 = vunpack.c.l.b16 %v1536
      %v1569 = vunpack.c.l.b16 %v1537
      %v1570 = vunpack.c.l.b16 %v1538
      %v1571 = vunpack.c.l.b16 %v1539
      %v1572 = vunpack.c.l.b16 %v1540
      %v1573 = vunpack.c.l.b16 %v1541
      %v1574 = vunpack.c.l.b16 %v1542
      %v1575 = vunpack.c.l.b16 %v1543
      %v1576 = vpack.c.b16 %v1561, %v1560
      %v1577 = vpack.c.b16 %v1563, %v1562
      %v1578 = vpack.c.b16 %v1565, %v1564
      %v1579 = vpack.c.b16 %v1567, %v1566
      %v1580 = vpack.c.b16 %v1569, %v1568
      %v1581 = vpack.c.b16 %v1571, %v1570
      %v1582 = vpack.c.b16 %v1573, %v1572
      %v1583 = vpack.c.b16 %v1575, %v1574
      %1592 = vmatprep.subr.bf16.mxu0 0
      %1593 = vmatpush1.bf16.msra.mxu0 %v1583
      %1594 = vmatprep.subr.bf16.mxu0 0
      %1595 = vmatpush1.bf16.msra.mxu0 %v1582
      %1596 = vmatprep.subr.bf16.mxu0 0
      %1597 = vmatpush1.bf16.msra.mxu0 %v1581
      %1598 = vmatprep.subr.bf16.mxu0 0
      %1599 = vmatpush1.bf16.msra.mxu0 %v1580
      %1600 = vmatprep.subr.bf16.mxu0 0
      %1601 = vmatpush1.bf16.msra.mxu0 %v1579
      %1602 = vmatprep.subr.bf16.mxu0 0
      %1603 = vmatpush1.bf16.msra.mxu0 %v1578
      %1604 = vmatprep.subr.bf16.mxu0 0
      %1605 = vmatpush1.bf16.msra.mxu0 %v1577
      %1606 = vmatprep.subr.bf16.mxu0 0
      %1607 = vmatpush1.bf16.msra.mxu0 %v1576
      %1608 = vmatprep.subr.bf16.mxu0 0
      %1609 = vmatpush2.bf16.msra.mxu0 0
      %1610 = vmatprep.subr.bf16.mxu0 0
      %1611 = vmatpush2.bf16.msra.mxu0 0
      %1612 = vmatprep.subr.bf16.mxu0 0
      %1613 = vmatpush2.bf16.msra.mxu0 0
      %1614 = vmatprep.subr.bf16.mxu0 0
      %1615 = vmatpush2.bf16.msra.mxu0 0
      %1616 = vmatprep.subr.bf16.mxu0 0
      %1617 = vmatpush2.bf16.msra.mxu0 0
      %1618 = vmatprep.subr.bf16.mxu0 0
      %1619 = vmatpush2.bf16.msra.mxu0 0
      %1620 = vmatprep.subr.bf16.mxu0 0
      %1621 = vmatpush2.bf16.msra.mxu0 0
      %1622 = vmatprep.subr.bf16.mxu0 0
      %1623 = vmatpush2.bf16.msra.mxu0 0
      %1624 = vmatprep.mubr.bf16.mxu0 0
      %1625 = vmatmul.mubr.bf16.gmra.mxu0 %v1509
      %v1626 = vpop.f32.mrf.mxu0
      %v1627 = vadd.f32 0.0, %v1626
      %v1628 = vpop.f32.mrf.mxu0
      %v1629 = vpop.f32.mrf.mxu0
      %v1630 = vadd.f32 0.0, %v1629
      %v1631 = vpop.f32.mrf.mxu0
      %1632 = vmatprep.mubr.bf16.mxu0 0
      %1633 = vmatmul.mubr.bf16.gmra.mxu0 %v1510
      %v1634 = vpop.f32.mrf.mxu0
      %v1635 = vadd.f32 0.0, %v1634
      %v1636 = vpop.f32.mrf.mxu0
      %v1637 = vpop.f32.mrf.mxu0
      %v1638 = vadd.f32 0.0, %v1637
      %v1639 = vpop.f32.mrf.mxu0
      %1640 = vmatprep.mubr.bf16.mxu0 0
      %1641 = vmatmul.mubr.bf16.gmra.mxu0 %v1511
      %v1642 = vpop.f32.mrf.mxu0
      %v1643 = vadd.f32 0.0, %v1642
      %v1644 = vpop.f32.mrf.mxu0
      %v1645 = vpop.f32.mrf.mxu0
      %v1646 = vadd.f32 0.0, %v1645
      %v1647 = vpop.f32.mrf.mxu0
      %1648 = vmatprep.mubr.bf16.mxu0 0
      %1649 = vmatmul.mubr.bf16.gmra.mxu0 %v1512
      %v1650 = vpop.f32.mrf.mxu0
      %v1651 = vadd.f32 0.0, %v1650
      %v1652 = vpop.f32.mrf.mxu0
      %v1653 = vpop.f32.mrf.mxu0
      %v1654 = vadd.f32 0.0, %v1653
      %v1655 = vpop.f32.mrf.mxu0
      %1656 = vmatprep.mubr.bf16.mxu0 0
      %1657 = vmatmul.mubr.bf16.gmra.mxu0 %v1513
      %v1658 = vpop.f32.mrf.mxu0
      %v1659 = vadd.f32 0.0, %v1658
      %v1660 = vpop.f32.mrf.mxu0
      %v1661 = vpop.f32.mrf.mxu0
      %v1662 = vadd.f32 0.0, %v1661
      %v1663 = vpop.f32.mrf.mxu0
      %1664 = vmatprep.mubr.bf16.mxu0 0
      %1665 = vmatmul.mubr.bf16.gmra.mxu0 %v1514
      %v1666 = vpop.f32.mrf.mxu0
      %v1667 = vadd.f32 0.0, %v1666
      %v1668 = vpop.f32.mrf.mxu0
      %v1669 = vpop.f32.mrf.mxu0
      %v1670 = vadd.f32 0.0, %v1669
      %v1671 = vpop.f32.mrf.mxu0
      %1672 = vmatprep.mubr.bf16.mxu0 0
      %1673 = vmatmul.mubr.bf16.gmra.mxu0 %v1515
      %v1674 = vpop.f32.mrf.mxu0
      %v1675 = vadd.f32 0.0, %v1674
      %v1676 = vpop.f32.mrf.mxu0
      %v1677 = vpop.f32.mrf.mxu0
      %v1678 = vadd.f32 0.0, %v1677
      %v1679 = vpop.f32.mrf.mxu0
      %1680 = vmatprep.mubr.bf16.mxu0 0
      %1681 = vmatmul.mubr.bf16.gmra.mxu0 %v1516
      %v1682 = vpop.f32.mrf.mxu0
      %v1683 = vadd.f32 0.0, %v1682
      %v1684 = vpop.f32.mrf.mxu0
      %v1685 = vpop.f32.mrf.mxu0
      %v1686 = vadd.f32 0.0, %v1685
      %v1687 = vpop.f32.mrf.mxu0
      %1688 = vmatprep.mubr.bf16.mxu0 0
      %1689 = vmatmul.mubr.bf16.gmra.mxu0 %v1517
      %v1690 = vpop.f32.mrf.mxu0
      %v1691 = vadd.f32 0.0, %v1690
      %v1692 = vpop.f32.mrf.mxu0
      %v1693 = vpop.f32.mrf.mxu0
      %v1694 = vadd.f32 0.0, %v1693
      %v1695 = vpop.f32.mrf.mxu0
      %1696 = vmatprep.mubr.bf16.mxu0 0
      %1697 = vmatmul.mubr.bf16.gmra.mxu0 %v1518
      %v1698 = vpop.f32.mrf.mxu0
      %v1699 = vadd.f32 0.0, %v1698
      %v1700 = vpop.f32.mrf.mxu0
      %v1701 = vpop.f32.mrf.mxu0
      %v1702 = vadd.f32 0.0, %v1701
      %v1703 = vpop.f32.mrf.mxu0
      %1704 = vmatprep.mubr.bf16.mxu0 0
      %1705 = vmatmul.mubr.bf16.gmra.mxu0 %v1519
      %v1706 = vpop.f32.mrf.mxu0
      %v1707 = vadd.f32 0.0, %v1706
      %v1708 = vpop.f32.mrf.mxu0
      %v1709 = vpop.f32.mrf.mxu0
      %v1710 = vadd.f32 0.0, %v1709
      %v1711 = vpop.f32.mrf.mxu0
      %1712 = vmatprep.mubr.bf16.mxu0 0
      %1713 = vmatmul.mubr.bf16.gmra.mxu0 %v1520
      %v1714 = vpop.f32.mrf.mxu0
      %v1715 = vadd.f32 0.0, %v1714
      %v1716 = vpop.f32.mrf.mxu0
      %v1717 = vpop.f32.mrf.mxu0
      %v1718 = vadd.f32 0.0, %v1717
      %v1719 = vpop.f32.mrf.mxu0
      %1720 = vmatprep.mubr.bf16.mxu0 0
      %1721 = vmatmul.mubr.bf16.gmra.mxu0 %v1521
      %v1722 = vpop.f32.mrf.mxu0
      %v1723 = vadd.f32 0.0, %v1722
      %v1724 = vpop.f32.mrf.mxu0
      %v1725 = vpop.f32.mrf.mxu0
      %v1726 = vadd.f32 0.0, %v1725
      %v1727 = vpop.f32.mrf.mxu0
      %1728 = vmatprep.mubr.bf16.mxu0 0
      %1729 = vmatmul.mubr.bf16.gmra.mxu0 %v1522
      %v1730 = vpop.f32.mrf.mxu0
      %v1731 = vadd.f32 0.0, %v1730
      %v1732 = vpop.f32.mrf.mxu0
      %v1733 = vpop.f32.mrf.mxu0
      %v1734 = vadd.f32 0.0, %v1733
      %v1735 = vpop.f32.mrf.mxu0
      %1736 = vmatprep.mubr.bf16.mxu0 0
      %1737 = vmatmul.mubr.bf16.gmra.mxu0 %v1523
      %v1738 = vpop.f32.mrf.mxu0
      %v1739 = vadd.f32 0.0, %v1738
      %v1740 = vpop.f32.mrf.mxu0
      %v1741 = vpop.f32.mrf.mxu0
      %v1742 = vadd.f32 0.0, %v1741
      %v1743 = vpop.f32.mrf.mxu0
      %1744 = vmatprep.mubr.bf16.mxu0 0
      %1745 = vmatmul.mubr.bf16.gmra.mxu0 %v1524
      %v1746 = vpop.f32.mrf.mxu0
      %v1747 = vadd.f32 0.0, %v1746
      %v1748 = vpop.f32.mrf.mxu0
      %v1749 = vpop.f32.mrf.mxu0
      %v1750 = vadd.f32 0.0, %v1749
      %v1751 = vpop.f32.mrf.mxu0
      %1752 = vmatprep.mubr.bf16.mxu0 0
      %1753 = vmatmul.mubr.bf16.gmra.mxu0 %v1525
      %v1754 = vpop.f32.mrf.mxu0
      %v1755 = vadd.f32 0.0, %v1754
      %v1756 = vpop.f32.mrf.mxu0
      %v1757 = vpop.f32.mrf.mxu0
      %v1758 = vadd.f32 0.0, %v1757
      %v1759 = vpop.f32.mrf.mxu0
      %1760 = vmatprep.mubr.bf16.mxu0 0
      %1761 = vmatmul.mubr.bf16.gmra.mxu0 %v1526
      %v1762 = vpop.f32.mrf.mxu0
      %v1763 = vadd.f32 0.0, %v1762
      %v1764 = vpop.f32.mrf.mxu0
      %v1765 = vpop.f32.mrf.mxu0
      %v1766 = vadd.f32 0.0, %v1765
      %v1767 = vpop.f32.mrf.mxu0
      %1768 = vdwg.mxu0
      %v1769 = vadd.f32 %v1437, %v1627
      %v1770 = vadd.f32 %v1438, %v1630
      %v1771 = vadd.f32 %v1439, %v1635
      %v1772 = vadd.f32 %v1440, %v1638
      %v1773 = vadd.f32 %v1441, %v1643
      %v1774 = vadd.f32 %v1442, %v1646
      %v1775 = vadd.f32 %v1443, %v1651
      %v1776 = vadd.f32 %v1444, %v1654
      %v1777 = vadd.f32 %v1445, %v1659
      %v1778 = vadd.f32 %v1446, %v1662
      %v1779 = vadd.f32 %v1447, %v1667
      %v1780 = vadd.f32 %v1448, %v1670
      %v1781 = vadd.f32 %v1449, %v1675
      %v1782 = vadd.f32 %v1450, %v1678
      %v1783 = vadd.f32 %v1451, %v1683
      %v1784 = vadd.f32 %v1452, %v1686
      %v1785 = vadd.f32 %v1453, %v1691
      %v1786 = vadd.f32 %v1454, %v1694
      %v1787 = vadd.f32 %v1455, %v1699
      %v1788 = vadd.f32 %v1456, %v1702
      %v1789 = vadd.f32 %v1457, %v1707
      %v1790 = vadd.f32 %v1458, %v1710
      %v1791 = vadd.f32 %v1459, %v1715
      %v1792 = vadd.f32 %v1460, %v1718
      %v1793 = vadd.f32 %v1461, %v1723
      %v1794 = vadd.f32 %v1462, %v1726
      %v1795 = vadd.f32 %v1463, %v1731
      %v1796 = vadd.f32 %v1464, %v1734
      %v1797 = vadd.f32 %v1465, %v1739
      %v1798 = vadd.f32 %v1466, %v1742
      %v1799 = vadd.f32 %v1467, %v1747
      %v1800 = vadd.f32 %v1468, %v1750
      %v1801 = vadd.f32 %v1469, %v1755
      %v1802 = vadd.f32 %v1470, %v1758
      %v1803 = vadd.f32 %v1471, %v1763
      %v1804 = vadd.f32 %v1472, %v1766
      %v1805 = vld [vmem:[%s543 + $0x13] sm:$0xff]
      %v1806 = vld [vmem:[%s543 + $0x1b] sm:$0xff]
      %v1807 = vld [vmem:[%s543 + $0x23] sm:$0xff]
      %v1808 = vld [vmem:[%s543 + $0x2b] sm:$0xff]
      %v1809 = vld [vmem:[%s543 + $0x33] sm:$0xff]
      %v1810 = vld [vmem:[%s543 + $0x3b] sm:$0xff]
      %v1811 = vld [vmem:[%s543 + $0x43] sm:$0xff]
      %v1812 = vld [vmem:[%s543 + $0x4b] sm:$0xff]
      %v1813 = vld [vmem:[%s543 + $0x53] sm:$0xff]
      %v1814 = vld [vmem:[%s543 + $0x5b] sm:$0xff]
      %v1815 = vld [vmem:[%s543 + $0x63] sm:$0xff]
      %v1816 = vld [vmem:[%s543 + $0x6b] sm:$0xff]
      %v1817 = vld [vmem:[%s543 + $0x73] sm:$0xff]
      %v1818 = vld [vmem:[%s543 + $0x7b] sm:$0xff]
      %v1819 = vld [vmem:[%s543 + $0x83] sm:$0xff]
      %v1820 = vld [vmem:[%s543 + $0x8b] sm:$0xff]
      %v1821 = vld [vmem:[%s543 + $0x93] sm:$0xff]
      %v1822 = vld [vmem:[%s543 + $0x9b] sm:$0xff]
      %v1823 = vld [vmem:[%s543 + $0xa3] sm:$0xff]
      %v1824 = vld [vmem:[%s543 + $0xab] sm:$0xff]
      %v1825 = vld [vmem:[%s543 + $0xb3] sm:$0xff]
      %v1826 = vld [vmem:[%s543 + $0xbb] sm:$0xff]
      %v1827 = vld [vmem:[%s543 + $0xc3] sm:$0xff]
      %v1828 = vld [vmem:[%s543 + $0xcb] sm:$0xff]
      %v1829 = vld [vmem:[%s543 + $0xd3] sm:$0xff]
      %v1830 = vld [vmem:[%s543 + $0xdb] sm:$0xff]
      %v1831 = vld [vmem:[%s543 + $0xe3] sm:$0xff]
      %v1832 = vld [vmem:[%s543 + $0xeb] sm:$0xff]
      %v1833 = vld [vmem:[%s543 + $0xf3] sm:$0xff]
      %v1834 = vld [vmem:[%s543 + $0xfb] sm:$0xff]
      %v1835 = vld [vmem:[%s543 + $0x103] sm:$0xff]
      %v1836 = vld [vmem:[%s543 + $0x10b] sm:$0xff]
      %v1837 = vld [vmem:[%s543 + $0x113] sm:$0xff]
      %v1838 = vld [vmem:[%s543 + $0x11b] sm:$0xff]
      %v1839 = vld [vmem:[%s543 + $0x123] sm:$0xff]
      %v1840 = vld [vmem:[%s543 + $0x12b] sm:$0x3f]
      %v1841 = vpack.c.bf16 %v1806, %v1805
      %v1842 = vpack.c.bf16 %v1808, %v1807
      %v1843 = vpack.c.bf16 %v1810, %v1809
      %v1844 = vpack.c.bf16 %v1812, %v1811
      %v1845 = vpack.c.bf16 %v1814, %v1813
      %v1846 = vpack.c.bf16 %v1816, %v1815
      %v1847 = vpack.c.bf16 %v1818, %v1817
      %v1848 = vpack.c.bf16 %v1820, %v1819
      %v1849 = vpack.c.bf16 %v1822, %v1821
      %v1850 = vpack.c.bf16 %v1824, %v1823
      %v1851 = vpack.c.bf16 %v1826, %v1825
      %v1852 = vpack.c.bf16 %v1828, %v1827
      %v1853 = vpack.c.bf16 %v1830, %v1829
      %v1854 = vpack.c.bf16 %v1832, %v1831
      %v1855 = vpack.c.bf16 %v1834, %v1833
      %v1856 = vpack.c.bf16 %v1836, %v1835
      %v1857 = vpack.c.bf16 %v1838, %v1837
      %v1858 = vpack.c.bf16 %v1840, %v1839
      %s1859 = scalar_lea.vmem %s1, 256
      %v1860 = vld [vmem:[%s1859] sm:$0xf]
      %v1861 = vld [vmem:[%s1859 + $0x4] sm:$0xf]
      %v1862 = vld [vmem:[%s1859 + $0x8] sm:$0xf]
      %v1863 = vld [vmem:[%s1859 + $0xc] sm:$0xf]
      %v1864 = vld [vmem:[%s1859 + $0x10] sm:$0xf]
      %v1865 = vld [vmem:[%s1859 + $0x14] sm:$0xf]
      %v1866 = vld [vmem:[%s1859 + $0x18] sm:$0xf]
      %v1867 = vld [vmem:[%s1859 + $0x1c] sm:$0xf]
      %v1868 = vld [vmem:[%s1859 + $0x20] sm:$0xf]
      %v1869 = vld [vmem:[%s1859 + $0x24] sm:$0xf]
      %v1870 = vld [vmem:[%s1859 + $0x28] sm:$0xf]
      %v1871 = vld [vmem:[%s1859 + $0x2c] sm:$0xf]
      %v1872 = vld [vmem:[%s1859 + $0x30] sm:$0xf]
      %v1873 = vld [vmem:[%s1859 + $0x34] sm:$0xf]
      %v1874 = vld [vmem:[%s1859 + $0x38] sm:$0xf]
      %v1875 = vld [vmem:[%s1859 + $0x3c] sm:$0xf]
      %v1892 = vunpack.c.l.b16 %v1860
      %v1893 = vunpack.c.l.b16 %v1861
      %v1894 = vunpack.c.l.b16 %v1862
      %v1895 = vunpack.c.l.b16 %v1863
      %v1896 = vunpack.c.l.b16 %v1864
      %v1897 = vunpack.c.l.b16 %v1865
      %v1898 = vunpack.c.l.b16 %v1866
      %v1899 = vunpack.c.l.b16 %v1867
      %v1900 = vunpack.c.l.b16 %v1868
      %v1901 = vunpack.c.l.b16 %v1869
      %v1902 = vunpack.c.l.b16 %v1870
      %v1903 = vunpack.c.l.b16 %v1871
      %v1904 = vunpack.c.l.b16 %v1872
      %v1905 = vunpack.c.l.b16 %v1873
      %v1906 = vunpack.c.l.b16 %v1874
      %v1907 = vunpack.c.l.b16 %v1875
      %v1908 = vpack.c.b16 %v1893, %v1892
      %v1909 = vpack.c.b16 %v1895, %v1894
      %v1910 = vpack.c.b16 %v1897, %v1896
      %v1911 = vpack.c.b16 %v1899, %v1898
      %v1912 = vpack.c.b16 %v1901, %v1900
      %v1913 = vpack.c.b16 %v1903, %v1902
      %v1914 = vpack.c.b16 %v1905, %v1904
      %v1915 = vpack.c.b16 %v1907, %v1906
      %1924 = vmatprep.subr.bf16.mxu0 0
      %1925 = vmatpush1.bf16.msra.mxu0 %v1915
      %1926 = vmatprep.subr.bf16.mxu0 0
      %1927 = vmatpush1.bf16.msra.mxu0 %v1914
      %1928 = vmatprep.subr.bf16.mxu0 0
      %1929 = vmatpush1.bf16.msra.mxu0 %v1913
      %1930 = vmatprep.subr.bf16.mxu0 0
      %1931 = vmatpush1.bf16.msra.mxu0 %v1912
      %1932 = vmatprep.subr.bf16.mxu0 0
      %1933 = vmatpush1.bf16.msra.mxu0 %v1911
      %1934 = vmatprep.subr.bf16.mxu0 0
      %1935 = vmatpush1.bf16.msra.mxu0 %v1910
      %1936 = vmatprep.subr.bf16.mxu0 0
      %1937 = vmatpush1.bf16.msra.mxu0 %v1909
      %1938 = vmatprep.subr.bf16.mxu0 0
      %1939 = vmatpush1.bf16.msra.mxu0 %v1908
      %1940 = vmatprep.subr.bf16.mxu0 0
      %1941 = vmatpush2.bf16.msra.mxu0 0
      %1942 = vmatprep.subr.bf16.mxu0 0
      %1943 = vmatpush2.bf16.msra.mxu0 0
      %1944 = vmatprep.subr.bf16.mxu0 0
      %1945 = vmatpush2.bf16.msra.mxu0 0
      %1946 = vmatprep.subr.bf16.mxu0 0
      %1947 = vmatpush2.bf16.msra.mxu0 0
      %1948 = vmatprep.subr.bf16.mxu0 0
      %1949 = vmatpush2.bf16.msra.mxu0 0
      %1950 = vmatprep.subr.bf16.mxu0 0
      %1951 = vmatpush2.bf16.msra.mxu0 0
      %1952 = vmatprep.subr.bf16.mxu0 0
      %1953 = vmatpush2.bf16.msra.mxu0 0
      %1954 = vmatprep.subr.bf16.mxu0 0
      %1955 = vmatpush2.bf16.msra.mxu0 0
      %1956 = vmatprep.mubr.bf16.mxu0 0
      %1957 = vmatmul.mubr.bf16.gmra.mxu0 %v1841
      %v1958 = vpop.f32.mrf.mxu0
      %v1959 = vadd.f32 0.0, %v1958
      %v1960 = vpop.f32.mrf.mxu0
      %v1961 = vpop.f32.mrf.mxu0
      %v1962 = vadd.f32 0.0, %v1961
      %v1963 = vpop.f32.mrf.mxu0
      %1964 = vmatprep.mubr.bf16.mxu0 0
      %1965 = vmatmul.mubr.bf16.gmra.mxu0 %v1842
      %v1966 = vpop.f32.mrf.mxu0
      %v1967 = vadd.f32 0.0, %v1966
      %v1968 = vpop.f32.mrf.mxu0
      %v1969 = vpop.f32.mrf.mxu0
      %v1970 = vadd.f32 0.0, %v1969
      %v1971 = vpop.f32.mrf.mxu0
      %1972 = vmatprep.mubr.bf16.mxu0 0
      %1973 = vmatmul.mubr.bf16.gmra.mxu0 %v1843
      %v1974 = vpop.f32.mrf.mxu0
      %v1975 = vadd.f32 0.0, %v1974
      %v1976 = vpop.f32.mrf.mxu0
      %v1977 = vpop.f32.mrf.mxu0
      %v1978 = vadd.f32 0.0, %v1977
      %v1979 = vpop.f32.mrf.mxu0
      %1980 = vmatprep.mubr.bf16.mxu0 0
      %1981 = vmatmul.mubr.bf16.gmra.mxu0 %v1844
      %v1982 = vpop.f32.mrf.mxu0
      %v1983 = vadd.f32 0.0, %v1982
      %v1984 = vpop.f32.mrf.mxu0
      %v1985 = vpop.f32.mrf.mxu0
      %v1986 = vadd.f32 0.0, %v1985
      %v1987 = vpop.f32.mrf.mxu0
      %1988 = vmatprep.mubr.bf16.mxu0 0
      %1989 = vmatmul.mubr.bf16.gmra.mxu0 %v1845
      %v1990 = vpop.f32.mrf.mxu0
      %v1991 = vadd.f32 0.0, %v1990
      %v1992 = vpop.f32.mrf.mxu0
      %v1993 = vpop.f32.mrf.mxu0
      %v1994 = vadd.f32 0.0, %v1993
      %v1995 = vpop.f32.mrf.mxu0
      %1996 = vmatprep.mubr.bf16.mxu0 0
      %1997 = vmatmul.mubr.bf16.gmra.mxu0 %v1846
      %v1998 = vpop.f32.mrf.mxu0
      %v1999 = vadd.f32 0.0, %v1998
      %v2000 = vpop.f32.mrf.mxu0
      %v2001 = vpop.f32.mrf.mxu0
      %v2002 = vadd.f32 0.0, %v2001
      %v2003 = vpop.f32.mrf.mxu0
      %2004 = vmatprep.mubr.bf16.mxu0 0
      %2005 = vmatmul.mubr.bf16.gmra.mxu0 %v1847
      %v2006 = vpop.f32.mrf.mxu0
      %v2007 = vadd.f32 0.0, %v2006
      %v2008 = vpop.f32.mrf.mxu0
      %v2009 = vpop.f32.mrf.mxu0
      %v2010 = vadd.f32 0.0, %v2009
      %v2011 = vpop.f32.mrf.mxu0
      %2012 = vmatprep.mubr.bf16.mxu0 0
      %2013 = vmatmul.mubr.bf16.gmra.mxu0 %v1848
      %v2014 = vpop.f32.mrf.mxu0
      %v2015 = vadd.f32 0.0, %v2014
      %v2016 = vpop.f32.mrf.mxu0
      %v2017 = vpop.f32.mrf.mxu0
      %v2018 = vadd.f32 0.0, %v2017
      %v2019 = vpop.f32.mrf.mxu0
      %2020 = vmatprep.mubr.bf16.mxu0 0
      %2021 = vmatmul.mubr.bf16.gmra.mxu0 %v1849
      %v2022 = vpop.f32.mrf.mxu0
      %v2023 = vadd.f32 0.0, %v2022
      %v2024 = vpop.f32.mrf.mxu0
      %v2025 = vpop.f32.mrf.mxu0
      %v2026 = vadd.f32 0.0, %v2025
      %v2027 = vpop.f32.mrf.mxu0
      %2028 = vmatprep.mubr.bf16.mxu0 0
      %2029 = vmatmul.mubr.bf16.gmra.mxu0 %v1850
      %v2030 = vpop.f32.mrf.mxu0
      %v2031 = vadd.f32 0.0, %v2030
      %v2032 = vpop.f32.mrf.mxu0
      %v2033 = vpop.f32.mrf.mxu0
      %v2034 = vadd.f32 0.0, %v2033
      %v2035 = vpop.f32.mrf.mxu0
      %2036 = vmatprep.mubr.bf16.mxu0 0
      %2037 = vmatmul.mubr.bf16.gmra.mxu0 %v1851
      %v2038 = vpop.f32.mrf.mxu0
      %v2039 = vadd.f32 0.0, %v2038
      %v2040 = vpop.f32.mrf.mxu0
      %v2041 = vpop.f32.mrf.mxu0
      %v2042 = vadd.f32 0.0, %v2041
      %v2043 = vpop.f32.mrf.mxu0
      %2044 = vmatprep.mubr.bf16.mxu0 0
      %2045 = vmatmul.mubr.bf16.gmra.mxu0 %v1852
      %v2046 = vpop.f32.mrf.mxu0
      %v2047 = vadd.f32 0.0, %v2046
      %v2048 = vpop.f32.mrf.mxu0
      %v2049 = vpop.f32.mrf.mxu0
      %v2050 = vadd.f32 0.0, %v2049
      %v2051 = vpop.f32.mrf.mxu0
      %2052 = vmatprep.mubr.bf16.mxu0 0
      %2053 = vmatmul.mubr.bf16.gmra.mxu0 %v1853
      %v2054 = vpop.f32.mrf.mxu0
      %v2055 = vadd.f32 0.0, %v2054
      %v2056 = vpop.f32.mrf.mxu0
      %v2057 = vpop.f32.mrf.mxu0
      %v2058 = vadd.f32 0.0, %v2057
      %v2059 = vpop.f32.mrf.mxu0
      %2060 = vmatprep.mubr.bf16.mxu0 0
      %2061 = vmatmul.mubr.bf16.gmra.mxu0 %v1854
      %v2062 = vpop.f32.mrf.mxu0
      %v2063 = vadd.f32 0.0, %v2062
      %v2064 = vpop.f32.mrf.mxu0
      %v2065 = vpop.f32.mrf.mxu0
      %v2066 = vadd.f32 0.0, %v2065
      %v2067 = vpop.f32.mrf.mxu0
      %2068 = vmatprep.mubr.bf16.mxu0 0
      %2069 = vmatmul.mubr.bf16.gmra.mxu0 %v1855
      %v2070 = vpop.f32.mrf.mxu0
      %v2071 = vadd.f32 0.0, %v2070
      %v2072 = vpop.f32.mrf.mxu0
      %v2073 = vpop.f32.mrf.mxu0
      %v2074 = vadd.f32 0.0, %v2073
      %v2075 = vpop.f32.mrf.mxu0
      %2076 = vmatprep.mubr.bf16.mxu0 0
      %2077 = vmatmul.mubr.bf16.gmra.mxu0 %v1856
      %v2078 = vpop.f32.mrf.mxu0
      %v2079 = vadd.f32 0.0, %v2078
      %v2080 = vpop.f32.mrf.mxu0
      %v2081 = vpop.f32.mrf.mxu0
      %v2082 = vadd.f32 0.0, %v2081
      %v2083 = vpop.f32.mrf.mxu0
      %2084 = vmatprep.mubr.bf16.mxu0 0
      %2085 = vmatmul.mubr.bf16.gmra.mxu0 %v1857
      %v2086 = vpop.f32.mrf.mxu0
      %v2087 = vadd.f32 0.0, %v2086
      %v2088 = vpop.f32.mrf.mxu0
      %v2089 = vpop.f32.mrf.mxu0
      %v2090 = vadd.f32 0.0, %v2089
      %v2091 = vpop.f32.mrf.mxu0
      %2092 = vmatprep.mubr.bf16.mxu0 0
      %2093 = vmatmul.mubr.bf16.gmra.mxu0 %v1858
      %v2094 = vpop.f32.mrf.mxu0
      %v2095 = vadd.f32 0.0, %v2094
      %v2096 = vpop.f32.mrf.mxu0
      %v2097 = vpop.f32.mrf.mxu0
      %v2098 = vadd.f32 0.0, %v2097
      %v2099 = vpop.f32.mrf.mxu0
      %2100 = vdwg.mxu0
      %v2101 = vadd.f32 %v1769, %v1959
      %v2102 = vadd.f32 %v1770, %v1962
      %v2103 = vadd.f32 %v1771, %v1967
      %v2104 = vadd.f32 %v1772, %v1970
      %v2105 = vadd.f32 %v1773, %v1975
      %v2106 = vadd.f32 %v1774, %v1978
      %v2107 = vadd.f32 %v1775, %v1983
      %v2108 = vadd.f32 %v1776, %v1986
      %v2109 = vadd.f32 %v1777, %v1991
      %v2110 = vadd.f32 %v1778, %v1994
      %v2111 = vadd.f32 %v1779, %v1999
      %v2112 = vadd.f32 %v1780, %v2002
      %v2113 = vadd.f32 %v1781, %v2007
      %v2114 = vadd.f32 %v1782, %v2010
      %v2115 = vadd.f32 %v1783, %v2015
      %v2116 = vadd.f32 %v1784, %v2018
      %v2117 = vadd.f32 %v1785, %v2023
      %v2118 = vadd.f32 %v1786, %v2026
      %v2119 = vadd.f32 %v1787, %v2031
      %v2120 = vadd.f32 %v1788, %v2034
      %v2121 = vadd.f32 %v1789, %v2039
      %v2122 = vadd.f32 %v1790, %v2042
      %v2123 = vadd.f32 %v1791, %v2047
      %v2124 = vadd.f32 %v1792, %v2050
      %v2125 = vadd.f32 %v1793, %v2055
      %v2126 = vadd.f32 %v1794, %v2058
      %v2127 = vadd.f32 %v1795, %v2063
      %v2128 = vadd.f32 %v1796, %v2066
      %v2129 = vadd.f32 %v1797, %v2071
      %v2130 = vadd.f32 %v1798, %v2074
      %v2131 = vadd.f32 %v1799, %v2079
      %v2132 = vadd.f32 %v1800, %v2082
      %v2133 = vadd.f32 %v1801, %v2087
      %v2134 = vadd.f32 %v1802, %v2090
      %v2135 = vadd.f32 %v1803, %v2095
      %v2136 = vadd.f32 %v1804, %v2098
      %v2137 = vld [vmem:[%s543 + $0x14] sm:$0xff]
      %v2138 = vld [vmem:[%s543 + $0x1c] sm:$0xff]
      %v2139 = vld [vmem:[%s543 + $0x24] sm:$0xff]
      %v2140 = vld [vmem:[%s543 + $0x2c] sm:$0xff]
      %v2141 = vld [vmem:[%s543 + $0x34] sm:$0xff]
      %v2142 = vld [vmem:[%s543 + $0x3c] sm:$0xff]
      %v2143 = vld [vmem:[%s543 + $0x44] sm:$0xff]
      %v2144 = vld [vmem:[%s543 + $0x4c] sm:$0xff]
      %v2145 = vld [vmem:[%s543 + $0x54] sm:$0xff]
      %v2146 = vld [vmem:[%s543 + $0x5c] sm:$0xff]
      %v2147 = vld [vmem:[%s543 + $0x64] sm:$0xff]
      %v2148 = vld [vmem:[%s543 + $0x6c] sm:$0xff]
      %v2149 = vld [vmem:[%s543 + $0x74] sm:$0xff]
      %v2150 = vld [vmem:[%s543 + $0x7c] sm:$0xff]
      %v2151 = vld [vmem:[%s543 + $0x84] sm:$0xff]
      %v2152 = vld [vmem:[%s543 + $0x8c] sm:$0xff]
      %v2153 = vld [vmem:[%s543 + $0x94] sm:$0xff]
      %v2154 = vld [vmem:[%s543 + $0x9c] sm:$0xff]
      %v2155 = vld [vmem:[%s543 + $0xa4] sm:$0xff]
      %v2156 = vld [vmem:[%s543 + $0xac] sm:$0xff]
      %v2157 = vld [vmem:[%s543 + $0xb4] sm:$0xff]
      %v2158 = vld [vmem:[%s543 + $0xbc] sm:$0xff]
      %v2159 = vld [vmem:[%s543 + $0xc4] sm:$0xff]
      %v2160 = vld [vmem:[%s543 + $0xcc] sm:$0xff]
      %v2161 = vld [vmem:[%s543 + $0xd4] sm:$0xff]
      %v2162 = vld [vmem:[%s543 + $0xdc] sm:$0xff]
      %v2163 = vld [vmem:[%s543 + $0xe4] sm:$0xff]
      %v2164 = vld [vmem:[%s543 + $0xec] sm:$0xff]
      %v2165 = vld [vmem:[%s543 + $0xf4] sm:$0xff]
      %v2166 = vld [vmem:[%s543 + $0xfc] sm:$0xff]
      %v2167 = vld [vmem:[%s543 + $0x104] sm:$0xff]
      %v2168 = vld [vmem:[%s543 + $0x10c] sm:$0xff]
      %v2169 = vld [vmem:[%s543 + $0x114] sm:$0xff]
      %v2170 = vld [vmem:[%s543 + $0x11c] sm:$0xff]
      %v2171 = vld [vmem:[%s543 + $0x124] sm:$0xff]
      %v2172 = vld [vmem:[%s543 + $0x12c] sm:$0x3f]
      %v2173 = vpack.c.bf16 %v2138, %v2137
      %v2174 = vpack.c.bf16 %v2140, %v2139
      %v2175 = vpack.c.bf16 %v2142, %v2141
      %v2176 = vpack.c.bf16 %v2144, %v2143
      %v2177 = vpack.c.bf16 %v2146, %v2145
      %v2178 = vpack.c.bf16 %v2148, %v2147
      %v2179 = vpack.c.bf16 %v2150, %v2149
      %v2180 = vpack.c.bf16 %v2152, %v2151
      %v2181 = vpack.c.bf16 %v2154, %v2153
      %v2182 = vpack.c.bf16 %v2156, %v2155
      %v2183 = vpack.c.bf16 %v2158, %v2157
      %v2184 = vpack.c.bf16 %v2160, %v2159
      %v2185 = vpack.c.bf16 %v2162, %v2161
      %v2186 = vpack.c.bf16 %v2164, %v2163
      %v2187 = vpack.c.bf16 %v2166, %v2165
      %v2188 = vpack.c.bf16 %v2168, %v2167
      %v2189 = vpack.c.bf16 %v2170, %v2169
      %v2190 = vpack.c.bf16 %v2172, %v2171
      %s2191 = scalar_lea.vmem %s1, 320
      %v2192 = vld [vmem:[%s2191] sm:$0xf]
      %v2193 = vld [vmem:[%s2191 + $0x4] sm:$0xf]
      %v2194 = vld [vmem:[%s2191 + $0x8] sm:$0xf]
      %v2195 = vld [vmem:[%s2191 + $0xc] sm:$0xf]
      %v2196 = vld [vmem:[%s2191 + $0x10] sm:$0xf]
      %v2197 = vld [vmem:[%s2191 + $0x14] sm:$0xf]
      %v2198 = vld [vmem:[%s2191 + $0x18] sm:$0xf]
      %v2199 = vld [vmem:[%s2191 + $0x1c] sm:$0xf]
      %v2200 = vld [vmem:[%s2191 + $0x20] sm:$0xf]
      %v2201 = vld [vmem:[%s2191 + $0x24] sm:$0xf]
      %v2202 = vld [vmem:[%s2191 + $0x28] sm:$0xf]
      %v2203 = vld [vmem:[%s2191 + $0x2c] sm:$0xf]
      %v2204 = vld [vmem:[%s2191 + $0x30] sm:$0xf]
      %v2205 = vld [vmem:[%s2191 + $0x34] sm:$0xf]
      %v2206 = vld [vmem:[%s2191 + $0x38] sm:$0xf]
      %v2207 = vld [vmem:[%s2191 + $0x3c] sm:$0xf]
      %v2224 = vunpack.c.l.b16 %v2192
      %v2225 = vunpack.c.l.b16 %v2193
      %v2226 = vunpack.c.l.b16 %v2194
      %v2227 = vunpack.c.l.b16 %v2195
      %v2228 = vunpack.c.l.b16 %v2196
      %v2229 = vunpack.c.l.b16 %v2197
      %v2230 = vunpack.c.l.b16 %v2198
      %v2231 = vunpack.c.l.b16 %v2199
      %v2232 = vunpack.c.l.b16 %v2200
      %v2233 = vunpack.c.l.b16 %v2201
      %v2234 = vunpack.c.l.b16 %v2202
      %v2235 = vunpack.c.l.b16 %v2203
      %v2236 = vunpack.c.l.b16 %v2204
      %v2237 = vunpack.c.l.b16 %v2205
      %v2238 = vunpack.c.l.b16 %v2206
      %v2239 = vunpack.c.l.b16 %v2207
      %v2240 = vpack.c.b16 %v2225, %v2224
      %v2241 = vpack.c.b16 %v2227, %v2226
      %v2242 = vpack.c.b16 %v2229, %v2228
      %v2243 = vpack.c.b16 %v2231, %v2230
      %v2244 = vpack.c.b16 %v2233, %v2232
      %v2245 = vpack.c.b16 %v2235, %v2234
      %v2246 = vpack.c.b16 %v2237, %v2236
      %v2247 = vpack.c.b16 %v2239, %v2238
      %2256 = vmatprep.subr.bf16.mxu0 0
      %2257 = vmatpush1.bf16.msra.mxu0 %v2247
      %2258 = vmatprep.subr.bf16.mxu0 0
      %2259 = vmatpush1.bf16.msra.mxu0 %v2246
      %2260 = vmatprep.subr.bf16.mxu0 0
      %2261 = vmatpush1.bf16.msra.mxu0 %v2245
      %2262 = vmatprep.subr.bf16.mxu0 0
      %2263 = vmatpush1.bf16.msra.mxu0 %v2244
      %2264 = vmatprep.subr.bf16.mxu0 0
      %2265 = vmatpush1.bf16.msra.mxu0 %v2243
      %2266 = vmatprep.subr.bf16.mxu0 0
      %2267 = vmatpush1.bf16.msra.mxu0 %v2242
      %2268 = vmatprep.subr.bf16.mxu0 0
      %2269 = vmatpush1.bf16.msra.mxu0 %v2241
      %2270 = vmatprep.subr.bf16.mxu0 0
      %2271 = vmatpush1.bf16.msra.mxu0 %v2240
      %2272 = vmatprep.subr.bf16.mxu0 0
      %2273 = vmatpush2.bf16.msra.mxu0 0
      %2274 = vmatprep.subr.bf16.mxu0 0
      %2275 = vmatpush2.bf16.msra.mxu0 0
      %2276 = vmatprep.subr.bf16.mxu0 0
      %2277 = vmatpush2.bf16.msra.mxu0 0
      %2278 = vmatprep.subr.bf16.mxu0 0
      %2279 = vmatpush2.bf16.msra.mxu0 0
      %2280 = vmatprep.subr.bf16.mxu0 0
      %2281 = vmatpush2.bf16.msra.mxu0 0
      %2282 = vmatprep.subr.bf16.mxu0 0
      %2283 = vmatpush2.bf16.msra.mxu0 0
      %2284 = vmatprep.subr.bf16.mxu0 0
      %2285 = vmatpush2.bf16.msra.mxu0 0
      %2286 = vmatprep.subr.bf16.mxu0 0
      %2287 = vmatpush2.bf16.msra.mxu0 0
      %2288 = vmatprep.mubr.bf16.mxu0 0
      %2289 = vmatmul.mubr.bf16.gmra.mxu0 %v2173
      %v2290 = vpop.f32.mrf.mxu0
      %v2291 = vadd.f32 0.0, %v2290
      %v2292 = vpop.f32.mrf.mxu0
      %v2293 = vpop.f32.mrf.mxu0
      %v2294 = vadd.f32 0.0, %v2293
      %v2295 = vpop.f32.mrf.mxu0
      %2296 = vmatprep.mubr.bf16.mxu0 0
      %2297 = vmatmul.mubr.bf16.gmra.mxu0 %v2174
      %v2298 = vpop.f32.mrf.mxu0
      %v2299 = vadd.f32 0.0, %v2298
      %v2300 = vpop.f32.mrf.mxu0
      %v2301 = vpop.f32.mrf.mxu0
      %v2302 = vadd.f32 0.0, %v2301
      %v2303 = vpop.f32.mrf.mxu0
      %2304 = vmatprep.mubr.bf16.mxu0 0
      %2305 = vmatmul.mubr.bf16.gmra.mxu0 %v2175
      %v2306 = vpop.f32.mrf.mxu0
      %v2307 = vadd.f32 0.0, %v2306
      %v2308 = vpop.f32.mrf.mxu0
      %v2309 = vpop.f32.mrf.mxu0
      %v2310 = vadd.f32 0.0, %v2309
      %v2311 = vpop.f32.mrf.mxu0
      %2312 = vmatprep.mubr.bf16.mxu0 0
      %2313 = vmatmul.mubr.bf16.gmra.mxu0 %v2176
      %v2314 = vpop.f32.mrf.mxu0
      %v2315 = vadd.f32 0.0, %v2314
      %v2316 = vpop.f32.mrf.mxu0
      %v2317 = vpop.f32.mrf.mxu0
      %v2318 = vadd.f32 0.0, %v2317
      %v2319 = vpop.f32.mrf.mxu0
      %2320 = vmatprep.mubr.bf16.mxu0 0
      %2321 = vmatmul.mubr.bf16.gmra.mxu0 %v2177
      %v2322 = vpop.f32.mrf.mxu0
      %v2323 = vadd.f32 0.0, %v2322
      %v2324 = vpop.f32.mrf.mxu0
      %v2325 = vpop.f32.mrf.mxu0
      %v2326 = vadd.f32 0.0, %v2325
      %v2327 = vpop.f32.mrf.mxu0
      %2328 = vmatprep.mubr.bf16.mxu0 0
      %2329 = vmatmul.mubr.bf16.gmra.mxu0 %v2178
      %v2330 = vpop.f32.mrf.mxu0
      %v2331 = vadd.f32 0.0, %v2330
      %v2332 = vpop.f32.mrf.mxu0
      %v2333 = vpop.f32.mrf.mxu0
      %v2334 = vadd.f32 0.0, %v2333
      %v2335 = vpop.f32.mrf.mxu0
      %2336 = vmatprep.mubr.bf16.mxu0 0
      %2337 = vmatmul.mubr.bf16.gmra.mxu0 %v2179
      %v2338 = vpop.f32.mrf.mxu0
      %v2339 = vadd.f32 0.0, %v2338
      %v2340 = vpop.f32.mrf.mxu0
      %v2341 = vpop.f32.mrf.mxu0
      %v2342 = vadd.f32 0.0, %v2341
      %v2343 = vpop.f32.mrf.mxu0
      %2344 = vmatprep.mubr.bf16.mxu0 0
      %2345 = vmatmul.mubr.bf16.gmra.mxu0 %v2180
      %v2346 = vpop.f32.mrf.mxu0
      %v2347 = vadd.f32 0.0, %v2346
      %v2348 = vpop.f32.mrf.mxu0
      %v2349 = vpop.f32.mrf.mxu0
      %v2350 = vadd.f32 0.0, %v2349
      %v2351 = vpop.f32.mrf.mxu0
      %2352 = vmatprep.mubr.bf16.mxu0 0
      %2353 = vmatmul.mubr.bf16.gmra.mxu0 %v2181
      %v2354 = vpop.f32.mrf.mxu0
      %v2355 = vadd.f32 0.0, %v2354
      %v2356 = vpop.f32.mrf.mxu0
      %v2357 = vpop.f32.mrf.mxu0
      %v2358 = vadd.f32 0.0, %v2357
      %v2359 = vpop.f32.mrf.mxu0
      %2360 = vmatprep.mubr.bf16.mxu0 0
      %2361 = vmatmul.mubr.bf16.gmra.mxu0 %v2182
      %v2362 = vpop.f32.mrf.mxu0
      %v2363 = vadd.f32 0.0, %v2362
      %v2364 = vpop.f32.mrf.mxu0
      %v2365 = vpop.f32.mrf.mxu0
      %v2366 = vadd.f32 0.0, %v2365
      %v2367 = vpop.f32.mrf.mxu0
      %2368 = vmatprep.mubr.bf16.mxu0 0
      %2369 = vmatmul.mubr.bf16.gmra.mxu0 %v2183
      %v2370 = vpop.f32.mrf.mxu0
      %v2371 = vadd.f32 0.0, %v2370
      %v2372 = vpop.f32.mrf.mxu0
      %v2373 = vpop.f32.mrf.mxu0
      %v2374 = vadd.f32 0.0, %v2373
      %v2375 = vpop.f32.mrf.mxu0
      %2376 = vmatprep.mubr.bf16.mxu0 0
      %2377 = vmatmul.mubr.bf16.gmra.mxu0 %v2184
      %v2378 = vpop.f32.mrf.mxu0
      %v2379 = vadd.f32 0.0, %v2378
      %v2380 = vpop.f32.mrf.mxu0
      %v2381 = vpop.f32.mrf.mxu0
      %v2382 = vadd.f32 0.0, %v2381
      %v2383 = vpop.f32.mrf.mxu0
      %2384 = vmatprep.mubr.bf16.mxu0 0
      %2385 = vmatmul.mubr.bf16.gmra.mxu0 %v2185
      %v2386 = vpop.f32.mrf.mxu0
      %v2387 = vadd.f32 0.0, %v2386
      %v2388 = vpop.f32.mrf.mxu0
      %v2389 = vpop.f32.mrf.mxu0
      %v2390 = vadd.f32 0.0, %v2389
      %v2391 = vpop.f32.mrf.mxu0
      %2392 = vmatprep.mubr.bf16.mxu0 0
      %2393 = vmatmul.mubr.bf16.gmra.mxu0 %v2186
      %v2394 = vpop.f32.mrf.mxu0
      %v2395 = vadd.f32 0.0, %v2394
      %v2396 = vpop.f32.mrf.mxu0
      %v2397 = vpop.f32.mrf.mxu0
      %v2398 = vadd.f32 0.0, %v2397
      %v2399 = vpop.f32.mrf.mxu0
      %2400 = vmatprep.mubr.bf16.mxu0 0
      %2401 = vmatmul.mubr.bf16.gmra.mxu0 %v2187
      %v2402 = vpop.f32.mrf.mxu0
      %v2403 = vadd.f32 0.0, %v2402
      %v2404 = vpop.f32.mrf.mxu0
      %v2405 = vpop.f32.mrf.mxu0
      %v2406 = vadd.f32 0.0, %v2405
      %v2407 = vpop.f32.mrf.mxu0
      %2408 = vmatprep.mubr.bf16.mxu0 0
      %2409 = vmatmul.mubr.bf16.gmra.mxu0 %v2188
      %v2410 = vpop.f32.mrf.mxu0
      %v2411 = vadd.f32 0.0, %v2410
      %v2412 = vpop.f32.mrf.mxu0
      %v2413 = vpop.f32.mrf.mxu0
      %v2414 = vadd.f32 0.0, %v2413
      %v2415 = vpop.f32.mrf.mxu0
      %2416 = vmatprep.mubr.bf16.mxu0 0
      %2417 = vmatmul.mubr.bf16.gmra.mxu0 %v2189
      %v2418 = vpop.f32.mrf.mxu0
      %v2419 = vadd.f32 0.0, %v2418
      %v2420 = vpop.f32.mrf.mxu0
      %v2421 = vpop.f32.mrf.mxu0
      %v2422 = vadd.f32 0.0, %v2421
      %v2423 = vpop.f32.mrf.mxu0
      %2424 = vmatprep.mubr.bf16.mxu0 0
      %2425 = vmatmul.mubr.bf16.gmra.mxu0 %v2190
      %v2426 = vpop.f32.mrf.mxu0
      %v2427 = vadd.f32 0.0, %v2426
      %v2428 = vpop.f32.mrf.mxu0
      %v2429 = vpop.f32.mrf.mxu0
      %v2430 = vadd.f32 0.0, %v2429
      %v2431 = vpop.f32.mrf.mxu0
      %2432 = vdwg.mxu0
      %v2433 = vadd.f32 %v2101, %v2291
      %v2434 = vadd.f32 %v2102, %v2294
      %v2435 = vadd.f32 %v2103, %v2299
      %v2436 = vadd.f32 %v2104, %v2302
      %v2437 = vadd.f32 %v2105, %v2307
      %v2438 = vadd.f32 %v2106, %v2310
      %v2439 = vadd.f32 %v2107, %v2315
      %v2440 = vadd.f32 %v2108, %v2318
      %v2441 = vadd.f32 %v2109, %v2323
      %v2442 = vadd.f32 %v2110, %v2326
      %v2443 = vadd.f32 %v2111, %v2331
      %v2444 = vadd.f32 %v2112, %v2334
      %v2445 = vadd.f32 %v2113, %v2339
      %v2446 = vadd.f32 %v2114, %v2342
      %v2447 = vadd.f32 %v2115, %v2347
      %v2448 = vadd.f32 %v2116, %v2350
      %v2449 = vadd.f32 %v2117, %v2355
      %v2450 = vadd.f32 %v2118, %v2358
      %v2451 = vadd.f32 %v2119, %v2363
      %v2452 = vadd.f32 %v2120, %v2366
      %v2453 = vadd.f32 %v2121, %v2371
      %v2454 = vadd.f32 %v2122, %v2374
      %v2455 = vadd.f32 %v2123, %v2379
      %v2456 = vadd.f32 %v2124, %v2382
      %v2457 = vadd.f32 %v2125, %v2387
      %v2458 = vadd.f32 %v2126, %v2390
      %v2459 = vadd.f32 %v2127, %v2395
      %v2460 = vadd.f32 %v2128, %v2398
      %v2461 = vadd.f32 %v2129, %v2403
      %v2462 = vadd.f32 %v2130, %v2406
      %v2463 = vadd.f32 %v2131, %v2411
      %v2464 = vadd.f32 %v2132, %v2414
      %v2465 = vadd.f32 %v2133, %v2419
      %v2466 = vadd.f32 %v2134, %v2422
      %v2467 = vadd.f32 %v2135, %v2427
      %v2468 = vadd.f32 %v2136, %v2430
      %v2469 = vld [vmem:[%s543 + $0x24] sm:$0xff]
      %v2470 = vld [vmem:[%s543 + $0x2c] sm:$0xff]
      %v2471 = vld [vmem:[%s543 + $0x34] sm:$0xff]
      %v2472 = vld [vmem:[%s543 + $0x3c] sm:$0xff]
      %v2473 = vld [vmem:[%s543 + $0x44] sm:$0xff]
      %v2474 = vld [vmem:[%s543 + $0x4c] sm:$0xff]
      %v2475 = vld [vmem:[%s543 + $0x54] sm:$0xff]
      %v2476 = vld [vmem:[%s543 + $0x5c] sm:$0xff]
      %v2477 = vld [vmem:[%s543 + $0x64] sm:$0xff]
      %v2478 = vld [vmem:[%s543 + $0x6c] sm:$0xff]
      %v2479 = vld [vmem:[%s543 + $0x74] sm:$0xff]
      %v2480 = vld [vmem:[%s543 + $0x7c] sm:$0xff]
      %v2481 = vld [vmem:[%s543 + $0x84] sm:$0xff]
      %v2482 = vld [vmem:[%s543 + $0x8c] sm:$0xff]
      %v2483 = vld [vmem:[%s543 + $0x94] sm:$0xff]
      %v2484 = vld [vmem:[%s543 + $0x9c] sm:$0xff]
      %v2485 = vld [vmem:[%s543 + $0xa4] sm:$0xff]
      %v2486 = vld [vmem:[%s543 + $0xac] sm:$0xff]
      %v2487 = vld [vmem:[%s543 + $0xb4] sm:$0xff]
      %v2488 = vld [vmem:[%s543 + $0xbc] sm:$0xff]
      %v2489 = vld [vmem:[%s543 + $0xc4] sm:$0xff]
      %v2490 = vld [vmem:[%s543 + $0xcc] sm:$0xff]
      %v2491 = vld [vmem:[%s543 + $0xd4] sm:$0xff]
      %v2492 = vld [vmem:[%s543 + $0xdc] sm:$0xff]
      %v2493 = vld [vmem:[%s543 + $0xe4] sm:$0xff]
      %v2494 = vld [vmem:[%s543 + $0xec] sm:$0xff]
      %v2495 = vld [vmem:[%s543 + $0xf4] sm:$0xff]
      %v2496 = vld [vmem:[%s543 + $0xfc] sm:$0xff]
      %v2497 = vld [vmem:[%s543 + $0x104] sm:$0xff]
      %v2498 = vld [vmem:[%s543 + $0x10c] sm:$0xff]
      %v2499 = vld [vmem:[%s543 + $0x114] sm:$0xff]
      %v2500 = vld [vmem:[%s543 + $0x11c] sm:$0xff]
      %v2501 = vld [vmem:[%s543 + $0x124] sm:$0xff]
      %v2502 = vld [vmem:[%s543 + $0x12c] sm:$0xff]
      %v2503 = vld [vmem:[%s543 + $0x134] sm:$0xff]
      %v2504 = vld [vmem:[%s543 + $0x13c] sm:$0x3f]
      %v2505 = vpack.c.bf16 %v2470, %v2469
      %v2506 = vpack.c.bf16 %v2472, %v2471
      %v2507 = vpack.c.bf16 %v2474, %v2473
      %v2508 = vpack.c.bf16 %v2476, %v2475
      %v2509 = vpack.c.bf16 %v2478, %v2477
      %v2510 = vpack.c.bf16 %v2480, %v2479
      %v2511 = vpack.c.bf16 %v2482, %v2481
      %v2512 = vpack.c.bf16 %v2484, %v2483
      %v2513 = vpack.c.bf16 %v2486, %v2485
      %v2514 = vpack.c.bf16 %v2488, %v2487
      %v2515 = vpack.c.bf16 %v2490, %v2489
      %v2516 = vpack.c.bf16 %v2492, %v2491
      %v2517 = vpack.c.bf16 %v2494, %v2493
      %v2518 = vpack.c.bf16 %v2496, %v2495
      %v2519 = vpack.c.bf16 %v2498, %v2497
      %v2520 = vpack.c.bf16 %v2500, %v2499
      %v2521 = vpack.c.bf16 %v2502, %v2501
      %v2522 = vpack.c.bf16 %v2504, %v2503
      %s2523 = scalar_lea.vmem %s1, 384
      %v2524 = vld [vmem:[%s2523] sm:$0xf]
      %v2525 = vld [vmem:[%s2523 + $0x4] sm:$0xf]
      %v2526 = vld [vmem:[%s2523 + $0x8] sm:$0xf]
      %v2527 = vld [vmem:[%s2523 + $0xc] sm:$0xf]
      %v2528 = vld [vmem:[%s2523 + $0x10] sm:$0xf]
      %v2529 = vld [vmem:[%s2523 + $0x14] sm:$0xf]
      %v2530 = vld [vmem:[%s2523 + $0x18] sm:$0xf]
      %v2531 = vld [vmem:[%s2523 + $0x1c] sm:$0xf]
      %v2532 = vld [vmem:[%s2523 + $0x20] sm:$0xf]
      %v2533 = vld [vmem:[%s2523 + $0x24] sm:$0xf]
      %v2534 = vld [vmem:[%s2523 + $0x28] sm:$0xf]
      %v2535 = vld [vmem:[%s2523 + $0x2c] sm:$0xf]
      %v2536 = vld [vmem:[%s2523 + $0x30] sm:$0xf]
      %v2537 = vld [vmem:[%s2523 + $0x34] sm:$0xf]
      %v2538 = vld [vmem:[%s2523 + $0x38] sm:$0xf]
      %v2539 = vld [vmem:[%s2523 + $0x3c] sm:$0xf]
      %v2556 = vunpack.c.l.b16 %v2524
      %v2557 = vunpack.c.l.b16 %v2525
      %v2558 = vunpack.c.l.b16 %v2526
      %v2559 = vunpack.c.l.b16 %v2527
      %v2560 = vunpack.c.l.b16 %v2528
      %v2561 = vunpack.c.l.b16 %v2529
      %v2562 = vunpack.c.l.b16 %v2530
      %v2563 = vunpack.c.l.b16 %v2531
      %v2564 = vunpack.c.l.b16 %v2532
      %v2565 = vunpack.c.l.b16 %v2533
      %v2566 = vunpack.c.l.b16 %v2534
      %v2567 = vunpack.c.l.b16 %v2535
      %v2568 = vunpack.c.l.b16 %v2536
      %v2569 = vunpack.c.l.b16 %v2537
      %v2570 = vunpack.c.l.b16 %v2538
      %v2571 = vunpack.c.l.b16 %v2539
      %v2572 = vpack.c.b16 %v2557, %v2556
      %v2573 = vpack.c.b16 %v2559, %v2558
      %v2574 = vpack.c.b16 %v2561, %v2560
      %v2575 = vpack.c.b16 %v2563, %v2562
      %v2576 = vpack.c.b16 %v2565, %v2564
      %v2577 = vpack.c.b16 %v2567, %v2566
      %v2578 = vpack.c.b16 %v2569, %v2568
      %v2579 = vpack.c.b16 %v2571, %v2570
      %2588 = vmatprep.subr.bf16.mxu0 0
      %2589 = vmatpush1.bf16.msra.mxu0 %v2579
      %2590 = vmatprep.subr.bf16.mxu0 0
      %2591 = vmatpush1.bf16.msra.mxu0 %v2578
      %2592 = vmatprep.subr.bf16.mxu0 0
      %2593 = vmatpush1.bf16.msra.mxu0 %v2577
      %2594 = vmatprep.subr.bf16.mxu0 0
      %2595 = vmatpush1.bf16.msra.mxu0 %v2576
      %2596 = vmatprep.subr.bf16.mxu0 0
      %2597 = vmatpush1.bf16.msra.mxu0 %v2575
      %2598 = vmatprep.subr.bf16.mxu0 0
      %2599 = vmatpush1.bf16.msra.mxu0 %v2574
      %2600 = vmatprep.subr.bf16.mxu0 0
      %2601 = vmatpush1.bf16.msra.mxu0 %v2573
      %2602 = vmatprep.subr.bf16.mxu0 0
      %2603 = vmatpush1.bf16.msra.mxu0 %v2572
      %2604 = vmatprep.subr.bf16.mxu0 0
      %2605 = vmatpush2.bf16.msra.mxu0 0
      %2606 = vmatprep.subr.bf16.mxu0 0
      %2607 = vmatpush2.bf16.msra.mxu0 0
      %2608 = vmatprep.subr.bf16.mxu0 0
      %2609 = vmatpush2.bf16.msra.mxu0 0
      %2610 = vmatprep.subr.bf16.mxu0 0
      %2611 = vmatpush2.bf16.msra.mxu0 0
      %2612 = vmatprep.subr.bf16.mxu0 0
      %2613 = vmatpush2.bf16.msra.mxu0 0
      %2614 = vmatprep.subr.bf16.mxu0 0
      %2615 = vmatpush2.bf16.msra.mxu0 0
      %2616 = vmatprep.subr.bf16.mxu0 0
      %2617 = vmatpush2.bf16.msra.mxu0 0
      %2618 = vmatprep.subr.bf16.mxu0 0
      %2619 = vmatpush2.bf16.msra.mxu0 0
      %2620 = vmatprep.mubr.bf16.mxu0 0
      %2621 = vmatmul.mubr.bf16.gmra.mxu0 %v2505
      %v2622 = vpop.f32.mrf.mxu0
      %v2623 = vadd.f32 0.0, %v2622
      %v2624 = vpop.f32.mrf.mxu0
      %v2625 = vpop.f32.mrf.mxu0
      %v2626 = vadd.f32 0.0, %v2625
      %v2627 = vpop.f32.mrf.mxu0
      %2628 = vmatprep.mubr.bf16.mxu0 0
      %2629 = vmatmul.mubr.bf16.gmra.mxu0 %v2506
      %v2630 = vpop.f32.mrf.mxu0
      %v2631 = vadd.f32 0.0, %v2630
      %v2632 = vpop.f32.mrf.mxu0
      %v2633 = vpop.f32.mrf.mxu0
      %v2634 = vadd.f32 0.0, %v2633
      %v2635 = vpop.f32.mrf.mxu0
      %2636 = vmatprep.mubr.bf16.mxu0 0
      %2637 = vmatmul.mubr.bf16.gmra.mxu0 %v2507
      %v2638 = vpop.f32.mrf.mxu0
      %v2639 = vadd.f32 0.0, %v2638
      %v2640 = vpop.f32.mrf.mxu0
      %v2641 = vpop.f32.mrf.mxu0
      %v2642 = vadd.f32 0.0, %v2641
      %v2643 = vpop.f32.mrf.mxu0
      %2644 = vmatprep.mubr.bf16.mxu0 0
      %2645 = vmatmul.mubr.bf16.gmra.mxu0 %v2508
      %v2646 = vpop.f32.mrf.mxu0
      %v2647 = vadd.f32 0.0, %v2646
      %v2648 = vpop.f32.mrf.mxu0
      %v2649 = vpop.f32.mrf.mxu0
      %v2650 = vadd.f32 0.0, %v2649
      %v2651 = vpop.f32.mrf.mxu0
      %2652 = vmatprep.mubr.bf16.mxu0 0
      %2653 = vmatmul.mubr.bf16.gmra.mxu0 %v2509
      %v2654 = vpop.f32.mrf.mxu0
      %v2655 = vadd.f32 0.0, %v2654
      %v2656 = vpop.f32.mrf.mxu0
      %v2657 = vpop.f32.mrf.mxu0
      %v2658 = vadd.f32 0.0, %v2657
      %v2659 = vpop.f32.mrf.mxu0
      %2660 = vmatprep.mubr.bf16.mxu0 0
      %2661 = vmatmul.mubr.bf16.gmra.mxu0 %v2510
      %v2662 = vpop.f32.mrf.mxu0
      %v2663 = vadd.f32 0.0, %v2662
      %v2664 = vpop.f32.mrf.mxu0
      %v2665 = vpop.f32.mrf.mxu0
      %v2666 = vadd.f32 0.0, %v2665
      %v2667 = vpop.f32.mrf.mxu0
      %2668 = vmatprep.mubr.bf16.mxu0 0
      %2669 = vmatmul.mubr.bf16.gmra.mxu0 %v2511
      %v2670 = vpop.f32.mrf.mxu0
      %v2671 = vadd.f32 0.0, %v2670
      %v2672 = vpop.f32.mrf.mxu0
      %v2673 = vpop.f32.mrf.mxu0
      %v2674 = vadd.f32 0.0, %v2673
      %v2675 = vpop.f32.mrf.mxu0
      %2676 = vmatprep.mubr.bf16.mxu0 0
      %2677 = vmatmul.mubr.bf16.gmra.mxu0 %v2512
      %v2678 = vpop.f32.mrf.mxu0
      %v2679 = vadd.f32 0.0, %v2678
      %v2680 = vpop.f32.mrf.mxu0
      %v2681 = vpop.f32.mrf.mxu0
      %v2682 = vadd.f32 0.0, %v2681
      %v2683 = vpop.f32.mrf.mxu0
      %2684 = vmatprep.mubr.bf16.mxu0 0
      %2685 = vmatmul.mubr.bf16.gmra.mxu0 %v2513
      %v2686 = vpop.f32.mrf.mxu0
      %v2687 = vadd.f32 0.0, %v2686
      %v2688 = vpop.f32.mrf.mxu0
      %v2689 = vpop.f32.mrf.mxu0
      %v2690 = vadd.f32 0.0, %v2689
      %v2691 = vpop.f32.mrf.mxu0
      %2692 = vmatprep.mubr.bf16.mxu0 0
      %2693 = vmatmul.mubr.bf16.gmra.mxu0 %v2514
      %v2694 = vpop.f32.mrf.mxu0
      %v2695 = vadd.f32 0.0, %v2694
      %v2696 = vpop.f32.mrf.mxu0
      %v2697 = vpop.f32.mrf.mxu0
      %v2698 = vadd.f32 0.0, %v2697
      %v2699 = vpop.f32.mrf.mxu0
      %2700 = vmatprep.mubr.bf16.mxu0 0
      %2701 = vmatmul.mubr.bf16.gmra.mxu0 %v2515
      %v2702 = vpop.f32.mrf.mxu0
      %v2703 = vadd.f32 0.0, %v2702
      %v2704 = vpop.f32.mrf.mxu0
      %v2705 = vpop.f32.mrf.mxu0
      %v2706 = vadd.f32 0.0, %v2705
      %v2707 = vpop.f32.mrf.mxu0
      %2708 = vmatprep.mubr.bf16.mxu0 0
      %2709 = vmatmul.mubr.bf16.gmra.mxu0 %v2516
      %v2710 = vpop.f32.mrf.mxu0
      %v2711 = vadd.f32 0.0, %v2710
      %v2712 = vpop.f32.mrf.mxu0
      %v2713 = vpop.f32.mrf.mxu0
      %v2714 = vadd.f32 0.0, %v2713
      %v2715 = vpop.f32.mrf.mxu0
      %2716 = vmatprep.mubr.bf16.mxu0 0
      %2717 = vmatmul.mubr.bf16.gmra.mxu0 %v2517
      %v2718 = vpop.f32.mrf.mxu0
      %v2719 = vadd.f32 0.0, %v2718
      %v2720 = vpop.f32.mrf.mxu0
      %v2721 = vpop.f32.mrf.mxu0
      %v2722 = vadd.f32 0.0, %v2721
      %v2723 = vpop.f32.mrf.mxu0
      %2724 = vmatprep.mubr.bf16.mxu0 0
      %2725 = vmatmul.mubr.bf16.gmra.mxu0 %v2518
      %v2726 = vpop.f32.mrf.mxu0
      %v2727 = vadd.f32 0.0, %v2726
      %v2728 = vpop.f32.mrf.mxu0
      %v2729 = vpop.f32.mrf.mxu0
      %v2730 = vadd.f32 0.0, %v2729
      %v2731 = vpop.f32.mrf.mxu0
      %2732 = vmatprep.mubr.bf16.mxu0 0
      %2733 = vmatmul.mubr.bf16.gmra.mxu0 %v2519
      %v2734 = vpop.f32.mrf.mxu0
      %v2735 = vadd.f32 0.0, %v2734
      %v2736 = vpop.f32.mrf.mxu0
      %v2737 = vpop.f32.mrf.mxu0
      %v2738 = vadd.f32 0.0, %v2737
      %v2739 = vpop.f32.mrf.mxu0
      %2740 = vmatprep.mubr.bf16.mxu0 0
      %2741 = vmatmul.mubr.bf16.gmra.mxu0 %v2520
      %v2742 = vpop.f32.mrf.mxu0
      %v2743 = vadd.f32 0.0, %v2742
      %v2744 = vpop.f32.mrf.mxu0
      %v2745 = vpop.f32.mrf.mxu0
      %v2746 = vadd.f32 0.0, %v2745
      %v2747 = vpop.f32.mrf.mxu0
      %2748 = vmatprep.mubr.bf16.mxu0 0
      %2749 = vmatmul.mubr.bf16.gmra.mxu0 %v2521
      %v2750 = vpop.f32.mrf.mxu0
      %v2751 = vadd.f32 0.0, %v2750
      %v2752 = vpop.f32.mrf.mxu0
      %v2753 = vpop.f32.mrf.mxu0
      %v2754 = vadd.f32 0.0, %v2753
      %v2755 = vpop.f32.mrf.mxu0
      %2756 = vmatprep.mubr.bf16.mxu0 0
      %2757 = vmatmul.mubr.bf16.gmra.mxu0 %v2522
      %v2758 = vpop.f32.mrf.mxu0
      %v2759 = vadd.f32 0.0, %v2758
      %v2760 = vpop.f32.mrf.mxu0
      %v2761 = vpop.f32.mrf.mxu0
      %v2762 = vadd.f32 0.0, %v2761
      %v2763 = vpop.f32.mrf.mxu0
      %2764 = vdwg.mxu0
      %v2765 = vadd.f32 %v2433, %v2623
      %v2766 = vadd.f32 %v2434, %v2626
      %v2767 = vadd.f32 %v2435, %v2631
      %v2768 = vadd.f32 %v2436, %v2634
      %v2769 = vadd.f32 %v2437, %v2639
      %v2770 = vadd.f32 %v2438, %v2642
      %v2771 = vadd.f32 %v2439, %v2647
      %v2772 = vadd.f32 %v2440, %v2650
      %v2773 = vadd.f32 %v2441, %v2655
      %v2774 = vadd.f32 %v2442, %v2658
      %v2775 = vadd.f32 %v2443, %v2663
      %v2776 = vadd.f32 %v2444, %v2666
      %v2777 = vadd.f32 %v2445, %v2671
      %v2778 = vadd.f32 %v2446, %v2674
      %v2779 = vadd.f32 %v2447, %v2679
      %v2780 = vadd.f32 %v2448, %v2682
      %v2781 = vadd.f32 %v2449, %v2687
      %v2782 = vadd.f32 %v2450, %v2690
      %v2783 = vadd.f32 %v2451, %v2695
      %v2784 = vadd.f32 %v2452, %v2698
      %v2785 = vadd.f32 %v2453, %v2703
      %v2786 = vadd.f32 %v2454, %v2706
      %v2787 = vadd.f32 %v2455, %v2711
      %v2788 = vadd.f32 %v2456, %v2714
      %v2789 = vadd.f32 %v2457, %v2719
      %v2790 = vadd.f32 %v2458, %v2722
      %v2791 = vadd.f32 %v2459, %v2727
      %v2792 = vadd.f32 %v2460, %v2730
      %v2793 = vadd.f32 %v2461, %v2735
      %v2794 = vadd.f32 %v2462, %v2738
      %v2795 = vadd.f32 %v2463, %v2743
      %v2796 = vadd.f32 %v2464, %v2746
      %v2797 = vadd.f32 %v2465, %v2751
      %v2798 = vadd.f32 %v2466, %v2754
      %v2799 = vadd.f32 %v2467, %v2759
      %v2800 = vadd.f32 %v2468, %v2762
      %v2801 = vld [vmem:[%s543 + $0x25] sm:$0xff]
      %v2802 = vld [vmem:[%s543 + $0x2d] sm:$0xff]
      %v2803 = vld [vmem:[%s543 + $0x35] sm:$0xff]
      %v2804 = vld [vmem:[%s543 + $0x3d] sm:$0xff]
      %v2805 = vld [vmem:[%s543 + $0x45] sm:$0xff]
      %v2806 = vld [vmem:[%s543 + $0x4d] sm:$0xff]
      %v2807 = vld [vmem:[%s543 + $0x55] sm:$0xff]
      %v2808 = vld [vmem:[%s543 + $0x5d] sm:$0xff]
      %v2809 = vld [vmem:[%s543 + $0x65] sm:$0xff]
      %v2810 = vld [vmem:[%s543 + $0x6d] sm:$0xff]
      %v2811 = vld [vmem:[%s543 + $0x75] sm:$0xff]
      %v2812 = vld [vmem:[%s543 + $0x7d] sm:$0xff]
      %v2813 = vld [vmem:[%s543 + $0x85] sm:$0xff]
      %v2814 = vld [vmem:[%s543 + $0x8d] sm:$0xff]
      %v2815 = vld [vmem:[%s543 + $0x95] sm:$0xff]
      %v2816 = vld [vmem:[%s543 + $0x9d] sm:$0xff]
      %v2817 = vld [vmem:[%s543 + $0xa5] sm:$0xff]
      %v2818 = vld [vmem:[%s543 + $0xad] sm:$0xff]
      %v2819 = vld [vmem:[%s543 + $0xb5] sm:$0xff]
      %v2820 = vld [vmem:[%s543 + $0xbd] sm:$0xff]
      %v2821 = vld [vmem:[%s543 + $0xc5] sm:$0xff]
      %v2822 = vld [vmem:[%s543 + $0xcd] sm:$0xff]
      %v2823 = vld [vmem:[%s543 + $0xd5] sm:$0xff]
      %v2824 = vld [vmem:[%s543 + $0xdd] sm:$0xff]
      %v2825 = vld [vmem:[%s543 + $0xe5] sm:$0xff]
      %v2826 = vld [vmem:[%s543 + $0xed] sm:$0xff]
      %v2827 = vld [vmem:[%s543 + $0xf5] sm:$0xff]
      %v2828 = vld [vmem:[%s543 + $0xfd] sm:$0xff]
      %v2829 = vld [vmem:[%s543 + $0x105] sm:$0xff]
      %v2830 = vld [vmem:[%s543 + $0x10d] sm:$0xff]
      %v2831 = vld [vmem:[%s543 + $0x115] sm:$0xff]
      %v2832 = vld [vmem:[%s543 + $0x11d] sm:$0xff]
      %v2833 = vld [vmem:[%s543 + $0x125] sm:$0xff]
      %v2834 = vld [vmem:[%s543 + $0x12d] sm:$0xff]
      %v2835 = vld [vmem:[%s543 + $0x135] sm:$0xff]
      %v2836 = vld [vmem:[%s543 + $0x13d] sm:$0x3f]
      %v2837 = vpack.c.bf16 %v2802, %v2801
      %v2838 = vpack.c.bf16 %v2804, %v2803
      %v2839 = vpack.c.bf16 %v2806, %v2805
      %v2840 = vpack.c.bf16 %v2808, %v2807
      %v2841 = vpack.c.bf16 %v2810, %v2809
      %v2842 = vpack.c.bf16 %v2812, %v2811
      %v2843 = vpack.c.bf16 %v2814, %v2813
      %v2844 = vpack.c.bf16 %v2816, %v2815
      %v2845 = vpack.c.bf16 %v2818, %v2817
      %v2846 = vpack.c.bf16 %v2820, %v2819
      %v2847 = vpack.c.bf16 %v2822, %v2821
      %v2848 = vpack.c.bf16 %v2824, %v2823
      %v2849 = vpack.c.bf16 %v2826, %v2825
      %v2850 = vpack.c.bf16 %v2828, %v2827
      %v2851 = vpack.c.bf16 %v2830, %v2829
      %v2852 = vpack.c.bf16 %v2832, %v2831
      %v2853 = vpack.c.bf16 %v2834, %v2833
      %v2854 = vpack.c.bf16 %v2836, %v2835
      %s2855 = scalar_lea.vmem %s1, 448
      %v2856 = vld [vmem:[%s2855] sm:$0xf]
      %v2857 = vld [vmem:[%s2855 + $0x4] sm:$0xf]
      %v2858 = vld [vmem:[%s2855 + $0x8] sm:$0xf]
      %v2859 = vld [vmem:[%s2855 + $0xc] sm:$0xf]
      %v2860 = vld [vmem:[%s2855 + $0x10] sm:$0xf]
      %v2861 = vld [vmem:[%s2855 + $0x14] sm:$0xf]
      %v2862 = vld [vmem:[%s2855 + $0x18] sm:$0xf]
      %v2863 = vld [vmem:[%s2855 + $0x1c] sm:$0xf]
      %v2864 = vld [vmem:[%s2855 + $0x20] sm:$0xf]
      %v2865 = vld [vmem:[%s2855 + $0x24] sm:$0xf]
      %v2866 = vld [vmem:[%s2855 + $0x28] sm:$0xf]
      %v2867 = vld [vmem:[%s2855 + $0x2c] sm:$0xf]
      %v2868 = vld [vmem:[%s2855 + $0x30] sm:$0xf]
      %v2869 = vld [vmem:[%s2855 + $0x34] sm:$0xf]
      %v2870 = vld [vmem:[%s2855 + $0x38] sm:$0xf]
      %v2871 = vld [vmem:[%s2855 + $0x3c] sm:$0xf]
      %v2888 = vunpack.c.l.b16 %v2856
      %v2889 = vunpack.c.l.b16 %v2857
      %v2890 = vunpack.c.l.b16 %v2858
      %v2891 = vunpack.c.l.b16 %v2859
      %v2892 = vunpack.c.l.b16 %v2860
      %v2893 = vunpack.c.l.b16 %v2861
      %v2894 = vunpack.c.l.b16 %v2862
      %v2895 = vunpack.c.l.b16 %v2863
      %v2896 = vunpack.c.l.b16 %v2864
      %v2897 = vunpack.c.l.b16 %v2865
      %v2898 = vunpack.c.l.b16 %v2866
      %v2899 = vunpack.c.l.b16 %v2867
      %v2900 = vunpack.c.l.b16 %v2868
      %v2901 = vunpack.c.l.b16 %v2869
      %v2902 = vunpack.c.l.b16 %v2870
      %v2903 = vunpack.c.l.b16 %v2871
      %v2904 = vpack.c.b16 %v2889, %v2888
      %v2905 = vpack.c.b16 %v2891, %v2890
      %v2906 = vpack.c.b16 %v2893, %v2892
      %v2907 = vpack.c.b16 %v2895, %v2894
      %v2908 = vpack.c.b16 %v2897, %v2896
      %v2909 = vpack.c.b16 %v2899, %v2898
      %v2910 = vpack.c.b16 %v2901, %v2900
      %v2911 = vpack.c.b16 %v2903, %v2902
      %2920 = vmatprep.subr.bf16.mxu0 0
      %2921 = vmatpush1.bf16.msra.mxu0 %v2911
      %2922 = vmatprep.subr.bf16.mxu0 0
      %2923 = vmatpush1.bf16.msra.mxu0 %v2910
      %2924 = vmatprep.subr.bf16.mxu0 0
      %2925 = vmatpush1.bf16.msra.mxu0 %v2909
      %2926 = vmatprep.subr.bf16.mxu0 0
      %2927 = vmatpush1.bf16.msra.mxu0 %v2908
      %2928 = vmatprep.subr.bf16.mxu0 0
      %2929 = vmatpush1.bf16.msra.mxu0 %v2907
      %2930 = vmatprep.subr.bf16.mxu0 0
      %2931 = vmatpush1.bf16.msra.mxu0 %v2906
      %2932 = vmatprep.subr.bf16.mxu0 0
      %2933 = vmatpush1.bf16.msra.mxu0 %v2905
      %2934 = vmatprep.subr.bf16.mxu0 0
      %2935 = vmatpush1.bf16.msra.mxu0 %v2904
      %2936 = vmatprep.subr.bf16.mxu0 0
      %2937 = vmatpush2.bf16.msra.mxu0 0
      %2938 = vmatprep.subr.bf16.mxu0 0
      %2939 = vmatpush2.bf16.msra.mxu0 0
      %2940 = vmatprep.subr.bf16.mxu0 0
      %2941 = vmatpush2.bf16.msra.mxu0 0
      %2942 = vmatprep.subr.bf16.mxu0 0
      %2943 = vmatpush2.bf16.msra.mxu0 0
      %2944 = vmatprep.subr.bf16.mxu0 0
      %2945 = vmatpush2.bf16.msra.mxu0 0
      %2946 = vmatprep.subr.bf16.mxu0 0
      %2947 = vmatpush2.bf16.msra.mxu0 0
      %2948 = vmatprep.subr.bf16.mxu0 0
      %2949 = vmatpush2.bf16.msra.mxu0 0
      %2950 = vmatprep.subr.bf16.mxu0 0
      %2951 = vmatpush2.bf16.msra.mxu0 0
      %2952 = vmatprep.mubr.bf16.mxu0 0
      %2953 = vmatmul.mubr.bf16.gmra.mxu0 %v2837
      %v2954 = vpop.f32.mrf.mxu0
      %v2955 = vadd.f32 0.0, %v2954
      %v2956 = vpop.f32.mrf.mxu0
      %v2957 = vpop.f32.mrf.mxu0
      %v2958 = vadd.f32 0.0, %v2957
      %v2959 = vpop.f32.mrf.mxu0
      %2960 = vmatprep.mubr.bf16.mxu0 0
      %2961 = vmatmul.mubr.bf16.gmra.mxu0 %v2838
      %v2962 = vpop.f32.mrf.mxu0
      %v2963 = vadd.f32 0.0, %v2962
      %v2964 = vpop.f32.mrf.mxu0
      %v2965 = vpop.f32.mrf.mxu0
      %v2966 = vadd.f32 0.0, %v2965
      %v2967 = vpop.f32.mrf.mxu0
      %2968 = vmatprep.mubr.bf16.mxu0 0
      %2969 = vmatmul.mubr.bf16.gmra.mxu0 %v2839
      %v2970 = vpop.f32.mrf.mxu0
      %v2971 = vadd.f32 0.0, %v2970
      %v2972 = vpop.f32.mrf.mxu0
      %v2973 = vpop.f32.mrf.mxu0
      %v2974 = vadd.f32 0.0, %v2973
      %v2975 = vpop.f32.mrf.mxu0
      %2976 = vmatprep.mubr.bf16.mxu0 0
      %2977 = vmatmul.mubr.bf16.gmra.mxu0 %v2840
      %v2978 = vpop.f32.mrf.mxu0
      %v2979 = vadd.f32 0.0, %v2978
      %v2980 = vpop.f32.mrf.mxu0
      %v2981 = vpop.f32.mrf.mxu0
      %v2982 = vadd.f32 0.0, %v2981
      %v2983 = vpop.f32.mrf.mxu0
      %2984 = vmatprep.mubr.bf16.mxu0 0
      %2985 = vmatmul.mubr.bf16.gmra.mxu0 %v2841
      %v2986 = vpop.f32.mrf.mxu0
      %v2987 = vadd.f32 0.0, %v2986
      %v2988 = vpop.f32.mrf.mxu0
      %v2989 = vpop.f32.mrf.mxu0
      %v2990 = vadd.f32 0.0, %v2989
      %v2991 = vpop.f32.mrf.mxu0
      %2992 = vmatprep.mubr.bf16.mxu0 0
      %2993 = vmatmul.mubr.bf16.gmra.mxu0 %v2842
      %v2994 = vpop.f32.mrf.mxu0
      %v2995 = vadd.f32 0.0, %v2994
      %v2996 = vpop.f32.mrf.mxu0
      %v2997 = vpop.f32.mrf.mxu0
      %v2998 = vadd.f32 0.0, %v2997
      %v2999 = vpop.f32.mrf.mxu0
      %3000 = vmatprep.mubr.bf16.mxu0 0
      %3001 = vmatmul.mubr.bf16.gmra.mxu0 %v2843
      %v3002 = vpop.f32.mrf.mxu0
      %v3003 = vadd.f32 0.0, %v3002
      %v3004 = vpop.f32.mrf.mxu0
      %v3005 = vpop.f32.mrf.mxu0
      %v3006 = vadd.f32 0.0, %v3005
      %v3007 = vpop.f32.mrf.mxu0
      %3008 = vmatprep.mubr.bf16.mxu0 0
      %3009 = vmatmul.mubr.bf16.gmra.mxu0 %v2844
      %v3010 = vpop.f32.mrf.mxu0
      %v3011 = vadd.f32 0.0, %v3010
      %v3012 = vpop.f32.mrf.mxu0
      %v3013 = vpop.f32.mrf.mxu0
      %v3014 = vadd.f32 0.0, %v3013
      %v3015 = vpop.f32.mrf.mxu0
      %3016 = vmatprep.mubr.bf16.mxu0 0
      %3017 = vmatmul.mubr.bf16.gmra.mxu0 %v2845
      %v3018 = vpop.f32.mrf.mxu0
      %v3019 = vadd.f32 0.0, %v3018
      %v3020 = vpop.f32.mrf.mxu0
      %v3021 = vpop.f32.mrf.mxu0
      %v3022 = vadd.f32 0.0, %v3021
      %v3023 = vpop.f32.mrf.mxu0
      %3024 = vmatprep.mubr.bf16.mxu0 0
      %3025 = vmatmul.mubr.bf16.gmra.mxu0 %v2846
      %v3026 = vpop.f32.mrf.mxu0
      %v3027 = vadd.f32 0.0, %v3026
      %v3028 = vpop.f32.mrf.mxu0
      %v3029 = vpop.f32.mrf.mxu0
      %v3030 = vadd.f32 0.0, %v3029
      %v3031 = vpop.f32.mrf.mxu0
      %3032 = vmatprep.mubr.bf16.mxu0 0
      %3033 = vmatmul.mubr.bf16.gmra.mxu0 %v2847
      %v3034 = vpop.f32.mrf.mxu0
      %v3035 = vadd.f32 0.0, %v3034
      %v3036 = vpop.f32.mrf.mxu0
      %v3037 = vpop.f32.mrf.mxu0
      %v3038 = vadd.f32 0.0, %v3037
      %v3039 = vpop.f32.mrf.mxu0
      %3040 = vmatprep.mubr.bf16.mxu0 0
      %3041 = vmatmul.mubr.bf16.gmra.mxu0 %v2848
      %v3042 = vpop.f32.mrf.mxu0
      %v3043 = vadd.f32 0.0, %v3042
      %v3044 = vpop.f32.mrf.mxu0
      %v3045 = vpop.f32.mrf.mxu0
      %v3046 = vadd.f32 0.0, %v3045
      %v3047 = vpop.f32.mrf.mxu0
      %3048 = vmatprep.mubr.bf16.mxu0 0
      %3049 = vmatmul.mubr.bf16.gmra.mxu0 %v2849
      %v3050 = vpop.f32.mrf.mxu0
      %v3051 = vadd.f32 0.0, %v3050
      %v3052 = vpop.f32.mrf.mxu0
      %v3053 = vpop.f32.mrf.mxu0
      %v3054 = vadd.f32 0.0, %v3053
      %v3055 = vpop.f32.mrf.mxu0
      %3056 = vmatprep.mubr.bf16.mxu0 0
      %3057 = vmatmul.mubr.bf16.gmra.mxu0 %v2850
      %v3058 = vpop.f32.mrf.mxu0
      %v3059 = vadd.f32 0.0, %v3058
      %v3060 = vpop.f32.mrf.mxu0
      %v3061 = vpop.f32.mrf.mxu0
      %v3062 = vadd.f32 0.0, %v3061
      %v3063 = vpop.f32.mrf.mxu0
      %3064 = vmatprep.mubr.bf16.mxu0 0
      %3065 = vmatmul.mubr.bf16.gmra.mxu0 %v2851
      %v3066 = vpop.f32.mrf.mxu0
      %v3067 = vadd.f32 0.0, %v3066
      %v3068 = vpop.f32.mrf.mxu0
      %v3069 = vpop.f32.mrf.mxu0
      %v3070 = vadd.f32 0.0, %v3069
      %v3071 = vpop.f32.mrf.mxu0
      %3072 = vmatprep.mubr.bf16.mxu0 0
      %3073 = vmatmul.mubr.bf16.gmra.mxu0 %v2852
      %v3074 = vpop.f32.mrf.mxu0
      %v3075 = vadd.f32 0.0, %v3074
      %v3076 = vpop.f32.mrf.mxu0
      %v3077 = vpop.f32.mrf.mxu0
      %v3078 = vadd.f32 0.0, %v3077
      %v3079 = vpop.f32.mrf.mxu0
      %3080 = vmatprep.mubr.bf16.mxu0 0
      %3081 = vmatmul.mubr.bf16.gmra.mxu0 %v2853
      %v3082 = vpop.f32.mrf.mxu0
      %v3083 = vadd.f32 0.0, %v3082
      %v3084 = vpop.f32.mrf.mxu0
      %v3085 = vpop.f32.mrf.mxu0
      %v3086 = vadd.f32 0.0, %v3085
      %v3087 = vpop.f32.mrf.mxu0
      %3088 = vmatprep.mubr.bf16.mxu0 0
      %3089 = vmatmul.mubr.bf16.gmra.mxu0 %v2854
      %v3090 = vpop.f32.mrf.mxu0
      %v3091 = vadd.f32 0.0, %v3090
      %v3092 = vpop.f32.mrf.mxu0
      %v3093 = vpop.f32.mrf.mxu0
      %v3094 = vadd.f32 0.0, %v3093
      %v3095 = vpop.f32.mrf.mxu0
      %3096 = vdwg.mxu0
      %v3097 = vadd.f32 %v2765, %v2955
      %v3098 = vadd.f32 %v2766, %v2958
      %v3099 = vadd.f32 %v2767, %v2963
      %v3100 = vadd.f32 %v2768, %v2966
      %v3101 = vadd.f32 %v2769, %v2971
      %v3102 = vadd.f32 %v2770, %v2974
      %v3103 = vadd.f32 %v2771, %v2979
      %v3104 = vadd.f32 %v2772, %v2982
      %v3105 = vadd.f32 %v2773, %v2987
      %v3106 = vadd.f32 %v2774, %v2990
      %v3107 = vadd.f32 %v2775, %v2995
      %v3108 = vadd.f32 %v2776, %v2998
      %v3109 = vadd.f32 %v2777, %v3003
      %v3110 = vadd.f32 %v2778, %v3006
      %v3111 = vadd.f32 %v2779, %v3011
      %v3112 = vadd.f32 %v2780, %v3014
      %v3113 = vadd.f32 %v2781, %v3019
      %v3114 = vadd.f32 %v2782, %v3022
      %v3115 = vadd.f32 %v2783, %v3027
      %v3116 = vadd.f32 %v2784, %v3030
      %v3117 = vadd.f32 %v2785, %v3035
      %v3118 = vadd.f32 %v2786, %v3038
      %v3119 = vadd.f32 %v2787, %v3043
      %v3120 = vadd.f32 %v2788, %v3046
      %v3121 = vadd.f32 %v2789, %v3051
      %v3122 = vadd.f32 %v2790, %v3054
      %v3123 = vadd.f32 %v2791, %v3059
      %v3124 = vadd.f32 %v2792, %v3062
      %v3125 = vadd.f32 %v2793, %v3067
      %v3126 = vadd.f32 %v2794, %v3070
      %v3127 = vadd.f32 %v2795, %v3075
      %v3128 = vadd.f32 %v2796, %v3078
      %v3129 = vadd.f32 %v2797, %v3083
      %v3130 = vadd.f32 %v2798, %v3086
      %v3131 = vadd.f32 %v2799, %v3091
      %v3132 = vadd.f32 %v2800, %v3094
      %v3133 = vld [vmem:[%s543 + $0x26] sm:$0xff]
      %v3134 = vld [vmem:[%s543 + $0x2e] sm:$0xff]
      %v3135 = vld [vmem:[%s543 + $0x36] sm:$0xff]
      %v3136 = vld [vmem:[%s543 + $0x3e] sm:$0xff]
      %v3137 = vld [vmem:[%s543 + $0x46] sm:$0xff]
      %v3138 = vld [vmem:[%s543 + $0x4e] sm:$0xff]
      %v3139 = vld [vmem:[%s543 + $0x56] sm:$0xff]
      %v3140 = vld [vmem:[%s543 + $0x5e] sm:$0xff]
      %v3141 = vld [vmem:[%s543 + $0x66] sm:$0xff]
      %v3142 = vld [vmem:[%s543 + $0x6e] sm:$0xff]
      %v3143 = vld [vmem:[%s543 + $0x76] sm:$0xff]
      %v3144 = vld [vmem:[%s543 + $0x7e] sm:$0xff]
      %v3145 = vld [vmem:[%s543 + $0x86] sm:$0xff]
      %v3146 = vld [vmem:[%s543 + $0x8e] sm:$0xff]
      %v3147 = vld [vmem:[%s543 + $0x96] sm:$0xff]
      %v3148 = vld [vmem:[%s543 + $0x9e] sm:$0xff]
      %v3149 = vld [vmem:[%s543 + $0xa6] sm:$0xff]
      %v3150 = vld [vmem:[%s543 + $0xae] sm:$0xff]
      %v3151 = vld [vmem:[%s543 + $0xb6] sm:$0xff]
      %v3152 = vld [vmem:[%s543 + $0xbe] sm:$0xff]
      %v3153 = vld [vmem:[%s543 + $0xc6] sm:$0xff]
      %v3154 = vld [vmem:[%s543 + $0xce] sm:$0xff]
      %v3155 = vld [vmem:[%s543 + $0xd6] sm:$0xff]
      %v3156 = vld [vmem:[%s543 + $0xde] sm:$0xff]
      %v3157 = vld [vmem:[%s543 + $0xe6] sm:$0xff]
      %v3158 = vld [vmem:[%s543 + $0xee] sm:$0xff]
      %v3159 = vld [vmem:[%s543 + $0xf6] sm:$0xff]
      %v3160 = vld [vmem:[%s543 + $0xfe] sm:$0xff]
      %v3161 = vld [vmem:[%s543 + $0x106] sm:$0xff]
      %v3162 = vld [vmem:[%s543 + $0x10e] sm:$0xff]
      %v3163 = vld [vmem:[%s543 + $0x116] sm:$0xff]
      %v3164 = vld [vmem:[%s543 + $0x11e] sm:$0xff]
      %v3165 = vld [vmem:[%s543 + $0x126] sm:$0xff]
      %v3166 = vld [vmem:[%s543 + $0x12e] sm:$0xff]
      %v3167 = vld [vmem:[%s543 + $0x136] sm:$0xff]
      %v3168 = vld [vmem:[%s543 + $0x13e] sm:$0x3f]
      %v3169 = vpack.c.bf16 %v3134, %v3133
      %v3170 = vpack.c.bf16 %v3136, %v3135
      %v3171 = vpack.c.bf16 %v3138, %v3137
      %v3172 = vpack.c.bf16 %v3140, %v3139
      %v3173 = vpack.c.bf16 %v3142, %v3141
      %v3174 = vpack.c.bf16 %v3144, %v3143
      %v3175 = vpack.c.bf16 %v3146, %v3145
      %v3176 = vpack.c.bf16 %v3148, %v3147
      %v3177 = vpack.c.bf16 %v3150, %v3149
      %v3178 = vpack.c.bf16 %v3152, %v3151
      %v3179 = vpack.c.bf16 %v3154, %v3153
      %v3180 = vpack.c.bf16 %v3156, %v3155
      %v3181 = vpack.c.bf16 %v3158, %v3157
      %v3182 = vpack.c.bf16 %v3160, %v3159
      %v3183 = vpack.c.bf16 %v3162, %v3161
      %v3184 = vpack.c.bf16 %v3164, %v3163
      %v3185 = vpack.c.bf16 %v3166, %v3165
      %v3186 = vpack.c.bf16 %v3168, %v3167
      %s3187 = scalar_lea.vmem %s1, 512
      %v3188 = vld [vmem:[%s3187] sm:$0xf]
      %v3189 = vld [vmem:[%s3187 + $0x4] sm:$0xf]
      %v3190 = vld [vmem:[%s3187 + $0x8] sm:$0xf]
      %v3191 = vld [vmem:[%s3187 + $0xc] sm:$0xf]
      %v3192 = vld [vmem:[%s3187 + $0x10] sm:$0xf]
      %v3193 = vld [vmem:[%s3187 + $0x14] sm:$0xf]
      %v3194 = vld [vmem:[%s3187 + $0x18] sm:$0xf]
      %v3195 = vld [vmem:[%s3187 + $0x1c] sm:$0xf]
      %v3196 = vld [vmem:[%s3187 + $0x20] sm:$0xf]
      %v3197 = vld [vmem:[%s3187 + $0x24] sm:$0xf]
      %v3198 = vld [vmem:[%s3187 + $0x28] sm:$0xf]
      %v3199 = vld [vmem:[%s3187 + $0x2c] sm:$0xf]
      %v3200 = vld [vmem:[%s3187 + $0x30] sm:$0xf]
      %v3201 = vld [vmem:[%s3187 + $0x34] sm:$0xf]
      %v3202 = vld [vmem:[%s3187 + $0x38] sm:$0xf]
      %v3203 = vld [vmem:[%s3187 + $0x3c] sm:$0xf]
      %v3220 = vunpack.c.l.b16 %v3188
      %v3221 = vunpack.c.l.b16 %v3189
      %v3222 = vunpack.c.l.b16 %v3190
      %v3223 = vunpack.c.l.b16 %v3191
      %v3224 = vunpack.c.l.b16 %v3192
      %v3225 = vunpack.c.l.b16 %v3193
      %v3226 = vunpack.c.l.b16 %v3194
      %v3227 = vunpack.c.l.b16 %v3195
      %v3228 = vunpack.c.l.b16 %v3196
      %v3229 = vunpack.c.l.b16 %v3197
      %v3230 = vunpack.c.l.b16 %v3198
      %v3231 = vunpack.c.l.b16 %v3199
      %v3232 = vunpack.c.l.b16 %v3200
      %v3233 = vunpack.c.l.b16 %v3201
      %v3234 = vunpack.c.l.b16 %v3202
      %v3235 = vunpack.c.l.b16 %v3203
      %v3236 = vpack.c.b16 %v3221, %v3220
      %v3237 = vpack.c.b16 %v3223, %v3222
      %v3238 = vpack.c.b16 %v3225, %v3224
      %v3239 = vpack.c.b16 %v3227, %v3226
      %v3240 = vpack.c.b16 %v3229, %v3228
      %v3241 = vpack.c.b16 %v3231, %v3230
      %v3242 = vpack.c.b16 %v3233, %v3232
      %v3243 = vpack.c.b16 %v3235, %v3234
      %3252 = vmatprep.subr.bf16.mxu0 0
      %3253 = vmatpush1.bf16.msra.mxu0 %v3243
      %3254 = vmatprep.subr.bf16.mxu0 0
      %3255 = vmatpush1.bf16.msra.mxu0 %v3242
      %3256 = vmatprep.subr.bf16.mxu0 0
      %3257 = vmatpush1.bf16.msra.mxu0 %v3241
      %3258 = vmatprep.subr.bf16.mxu0 0
      %3259 = vmatpush1.bf16.msra.mxu0 %v3240
      %3260 = vmatprep.subr.bf16.mxu0 0
      %3261 = vmatpush1.bf16.msra.mxu0 %v3239
      %3262 = vmatprep.subr.bf16.mxu0 0
      %3263 = vmatpush1.bf16.msra.mxu0 %v3238
      %3264 = vmatprep.subr.bf16.mxu0 0
      %3265 = vmatpush1.bf16.msra.mxu0 %v3237
      %3266 = vmatprep.subr.bf16.mxu0 0
      %3267 = vmatpush1.bf16.msra.mxu0 %v3236
      %3268 = vmatprep.subr.bf16.mxu0 0
      %3269 = vmatpush2.bf16.msra.mxu0 0
      %3270 = vmatprep.subr.bf16.mxu0 0
      %3271 = vmatpush2.bf16.msra.mxu0 0
      %3272 = vmatprep.subr.bf16.mxu0 0
      %3273 = vmatpush2.bf16.msra.mxu0 0
      %3274 = vmatprep.subr.bf16.mxu0 0
      %3275 = vmatpush2.bf16.msra.mxu0 0
      %3276 = vmatprep.subr.bf16.mxu0 0
      %3277 = vmatpush2.bf16.msra.mxu0 0
      %3278 = vmatprep.subr.bf16.mxu0 0
      %3279 = vmatpush2.bf16.msra.mxu0 0
      %3280 = vmatprep.subr.bf16.mxu0 0
      %3281 = vmatpush2.bf16.msra.mxu0 0
      %3282 = vmatprep.subr.bf16.mxu0 0
      %3283 = vmatpush2.bf16.msra.mxu0 0
      %3284 = vmatprep.mubr.bf16.mxu0 0
      %3285 = vmatmul.mubr.bf16.gmra.mxu0 %v3169
      %v3286 = vpop.f32.mrf.mxu0
      %v3287 = vadd.f32 0.0, %v3286
      %v3288 = vpop.f32.mrf.mxu0
      %v3289 = vpop.f32.mrf.mxu0
      %v3290 = vadd.f32 0.0, %v3289
      %v3291 = vpop.f32.mrf.mxu0
      %3292 = vmatprep.mubr.bf16.mxu0 0
      %3293 = vmatmul.mubr.bf16.gmra.mxu0 %v3170
      %v3294 = vpop.f32.mrf.mxu0
      %v3295 = vadd.f32 0.0, %v3294
      %v3296 = vpop.f32.mrf.mxu0
      %v3297 = vpop.f32.mrf.mxu0
      %v3298 = vadd.f32 0.0, %v3297
      %v3299 = vpop.f32.mrf.mxu0
      %3300 = vmatprep.mubr.bf16.mxu0 0
      %3301 = vmatmul.mubr.bf16.gmra.mxu0 %v3171
      %v3302 = vpop.f32.mrf.mxu0
      %v3303 = vadd.f32 0.0, %v3302
      %v3304 = vpop.f32.mrf.mxu0
      %v3305 = vpop.f32.mrf.mxu0
      %v3306 = vadd.f32 0.0, %v3305
      %v3307 = vpop.f32.mrf.mxu0
      %3308 = vmatprep.mubr.bf16.mxu0 0
      %3309 = vmatmul.mubr.bf16.gmra.mxu0 %v3172
      %v3310 = vpop.f32.mrf.mxu0
      %v3311 = vadd.f32 0.0, %v3310
      %v3312 = vpop.f32.mrf.mxu0
      %v3313 = vpop.f32.mrf.mxu0
      %v3314 = vadd.f32 0.0, %v3313
      %v3315 = vpop.f32.mrf.mxu0
      %3316 = vmatprep.mubr.bf16.mxu0 0
      %3317 = vmatmul.mubr.bf16.gmra.mxu0 %v3173
      %v3318 = vpop.f32.mrf.mxu0
      %v3319 = vadd.f32 0.0, %v3318
      %v3320 = vpop.f32.mrf.mxu0
      %v3321 = vpop.f32.mrf.mxu0
      %v3322 = vadd.f32 0.0, %v3321
      %v3323 = vpop.f32.mrf.mxu0
      %3324 = vmatprep.mubr.bf16.mxu0 0
      %3325 = vmatmul.mubr.bf16.gmra.mxu0 %v3174
      %v3326 = vpop.f32.mrf.mxu0
      %v3327 = vadd.f32 0.0, %v3326
      %v3328 = vpop.f32.mrf.mxu0
      %v3329 = vpop.f32.mrf.mxu0
      %v3330 = vadd.f32 0.0, %v3329
      %v3331 = vpop.f32.mrf.mxu0
      %3332 = vmatprep.mubr.bf16.mxu0 0
      %3333 = vmatmul.mubr.bf16.gmra.mxu0 %v3175
      %v3334 = vpop.f32.mrf.mxu0
      %v3335 = vadd.f32 0.0, %v3334
      %v3336 = vpop.f32.mrf.mxu0
      %v3337 = vpop.f32.mrf.mxu0
      %v3338 = vadd.f32 0.0, %v3337
      %v3339 = vpop.f32.mrf.mxu0
      %3340 = vmatprep.mubr.bf16.mxu0 0
      %3341 = vmatmul.mubr.bf16.gmra.mxu0 %v3176
      %v3342 = vpop.f32.mrf.mxu0
      %v3343 = vadd.f32 0.0, %v3342
      %v3344 = vpop.f32.mrf.mxu0
      %v3345 = vpop.f32.mrf.mxu0
      %v3346 = vadd.f32 0.0, %v3345
      %v3347 = vpop.f32.mrf.mxu0
      %3348 = vmatprep.mubr.bf16.mxu0 0
      %3349 = vmatmul.mubr.bf16.gmra.mxu0 %v3177
      %v3350 = vpop.f32.mrf.mxu0
      %v3351 = vadd.f32 0.0, %v3350
      %v3352 = vpop.f32.mrf.mxu0
      %v3353 = vpop.f32.mrf.mxu0
      %v3354 = vadd.f32 0.0, %v3353
      %v3355 = vpop.f32.mrf.mxu0
      %3356 = vmatprep.mubr.bf16.mxu0 0
      %3357 = vmatmul.mubr.bf16.gmra.mxu0 %v3178
      %v3358 = vpop.f32.mrf.mxu0
      %v3359 = vadd.f32 0.0, %v3358
      %v3360 = vpop.f32.mrf.mxu0
      %v3361 = vpop.f32.mrf.mxu0
      %v3362 = vadd.f32 0.0, %v3361
      %v3363 = vpop.f32.mrf.mxu0
      %3364 = vmatprep.mubr.bf16.mxu0 0
      %3365 = vmatmul.mubr.bf16.gmra.mxu0 %v3179
      %v3366 = vpop.f32.mrf.mxu0
      %v3367 = vadd.f32 0.0, %v3366
      %v3368 = vpop.f32.mrf.mxu0
      %v3369 = vpop.f32.mrf.mxu0
      %v3370 = vadd.f32 0.0, %v3369
      %v3371 = vpop.f32.mrf.mxu0
      %3372 = vmatprep.mubr.bf16.mxu0 0
      %3373 = vmatmul.mubr.bf16.gmra.mxu0 %v3180
      %v3374 = vpop.f32.mrf.mxu0
      %v3375 = vadd.f32 0.0, %v3374
      %v3376 = vpop.f32.mrf.mxu0
      %v3377 = vpop.f32.mrf.mxu0
      %v3378 = vadd.f32 0.0, %v3377
      %v3379 = vpop.f32.mrf.mxu0
      %3380 = vmatprep.mubr.bf16.mxu0 0
      %3381 = vmatmul.mubr.bf16.gmra.mxu0 %v3181
      %v3382 = vpop.f32.mrf.mxu0
      %v3383 = vadd.f32 0.0, %v3382
      %v3384 = vpop.f32.mrf.mxu0
      %v3385 = vpop.f32.mrf.mxu0
      %v3386 = vadd.f32 0.0, %v3385
      %v3387 = vpop.f32.mrf.mxu0
      %3388 = vmatprep.mubr.bf16.mxu0 0
      %3389 = vmatmul.mubr.bf16.gmra.mxu0 %v3182
      %v3390 = vpop.f32.mrf.mxu0
      %v3391 = vadd.f32 0.0, %v3390
      %v3392 = vpop.f32.mrf.mxu0
      %v3393 = vpop.f32.mrf.mxu0
      %v3394 = vadd.f32 0.0, %v3393
      %v3395 = vpop.f32.mrf.mxu0
      %3396 = vmatprep.mubr.bf16.mxu0 0
      %3397 = vmatmul.mubr.bf16.gmra.mxu0 %v3183
      %v3398 = vpop.f32.mrf.mxu0
      %v3399 = vadd.f32 0.0, %v3398
      %v3400 = vpop.f32.mrf.mxu0
      %v3401 = vpop.f32.mrf.mxu0
      %v3402 = vadd.f32 0.0, %v3401
      %v3403 = vpop.f32.mrf.mxu0
      %3404 = vmatprep.mubr.bf16.mxu0 0
      %3405 = vmatmul.mubr.bf16.gmra.mxu0 %v3184
      %v3406 = vpop.f32.mrf.mxu0
      %v3407 = vadd.f32 0.0, %v3406
      %v3408 = vpop.f32.mrf.mxu0
      %v3409 = vpop.f32.mrf.mxu0
      %v3410 = vadd.f32 0.0, %v3409
      %v3411 = vpop.f32.mrf.mxu0
      %3412 = vmatprep.mubr.bf16.mxu0 0
      %3413 = vmatmul.mubr.bf16.gmra.mxu0 %v3185
      %v3414 = vpop.f32.mrf.mxu0
      %v3415 = vadd.f32 0.0, %v3414
      %v3416 = vpop.f32.mrf.mxu0
      %v3417 = vpop.f32.mrf.mxu0
      %v3418 = vadd.f32 0.0, %v3417
      %v3419 = vpop.f32.mrf.mxu0
      %3420 = vmatprep.mubr.bf16.mxu0 0
      %3421 = vmatmul.mubr.bf16.gmra.mxu0 %v3186
      %v3422 = vpop.f32.mrf.mxu0
      %v3423 = vadd.f32 0.0, %v3422
      %v3424 = vpop.f32.mrf.mxu0
      %v3425 = vpop.f32.mrf.mxu0
      %v3426 = vadd.f32 0.0, %v3425
      %v3427 = vpop.f32.mrf.mxu0
      %3428 = vdwg.mxu0
      %v3429 = vadd.f32 %v3097, %v3287
      %v3430 = vadd.f32 %v3098, %v3290
      %v3431 = vadd.f32 %v3099, %v3295
      %v3432 = vadd.f32 %v3100, %v3298
      %v3433 = vadd.f32 %v3101, %v3303
      %v3434 = vadd.f32 %v3102, %v3306
      %v3435 = vadd.f32 %v3103, %v3311
      %v3436 = vadd.f32 %v3104, %v3314
      %v3437 = vadd.f32 %v3105, %v3319
      %v3438 = vadd.f32 %v3106, %v3322
      %v3439 = vadd.f32 %v3107, %v3327
      %v3440 = vadd.f32 %v3108, %v3330
      %v3441 = vadd.f32 %v3109, %v3335
      %v3442 = vadd.f32 %v3110, %v3338
      %v3443 = vadd.f32 %v3111, %v3343
      %v3444 = vadd.f32 %v3112, %v3346
      %v3445 = vadd.f32 %v3113, %v3351
      %v3446 = vadd.f32 %v3114, %v3354
      %v3447 = vadd.f32 %v3115, %v3359
      %v3448 = vadd.f32 %v3116, %v3362
      %v3449 = vadd.f32 %v3117, %v3367
      %v3450 = vadd.f32 %v3118, %v3370
      %v3451 = vadd.f32 %v3119, %v3375
      %v3452 = vadd.f32 %v3120, %v3378
      %v3453 = vadd.f32 %v3121, %v3383
      %v3454 = vadd.f32 %v3122, %v3386
      %v3455 = vadd.f32 %v3123, %v3391
      %v3456 = vadd.f32 %v3124, %v3394
      %v3457 = vadd.f32 %v3125, %v3399
      %v3458 = vadd.f32 %v3126, %v3402
      %v3459 = vadd.f32 %v3127, %v3407
      %v3460 = vadd.f32 %v3128, %v3410
      %v3461 = vadd.f32 %v3129, %v3415
      %v3462 = vadd.f32 %v3130, %v3418
      %v3463 = vadd.f32 %v3131, %v3423
      %v3464 = vadd.f32 %v3132, %v3426
      %v3465 = vld [vmem:[%s2] sm:$0x1]
      %v3467 = vlaneseq
      %v3468 = vshrl.u32 %v3467, 7
      %v3469 = vsub.s32 0, %v3468
      %v3470 = vrot.slane %v3465, %v3469
      %v3472 = vadd.f32 %v3429, %v3470
      %v3473 = vadd.f32 %v3430, %v3470
      %v3474 = vadd.f32 %v3431, %v3470
      %v3475 = vadd.f32 %v3432, %v3470
      %v3476 = vadd.f32 %v3433, %v3470
      %v3477 = vadd.f32 %v3434, %v3470
      %v3478 = vadd.f32 %v3435, %v3470
      %v3479 = vadd.f32 %v3436, %v3470
      %v3480 = vadd.f32 %v3437, %v3470
      %v3481 = vadd.f32 %v3438, %v3470
      %v3482 = vadd.f32 %v3439, %v3470
      %v3483 = vadd.f32 %v3440, %v3470
      %v3484 = vadd.f32 %v3441, %v3470
      %v3485 = vadd.f32 %v3442, %v3470
      %v3486 = vadd.f32 %v3443, %v3470
      %v3487 = vadd.f32 %v3444, %v3470
      %v3488 = vadd.f32 %v3445, %v3470
      %v3489 = vadd.f32 %v3446, %v3470
      %v3490 = vadd.f32 %v3447, %v3470
      %v3491 = vadd.f32 %v3448, %v3470
      %v3492 = vadd.f32 %v3449, %v3470
      %v3493 = vadd.f32 %v3450, %v3470
      %v3494 = vadd.f32 %v3451, %v3470
      %v3495 = vadd.f32 %v3452, %v3470
      %v3496 = vadd.f32 %v3453, %v3470
      %v3497 = vadd.f32 %v3454, %v3470
      %v3498 = vadd.f32 %v3455, %v3470
      %v3499 = vadd.f32 %v3456, %v3470
      %v3500 = vadd.f32 %v3457, %v3470
      %v3501 = vadd.f32 %v3458, %v3470
      %v3502 = vadd.f32 %v3459, %v3470
      %v3503 = vadd.f32 %v3460, %v3470
      %v3504 = vadd.f32 %v3461, %v3470
      %v3505 = vadd.f32 %v3462, %v3470
      %v3506 = vadd.f32 %v3463, %v3470
      %v3507 = vadd.f32 %v3464, %v3470
      %v3508 = vmax.f32 %v3472, 0.0
      %v3509 = vmax.f32 %v3473, 0.0
      %v3510 = vmax.f32 %v3474, 0.0
      %v3511 = vmax.f32 %v3475, 0.0
      %v3512 = vmax.f32 %v3476, 0.0
      %v3513 = vmax.f32 %v3477, 0.0
      %v3514 = vmax.f32 %v3478, 0.0
      %v3515 = vmax.f32 %v3479, 0.0
      %v3516 = vmax.f32 %v3480, 0.0
      %v3517 = vmax.f32 %v3481, 0.0
      %v3518 = vmax.f32 %v3482, 0.0
      %v3519 = vmax.f32 %v3483, 0.0
      %v3520 = vmax.f32 %v3484, 0.0
      %v3521 = vmax.f32 %v3485, 0.0
      %v3522 = vmax.f32 %v3486, 0.0
      %v3523 = vmax.f32 %v3487, 0.0
      %v3524 = vmax.f32 %v3488, 0.0
      %v3525 = vmax.f32 %v3489, 0.0
      %v3526 = vmax.f32 %v3490, 0.0
      %v3527 = vmax.f32 %v3491, 0.0
      %v3528 = vmax.f32 %v3492, 0.0
      %v3529 = vmax.f32 %v3493, 0.0
      %v3530 = vmax.f32 %v3494, 0.0
      %v3531 = vmax.f32 %v3495, 0.0
      %v3532 = vmax.f32 %v3496, 0.0
      %v3533 = vmax.f32 %v3497, 0.0
      %v3534 = vmax.f32 %v3498, 0.0
      %v3535 = vmax.f32 %v3499, 0.0
      %v3536 = vmax.f32 %v3500, 0.0
      %v3537 = vmax.f32 %v3501, 0.0
      %v3538 = vmax.f32 %v3502, 0.0
      %v3539 = vmax.f32 %v3503, 0.0
      %v3540 = vmax.f32 %v3504, 0.0
      %v3541 = vmax.f32 %v3505, 0.0
      %v3542 = vmax.f32 %v3506, 0.0
      %v3543 = vmax.f32 %v3507, 0.0
      %3544 = vst [vmem:[#allocation2] sm:$0xff] 0.0
      %3545 = vst [vmem:[#allocation2 + $0x8] sm:$0xff] 0.0
      %3546 = vst [vmem:[#allocation2 + $0x10] sm:$0xff] 0.0
      %3547 = vst [vmem:[#allocation2 + $0x18] sm:$0xff] 0.0
      %3548 = vst [vmem:[#allocation2 + $0x20] sm:$0xff] 0.0
      %3549 = vst [vmem:[#allocation2 + $0x28] sm:$0xff] 0.0
      %3550 = vst [vmem:[#allocation2 + $0x30] sm:$0xff] 0.0
      %3551 = vst [vmem:[#allocation2 + $0x38] sm:$0xff] 0.0
      %3552 = vst [vmem:[#allocation2 + $0x40] sm:$0xff] 0.0
      %3553 = vst [vmem:[#allocation2 + $0x48] sm:$0xff] 0.0
      %3554 = vst [vmem:[#allocation2 + $0x50] sm:$0xff] 0.0
      %3555 = vst [vmem:[#allocation2 + $0x58] sm:$0xff] 0.0
      %3556 = vst [vmem:[#allocation2 + $0x60] sm:$0xff] 0.0
      %3557 = vst [vmem:[#allocation2 + $0x68] sm:$0xff] 0.0
      %3558 = vst [vmem:[#allocation2 + $0x70] sm:$0xff] 0.0
      %3559 = vst [vmem:[#allocation2 + $0x78] sm:$0xff] 0.0
      %3560 = vst [vmem:[#allocation2 + $0x80] sm:$0xff] 0.0
      %3561 = vst [vmem:[#allocation2 + $0x88] sm:$0xff] 0.0
      %3562 = vst [vmem:[#allocation2 + $0x90] sm:$0xff] 0.0
      %3563 = vst [vmem:[#allocation2 + $0x98] sm:$0xff] 0.0
      %3564 = vst [vmem:[#allocation2 + $0xa0] sm:$0xff] 0.0
      %3565 = vst [vmem:[#allocation2 + $0xa8] sm:$0xff] 0.0
      %3566 = vst [vmem:[#allocation2 + $0xb0] sm:$0xff] 0.0
      %3567 = vst [vmem:[#allocation2 + $0xb8] sm:$0xff] 0.0
      %3568 = vst [vmem:[#allocation2 + $0xc0] sm:$0xff] 0.0
      %3569 = vst [vmem:[#allocation2 + $0xc8] sm:$0xff] 0.0
      %3570 = vst [vmem:[#allocation2 + $0xd0] sm:$0xff] 0.0
      %3571 = vst [vmem:[#allocation2 + $0xd8] sm:$0xff] 0.0
      %3572 = vst [vmem:[#allocation2 + $0xe0] sm:$0xff] 0.0
      %3573 = vst [vmem:[#allocation2 + $0xe8] sm:$0xff] 0.0
      %3574 = vst [vmem:[#allocation2 + $0xf0] sm:$0xff] 0.0
      %3575 = vst [vmem:[#allocation2 + $0xf8] sm:$0xff] 0.0
      %3576 = vst [vmem:[#allocation2 + $0x100] sm:$0xff] 0.0
      %3577 = vst [vmem:[#allocation2 + $0x108] sm:$0xff] 0.0
      %3578 = vst [vmem:[#allocation2 + $0x110] sm:$0xff] 0.0
      %3579 = vst [vmem:[#allocation2 + $0x118] sm:$0xff] 0.0
      %3580 = vst [vmem:[#allocation2 + $0x120] sm:$0xff] 0.0
      %3581 = vst [vmem:[#allocation2 + $0x128] sm:$0xff] 0.0
      %3582 = vst [vmem:[#allocation2 + $0x130] sm:$0xff] 0.0
      %3583 = vst [vmem:[#allocation2 + $0x138] sm:$0xff] 0.0
      %3584 = vst [vmem:[#allocation2 + $0x140] sm:$0xf] 0.0
      %3585 = vst [vmem:[#allocation2 + $0x13] sm:$0xff] %v3508
      %3586 = vst [vmem:[#allocation2 + $0x1b] sm:$0xff] %v3509
      %3587 = vst [vmem:[#allocation2 + $0x23] sm:$0xff] %v3510
      %3588 = vst [vmem:[#allocation2 + $0x2b] sm:$0xff] %v3511
      %3589 = vst [vmem:[#allocation2 + $0x33] sm:$0xff] %v3512
      %3590 = vst [vmem:[#allocation2 + $0x3b] sm:$0xff] %v3513
      %3591 = vst [vmem:[#allocation2 + $0x43] sm:$0xff] %v3514
      %3592 = vst [vmem:[#allocation2 + $0x4b] sm:$0xff] %v3515
      %3593 = vst [vmem:[#allocation2 + $0x53] sm:$0xff] %v3516
      %3594 = vst [vmem:[#allocation2 + $0x5b] sm:$0xff] %v3517
      %3595 = vst [vmem:[#allocation2 + $0x63] sm:$0xff] %v3518
      %3596 = vst [vmem:[#allocation2 + $0x6b] sm:$0xff] %v3519
      %3597 = vst [vmem:[#allocation2 + $0x73] sm:$0xff] %v3520
      %3598 = vst [vmem:[#allocation2 + $0x7b] sm:$0xff] %v3521
      %3599 = vst [vmem:[#allocation2 + $0x83] sm:$0xff] %v3522
      %3600 = vst [vmem:[#allocation2 + $0x8b] sm:$0xff] %v3523
      %3601 = vst [vmem:[#allocation2 + $0x93] sm:$0xff] %v3524
      %3602 = vst [vmem:[#allocation2 + $0x9b] sm:$0xff] %v3525
      %3603 = vst [vmem:[#allocation2 + $0xa3] sm:$0xff] %v3526
      %3604 = vst [vmem:[#allocation2 + $0xab] sm:$0xff] %v3527
      %3605 = vst [vmem:[#allocation2 + $0xb3] sm:$0xff] %v3528
      %3606 = vst [vmem:[#allocation2 + $0xbb] sm:$0xff] %v3529
      %3607 = vst [vmem:[#allocation2 + $0xc3] sm:$0xff] %v3530
      %3608 = vst [vmem:[#allocation2 + $0xcb] sm:$0xff] %v3531
      %3609 = vst [vmem:[#allocation2 + $0xd3] sm:$0xff] %v3532
      %3610 = vst [vmem:[#allocation2 + $0xdb] sm:$0xff] %v3533
      %3611 = vst [vmem:[#allocation2 + $0xe3] sm:$0xff] %v3534
      %3612 = vst [vmem:[#allocation2 + $0xeb] sm:$0xff] %v3535
      %3613 = vst [vmem:[#allocation2 + $0xf3] sm:$0xff] %v3536
      %3614 = vst [vmem:[#allocation2 + $0xfb] sm:$0xff] %v3537
      %3615 = vst [vmem:[#allocation2 + $0x103] sm:$0xff] %v3538
      %3616 = vst [vmem:[#allocation2 + $0x10b] sm:$0xff] %v3539
      %3617 = vst [vmem:[#allocation2 + $0x113] sm:$0xff] %v3540
      %3618 = vst [vmem:[#allocation2 + $0x11b] sm:$0xff] %v3541
      %3619 = vst [vmem:[#allocation2 + $0x123] sm:$0xff] %v3542
      %3620 = vst [vmem:[#allocation2 + $0x12b] sm:$0x3f] %v3543
      %v3621 = vld [vmem:[%s11] sm:$0xff]
      %v3622 = vld [vmem:[%s11 + $0x8] sm:$0xf]
      %v3623 = vld [vmem:[%s11 + $0xc] sm:$0xff]
      %v3624 = vld [vmem:[%s11 + $0x14] sm:$0xf]
      %v3625 = vld [vmem:[%s11 + $0x18] sm:$0xff]
      %v3626 = vld [vmem:[%s11 + $0x20] sm:$0xf]
      %v3627 = vld [vmem:[%s11 + $0x24] sm:$0xff]
      %v3628 = vld [vmem:[%s11 + $0x2c] sm:$0xf]
      %v3629 = vld [vmem:[%s11 + $0x30] sm:$0xff]
      %v3630 = vld [vmem:[%s11 + $0x38] sm:$0xf]
      %v3631 = vld [vmem:[%s11 + $0x3c] sm:$0xff]
      %v3632 = vld [vmem:[%s11 + $0x44] sm:$0xf]
      %v3633 = vld [vmem:[%s11 + $0x48] sm:$0xff]
      %v3634 = vld [vmem:[%s11 + $0x50] sm:$0xf]
      %v3635 = vld [vmem:[%s11 + $0x54] sm:$0xff]
      %v3636 = vld [vmem:[%s11 + $0x5c] sm:$0xf]
      %v3637 = vld [vmem:[%s11 + $0x60] sm:$0xff]
      %v3638 = vld [vmem:[%s11 + $0x68] sm:$0xf]
      %v3639 = vld [vmem:[%s11 + $0x6c] sm:$0xff]
      %v3640 = vld [vmem:[%s11 + $0x74] sm:$0xf]
      %v3641 = vld [vmem:[%s11 + $0x78] sm:$0xff]
      %v3642 = vld [vmem:[%s11 + $0x80] sm:$0xf]
      %v3643 = vld [vmem:[%s11 + $0x84] sm:$0xff]
      %v3644 = vld [vmem:[%s11 + $0x8c] sm:$0xf]
      %v3645 = vld [vmem:[%s11 + $0x90] sm:$0xff]
      %v3646 = vld [vmem:[%s11 + $0x98] sm:$0xf]
      %v3647 = vld [vmem:[%s11 + $0x9c] sm:$0xff]
      %v3648 = vld [vmem:[%s11 + $0xa4] sm:$0xf]
      %v3649 = vld [vmem:[%s11 + $0xa8] sm:$0xff]
      %v3650 = vld [vmem:[%s11 + $0xb0] sm:$0xf]
      %v3651 = vld [vmem:[%s11 + $0xb4] sm:$0xff]
      %v3652 = vld [vmem:[%s11 + $0xbc] sm:$0xf]
      %v3653 = vld [vmem:[%s11 + $0xc0] sm:$0xff]
      %v3654 = vld [vmem:[%s11 + $0xc8] sm:$0xf]
      %v3655 = vld [vmem:[%s11 + $0xcc] sm:$0xff]
      %v3656 = vld [vmem:[%s11 + $0xd4] sm:$0xf]
      %v3657 = vld [vmem:[%s11 + $0xd8] sm:$0xff]
      %v3658 = vld [vmem:[%s11 + $0xe0] sm:$0xf]
      %v3659 = vld [vmem:[%s11 + $0xe4] sm:$0xff]
      %v3660 = vld [vmem:[%s11 + $0xec] sm:$0xf]
      %v3661 = vld [vmem:[%s11 + $0xf0] sm:$0xff]
      %v3662 = vld [vmem:[%s11 + $0xf8] sm:$0xf]
      %v3663 = vld [vmem:[%s11 + $0xfc] sm:$0xff]
      %v3664 = vld [vmem:[%s11 + $0x104] sm:$0xf]
      %v3665 = vld [vmem:[%s11 + $0x108] sm:$0xff]
      %v3666 = vld [vmem:[%s11 + $0x110] sm:$0xf]
      %v3667 = vld [vmem:[%s11 + $0x114] sm:$0xff]
      %v3668 = vld [vmem:[%s11 + $0x11c] sm:$0xf]
      %v3669 = vld [vmem:[%s11 + $0x120] sm:$0xff]
      %v3670 = vld [vmem:[%s11 + $0x128] sm:$0xf]
      %v3671 = vld [vmem:[%s11 + $0x12c] sm:$0xff]
      %v3672 = vld [vmem:[%s11 + $0x134] sm:$0xf]
      %v3673 = vld [vmem:[%s11 + $0x138] sm:$0xff]
      %v3674 = vld [vmem:[%s11 + $0x140] sm:$0xf]
      %v3675 = vld [vmem:[%s11 + $0x144] sm:$0xff]
      %v3676 = vld [vmem:[%s11 + $0x14c] sm:$0xf]
      %v3677 = vld [vmem:[%s11 + $0x150] sm:$0xff]
      %v3678 = vld [vmem:[%s11 + $0x158] sm:$0xf]
      %v3679 = vld [vmem:[%s11 + $0x15c] sm:$0xff]
      %v3680 = vld [vmem:[%s11 + $0x164] sm:$0xf]
      %v3681 = vld [vmem:[%s11 + $0x168] sm:$0xff]
      %v3682 = vld [vmem:[%s11 + $0x170] sm:$0xf]
      %v3683 = vld [vmem:[%s11 + $0x174] sm:$0xff]
      %v3684 = vld [vmem:[%s11 + $0x17c] sm:$0xf]
      %v3685 = vld [vmem:[#allocation2] sm:$0xff]
      %v3686 = vld [vmem:[#allocation2 + $0x8] sm:$0xff]
      %v3687 = vld [vmem:[#allocation2 + $0x10] sm:$0xff]
      %v3688 = vld [vmem:[#allocation2 + $0x18] sm:$0xff]
      %v3689 = vld [vmem:[#allocation2 + $0x20] sm:$0xff]
      %v3690 = vld [vmem:[#allocation2 + $0x28] sm:$0xff]
      %v3691 = vld [vmem:[#allocation2 + $0x30] sm:$0xff]
      %v3692 = vld [vmem:[#allocation2 + $0x38] sm:$0xff]
      %v3693 = vld [vmem:[#allocation2 + $0x40] sm:$0xff]
      %v3694 = vld [vmem:[#allocation2 + $0x48] sm:$0xff]
      %v3695 = vld [vmem:[#allocation2 + $0x50] sm:$0xff]
      %v3696 = vld [vmem:[#allocation2 + $0x58] sm:$0xff]
      %v3697 = vld [vmem:[#allocation2 + $0x60] sm:$0xff]
      %v3698 = vld [vmem:[#allocation2 + $0x68] sm:$0xff]
      %v3699 = vld [vmem:[#allocation2 + $0x70] sm:$0xff]
      %v3700 = vld [vmem:[#allocation2 + $0x78] sm:$0xff]
      %v3701 = vld [vmem:[#allocation2 + $0x80] sm:$0xff]
      %v3702 = vld [vmem:[#allocation2 + $0x88] sm:$0xff]
      %v3703 = vld [vmem:[#allocation2 + $0x90] sm:$0xff]
      %v3704 = vld [vmem:[#allocation2 + $0x98] sm:$0xff]
      %v3705 = vld [vmem:[#allocation2 + $0xa0] sm:$0xff]
      %v3706 = vld [vmem:[#allocation2 + $0xa8] sm:$0xff]
      %v3707 = vld [vmem:[#allocation2 + $0xb0] sm:$0xff]
      %v3708 = vld [vmem:[#allocation2 + $0xb8] sm:$0xff]
      %v3709 = vld [vmem:[#allocation2 + $0xc0] sm:$0xff]
      %v3710 = vld [vmem:[#allocation2 + $0xc8] sm:$0xff]
      %v3711 = vld [vmem:[#allocation2 + $0xd0] sm:$0xff]
      %v3712 = vld [vmem:[#allocation2 + $0xd8] sm:$0xff]
      %v3713 = vld [vmem:[#allocation2 + $0xe0] sm:$0xff]
      %v3714 = vld [vmem:[#allocation2 + $0xe8] sm:$0xff]
      %v3715 = vld [vmem:[#allocation2 + $0xf0] sm:$0xff]
      %v3716 = vld [vmem:[#allocation2 + $0xf8] sm:$0xff]
      %v3717 = vld [vmem:[#allocation2 + $0x100] sm:$0xff]
      %v3718 = vld [vmem:[#allocation2 + $0x108] sm:$0xff]
      %v3719 = vld [vmem:[#allocation2 + $0x110] sm:$0xff]
      %v3720 = vld [vmem:[#allocation2 + $0x118] sm:$0xff]
      %v3721 = vld [vmem:[#allocation2 + $0x120] sm:$0xff]
      %v3722 = vld [vmem:[#allocation2 + $0x128] sm:$0xff]
      %v3723 = vld [vmem:[#allocation2 + $0x130] sm:$0xff]
      %v3724 = vld [vmem:[#allocation2 + $0x138] sm:$0xff]
      %v3725 = vld [vmem:[#allocation2 + $0x140] sm:$0xf]
      %v3726 = vpack.c.bf16 %v3686, %v3685
      %v3727 = vpack.c.bf16 %v3688, %v3687
      %v3728 = vpack.c.bf16 %v3690, %v3689
      %v3729 = vpack.c.bf16 %v3692, %v3691
      %v3730 = vpack.c.bf16 %v3694, %v3693
      %v3731 = vpack.c.bf16 %v3696, %v3695
      %v3732 = vpack.c.bf16 %v3698, %v3697
      %v3733 = vpack.c.bf16 %v3700, %v3699
      %v3734 = vpack.c.bf16 %v3702, %v3701
      %v3735 = vpack.c.bf16 %v3704, %v3703
      %v3736 = vpack.c.bf16 %v3706, %v3705
      %v3737 = vpack.c.bf16 %v3708, %v3707
      %v3738 = vpack.c.bf16 %v3710, %v3709
      %v3739 = vpack.c.bf16 %v3712, %v3711
      %v3740 = vpack.c.bf16 %v3714, %v3713
      %v3741 = vpack.c.bf16 %v3716, %v3715
      %v3742 = vpack.c.bf16 %v3718, %v3717
      %v3743 = vpack.c.bf16 %v3720, %v3719
      %v3744 = vpack.c.bf16 %v3722, %v3721
      %v3745 = vpack.c.bf16 %v3724, %v3723
      %v3746 = vpack.c.bf16 %v3725, %v3725
      %v3811 = vunpack.c.l.b16 %v3621
      %v3812 = vunpack.c.h.b16 %v3621
      %v3813 = vunpack.c.l.b16 %v3622
      %v3814 = vunpack.c.l.b16 %v3623
      %v3815 = vunpack.c.h.b16 %v3623
      %v3816 = vunpack.c.l.b16 %v3624
      %v3817 = vunpack.c.l.b16 %v3625
      %v3818 = vunpack.c.h.b16 %v3625
      %v3819 = vunpack.c.l.b16 %v3626
      %v3820 = vunpack.c.l.b16 %v3627
      %v3821 = vunpack.c.h.b16 %v3627
      %v3822 = vunpack.c.l.b16 %v3628
      %v3823 = vunpack.c.l.b16 %v3629
      %v3824 = vunpack.c.h.b16 %v3629
      %v3825 = vunpack.c.l.b16 %v3630
      %v3826 = vunpack.c.l.b16 %v3631
      %v3827 = vunpack.c.h.b16 %v3631
      %v3828 = vunpack.c.l.b16 %v3632
      %v3829 = vunpack.c.l.b16 %v3633
      %v3830 = vunpack.c.h.b16 %v3633
      %v3831 = vunpack.c.l.b16 %v3634
      %v3832 = vunpack.c.l.b16 %v3635
      %v3833 = vunpack.c.h.b16 %v3635
      %v3834 = vunpack.c.l.b16 %v3636
      %v3835 = vunpack.c.l.b16 %v3637
      %v3836 = vunpack.c.h.b16 %v3637
      %v3837 = vunpack.c.l.b16 %v3638
      %v3838 = vunpack.c.l.b16 %v3639
      %v3839 = vunpack.c.h.b16 %v3639
      %v3840 = vunpack.c.l.b16 %v3640
      %v3841 = vunpack.c.l.b16 %v3641
      %v3842 = vunpack.c.h.b16 %v3641
      %v3843 = vunpack.c.l.b16 %v3642
      %v3844 = vunpack.c.l.b16 %v3643
      %v3845 = vunpack.c.h.b16 %v3643
      %v3846 = vunpack.c.l.b16 %v3644
      %v3847 = vunpack.c.l.b16 %v3645
      %v3848 = vunpack.c.h.b16 %v3645
      %v3849 = vunpack.c.l.b16 %v3646
      %v3850 = vunpack.c.l.b16 %v3647
      %v3851 = vunpack.c.h.b16 %v3647
      %v3852 = vunpack.c.l.b16 %v3648
      %v3853 = vunpack.c.l.b16 %v3649
      %v3854 = vunpack.c.h.b16 %v3649
      %v3855 = vunpack.c.l.b16 %v3650
      %v3856 = vunpack.c.l.b16 %v3651
      %v3857 = vunpack.c.h.b16 %v3651
      %v3858 = vunpack.c.l.b16 %v3652
      %v3859 = vunpack.c.l.b16 %v3653
      %v3860 = vunpack.c.h.b16 %v3653
      %v3861 = vunpack.c.l.b16 %v3654
      %v3862 = vunpack.c.l.b16 %v3655
      %v3863 = vunpack.c.h.b16 %v3655
      %v3864 = vunpack.c.l.b16 %v3656
      %v3865 = vunpack.c.l.b16 %v3657
      %v3866 = vunpack.c.h.b16 %v3657
      %v3867 = vunpack.c.l.b16 %v3658
      %v3868 = vunpack.c.l.b16 %v3659
      %v3869 = vunpack.c.h.b16 %v3659
      %v3870 = vunpack.c.l.b16 %v3660
      %v3871 = vunpack.c.l.b16 %v3661
      %v3872 = vunpack.c.h.b16 %v3661
      %v3873 = vunpack.c.l.b16 %v3662
      %v3874 = vunpack.c.l.b16 %v3663
      %v3875 = vunpack.c.h.b16 %v3663
      %v3876 = vunpack.c.l.b16 %v3664
      %v3877 = vunpack.c.l.b16 %v3665
      %v3878 = vunpack.c.h.b16 %v3665
      %v3879 = vunpack.c.l.b16 %v3666
      %v3880 = vunpack.c.l.b16 %v3667
      %v3881 = vunpack.c.h.b16 %v3667
      %v3882 = vunpack.c.l.b16 %v3668
      %v3883 = vunpack.c.l.b16 %v3669
      %v3884 = vunpack.c.h.b16 %v3669
      %v3885 = vunpack.c.l.b16 %v3670
      %v3886 = vunpack.c.l.b16 %v3671
      %v3887 = vunpack.c.h.b16 %v3671
      %v3888 = vunpack.c.l.b16 %v3672
      %v3889 = vunpack.c.l.b16 %v3673
      %v3890 = vunpack.c.h.b16 %v3673
      %v3891 = vunpack.c.l.b16 %v3674
      %v3892 = vunpack.c.l.b16 %v3675
      %v3893 = vunpack.c.h.b16 %v3675
      %v3894 = vunpack.c.l.b16 %v3676
      %v3895 = vunpack.c.l.b16 %v3677
      %v3896 = vunpack.c.h.b16 %v3677
      %v3897 = vunpack.c.l.b16 %v3678
      %v3898 = vunpack.c.l.b16 %v3679
      %v3899 = vunpack.c.h.b16 %v3679
      %v3900 = vunpack.c.l.b16 %v3680
      %v3901 = vunpack.c.l.b16 %v3681
      %v3902 = vunpack.c.h.b16 %v3681
      %v3903 = vunpack.c.l.b16 %v3682
      %v3904 = vunpack.c.l.b16 %v3683
      %v3905 = vunpack.c.h.b16 %v3683
      %v3906 = vunpack.c.l.b16 %v3684
      %v3907 = vpack.c.b16 %v3814, %v3811
      %v3908 = vpack.c.b16 %v3815, %v3812
      %v3909 = vpack.c.b16 %v3816, %v3813
      %v3910 = vpack.c.b16 %v3820, %v3817
      %v3911 = vpack.c.b16 %v3821, %v3818
      %v3912 = vpack.c.b16 %v3822, %v3819
      %v3913 = vpack.c.b16 %v3826, %v3823
      %v3914 = vpack.c.b16 %v3827, %v3824
      %v3915 = vpack.c.b16 %v3828, %v3825
      %v3916 = vpack.c.b16 %v3832, %v3829
      %v3917 = vpack.c.b16 %v3833, %v3830
      %v3918 = vpack.c.b16 %v3834, %v3831
      %v3919 = vpack.c.b16 %v3838, %v3835
      %v3920 = vpack.c.b16 %v3839, %v3836
      %v3921 = vpack.c.b16 %v3840, %v3837
      %v3922 = vpack.c.b16 %v3844, %v3841
      %v3923 = vpack.c.b16 %v3845, %v3842
      %v3924 = vpack.c.b16 %v3846, %v3843
      %v3925 = vpack.c.b16 %v3850, %v3847
      %v3926 = vpack.c.b16 %v3851, %v3848
      %v3927 = vpack.c.b16 %v3852, %v3849
      %v3928 = vpack.c.b16 %v3856, %v3853
      %v3929 = vpack.c.b16 %v3857, %v3854
      %v3930 = vpack.c.b16 %v3858, %v3855
      %v3931 = vpack.c.b16 %v3862, %v3859
      %v3932 = vpack.c.b16 %v3863, %v3860
      %v3933 = vpack.c.b16 %v3864, %v3861
      %v3934 = vpack.c.b16 %v3868, %v3865
      %v3935 = vpack.c.b16 %v3869, %v3866
      %v3936 = vpack.c.b16 %v3870, %v3867
      %v3937 = vpack.c.b16 %v3874, %v3871
      %v3938 = vpack.c.b16 %v3875, %v3872
      %v3939 = vpack.c.b16 %v3876, %v3873
      %v3940 = vpack.c.b16 %v3880, %v3877
      %v3941 = vpack.c.b16 %v3881, %v3878
      %v3942 = vpack.c.b16 %v3882, %v3879
      %v3943 = vpack.c.b16 %v3886, %v3883
      %v3944 = vpack.c.b16 %v3887, %v3884
      %v3945 = vpack.c.b16 %v3888, %v3885
      %v3946 = vpack.c.b16 %v3892, %v3889
      %v3947 = vpack.c.b16 %v3893, %v3890
      %v3948 = vpack.c.b16 %v3894, %v3891
      %v3949 = vpack.c.b16 %v3898, %v3895
      %v3950 = vpack.c.b16 %v3899, %v3896
      %v3951 = vpack.c.b16 %v3900, %v3897
      %v3952 = vpack.c.b16 %v3904, %v3901
      %v3953 = vpack.c.b16 %v3905, %v3902
      %v3954 = vpack.c.b16 %v3906, %v3903
      %vm3987 = vcmask 556032
      %v3989 = vsel %vm3987, %v3909, 0
      %v3992 = vsel %vm3987, %v3912, 0
      %v3995 = vsel %vm3987, %v3915, 0
      %v3998 = vsel %vm3987, %v3918, 0
      %v4001 = vsel %vm3987, %v3921, 0
      %v4004 = vsel %vm3987, %v3924, 0
      %v4007 = vsel %vm3987, %v3927, 0
      %v4010 = vsel %vm3987, %v3930, 0
      %v4013 = vsel %vm3987, %v3933, 0
      %v4016 = vsel %vm3987, %v3936, 0
      %v4019 = vsel %vm3987, %v3939, 0
      %v4022 = vsel %vm3987, %v3942, 0
      %v4025 = vsel %vm3987, %v3945, 0
      %v4028 = vsel %vm3987, %v3948, 0
      %v4031 = vsel %vm3987, %v3951, 0
      %v4034 = vsel %vm3987, %v3954, 0
      %vm4036 = vcmask 1041408
      %v4038 = vsel %vm4036, %v3746, 0
      %4040 = vmatprep.subr.bf16.mxu0 0
      %4041 = vmatpush1.bf16.msra.mxu0 %v3733
      %4042 = vmatprep.subr.bf16.mxu0 0
      %4043 = vmatpush1.bf16.msra.mxu0 %v3732
      %4044 = vmatprep.subr.bf16.mxu0 0
      %4045 = vmatpush1.bf16.msra.mxu0 %v3731
      %4046 = vmatprep.subr.bf16.mxu0 0
      %4047 = vmatpush1.bf16.msra.mxu0 %v3730
      %4048 = vmatprep.subr.bf16.mxu0 0
      %4049 = vmatpush1.bf16.msra.mxu0 %v3729
      %4050 = vmatprep.subr.bf16.mxu0 0
      %4051 = vmatpush1.bf16.msra.mxu0 %v3728
      %4052 = vmatprep.subr.bf16.mxu0 0
      %4053 = vmatpush1.bf16.msra.mxu0 %v3727
      %4054 = vmatprep.subr.bf16.mxu0 0
      %4055 = vmatpush1.bf16.msra.mxu0 %v3726
      %4056 = vmatprep.subr.bf16.mxu0 0
      %4057 = vmatpush2.bf16.msra.mxu0 %v3741
      %4058 = vmatprep.subr.bf16.mxu0 0
      %4059 = vmatpush2.bf16.msra.mxu0 %v3740
      %4060 = vmatprep.subr.bf16.mxu0 0
      %4061 = vmatpush2.bf16.msra.mxu0 %v3739
      %4062 = vmatprep.subr.bf16.mxu0 0
      %4063 = vmatpush2.bf16.msra.mxu0 %v3738
      %4064 = vmatprep.subr.bf16.mxu0 0
      %4065 = vmatpush2.bf16.msra.mxu0 %v3737
      %4066 = vmatprep.subr.bf16.mxu0 0
      %4067 = vmatpush2.bf16.msra.mxu0 %v3736
      %4068 = vmatprep.subr.bf16.mxu0 0
      %4069 = vmatpush2.bf16.msra.mxu0 %v3735
      %4070 = vmatprep.subr.bf16.mxu0 0
      %4071 = vmatpush2.bf16.msra.mxu0 %v3734
      %4072 = vmatprep.mubr.bf16.mxu0 %v3908
      %4073 = vmatmul.mubr.bf16.gmra.mxu0 %v3907
      %v4074 = vpop.f32.mrf.mxu0
      %v4075 = vadd.f32 0.0, %v4074
      %v4076 = vpop.f32.mrf.mxu0
      %v4077 = vpop.f32.mrf.mxu0
      %v4078 = vadd.f32 0.0, %v4077
      %v4079 = vpop.f32.mrf.mxu0
      %4080 = vmatprep.mubr.bf16.mxu0 %v3911
      %4081 = vmatmul.mubr.bf16.gmra.mxu0 %v3910
      %v4082 = vpop.f32.mrf.mxu0
      %v4083 = vadd.f32 0.0, %v4082
      %v4084 = vpop.f32.mrf.mxu0
      %v4085 = vpop.f32.mrf.mxu0
      %v4086 = vadd.f32 0.0, %v4085
      %v4087 = vpop.f32.mrf.mxu0
      %4088 = vmatprep.mubr.bf16.mxu0 %v3914
      %4089 = vmatmul.mubr.bf16.gmra.mxu0 %v3913
      %v4090 = vpop.f32.mrf.mxu0
      %v4091 = vadd.f32 0.0, %v4090
      %v4092 = vpop.f32.mrf.mxu0
      %v4093 = vpop.f32.mrf.mxu0
      %v4094 = vadd.f32 0.0, %v4093
      %v4095 = vpop.f32.mrf.mxu0
      %4096 = vmatprep.mubr.bf16.mxu0 %v3917
      %4097 = vmatmul.mubr.bf16.gmra.mxu0 %v3916
      %v4098 = vpop.f32.mrf.mxu0
      %v4099 = vadd.f32 0.0, %v4098
      %v4100 = vpop.f32.mrf.mxu0
      %v4101 = vpop.f32.mrf.mxu0
      %v4102 = vadd.f32 0.0, %v4101
      %v4103 = vpop.f32.mrf.mxu0
      %4104 = vmatprep.mubr.bf16.mxu0 %v3920
      %4105 = vmatmul.mubr.bf16.gmra.mxu0 %v3919
      %v4106 = vpop.f32.mrf.mxu0
      %v4107 = vadd.f32 0.0, %v4106
      %v4108 = vpop.f32.mrf.mxu0
      %v4109 = vpop.f32.mrf.mxu0
      %v4110 = vadd.f32 0.0, %v4109
      %v4111 = vpop.f32.mrf.mxu0
      %4112 = vmatprep.mubr.bf16.mxu0 %v3923
      %4113 = vmatmul.mubr.bf16.gmra.mxu0 %v3922
      %v4114 = vpop.f32.mrf.mxu0
      %v4115 = vadd.f32 0.0, %v4114
      %v4116 = vpop.f32.mrf.mxu0
      %v4117 = vpop.f32.mrf.mxu0
      %v4118 = vadd.f32 0.0, %v4117
      %v4119 = vpop.f32.mrf.mxu0
      %4120 = vmatprep.mubr.bf16.mxu0 %v3926
      %4121 = vmatmul.mubr.bf16.gmra.mxu0 %v3925
      %v4122 = vpop.f32.mrf.mxu0
      %v4123 = vadd.f32 0.0, %v4122
      %v4124 = vpop.f32.mrf.mxu0
      %v4125 = vpop.f32.mrf.mxu0
      %v4126 = vadd.f32 0.0, %v4125
      %v4127 = vpop.f32.mrf.mxu0
      %4128 = vmatprep.mubr.bf16.mxu0 %v3929
      %4129 = vmatmul.mubr.bf16.gmra.mxu0 %v3928
      %v4130 = vpop.f32.mrf.mxu0
      %v4131 = vadd.f32 0.0, %v4130
      %v4132 = vpop.f32.mrf.mxu0
      %v4133 = vpop.f32.mrf.mxu0
      %v4134 = vadd.f32 0.0, %v4133
      %v4135 = vpop.f32.mrf.mxu0
      %4136 = vmatprep.mubr.bf16.mxu0 %v3932
      %4137 = vmatmul.mubr.bf16.gmra.mxu0 %v3931
      %v4138 = vpop.f32.mrf.mxu0
      %v4139 = vadd.f32 0.0, %v4138
      %v4140 = vpop.f32.mrf.mxu0
      %v4141 = vpop.f32.mrf.mxu0
      %v4142 = vadd.f32 0.0, %v4141
      %v4143 = vpop.f32.mrf.mxu0
      %4144 = vmatprep.mubr.bf16.mxu0 %v3935
      %4145 = vmatmul.mubr.bf16.gmra.mxu0 %v3934
      %v4146 = vpop.f32.mrf.mxu0
      %v4147 = vadd.f32 0.0, %v4146
      %v4148 = vpop.f32.mrf.mxu0
      %v4149 = vpop.f32.mrf.mxu0
      %v4150 = vadd.f32 0.0, %v4149
      %v4151 = vpop.f32.mrf.mxu0
      %4152 = vmatprep.mubr.bf16.mxu0 %v3938
      %4153 = vmatmul.mubr.bf16.gmra.mxu0 %v3937
      %v4154 = vpop.f32.mrf.mxu0
      %v4155 = vadd.f32 0.0, %v4154
      %v4156 = vpop.f32.mrf.mxu0
      %v4157 = vpop.f32.mrf.mxu0
      %v4158 = vadd.f32 0.0, %v4157
      %v4159 = vpop.f32.mrf.mxu0
      %4160 = vmatprep.mubr.bf16.mxu0 %v3941
      %4161 = vmatmul.mubr.bf16.gmra.mxu0 %v3940
      %v4162 = vpop.f32.mrf.mxu0
      %v4163 = vadd.f32 0.0, %v4162
      %v4164 = vpop.f32.mrf.mxu0
      %v4165 = vpop.f32.mrf.mxu0
      %v4166 = vadd.f32 0.0, %v4165
      %v4167 = vpop.f32.mrf.mxu0
      %4168 = vmatprep.mubr.bf16.mxu0 %v3944
      %4169 = vmatmul.mubr.bf16.gmra.mxu0 %v3943
      %v4170 = vpop.f32.mrf.mxu0
      %v4171 = vadd.f32 0.0, %v4170
      %v4172 = vpop.f32.mrf.mxu0
      %v4173 = vpop.f32.mrf.mxu0
      %v4174 = vadd.f32 0.0, %v4173
      %v4175 = vpop.f32.mrf.mxu0
      %4176 = vmatprep.mubr.bf16.mxu0 %v3947
      %4177 = vmatmul.mubr.bf16.gmra.mxu0 %v3946
      %v4178 = vpop.f32.mrf.mxu0
      %v4179 = vadd.f32 0.0, %v4178
      %v4180 = vpop.f32.mrf.mxu0
      %v4181 = vpop.f32.mrf.mxu0
      %v4182 = vadd.f32 0.0, %v4181
      %v4183 = vpop.f32.mrf.mxu0
      %4184 = vmatprep.mubr.bf16.mxu0 %v3950
      %4185 = vmatmul.mubr.bf16.gmra.mxu0 %v3949
      %v4186 = vpop.f32.mrf.mxu0
      %v4187 = vadd.f32 0.0, %v4186
      %v4188 = vpop.f32.mrf.mxu0
      %v4189 = vpop.f32.mrf.mxu0
      %v4190 = vadd.f32 0.0, %v4189
      %v4191 = vpop.f32.mrf.mxu0
      %4192 = vmatprep.mubr.bf16.mxu0 %v3953
      %4193 = vmatmul.mubr.bf16.gmra.mxu0 %v3952
      %v4194 = vpop.f32.mrf.mxu0
      %v4195 = vadd.f32 0.0, %v4194
      %v4196 = vpop.f32.mrf.mxu0
      %v4197 = vpop.f32.mrf.mxu0
      %v4198 = vadd.f32 0.0, %v4197
      %v4199 = vpop.f32.mrf.mxu0
      %4200 = vdwg.mxu0
      %4201 = vmatprep.subr.bf16.mxu0 0
      %4202 = vmatpush1.bf16.msra.mxu0 0
      %4203 = vmatprep.subr.bf16.mxu0 0
      %4204 = vmatpush1.bf16.msra.mxu0 0
      %4205 = vmatprep.subr.bf16.mxu0 0
      %4206 = vmatpush1.bf16.msra.mxu0 0
      %4207 = vmatprep.subr.bf16.mxu0 0
      %4208 = vmatpush1.bf16.msra.mxu0 %v4038
      %4209 = vmatprep.subr.bf16.mxu0 0
      %4210 = vmatpush1.bf16.msra.mxu0 %v3745
      %4211 = vmatprep.subr.bf16.mxu0 0
      %4212 = vmatpush1.bf16.msra.mxu0 %v3744
      %4213 = vmatprep.subr.bf16.mxu0 0
      %4214 = vmatpush1.bf16.msra.mxu0 %v3743
      %4215 = vmatprep.subr.bf16.mxu0 0
      %4216 = vmatpush1.bf16.msra.mxu0 %v3742
      %4217 = vmatprep.subr.bf16.mxu0 0
      %4218 = vmatpush2.bf16.msra.mxu0 0
      %4219 = vmatprep.subr.bf16.mxu0 0
      %4220 = vmatpush2.bf16.msra.mxu0 0
      %4221 = vmatprep.subr.bf16.mxu0 0
      %4222 = vmatpush2.bf16.msra.mxu0 0
      %4223 = vmatprep.subr.bf16.mxu0 0
      %4224 = vmatpush2.bf16.msra.mxu0 0
      %4225 = vmatprep.subr.bf16.mxu0 0
      %4226 = vmatpush2.bf16.msra.mxu0 0
      %4227 = vmatprep.subr.bf16.mxu0 0
      %4228 = vmatpush2.bf16.msra.mxu0 0
      %4229 = vmatprep.subr.bf16.mxu0 0
      %4230 = vmatpush2.bf16.msra.mxu0 0
      %4231 = vmatprep.subr.bf16.mxu0 0
      %4232 = vmatpush2.bf16.msra.mxu0 0
      %4233 = vmatprep.mubr.bf16.mxu0 0
      %4234 = vmatmul.mubr.bf16.gmra.mxu0 %v3989
      %v4235 = vpop.f32.mrf.mxu0
      %v4236 = vadd.f32 %v4075, %v4235
      %v4237 = vpop.f32.mrf.mxu0
      %v4238 = vpop.f32.mrf.mxu0
      %v4239 = vadd.f32 %v4078, %v4238
      %v4240 = vpop.f32.mrf.mxu0
      %4241 = vmatprep.mubr.bf16.mxu0 0
      %4242 = vmatmul.mubr.bf16.gmra.mxu0 %v3992
      %v4243 = vpop.f32.mrf.mxu0
      %v4244 = vadd.f32 %v4083, %v4243
      %v4245 = vpop.f32.mrf.mxu0
      %v4246 = vpop.f32.mrf.mxu0
      %v4247 = vadd.f32 %v4086, %v4246
      %v4248 = vpop.f32.mrf.mxu0
      %4249 = vmatprep.mubr.bf16.mxu0 0
      %4250 = vmatmul.mubr.bf16.gmra.mxu0 %v3995
      %v4251 = vpop.f32.mrf.mxu0
      %v4252 = vadd.f32 %v4091, %v4251
      %v4253 = vpop.f32.mrf.mxu0
      %v4254 = vpop.f32.mrf.mxu0
      %v4255 = vadd.f32 %v4094, %v4254
      %v4256 = vpop.f32.mrf.mxu0
      %4257 = vmatprep.mubr.bf16.mxu0 0
      %4258 = vmatmul.mubr.bf16.gmra.mxu0 %v3998
      %v4259 = vpop.f32.mrf.mxu0
      %v4260 = vadd.f32 %v4099, %v4259
      %v4261 = vpop.f32.mrf.mxu0
      %v4262 = vpop.f32.mrf.mxu0
      %v4263 = vadd.f32 %v4102, %v4262
      %v4264 = vpop.f32.mrf.mxu0
      %4265 = vmatprep.mubr.bf16.mxu0 0
      %4266 = vmatmul.mubr.bf16.gmra.mxu0 %v4001
      %v4267 = vpop.f32.mrf.mxu0
      %v4268 = vadd.f32 %v4107, %v4267
      %v4269 = vpop.f32.mrf.mxu0
      %v4270 = vpop.f32.mrf.mxu0
      %v4271 = vadd.f32 %v4110, %v4270
      %v4272 = vpop.f32.mrf.mxu0
      %4273 = vmatprep.mubr.bf16.mxu0 0
      %4274 = vmatmul.mubr.bf16.gmra.mxu0 %v4004
      %v4275 = vpop.f32.mrf.mxu0
      %v4276 = vadd.f32 %v4115, %v4275
      %v4277 = vpop.f32.mrf.mxu0
      %v4278 = vpop.f32.mrf.mxu0
      %v4279 = vadd.f32 %v4118, %v4278
      %v4280 = vpop.f32.mrf.mxu0
      %4281 = vmatprep.mubr.bf16.mxu0 0
      %4282 = vmatmul.mubr.bf16.gmra.mxu0 %v4007
      %v4283 = vpop.f32.mrf.mxu0
      %v4284 = vadd.f32 %v4123, %v4283
      %v4285 = vpop.f32.mrf.mxu0
      %v4286 = vpop.f32.mrf.mxu0
      %v4287 = vadd.f32 %v4126, %v4286
      %v4288 = vpop.f32.mrf.mxu0
      %4289 = vmatprep.mubr.bf16.mxu0 0
      %4290 = vmatmul.mubr.bf16.gmra.mxu0 %v4010
      %v4291 = vpop.f32.mrf.mxu0
      %v4292 = vadd.f32 %v4131, %v4291
      %v4293 = vpop.f32.mrf.mxu0
      %v4294 = vpop.f32.mrf.mxu0
      %v4295 = vadd.f32 %v4134, %v4294
      %v4296 = vpop.f32.mrf.mxu0
      %4297 = vmatprep.mubr.bf16.mxu0 0
      %4298 = vmatmul.mubr.bf16.gmra.mxu0 %v4013
      %v4299 = vpop.f32.mrf.mxu0
      %v4300 = vadd.f32 %v4139, %v4299
      %v4301 = vpop.f32.mrf.mxu0
      %v4302 = vpop.f32.mrf.mxu0
      %v4303 = vadd.f32 %v4142, %v4302
      %v4304 = vpop.f32.mrf.mxu0
      %4305 = vmatprep.mubr.bf16.mxu0 0
      %4306 = vmatmul.mubr.bf16.gmra.mxu0 %v4016
      %v4307 = vpop.f32.mrf.mxu0
      %v4308 = vadd.f32 %v4147, %v4307
      %v4309 = vpop.f32.mrf.mxu0
      %v4310 = vpop.f32.mrf.mxu0
      %v4311 = vadd.f32 %v4150, %v4310
      %v4312 = vpop.f32.mrf.mxu0
      %4313 = vmatprep.mubr.bf16.mxu0 0
      %4314 = vmatmul.mubr.bf16.gmra.mxu0 %v4019
      %v4315 = vpop.f32.mrf.mxu0
      %v4316 = vadd.f32 %v4155, %v4315
      %v4317 = vpop.f32.mrf.mxu0
      %v4318 = vpop.f32.mrf.mxu0
      %v4319 = vadd.f32 %v4158, %v4318
      %v4320 = vpop.f32.mrf.mxu0
      %4321 = vmatprep.mubr.bf16.mxu0 0
      %4322 = vmatmul.mubr.bf16.gmra.mxu0 %v4022
      %v4323 = vpop.f32.mrf.mxu0
      %v4324 = vadd.f32 %v4163, %v4323
      %v4325 = vpop.f32.mrf.mxu0
      %v4326 = vpop.f32.mrf.mxu0
      %v4327 = vadd.f32 %v4166, %v4326
      %v4328 = vpop.f32.mrf.mxu0
      %4329 = vmatprep.mubr.bf16.mxu0 0
      %4330 = vmatmul.mubr.bf16.gmra.mxu0 %v4025
      %v4331 = vpop.f32.mrf.mxu0
      %v4332 = vadd.f32 %v4171, %v4331
      %v4333 = vpop.f32.mrf.mxu0
      %v4334 = vpop.f32.mrf.mxu0
      %v4335 = vadd.f32 %v4174, %v4334
      %v4336 = vpop.f32.mrf.mxu0
      %4337 = vmatprep.mubr.bf16.mxu0 0
      %4338 = vmatmul.mubr.bf16.gmra.mxu0 %v4028
      %v4339 = vpop.f32.mrf.mxu0
      %v4340 = vadd.f32 %v4179, %v4339
      %v4341 = vpop.f32.mrf.mxu0
      %v4342 = vpop.f32.mrf.mxu0
      %v4343 = vadd.f32 %v4182, %v4342
      %v4344 = vpop.f32.mrf.mxu0
      %4345 = vmatprep.mubr.bf16.mxu0 0
      %4346 = vmatmul.mubr.bf16.gmra.mxu0 %v4031
      %v4347 = vpop.f32.mrf.mxu0
      %v4348 = vadd.f32 %v4187, %v4347
      %v4349 = vpop.f32.mrf.mxu0
      %v4350 = vpop.f32.mrf.mxu0
      %v4351 = vadd.f32 %v4190, %v4350
      %v4352 = vpop.f32.mrf.mxu0
      %4353 = vmatprep.mubr.bf16.mxu0 0
      %4354 = vmatmul.mubr.bf16.gmra.mxu0 %v4034
      %v4355 = vpop.f32.mrf.mxu0
      %v4356 = vadd.f32 %v4195, %v4355
      %v4357 = vpop.f32.mrf.mxu0
      %v4358 = vpop.f32.mrf.mxu0
      %v4359 = vadd.f32 %v4198, %v4358
      %v4360 = vpop.f32.mrf.mxu0
      %4361 = vdwg.mxu0
      %v4362 = vmax.f32 %v4236, %v4268
      %v4363 = vmax.f32 %v4239, %v4271
      %v4364 = vmax.f32 %v4244, %v4276
      %v4365 = vmax.f32 %v4247, %v4279
      %v4366 = vmax.f32 %v4252, %v4284
      %v4367 = vmax.f32 %v4255, %v4287
      %v4368 = vmax.f32 %v4260, %v4292
      %v4369 = vmax.f32 %v4263, %v4295
      %v4370 = vmax.f32 %v4300, %v4332
      %v4371 = vmax.f32 %v4303, %v4335
      %v4372 = vmax.f32 %v4308, %v4340
      %v4373 = vmax.f32 %v4311, %v4343
      %v4374 = vmax.f32 %v4316, %v4348
      %v4375 = vmax.f32 %v4319, %v4351
      %v4376 = vmax.f32 %v4324, %v4356
      %v4377 = vmax.f32 %v4327, %v4359
      %v4378 = vmax.f32 %v4362, %v4370
      %v4379 = vmax.f32 %v4363, %v4371
      %v4380 = vmax.f32 %v4364, %v4372
      %v4381 = vmax.f32 %v4365, %v4373
      %v4382 = vmax.f32 %v4366, %v4374
      %v4383 = vmax.f32 %v4367, %v4375
      %v4384 = vmax.f32 %v4368, %v4376
      %v4385 = vmax.f32 %v4369, %v4377
      %v4386 = vld [vmem:[%s12] sm:$0xf]
      %v4387 = vld [vmem:[%s12 + $0x4] sm:$0xf]
      %v4388 = vld [vmem:[%s12 + $0x8] sm:$0xf]
      %v4389 = vld [vmem:[%s12 + $0xc] sm:$0xf]
      %v4390 = vld [vmem:[%s12 + $0x10] sm:$0xf]
      %v4391 = vld [vmem:[%s12 + $0x14] sm:$0xf]
      %v4392 = vld [vmem:[%s12 + $0x18] sm:$0xf]
      %v4393 = vld [vmem:[%s12 + $0x1c] sm:$0xf]
      %v4394 = vld [vmem:[%s12 + $0x20] sm:$0xf]
      %v4395 = vld [vmem:[%s12 + $0x24] sm:$0xf]
      %v4396 = vld [vmem:[%s12 + $0x28] sm:$0xf]
      %v4397 = vld [vmem:[%s12 + $0x2c] sm:$0xf]
      %v4398 = vld [vmem:[%s12 + $0x30] sm:$0x3]
      %v4399 = vpack.c.bf16 %v4379, %v4378
      %v4400 = vpack.c.bf16 %v4381, %v4380
      %v4401 = vpack.c.bf16 %v4383, %v4382
      %v4402 = vpack.c.bf16 %v4385, %v4384
      %v4416 = vunpack.c.l.b16 %v4386
      %v4417 = vunpack.c.l.b16 %v4387
      %v4418 = vunpack.c.l.b16 %v4388
      %v4419 = vunpack.c.l.b16 %v4389
      %v4420 = vunpack.c.l.b16 %v4390
      %v4421 = vunpack.c.l.b16 %v4391
      %v4422 = vunpack.c.l.b16 %v4392
      %v4423 = vunpack.c.l.b16 %v4393
      %v4424 = vunpack.c.l.b16 %v4394
      %v4425 = vunpack.c.l.b16 %v4395
      %v4426 = vunpack.c.l.b16 %v4396
      %v4427 = vunpack.c.l.b16 %v4397
      %v4428 = vunpack.c.l.b16 %v4398
      %v4429 = vpack.c.b16 %v4417, %v4416
      %v4430 = vpack.c.b16 %v4419, %v4418
      %v4431 = vpack.c.b16 %v4421, %v4420
      %v4432 = vpack.c.b16 %v4423, %v4422
      %v4433 = vpack.c.b16 %v4425, %v4424
      %v4434 = vpack.c.b16 %v4427, %v4426
      %v4435 = vpack.c.b16 %v4428, %v4428
      %vm4436 = vcmask 523264
      %v4438 = vsel %vm4436, %v4429, 0
      %v4441 = vsel %vm4436, %v4430, 0
      %v4444 = vsel %vm4436, %v4431, 0
      %v4447 = vsel %vm4436, %v4432, 0
      %v4450 = vsel %vm4436, %v4433, 0
      %v4453 = vsel %vm4436, %v4434, 0
      %v4456 = vsel %vm4436, %v4435, 0
      %4458 = vmatprep.subr.bf16.mxu0 0
      %4459 = vmatpush1.bf16.msra.mxu0 0
      %4460 = vmatprep.subr.bf16.mxu0 0
      %4461 = vmatpush1.bf16.msra.mxu0 0
      %4462 = vmatprep.subr.bf16.mxu0 0
      %4463 = vmatpush1.bf16.msra.mxu0 0
      %4464 = vmatprep.subr.bf16.mxu0 0
      %4465 = vmatpush1.bf16.msra.mxu0 0
      %4466 = vmatprep.subr.bf16.mxu0 0
      %4467 = vmatpush1.bf16.msra.mxu0 %v4402
      %4468 = vmatprep.subr.bf16.mxu0 0
      %4469 = vmatpush1.bf16.msra.mxu0 %v4401
      %4470 = vmatprep.subr.bf16.mxu0 0
      %4471 = vmatpush1.bf16.msra.mxu0 %v4400
      %4472 = vmatprep.subr.bf16.mxu0 0
      %4473 = vmatpush1.bf16.msra.mxu0 %v4399
      %4474 = vmatprep.subr.bf16.mxu0 0
      %4475 = vmatpush2.bf16.msra.mxu0 0
      %4476 = vmatprep.subr.bf16.mxu0 0
      %4477 = vmatpush2.bf16.msra.mxu0 0
      %4478 = vmatprep.subr.bf16.mxu0 0
      %4479 = vmatpush2.bf16.msra.mxu0 0
      %4480 = vmatprep.subr.bf16.mxu0 0
      %4481 = vmatpush2.bf16.msra.mxu0 0
      %4482 = vmatprep.subr.bf16.mxu0 0
      %4483 = vmatpush2.bf16.msra.mxu0 0
      %4484 = vmatprep.subr.bf16.mxu0 0
      %4485 = vmatpush2.bf16.msra.mxu0 0
      %4486 = vmatprep.subr.bf16.mxu0 0
      %4487 = vmatpush2.bf16.msra.mxu0 0
      %4488 = vmatprep.subr.bf16.mxu0 0
      %4489 = vmatpush2.bf16.msra.mxu0 0
      %4490 = vmatprep.mubr.bf16.mxu0 0
      %4491 = vmatmul.mubr.bf16.gmra.mxu0 %v4438
      %v4492 = vpop.f32.mrf.mxu0
      %v4493 = vadd.f32 0.0, %v4492
      %v4494 = vpop.f32.mrf.mxu0
      %v4495 = vpop.f32.mrf.mxu0
      %v4496 = vadd.f32 0.0, %v4495
      %v4497 = vpop.f32.mrf.mxu0
      %4498 = vmatprep.mubr.bf16.mxu0 0
      %4499 = vmatmul.mubr.bf16.gmra.mxu0 %v4441
      %v4500 = vpop.f32.mrf.mxu0
      %v4501 = vadd.f32 0.0, %v4500
      %v4502 = vpop.f32.mrf.mxu0
      %v4503 = vpop.f32.mrf.mxu0
      %v4504 = vadd.f32 0.0, %v4503
      %v4505 = vpop.f32.mrf.mxu0
      %4506 = vmatprep.mubr.bf16.mxu0 0
      %4507 = vmatmul.mubr.bf16.gmra.mxu0 %v4444
      %v4508 = vpop.f32.mrf.mxu0
      %v4509 = vadd.f32 0.0, %v4508
      %v4510 = vpop.f32.mrf.mxu0
      %v4511 = vpop.f32.mrf.mxu0
      %v4512 = vadd.f32 0.0, %v4511
      %v4513 = vpop.f32.mrf.mxu0
      %4514 = vmatprep.mubr.bf16.mxu0 0
      %4515 = vmatmul.mubr.bf16.gmra.mxu0 %v4447
      %v4516 = vpop.f32.mrf.mxu0
      %v4517 = vadd.f32 0.0, %v4516
      %v4518 = vpop.f32.mrf.mxu0
      %v4519 = vpop.f32.mrf.mxu0
      %v4520 = vadd.f32 0.0, %v4519
      %v4521 = vpop.f32.mrf.mxu0
      %4522 = vmatprep.mubr.bf16.mxu0 0
      %4523 = vmatmul.mubr.bf16.gmra.mxu0 %v4450
      %v4524 = vpop.f32.mrf.mxu0
      %v4525 = vadd.f32 0.0, %v4524
      %v4526 = vpop.f32.mrf.mxu0
      %v4527 = vpop.f32.mrf.mxu0
      %v4528 = vadd.f32 0.0, %v4527
      %v4529 = vpop.f32.mrf.mxu0
      %4530 = vmatprep.mubr.bf16.mxu0 0
      %4531 = vmatmul.mubr.bf16.gmra.mxu0 %v4453
      %v4532 = vpop.f32.mrf.mxu0
      %v4533 = vadd.f32 0.0, %v4532
      %v4534 = vpop.f32.mrf.mxu0
      %v4535 = vpop.f32.mrf.mxu0
      %v4536 = vadd.f32 0.0, %v4535
      %v4537 = vpop.f32.mrf.mxu0
      %4538 = vmatprep.mubr.bf16.mxu0 0
      %4539 = vmatmul.mubr.bf16.gmra.mxu0 %v4456
      %v4540 = vpop.f32.mrf.mxu0
      %v4541 = vadd.f32 0.0, %v4540
      %v4542 = vpop.f32.mrf.mxu0
      %v4543 = vpop.f32.mrf.mxu0
      %v4544 = vpop.f32.mrf.mxu0
      %4545 = vdwg.mxu0
      %4546 = vst [vmem:[#allocation3] sm:$0xff] %v4493
      %4547 = vst [vmem:[#allocation3 + $0x8] sm:$0xff] %v4496
      %4548 = vst [vmem:[#allocation3 + $0x10] sm:$0xff] %v4501
      %4549 = vst [vmem:[#allocation3 + $0x18] sm:$0xff] %v4504
      %4550 = vst [vmem:[#allocation3 + $0x20] sm:$0xff] %v4509
      %4551 = vst [vmem:[#allocation3 + $0x28] sm:$0xff] %v4512
      %4552 = vst [vmem:[#allocation3 + $0x30] sm:$0xff] %v4517
      %4553 = vst [vmem:[#allocation3 + $0x38] sm:$0xff] %v4520
      %4554 = vst [vmem:[#allocation3 + $0x40] sm:$0xff] %v4525
      %4555 = vst [vmem:[#allocation3 + $0x48] sm:$0xff] %v4528
      %4556 = vst [vmem:[#allocation3 + $0x50] sm:$0xff] %v4533
      %4557 = vst [vmem:[#allocation3 + $0x58] sm:$0xff] %v4536
      %4558 = vst [vmem:[#allocation3 + $0x60] sm:$0xf] %v4541
      %v4559 = vld [vmem:[#allocation3] sm:$0xff]
      %v4560 = vld [vmem:[#allocation3 + $0x8] sm:$0xff]
      %v4561 = vld [vmem:[#allocation3 + $0x10] sm:$0xff]
      %v4562 = vld [vmem:[#allocation3 + $0x18] sm:$0xff]
      %v4563 = vld [vmem:[#allocation3 + $0x20] sm:$0xff]
      %v4564 = vld [vmem:[#allocation3 + $0x28] sm:$0xff]
      %v4565 = vld [vmem:[#allocation3 + $0x30] sm:$0xff]
      %v4566 = vld [vmem:[#allocation3 + $0x38] sm:$0xff]
      %v4567 = vld [vmem:[#allocation3 + $0x40] sm:$0xff]
      %v4568 = vld [vmem:[#allocation3 + $0x48] sm:$0x3f]
      %v4569 = vpack.c.bf16 %v4560, %v4559
      %v4570 = vpack.c.bf16 %v4562, %v4561
      %v4571 = vpack.c.bf16 %v4564, %v4563
      %v4572 = vpack.c.bf16 %v4566, %v4565
      %v4573 = vpack.c.bf16 %v4568, %v4567
      %v4574 = vld [vmem:[%s3] sm:$0xf]
      %v4575 = vld [vmem:[%s3 + $0x4] sm:$0xf]
      %v4576 = vld [vmem:[%s3 + $0x8] sm:$0xf]
      %v4577 = vld [vmem:[%s3 + $0xc] sm:$0xf]
      %v4578 = vld [vmem:[%s3 + $0x10] sm:$0xf]
      %v4579 = vld [vmem:[%s3 + $0x14] sm:$0xf]
      %v4580 = vld [vmem:[%s3 + $0x18] sm:$0xf]
      %v4581 = vld [vmem:[%s3 + $0x1c] sm:$0xf]
      %v4582 = vld [vmem:[%s3 + $0x20] sm:$0xf]
      %v4583 = vld [vmem:[%s3 + $0x24] sm:$0xf]
      %v4584 = vld [vmem:[%s3 + $0x28] sm:$0xf]
      %v4585 = vld [vmem:[%s3 + $0x2c] sm:$0xf]
      %v4586 = vld [vmem:[%s3 + $0x30] sm:$0xf]
      %v4587 = vld [vmem:[%s3 + $0x34] sm:$0xf]
      %v4588 = vld [vmem:[%s3 + $0x38] sm:$0xf]
      %v4589 = vld [vmem:[%s3 + $0x3c] sm:$0xf]
      %v4590 = vld [vmem:[#allocation3 + $0x1] sm:$0xff]
      %v4591 = vld [vmem:[#allocation3 + $0x9] sm:$0xff]
      %v4592 = vld [vmem:[#allocation3 + $0x11] sm:$0xff]
      %v4593 = vld [vmem:[#allocation3 + $0x19] sm:$0xff]
      %v4594 = vld [vmem:[#allocation3 + $0x21] sm:$0xff]
      %v4595 = vld [vmem:[#allocation3 + $0x29] sm:$0xff]
      %v4596 = vld [vmem:[#allocation3 + $0x31] sm:$0xff]
      %v4597 = vld [vmem:[#allocation3 + $0x39] sm:$0xff]
      %v4598 = vld [vmem:[#allocation3 + $0x41] sm:$0xff]
      %v4599 = vld [vmem:[#allocation3 + $0x49] sm:$0x3f]
      %v4600 = vpack.c.bf16 %v4591, %v4590
      %v4601 = vpack.c.bf16 %v4593, %v4592
      %v4602 = vpack.c.bf16 %v4595, %v4594
      %v4603 = vpack.c.bf16 %v4597, %v4596
      %v4604 = vpack.c.bf16 %v4599, %v4598
      %s4605 = scalar_lea.vmem %s3, 64
      %v4606 = vld [vmem:[%s4605] sm:$0xf]
      %v4607 = vld [vmem:[%s4605 + $0x4] sm:$0xf]
      %v4608 = vld [vmem:[%s4605 + $0x8] sm:$0xf]
      %v4609 = vld [vmem:[%s4605 + $0xc] sm:$0xf]
      %v4610 = vld [vmem:[%s4605 + $0x10] sm:$0xf]
      %v4611 = vld [vmem:[%s4605 + $0x14] sm:$0xf]
      %v4612 = vld [vmem:[%s4605 + $0x18] sm:$0xf]
      %v4613 = vld [vmem:[%s4605 + $0x1c] sm:$0xf]
      %v4614 = vld [vmem:[%s4605 + $0x20] sm:$0xf]
      %v4615 = vld [vmem:[%s4605 + $0x24] sm:$0xf]
      %v4616 = vld [vmem:[%s4605 + $0x28] sm:$0xf]
      %v4617 = vld [vmem:[%s4605 + $0x2c] sm:$0xf]
      %v4618 = vld [vmem:[%s4605 + $0x30] sm:$0xf]
      %v4619 = vld [vmem:[%s4605 + $0x34] sm:$0xf]
      %v4620 = vld [vmem:[%s4605 + $0x38] sm:$0xf]
      %v4621 = vld [vmem:[%s4605 + $0x3c] sm:$0xf]
      %v4638 = vunpack.c.l.b16 %v4606
      %v4639 = vunpack.c.l.b16 %v4607
      %v4640 = vunpack.c.l.b16 %v4608
      %v4641 = vunpack.c.l.b16 %v4609
      %v4642 = vunpack.c.l.b16 %v4610
      %v4643 = vunpack.c.l.b16 %v4611
      %v4644 = vunpack.c.l.b16 %v4612
      %v4645 = vunpack.c.l.b16 %v4613
      %v4646 = vunpack.c.l.b16 %v4614
      %v4647 = vunpack.c.l.b16 %v4615
      %v4648 = vunpack.c.l.b16 %v4616
      %v4649 = vunpack.c.l.b16 %v4617
      %v4650 = vunpack.c.l.b16 %v4618
      %v4651 = vunpack.c.l.b16 %v4619
      %v4652 = vunpack.c.l.b16 %v4620
      %v4653 = vunpack.c.l.b16 %v4621
      %v4654 = vpack.c.b16 %v4639, %v4638
      %v4655 = vpack.c.b16 %v4641, %v4640
      %v4656 = vpack.c.b16 %v4643, %v4642
      %v4657 = vpack.c.b16 %v4645, %v4644
      %v4658 = vpack.c.b16 %v4647, %v4646
      %v4659 = vpack.c.b16 %v4649, %v4648
      %v4660 = vpack.c.b16 %v4651, %v4650
      %v4661 = vpack.c.b16 %v4653, %v4652
      %4670 = vmatprep.subr.bf16.mxu0 0
      %4671 = vmatpush1.bf16.msra.mxu0 %v4661
      %4672 = vmatprep.subr.bf16.mxu0 0
      %4673 = vmatpush1.bf16.msra.mxu0 %v4660
      %4674 = vmatprep.subr.bf16.mxu0 0
      %4675 = vmatpush1.bf16.msra.mxu0 %v4659
      %4676 = vmatprep.subr.bf16.mxu0 0
      %4677 = vmatpush1.bf16.msra.mxu0 %v4658
      %4678 = vmatprep.subr.bf16.mxu0 0
      %4679 = vmatpush1.bf16.msra.mxu0 %v4657
      %4680 = vmatprep.subr.bf16.mxu0 0
      %4681 = vmatpush1.bf16.msra.mxu0 %v4656
      %4682 = vmatprep.subr.bf16.mxu0 0
      %4683 = vmatpush1.bf16.msra.mxu0 %v4655
      %4684 = vmatprep.subr.bf16.mxu0 0
      %4685 = vmatpush1.bf16.msra.mxu0 %v4654
      %4686 = vmatprep.subr.bf16.mxu0 0
      %4687 = vmatpush2.bf16.msra.mxu0 0
      %4688 = vmatprep.subr.bf16.mxu0 0
      %4689 = vmatpush2.bf16.msra.mxu0 0
      %4690 = vmatprep.subr.bf16.mxu0 0
      %4691 = vmatpush2.bf16.msra.mxu0 0
      %4692 = vmatprep.subr.bf16.mxu0 0
      %4693 = vmatpush2.bf16.msra.mxu0 0
      %4694 = vmatprep.subr.bf16.mxu0 0
      %4695 = vmatpush2.bf16.msra.mxu0 0
      %4696 = vmatprep.subr.bf16.mxu0 0
      %4697 = vmatpush2.bf16.msra.mxu0 0
      %4698 = vmatprep.subr.bf16.mxu0 0
      %4699 = vmatpush2.bf16.msra.mxu0 0
      %4700 = vmatprep.subr.bf16.mxu0 0
      %4701 = vmatpush2.bf16.msra.mxu0 0
      %4702 = vmatprep.mubr.bf16.mxu0 0
      %4703 = vmatmul.mubr.bf16.gmra.mxu0 %v4600
      %v4704 = vpop.f32.mrf.mxu0
      %v4705 = vadd.f32 0.0, %v4704
      %v4706 = vpop.f32.mrf.mxu0
      %v4707 = vpop.f32.mrf.mxu0
      %v4708 = vadd.f32 0.0, %v4707
      %v4709 = vpop.f32.mrf.mxu0
      %4710 = vmatprep.mubr.bf16.mxu0 0
      %4711 = vmatmul.mubr.bf16.gmra.mxu0 %v4601
      %v4712 = vpop.f32.mrf.mxu0
      %v4713 = vadd.f32 0.0, %v4712
      %v4714 = vpop.f32.mrf.mxu0
      %v4715 = vpop.f32.mrf.mxu0
      %v4716 = vadd.f32 0.0, %v4715
      %v4717 = vpop.f32.mrf.mxu0
      %4718 = vmatprep.mubr.bf16.mxu0 0
      %4719 = vmatmul.mubr.bf16.gmra.mxu0 %v4602
      %v4720 = vpop.f32.mrf.mxu0
      %v4721 = vadd.f32 0.0, %v4720
      %v4722 = vpop.f32.mrf.mxu0
      %v4723 = vpop.f32.mrf.mxu0
      %v4724 = vadd.f32 0.0, %v4723
      %v4725 = vpop.f32.mrf.mxu0
      %4726 = vmatprep.mubr.bf16.mxu0 0
      %4727 = vmatmul.mubr.bf16.gmra.mxu0 %v4603
      %v4728 = vpop.f32.mrf.mxu0
      %v4729 = vadd.f32 0.0, %v4728
      %v4730 = vpop.f32.mrf.mxu0
      %v4731 = vpop.f32.mrf.mxu0
      %v4732 = vadd.f32 0.0, %v4731
      %v4733 = vpop.f32.mrf.mxu0
      %4734 = vmatprep.mubr.bf16.mxu0 0
      %4735 = vmatmul.mubr.bf16.gmra.mxu0 %v4604
      %v4736 = vpop.f32.mrf.mxu0
      %v4737 = vadd.f32 0.0, %v4736
      %v4738 = vpop.f32.mrf.mxu0
      %v4739 = vpop.f32.mrf.mxu0
      %v4740 = vadd.f32 0.0, %v4739
      %v4741 = vpop.f32.mrf.mxu0
      %4742 = vdwg.mxu0
      %v4759 = vunpack.c.l.b16 %v4574
      %v4760 = vunpack.c.l.b16 %v4575
      %v4761 = vunpack.c.l.b16 %v4576
      %v4762 = vunpack.c.l.b16 %v4577
      %v4763 = vunpack.c.l.b16 %v4578
      %v4764 = vunpack.c.l.b16 %v4579
      %v4765 = vunpack.c.l.b16 %v4580
      %v4766 = vunpack.c.l.b16 %v4581
      %v4767 = vunpack.c.l.b16 %v4582
      %v4768 = vunpack.c.l.b16 %v4583
      %v4769 = vunpack.c.l.b16 %v4584
      %v4770 = vunpack.c.l.b16 %v4585
      %v4771 = vunpack.c.l.b16 %v4586
      %v4772 = vunpack.c.l.b16 %v4587
      %v4773 = vunpack.c.l.b16 %v4588
      %v4774 = vunpack.c.l.b16 %v4589
      %v4775 = vpack.c.b16 %v4760, %v4759
      %v4776 = vpack.c.b16 %v4762, %v4761
      %v4777 = vpack.c.b16 %v4764, %v4763
      %v4778 = vpack.c.b16 %v4766, %v4765
      %v4779 = vpack.c.b16 %v4768, %v4767
      %v4780 = vpack.c.b16 %v4770, %v4769
      %v4781 = vpack.c.b16 %v4772, %v4771
      %v4782 = vpack.c.b16 %v4774, %v4773
      %4791 = vmatprep.subr.bf16.mxu0 0
      %4792 = vmatpush1.bf16.msra.mxu0 %v4782
      %4793 = vmatprep.subr.bf16.mxu0 0
      %4794 = vmatpush1.bf16.msra.mxu0 %v4781
      %4795 = vmatprep.subr.bf16.mxu0 0
      %4796 = vmatpush1.bf16.msra.mxu0 %v4780
      %4797 = vmatprep.subr.bf16.mxu0 0
      %4798 = vmatpush1.bf16.msra.mxu0 %v4779
      %4799 = vmatprep.subr.bf16.mxu0 0
      %4800 = vmatpush1.bf16.msra.mxu0 %v4778
      %4801 = vmatprep.subr.bf16.mxu0 0
      %4802 = vmatpush1.bf16.msra.mxu0 %v4777
      %4803 = vmatprep.subr.bf16.mxu0 0
      %4804 = vmatpush1.bf16.msra.mxu0 %v4776
      %4805 = vmatprep.subr.bf16.mxu0 0
      %4806 = vmatpush1.bf16.msra.mxu0 %v4775
      %4807 = vmatprep.subr.bf16.mxu0 0
      %4808 = vmatpush2.bf16.msra.mxu0 0
      %4809 = vmatprep.subr.bf16.mxu0 0
      %4810 = vmatpush2.bf16.msra.mxu0 0
      %4811 = vmatprep.subr.bf16.mxu0 0
      %4812 = vmatpush2.bf16.msra.mxu0 0
      %4813 = vmatprep.subr.bf16.mxu0 0
      %4814 = vmatpush2.bf16.msra.mxu0 0
      %4815 = vmatprep.subr.bf16.mxu0 0
      %4816 = vmatpush2.bf16.msra.mxu0 0
      %4817 = vmatprep.subr.bf16.mxu0 0
      %4818 = vmatpush2.bf16.msra.mxu0 0
      %4819 = vmatprep.subr.bf16.mxu0 0
      %4820 = vmatpush2.bf16.msra.mxu0 0
      %4821 = vmatprep.subr.bf16.mxu0 0
      %4822 = vmatpush2.bf16.msra.mxu0 0
      %4823 = vmatprep.mubr.bf16.mxu0 0
      %4824 = vmatmul.mubr.bf16.gmra.mxu0 %v4569
      %v4825 = vpop.f32.mrf.mxu0
      %v4826 = vadd.f32 %v4705, %v4825
      %v4827 = vpop.f32.mrf.mxu0
      %v4828 = vpop.f32.mrf.mxu0
      %v4829 = vadd.f32 %v4708, %v4828
      %v4830 = vpop.f32.mrf.mxu0
      %4831 = vmatprep.mubr.bf16.mxu0 0
      %4832 = vmatmul.mubr.bf16.gmra.mxu0 %v4570
      %v4833 = vpop.f32.mrf.mxu0
      %v4834 = vadd.f32 %v4713, %v4833
      %v4835 = vpop.f32.mrf.mxu0
      %v4836 = vpop.f32.mrf.mxu0
      %v4837 = vadd.f32 %v4716, %v4836
      %v4838 = vpop.f32.mrf.mxu0
      %4839 = vmatprep.mubr.bf16.mxu0 0
      %4840 = vmatmul.mubr.bf16.gmra.mxu0 %v4571
      %v4841 = vpop.f32.mrf.mxu0
      %v4842 = vadd.f32 %v4721, %v4841
      %v4843 = vpop.f32.mrf.mxu0
      %v4844 = vpop.f32.mrf.mxu0
      %v4845 = vadd.f32 %v4724, %v4844
      %v4846 = vpop.f32.mrf.mxu0
      %4847 = vmatprep.mubr.bf16.mxu0 0
      %4848 = vmatmul.mubr.bf16.gmra.mxu0 %v4572
      %v4849 = vpop.f32.mrf.mxu0
      %v4850 = vadd.f32 %v4729, %v4849
      %v4851 = vpop.f32.mrf.mxu0
      %v4852 = vpop.f32.mrf.mxu0
      %v4853 = vadd.f32 %v4732, %v4852
      %v4854 = vpop.f32.mrf.mxu0
      %4855 = vmatprep.mubr.bf16.mxu0 0
      %4856 = vmatmul.mubr.bf16.gmra.mxu0 %v4573
      %v4857 = vpop.f32.mrf.mxu0
      %v4858 = vadd.f32 %v4737, %v4857
      %v4859 = vpop.f32.mrf.mxu0
      %v4860 = vpop.f32.mrf.mxu0
      %v4861 = vadd.f32 %v4740, %v4860
      %v4862 = vpop.f32.mrf.mxu0
      %4863 = vdwg.mxu0
      %v4864 = vld [vmem:[#allocation3 + $0x2] sm:$0xff]
      %v4865 = vld [vmem:[#allocation3 + $0xa] sm:$0xff]
      %v4866 = vld [vmem:[#allocation3 + $0x12] sm:$0xff]
      %v4867 = vld [vmem:[#allocation3 + $0x1a] sm:$0xff]
      %v4868 = vld [vmem:[#allocation3 + $0x22] sm:$0xff]
      %v4869 = vld [vmem:[#allocation3 + $0x2a] sm:$0xff]
      %v4870 = vld [vmem:[#allocation3 + $0x32] sm:$0xff]
      %v4871 = vld [vmem:[#allocation3 + $0x3a] sm:$0xff]
      %v4872 = vld [vmem:[#allocation3 + $0x42] sm:$0xff]
      %v4873 = vld [vmem:[#allocation3 + $0x4a] sm:$0x3f]
      %v4874 = vpack.c.bf16 %v4865, %v4864
      %v4875 = vpack.c.bf16 %v4867, %v4866
      %v4876 = vpack.c.bf16 %v4869, %v4868
      %v4877 = vpack.c.bf16 %v4871, %v4870
      %v4878 = vpack.c.bf16 %v4873, %v4872
      %s4879 = scalar_lea.vmem %s3, 128
      %v4880 = vld [vmem:[%s4879] sm:$0xf]
      %v4881 = vld [vmem:[%s4879 + $0x4] sm:$0xf]
      %v4882 = vld [vmem:[%s4879 + $0x8] sm:$0xf]
      %v4883 = vld [vmem:[%s4879 + $0xc] sm:$0xf]
      %v4884 = vld [vmem:[%s4879 + $0x10] sm:$0xf]
      %v4885 = vld [vmem:[%s4879 + $0x14] sm:$0xf]
      %v4886 = vld [vmem:[%s4879 + $0x18] sm:$0xf]
      %v4887 = vld [vmem:[%s4879 + $0x1c] sm:$0xf]
      %v4888 = vld [vmem:[%s4879 + $0x20] sm:$0xf]
      %v4889 = vld [vmem:[%s4879 + $0x24] sm:$0xf]
      %v4890 = vld [vmem:[%s4879 + $0x28] sm:$0xf]
      %v4891 = vld [vmem:[%s4879 + $0x2c] sm:$0xf]
      %v4892 = vld [vmem:[%s4879 + $0x30] sm:$0xf]
      %v4893 = vld [vmem:[%s4879 + $0x34] sm:$0xf]
      %v4894 = vld [vmem:[%s4879 + $0x38] sm:$0xf]
      %v4895 = vld [vmem:[%s4879 + $0x3c] sm:$0xf]
      %v4912 = vunpack.c.l.b16 %v4880
      %v4913 = vunpack.c.l.b16 %v4881
      %v4914 = vunpack.c.l.b16 %v4882
      %v4915 = vunpack.c.l.b16 %v4883
      %v4916 = vunpack.c.l.b16 %v4884
      %v4917 = vunpack.c.l.b16 %v4885
      %v4918 = vunpack.c.l.b16 %v4886
      %v4919 = vunpack.c.l.b16 %v4887
      %v4920 = vunpack.c.l.b16 %v4888
      %v4921 = vunpack.c.l.b16 %v4889
      %v4922 = vunpack.c.l.b16 %v4890
      %v4923 = vunpack.c.l.b16 %v4891
      %v4924 = vunpack.c.l.b16 %v4892
      %v4925 = vunpack.c.l.b16 %v4893
      %v4926 = vunpack.c.l.b16 %v4894
      %v4927 = vunpack.c.l.b16 %v4895
      %v4928 = vpack.c.b16 %v4913, %v4912
      %v4929 = vpack.c.b16 %v4915, %v4914
      %v4930 = vpack.c.b16 %v4917, %v4916
      %v4931 = vpack.c.b16 %v4919, %v4918
      %v4932 = vpack.c.b16 %v4921, %v4920
      %v4933 = vpack.c.b16 %v4923, %v4922
      %v4934 = vpack.c.b16 %v4925, %v4924
      %v4935 = vpack.c.b16 %v4927, %v4926
      %4944 = vmatprep.subr.bf16.mxu0 0
      %4945 = vmatpush1.bf16.msra.mxu0 %v4935
      %4946 = vmatprep.subr.bf16.mxu0 0
      %4947 = vmatpush1.bf16.msra.mxu0 %v4934
      %4948 = vmatprep.subr.bf16.mxu0 0
      %4949 = vmatpush1.bf16.msra.mxu0 %v4933
      %4950 = vmatprep.subr.bf16.mxu0 0
      %4951 = vmatpush1.bf16.msra.mxu0 %v4932
      %4952 = vmatprep.subr.bf16.mxu0 0
      %4953 = vmatpush1.bf16.msra.mxu0 %v4931
      %4954 = vmatprep.subr.bf16.mxu0 0
      %4955 = vmatpush1.bf16.msra.mxu0 %v4930
      %4956 = vmatprep.subr.bf16.mxu0 0
      %4957 = vmatpush1.bf16.msra.mxu0 %v4929
      %4958 = vmatprep.subr.bf16.mxu0 0
      %4959 = vmatpush1.bf16.msra.mxu0 %v4928
      %4960 = vmatprep.subr.bf16.mxu0 0
      %4961 = vmatpush2.bf16.msra.mxu0 0
      %4962 = vmatprep.subr.bf16.mxu0 0
      %4963 = vmatpush2.bf16.msra.mxu0 0
      %4964 = vmatprep.subr.bf16.mxu0 0
      %4965 = vmatpush2.bf16.msra.mxu0 0
      %4966 = vmatprep.subr.bf16.mxu0 0
      %4967 = vmatpush2.bf16.msra.mxu0 0
      %4968 = vmatprep.subr.bf16.mxu0 0
      %4969 = vmatpush2.bf16.msra.mxu0 0
      %4970 = vmatprep.subr.bf16.mxu0 0
      %4971 = vmatpush2.bf16.msra.mxu0 0
      %4972 = vmatprep.subr.bf16.mxu0 0
      %4973 = vmatpush2.bf16.msra.mxu0 0
      %4974 = vmatprep.subr.bf16.mxu0 0
      %4975 = vmatpush2.bf16.msra.mxu0 0
      %4976 = vmatprep.mubr.bf16.mxu0 0
      %4977 = vmatmul.mubr.bf16.gmra.mxu0 %v4874
      %v4978 = vpop.f32.mrf.mxu0
      %v4979 = vadd.f32 0.0, %v4978
      %v4980 = vpop.f32.mrf.mxu0
      %v4981 = vpop.f32.mrf.mxu0
      %v4982 = vadd.f32 0.0, %v4981
      %v4983 = vpop.f32.mrf.mxu0
      %4984 = vmatprep.mubr.bf16.mxu0 0
      %4985 = vmatmul.mubr.bf16.gmra.mxu0 %v4875
      %v4986 = vpop.f32.mrf.mxu0
      %v4987 = vadd.f32 0.0, %v4986
      %v4988 = vpop.f32.mrf.mxu0
      %v4989 = vpop.f32.mrf.mxu0
      %v4990 = vadd.f32 0.0, %v4989
      %v4991 = vpop.f32.mrf.mxu0
      %4992 = vmatprep.mubr.bf16.mxu0 0
      %4993 = vmatmul.mubr.bf16.gmra.mxu0 %v4876
      %v4994 = vpop.f32.mrf.mxu0
      %v4995 = vadd.f32 0.0, %v4994
      %v4996 = vpop.f32.mrf.mxu0
      %v4997 = vpop.f32.mrf.mxu0
      %v4998 = vadd.f32 0.0, %v4997
      %v4999 = vpop.f32.mrf.mxu0
      %5000 = vmatprep.mubr.bf16.mxu0 0
      %5001 = vmatmul.mubr.bf16.gmra.mxu0 %v4877
      %v5002 = vpop.f32.mrf.mxu0
      %v5003 = vadd.f32 0.0, %v5002
      %v5004 = vpop.f32.mrf.mxu0
      %v5005 = vpop.f32.mrf.mxu0
      %v5006 = vadd.f32 0.0, %v5005
      %v5007 = vpop.f32.mrf.mxu0
      %5008 = vmatprep.mubr.bf16.mxu0 0
      %5009 = vmatmul.mubr.bf16.gmra.mxu0 %v4878
      %v5010 = vpop.f32.mrf.mxu0
      %v5011 = vadd.f32 0.0, %v5010
      %v5012 = vpop.f32.mrf.mxu0
      %v5013 = vpop.f32.mrf.mxu0
      %v5014 = vadd.f32 0.0, %v5013
      %v5015 = vpop.f32.mrf.mxu0
      %5016 = vdwg.mxu0
      %v5017 = vadd.f32 %v4826, %v4979
      %v5018 = vadd.f32 %v4829, %v4982
      %v5019 = vadd.f32 %v4834, %v4987
      %v5020 = vadd.f32 %v4837, %v4990
      %v5021 = vadd.f32 %v4842, %v4995
      %v5022 = vadd.f32 %v4845, %v4998
      %v5023 = vadd.f32 %v4850, %v5003
      %v5024 = vadd.f32 %v4853, %v5006
      %v5025 = vadd.f32 %v4858, %v5011
      %v5026 = vadd.f32 %v4861, %v5014
      %v5027 = vld [vmem:[#allocation3 + $0xa] sm:$0xff]
      %v5028 = vld [vmem:[#allocation3 + $0x12] sm:$0xff]
      %v5029 = vld [vmem:[#allocation3 + $0x1a] sm:$0xff]
      %v5030 = vld [vmem:[#allocation3 + $0x22] sm:$0xff]
      %v5031 = vld [vmem:[#allocation3 + $0x2a] sm:$0xff]
      %v5032 = vld [vmem:[#allocation3 + $0x32] sm:$0xff]
      %v5033 = vld [vmem:[#allocation3 + $0x3a] sm:$0xff]
      %v5034 = vld [vmem:[#allocation3 + $0x42] sm:$0xff]
      %v5035 = vld [vmem:[#allocation3 + $0x4a] sm:$0xff]
      %v5036 = vld [vmem:[#allocation3 + $0x52] sm:$0x3f]
      %v5037 = vpack.c.bf16 %v5028, %v5027
      %v5038 = vpack.c.bf16 %v5030, %v5029
      %v5039 = vpack.c.bf16 %v5032, %v5031
      %v5040 = vpack.c.bf16 %v5034, %v5033
      %v5041 = vpack.c.bf16 %v5036, %v5035
      %s5042 = scalar_lea.vmem %s3, 192
      %v5043 = vld [vmem:[%s5042] sm:$0xf]
      %v5044 = vld [vmem:[%s5042 + $0x4] sm:$0xf]
      %v5045 = vld [vmem:[%s5042 + $0x8] sm:$0xf]
      %v5046 = vld [vmem:[%s5042 + $0xc] sm:$0xf]
      %v5047 = vld [vmem:[%s5042 + $0x10] sm:$0xf]
      %v5048 = vld [vmem:[%s5042 + $0x14] sm:$0xf]
      %v5049 = vld [vmem:[%s5042 + $0x18] sm:$0xf]
      %v5050 = vld [vmem:[%s5042 + $0x1c] sm:$0xf]
      %v5051 = vld [vmem:[%s5042 + $0x20] sm:$0xf]
      %v5052 = vld [vmem:[%s5042 + $0x24] sm:$0xf]
      %v5053 = vld [vmem:[%s5042 + $0x28] sm:$0xf]
      %v5054 = vld [vmem:[%s5042 + $0x2c] sm:$0xf]
      %v5055 = vld [vmem:[%s5042 + $0x30] sm:$0xf]
      %v5056 = vld [vmem:[%s5042 + $0x34] sm:$0xf]
      %v5057 = vld [vmem:[%s5042 + $0x38] sm:$0xf]
      %v5058 = vld [vmem:[%s5042 + $0x3c] sm:$0xf]
      %v5075 = vunpack.c.l.b16 %v5043
      %v5076 = vunpack.c.l.b16 %v5044
      %v5077 = vunpack.c.l.b16 %v5045
      %v5078 = vunpack.c.l.b16 %v5046
      %v5079 = vunpack.c.l.b16 %v5047
      %v5080 = vunpack.c.l.b16 %v5048
      %v5081 = vunpack.c.l.b16 %v5049
      %v5082 = vunpack.c.l.b16 %v5050
      %v5083 = vunpack.c.l.b16 %v5051
      %v5084 = vunpack.c.l.b16 %v5052
      %v5085 = vunpack.c.l.b16 %v5053
      %v5086 = vunpack.c.l.b16 %v5054
      %v5087 = vunpack.c.l.b16 %v5055
      %v5088 = vunpack.c.l.b16 %v5056
      %v5089 = vunpack.c.l.b16 %v5057
      %v5090 = vunpack.c.l.b16 %v5058
      %v5091 = vpack.c.b16 %v5076, %v5075
      %v5092 = vpack.c.b16 %v5078, %v5077
      %v5093 = vpack.c.b16 %v5080, %v5079
      %v5094 = vpack.c.b16 %v5082, %v5081
      %v5095 = vpack.c.b16 %v5084, %v5083
      %v5096 = vpack.c.b16 %v5086, %v5085
      %v5097 = vpack.c.b16 %v5088, %v5087
      %v5098 = vpack.c.b16 %v5090, %v5089
      %5107 = vmatprep.subr.bf16.mxu0 0
      %5108 = vmatpush1.bf16.msra.mxu0 %v5098
      %5109 = vmatprep.subr.bf16.mxu0 0
      %5110 = vmatpush1.bf16.msra.mxu0 %v5097
      %5111 = vmatprep.subr.bf16.mxu0 0
      %5112 = vmatpush1.bf16.msra.mxu0 %v5096
      %5113 = vmatprep.subr.bf16.mxu0 0
      %5114 = vmatpush1.bf16.msra.mxu0 %v5095
      %5115 = vmatprep.subr.bf16.mxu0 0
      %5116 = vmatpush1.bf16.msra.mxu0 %v5094
      %5117 = vmatprep.subr.bf16.mxu0 0
      %5118 = vmatpush1.bf16.msra.mxu0 %v5093
      %5119 = vmatprep.subr.bf16.mxu0 0
      %5120 = vmatpush1.bf16.msra.mxu0 %v5092
      %5121 = vmatprep.subr.bf16.mxu0 0
      %5122 = vmatpush1.bf16.msra.mxu0 %v5091
      %5123 = vmatprep.subr.bf16.mxu0 0
      %5124 = vmatpush2.bf16.msra.mxu0 0
      %5125 = vmatprep.subr.bf16.mxu0 0
      %5126 = vmatpush2.bf16.msra.mxu0 0
      %5127 = vmatprep.subr.bf16.mxu0 0
      %5128 = vmatpush2.bf16.msra.mxu0 0
      %5129 = vmatprep.subr.bf16.mxu0 0
      %5130 = vmatpush2.bf16.msra.mxu0 0
      %5131 = vmatprep.subr.bf16.mxu0 0
      %5132 = vmatpush2.bf16.msra.mxu0 0
      %5133 = vmatprep.subr.bf16.mxu0 0
      %5134 = vmatpush2.bf16.msra.mxu0 0
      %5135 = vmatprep.subr.bf16.mxu0 0
      %5136 = vmatpush2.bf16.msra.mxu0 0
      %5137 = vmatprep.subr.bf16.mxu0 0
      %5138 = vmatpush2.bf16.msra.mxu0 0
      %5139 = vmatprep.mubr.bf16.mxu0 0
      %5140 = vmatmul.mubr.bf16.gmra.mxu0 %v5037
      %v5141 = vpop.f32.mrf.mxu0
      %v5142 = vadd.f32 0.0, %v5141
      %v5143 = vpop.f32.mrf.mxu0
      %v5144 = vpop.f32.mrf.mxu0
      %v5145 = vadd.f32 0.0, %v5144
      %v5146 = vpop.f32.mrf.mxu0
      %5147 = vmatprep.mubr.bf16.mxu0 0
      %5148 = vmatmul.mubr.bf16.gmra.mxu0 %v5038
      %v5149 = vpop.f32.mrf.mxu0
      %v5150 = vadd.f32 0.0, %v5149
      %v5151 = vpop.f32.mrf.mxu0
      %v5152 = vpop.f32.mrf.mxu0
      %v5153 = vadd.f32 0.0, %v5152
      %v5154 = vpop.f32.mrf.mxu0
      %5155 = vmatprep.mubr.bf16.mxu0 0
      %5156 = vmatmul.mubr.bf16.gmra.mxu0 %v5039
      %v5157 = vpop.f32.mrf.mxu0
      %v5158 = vadd.f32 0.0, %v5157
      %v5159 = vpop.f32.mrf.mxu0
      %v5160 = vpop.f32.mrf.mxu0
      %v5161 = vadd.f32 0.0, %v5160
      %v5162 = vpop.f32.mrf.mxu0
      %5163 = vmatprep.mubr.bf16.mxu0 0
      %5164 = vmatmul.mubr.bf16.gmra.mxu0 %v5040
      %v5165 = vpop.f32.mrf.mxu0
      %v5166 = vadd.f32 0.0, %v5165
      %v5167 = vpop.f32.mrf.mxu0
      %v5168 = vpop.f32.mrf.mxu0
      %v5169 = vadd.f32 0.0, %v5168
      %v5170 = vpop.f32.mrf.mxu0
      %5171 = vmatprep.mubr.bf16.mxu0 0
      %5172 = vmatmul.mubr.bf16.gmra.mxu0 %v5041
      %v5173 = vpop.f32.mrf.mxu0
      %v5174 = vadd.f32 0.0, %v5173
      %v5175 = vpop.f32.mrf.mxu0
      %v5176 = vpop.f32.mrf.mxu0
      %v5177 = vadd.f32 0.0, %v5176
      %v5178 = vpop.f32.mrf.mxu0
      %5179 = vdwg.mxu0
      %v5180 = vadd.f32 %v5017, %v5142
      %v5181 = vadd.f32 %v5018, %v5145
      %v5182 = vadd.f32 %v5019, %v5150
      %v5183 = vadd.f32 %v5020, %v5153
      %v5184 = vadd.f32 %v5021, %v5158
      %v5185 = vadd.f32 %v5022, %v5161
      %v5186 = vadd.f32 %v5023, %v5166
      %v5187 = vadd.f32 %v5024, %v5169
      %v5188 = vadd.f32 %v5025, %v5174
      %v5189 = vadd.f32 %v5026, %v5177
      %v5190 = vld [vmem:[#allocation3 + $0xb] sm:$0xff]
      %v5191 = vld [vmem:[#allocation3 + $0x13] sm:$0xff]
      %v5192 = vld [vmem:[#allocation3 + $0x1b] sm:$0xff]
      %v5193 = vld [vmem:[#allocation3 + $0x23] sm:$0xff]
      %v5194 = vld [vmem:[#allocation3 + $0x2b] sm:$0xff]
      %v5195 = vld [vmem:[#allocation3 + $0x33] sm:$0xff]
      %v5196 = vld [vmem:[#allocation3 + $0x3b] sm:$0xff]
      %v5197 = vld [vmem:[#allocation3 + $0x43] sm:$0xff]
      %v5198 = vld [vmem:[#allocation3 + $0x4b] sm:$0xff]
      %v5199 = vld [vmem:[#allocation3 + $0x53] sm:$0x3f]
      %v5200 = vpack.c.bf16 %v5191, %v5190
      %v5201 = vpack.c.bf16 %v5193, %v5192
      %v5202 = vpack.c.bf16 %v5195, %v5194
      %v5203 = vpack.c.bf16 %v5197, %v5196
      %v5204 = vpack.c.bf16 %v5199, %v5198
      %s5205 = scalar_lea.vmem %s3, 256
      %v5206 = vld [vmem:[%s5205] sm:$0xf]
      %v5207 = vld [vmem:[%s5205 + $0x4] sm:$0xf]
      %v5208 = vld [vmem:[%s5205 + $0x8] sm:$0xf]
      %v5209 = vld [vmem:[%s5205 + $0xc] sm:$0xf]
      %v5210 = vld [vmem:[%s5205 + $0x10] sm:$0xf]
      %v5211 = vld [vmem:[%s5205 + $0x14] sm:$0xf]
      %v5212 = vld [vmem:[%s5205 + $0x18] sm:$0xf]
      %v5213 = vld [vmem:[%s5205 + $0x1c] sm:$0xf]
      %v5214 = vld [vmem:[%s5205 + $0x20] sm:$0xf]
      %v5215 = vld [vmem:[%s5205 + $0x24] sm:$0xf]
      %v5216 = vld [vmem:[%s5205 + $0x28] sm:$0xf]
      %v5217 = vld [vmem:[%s5205 + $0x2c] sm:$0xf]
      %v5218 = vld [vmem:[%s5205 + $0x30] sm:$0xf]
      %v5219 = vld [vmem:[%s5205 + $0x34] sm:$0xf]
      %v5220 = vld [vmem:[%s5205 + $0x38] sm:$0xf]
      %v5221 = vld [vmem:[%s5205 + $0x3c] sm:$0xf]
      %v5238 = vunpack.c.l.b16 %v5206
      %v5239 = vunpack.c.l.b16 %v5207
      %v5240 = vunpack.c.l.b16 %v5208
      %v5241 = vunpack.c.l.b16 %v5209
      %v5242 = vunpack.c.l.b16 %v5210
      %v5243 = vunpack.c.l.b16 %v5211
      %v5244 = vunpack.c.l.b16 %v5212
      %v5245 = vunpack.c.l.b16 %v5213
      %v5246 = vunpack.c.l.b16 %v5214
      %v5247 = vunpack.c.l.b16 %v5215
      %v5248 = vunpack.c.l.b16 %v5216
      %v5249 = vunpack.c.l.b16 %v5217
      %v5250 = vunpack.c.l.b16 %v5218
      %v5251 = vunpack.c.l.b16 %v5219
      %v5252 = vunpack.c.l.b16 %v5220
      %v5253 = vunpack.c.l.b16 %v5221
      %v5254 = vpack.c.b16 %v5239, %v5238
      %v5255 = vpack.c.b16 %v5241, %v5240
      %v5256 = vpack.c.b16 %v5243, %v5242
      %v5257 = vpack.c.b16 %v5245, %v5244
      %v5258 = vpack.c.b16 %v5247, %v5246
      %v5259 = vpack.c.b16 %v5249, %v5248
      %v5260 = vpack.c.b16 %v5251, %v5250
      %v5261 = vpack.c.b16 %v5253, %v5252
      %5270 = vmatprep.subr.bf16.mxu0 0
      %5271 = vmatpush1.bf16.msra.mxu0 %v5261
      %5272 = vmatprep.subr.bf16.mxu0 0
      %5273 = vmatpush1.bf16.msra.mxu0 %v5260
      %5274 = vmatprep.subr.bf16.mxu0 0
      %5275 = vmatpush1.bf16.msra.mxu0 %v5259
      %5276 = vmatprep.subr.bf16.mxu0 0
      %5277 = vmatpush1.bf16.msra.mxu0 %v5258
      %5278 = vmatprep.subr.bf16.mxu0 0
      %5279 = vmatpush1.bf16.msra.mxu0 %v5257
      %5280 = vmatprep.subr.bf16.mxu0 0
      %5281 = vmatpush1.bf16.msra.mxu0 %v5256
      %5282 = vmatprep.subr.bf16.mxu0 0
      %5283 = vmatpush1.bf16.msra.mxu0 %v5255
      %5284 = vmatprep.subr.bf16.mxu0 0
      %5285 = vmatpush1.bf16.msra.mxu0 %v5254
      %5286 = vmatprep.subr.bf16.mxu0 0
      %5287 = vmatpush2.bf16.msra.mxu0 0
      %5288 = vmatprep.subr.bf16.mxu0 0
      %5289 = vmatpush2.bf16.msra.mxu0 0
      %5290 = vmatprep.subr.bf16.mxu0 0
      %5291 = vmatpush2.bf16.msra.mxu0 0
      %5292 = vmatprep.subr.bf16.mxu0 0
      %5293 = vmatpush2.bf16.msra.mxu0 0
      %5294 = vmatprep.subr.bf16.mxu0 0
      %5295 = vmatpush2.bf16.msra.mxu0 0
      %5296 = vmatprep.subr.bf16.mxu0 0
      %5297 = vmatpush2.bf16.msra.mxu0 0
      %5298 = vmatprep.subr.bf16.mxu0 0
      %5299 = vmatpush2.bf16.msra.mxu0 0
      %5300 = vmatprep.subr.bf16.mxu0 0
      %5301 = vmatpush2.bf16.msra.mxu0 0
      %5302 = vmatprep.mubr.bf16.mxu0 0
      %5303 = vmatmul.mubr.bf16.gmra.mxu0 %v5200
      %v5304 = vpop.f32.mrf.mxu0
      %v5305 = vadd.f32 0.0, %v5304
      %v5306 = vpop.f32.mrf.mxu0
      %v5307 = vpop.f32.mrf.mxu0
      %v5308 = vadd.f32 0.0, %v5307
      %v5309 = vpop.f32.mrf.mxu0
      %5310 = vmatprep.mubr.bf16.mxu0 0
      %5311 = vmatmul.mubr.bf16.gmra.mxu0 %v5201
      %v5312 = vpop.f32.mrf.mxu0
      %v5313 = vadd.f32 0.0, %v5312
      %v5314 = vpop.f32.mrf.mxu0
      %v5315 = vpop.f32.mrf.mxu0
      %v5316 = vadd.f32 0.0, %v5315
      %v5317 = vpop.f32.mrf.mxu0
      %5318 = vmatprep.mubr.bf16.mxu0 0
      %5319 = vmatmul.mubr.bf16.gmra.mxu0 %v5202
      %v5320 = vpop.f32.mrf.mxu0
      %v5321 = vadd.f32 0.0, %v5320
      %v5322 = vpop.f32.mrf.mxu0
      %v5323 = vpop.f32.mrf.mxu0
      %v5324 = vadd.f32 0.0, %v5323
      %v5325 = vpop.f32.mrf.mxu0
      %5326 = vmatprep.mubr.bf16.mxu0 0
      %5327 = vmatmul.mubr.bf16.gmra.mxu0 %v5203
      %v5328 = vpop.f32.mrf.mxu0
      %v5329 = vadd.f32 0.0, %v5328
      %v5330 = vpop.f32.mrf.mxu0
      %v5331 = vpop.f32.mrf.mxu0
      %v5332 = vadd.f32 0.0, %v5331
      %v5333 = vpop.f32.mrf.mxu0
      %5334 = vmatprep.mubr.bf16.mxu0 0
      %5335 = vmatmul.mubr.bf16.gmra.mxu0 %v5204
      %v5336 = vpop.f32.mrf.mxu0
      %v5337 = vadd.f32 0.0, %v5336
      %v5338 = vpop.f32.mrf.mxu0
      %v5339 = vpop.f32.mrf.mxu0
      %v5340 = vadd.f32 0.0, %v5339
      %v5341 = vpop.f32.mrf.mxu0
      %5342 = vdwg.mxu0
      %v5343 = vadd.f32 %v5180, %v5305
      %v5344 = vadd.f32 %v5181, %v5308
      %v5345 = vadd.f32 %v5182, %v5313
      %v5346 = vadd.f32 %v5183, %v5316
      %v5347 = vadd.f32 %v5184, %v5321
      %v5348 = vadd.f32 %v5185, %v5324
      %v5349 = vadd.f32 %v5186, %v5329
      %v5350 = vadd.f32 %v5187, %v5332
      %v5351 = vadd.f32 %v5188, %v5337
      %v5352 = vadd.f32 %v5189, %v5340
      %v5353 = vld [vmem:[#allocation3 + $0xc] sm:$0xff]
      %v5354 = vld [vmem:[#allocation3 + $0x14] sm:$0xff]
      %v5355 = vld [vmem:[#allocation3 + $0x1c] sm:$0xff]
      %v5356 = vld [vmem:[#allocation3 + $0x24] sm:$0xff]
      %v5357 = vld [vmem:[#allocation3 + $0x2c] sm:$0xff]
      %v5358 = vld [vmem:[#allocation3 + $0x34] sm:$0xff]
      %v5359 = vld [vmem:[#allocation3 + $0x3c] sm:$0xff]
      %v5360 = vld [vmem:[#allocation3 + $0x44] sm:$0xff]
      %v5361 = vld [vmem:[#allocation3 + $0x4c] sm:$0xff]
      %v5362 = vld [vmem:[#allocation3 + $0x54] sm:$0x3f]
      %v5363 = vpack.c.bf16 %v5354, %v5353
      %v5364 = vpack.c.bf16 %v5356, %v5355
      %v5365 = vpack.c.bf16 %v5358, %v5357
      %v5366 = vpack.c.bf16 %v5360, %v5359
      %v5367 = vpack.c.bf16 %v5362, %v5361
      %s5368 = scalar_lea.vmem %s3, 320
      %v5369 = vld [vmem:[%s5368] sm:$0xf]
      %v5370 = vld [vmem:[%s5368 + $0x4] sm:$0xf]
      %v5371 = vld [vmem:[%s5368 + $0x8] sm:$0xf]
      %v5372 = vld [vmem:[%s5368 + $0xc] sm:$0xf]
      %v5373 = vld [vmem:[%s5368 + $0x10] sm:$0xf]
      %v5374 = vld [vmem:[%s5368 + $0x14] sm:$0xf]
      %v5375 = vld [vmem:[%s5368 + $0x18] sm:$0xf]
      %v5376 = vld [vmem:[%s5368 + $0x1c] sm:$0xf]
      %v5377 = vld [vmem:[%s5368 + $0x20] sm:$0xf]
      %v5378 = vld [vmem:[%s5368 + $0x24] sm:$0xf]
      %v5379 = vld [vmem:[%s5368 + $0x28] sm:$0xf]
      %v5380 = vld [vmem:[%s5368 + $0x2c] sm:$0xf]
      %v5381 = vld [vmem:[%s5368 + $0x30] sm:$0xf]
      %v5382 = vld [vmem:[%s5368 + $0x34] sm:$0xf]
      %v5383 = vld [vmem:[%s5368 + $0x38] sm:$0xf]
      %v5384 = vld [vmem:[%s5368 + $0x3c] sm:$0xf]
      %v5401 = vunpack.c.l.b16 %v5369
      %v5402 = vunpack.c.l.b16 %v5370
      %v5403 = vunpack.c.l.b16 %v5371
      %v5404 = vunpack.c.l.b16 %v5372
      %v5405 = vunpack.c.l.b16 %v5373
      %v5406 = vunpack.c.l.b16 %v5374
      %v5407 = vunpack.c.l.b16 %v5375
      %v5408 = vunpack.c.l.b16 %v5376
      %v5409 = vunpack.c.l.b16 %v5377
      %v5410 = vunpack.c.l.b16 %v5378
      %v5411 = vunpack.c.l.b16 %v5379
      %v5412 = vunpack.c.l.b16 %v5380
      %v5413 = vunpack.c.l.b16 %v5381
      %v5414 = vunpack.c.l.b16 %v5382
      %v5415 = vunpack.c.l.b16 %v5383
      %v5416 = vunpack.c.l.b16 %v5384
      %v5417 = vpack.c.b16 %v5402, %v5401
      %v5418 = vpack.c.b16 %v5404, %v5403
      %v5419 = vpack.c.b16 %v5406, %v5405
      %v5420 = vpack.c.b16 %v5408, %v5407
      %v5421 = vpack.c.b16 %v5410, %v5409
      %v5422 = vpack.c.b16 %v5412, %v5411
      %v5423 = vpack.c.b16 %v5414, %v5413
      %v5424 = vpack.c.b16 %v5416, %v5415
      %5433 = vmatprep.subr.bf16.mxu0 0
      %5434 = vmatpush1.bf16.msra.mxu0 %v5424
      %5435 = vmatprep.subr.bf16.mxu0 0
      %5436 = vmatpush1.bf16.msra.mxu0 %v5423
      %5437 = vmatprep.subr.bf16.mxu0 0
      %5438 = vmatpush1.bf16.msra.mxu0 %v5422
      %5439 = vmatprep.subr.bf16.mxu0 0
      %5440 = vmatpush1.bf16.msra.mxu0 %v5421
      %5441 = vmatprep.subr.bf16.mxu0 0
      %5442 = vmatpush1.bf16.msra.mxu0 %v5420
      %5443 = vmatprep.subr.bf16.mxu0 0
      %5444 = vmatpush1.bf16.msra.mxu0 %v5419
      %5445 = vmatprep.subr.bf16.mxu0 0
      %5446 = vmatpush1.bf16.msra.mxu0 %v5418
      %5447 = vmatprep.subr.bf16.mxu0 0
      %5448 = vmatpush1.bf16.msra.mxu0 %v5417
      %5449 = vmatprep.subr.bf16.mxu0 0
      %5450 = vmatpush2.bf16.msra.mxu0 0
      %5451 = vmatprep.subr.bf16.mxu0 0
      %5452 = vmatpush2.bf16.msra.mxu0 0
      %5453 = vmatprep.subr.bf16.mxu0 0
      %5454 = vmatpush2.bf16.msra.mxu0 0
      %5455 = vmatprep.subr.bf16.mxu0 0
      %5456 = vmatpush2.bf16.msra.mxu0 0
      %5457 = vmatprep.subr.bf16.mxu0 0
      %5458 = vmatpush2.bf16.msra.mxu0 0
      %5459 = vmatprep.subr.bf16.mxu0 0
      %5460 = vmatpush2.bf16.msra.mxu0 0
      %5461 = vmatprep.subr.bf16.mxu0 0
      %5462 = vmatpush2.bf16.msra.mxu0 0
      %5463 = vmatprep.subr.bf16.mxu0 0
      %5464 = vmatpush2.bf16.msra.mxu0 0
      %5465 = vmatprep.mubr.bf16.mxu0 0
      %5466 = vmatmul.mubr.bf16.gmra.mxu0 %v5363
      %v5467 = vpop.f32.mrf.mxu0
      %v5468 = vadd.f32 0.0, %v5467
      %v5469 = vpop.f32.mrf.mxu0
      %v5470 = vpop.f32.mrf.mxu0
      %v5471 = vadd.f32 0.0, %v5470
      %v5472 = vpop.f32.mrf.mxu0
      %5473 = vmatprep.mubr.bf16.mxu0 0
      %5474 = vmatmul.mubr.bf16.gmra.mxu0 %v5364
      %v5475 = vpop.f32.mrf.mxu0
      %v5476 = vadd.f32 0.0, %v5475
      %v5477 = vpop.f32.mrf.mxu0
      %v5478 = vpop.f32.mrf.mxu0
      %v5479 = vadd.f32 0.0, %v5478
      %v5480 = vpop.f32.mrf.mxu0
      %5481 = vmatprep.mubr.bf16.mxu0 0
      %5482 = vmatmul.mubr.bf16.gmra.mxu0 %v5365
      %v5483 = vpop.f32.mrf.mxu0
      %v5484 = vadd.f32 0.0, %v5483
      %v5485 = vpop.f32.mrf.mxu0
      %v5486 = vpop.f32.mrf.mxu0
      %v5487 = vadd.f32 0.0, %v5486
      %v5488 = vpop.f32.mrf.mxu0
      %5489 = vmatprep.mubr.bf16.mxu0 0
      %5490 = vmatmul.mubr.bf16.gmra.mxu0 %v5366
      %v5491 = vpop.f32.mrf.mxu0
      %v5492 = vadd.f32 0.0, %v5491
      %v5493 = vpop.f32.mrf.mxu0
      %v5494 = vpop.f32.mrf.mxu0
      %v5495 = vadd.f32 0.0, %v5494
      %v5496 = vpop.f32.mrf.mxu0
      %5497 = vmatprep.mubr.bf16.mxu0 0
      %5498 = vmatmul.mubr.bf16.gmra.mxu0 %v5367
      %v5499 = vpop.f32.mrf.mxu0
      %v5500 = vadd.f32 0.0, %v5499
      %v5501 = vpop.f32.mrf.mxu0
      %v5502 = vpop.f32.mrf.mxu0
      %v5503 = vadd.f32 0.0, %v5502
      %v5504 = vpop.f32.mrf.mxu0
      %5505 = vdwg.mxu0
      %v5506 = vadd.f32 %v5343, %v5468
      %v5507 = vadd.f32 %v5344, %v5471
      %v5508 = vadd.f32 %v5345, %v5476
      %v5509 = vadd.f32 %v5346, %v5479
      %v5510 = vadd.f32 %v5347, %v5484
      %v5511 = vadd.f32 %v5348, %v5487
      %v5512 = vadd.f32 %v5349, %v5492
      %v5513 = vadd.f32 %v5350, %v5495
      %v5514 = vadd.f32 %v5351, %v5500
      %v5515 = vadd.f32 %v5352, %v5503
      %v5516 = vld [vmem:[#allocation3 + $0x14] sm:$0xff]
      %v5517 = vld [vmem:[#allocation3 + $0x1c] sm:$0xff]
      %v5518 = vld [vmem:[#allocation3 + $0x24] sm:$0xff]
      %v5519 = vld [vmem:[#allocation3 + $0x2c] sm:$0xff]
      %v5520 = vld [vmem:[#allocation3 + $0x34] sm:$0xff]
      %v5521 = vld [vmem:[#allocation3 + $0x3c] sm:$0xff]
      %v5522 = vld [vmem:[#allocation3 + $0x44] sm:$0xff]
      %v5523 = vld [vmem:[#allocation3 + $0x4c] sm:$0xff]
      %v5524 = vld [vmem:[#allocation3 + $0x54] sm:$0xff]
      %v5525 = vld [vmem:[#allocation3 + $0x5c] sm:$0x3f]
      %v5526 = vpack.c.bf16 %v5517, %v5516
      %v5527 = vpack.c.bf16 %v5519, %v5518
      %v5528 = vpack.c.bf16 %v5521, %v5520
      %v5529 = vpack.c.bf16 %v5523, %v5522
      %v5530 = vpack.c.bf16 %v5525, %v5524
      %s5531 = scalar_lea.vmem %s3, 384
      %v5532 = vld [vmem:[%s5531] sm:$0xf]
      %v5533 = vld [vmem:[%s5531 + $0x4] sm:$0xf]
      %v5534 = vld [vmem:[%s5531 + $0x8] sm:$0xf]
      %v5535 = vld [vmem:[%s5531 + $0xc] sm:$0xf]
      %v5536 = vld [vmem:[%s5531 + $0x10] sm:$0xf]
      %v5537 = vld [vmem:[%s5531 + $0x14] sm:$0xf]
      %v5538 = vld [vmem:[%s5531 + $0x18] sm:$0xf]
      %v5539 = vld [vmem:[%s5531 + $0x1c] sm:$0xf]
      %v5540 = vld [vmem:[%s5531 + $0x20] sm:$0xf]
      %v5541 = vld [vmem:[%s5531 + $0x24] sm:$0xf]
      %v5542 = vld [vmem:[%s5531 + $0x28] sm:$0xf]
      %v5543 = vld [vmem:[%s5531 + $0x2c] sm:$0xf]
      %v5544 = vld [vmem:[%s5531 + $0x30] sm:$0xf]
      %v5545 = vld [vmem:[%s5531 + $0x34] sm:$0xf]
      %v5546 = vld [vmem:[%s5531 + $0x38] sm:$0xf]
      %v5547 = vld [vmem:[%s5531 + $0x3c] sm:$0xf]
      %v5564 = vunpack.c.l.b16 %v5532
      %v5565 = vunpack.c.l.b16 %v5533
      %v5566 = vunpack.c.l.b16 %v5534
      %v5567 = vunpack.c.l.b16 %v5535
      %v5568 = vunpack.c.l.b16 %v5536
      %v5569 = vunpack.c.l.b16 %v5537
      %v5570 = vunpack.c.l.b16 %v5538
      %v5571 = vunpack.c.l.b16 %v5539
      %v5572 = vunpack.c.l.b16 %v5540
      %v5573 = vunpack.c.l.b16 %v5541
      %v5574 = vunpack.c.l.b16 %v5542
      %v5575 = vunpack.c.l.b16 %v5543
      %v5576 = vunpack.c.l.b16 %v5544
      %v5577 = vunpack.c.l.b16 %v5545
      %v5578 = vunpack.c.l.b16 %v5546
      %v5579 = vunpack.c.l.b16 %v5547
      %v5580 = vpack.c.b16 %v5565, %v5564
      %v5581 = vpack.c.b16 %v5567, %v5566
      %v5582 = vpack.c.b16 %v5569, %v5568
      %v5583 = vpack.c.b16 %v5571, %v5570
      %v5584 = vpack.c.b16 %v5573, %v5572
      %v5585 = vpack.c.b16 %v5575, %v5574
      %v5586 = vpack.c.b16 %v5577, %v5576
      %v5587 = vpack.c.b16 %v5579, %v5578
      %5596 = vmatprep.subr.bf16.mxu0 0
      %5597 = vmatpush1.bf16.msra.mxu0 %v5587
      %5598 = vmatprep.subr.bf16.mxu0 0
      %5599 = vmatpush1.bf16.msra.mxu0 %v5586
      %5600 = vmatprep.subr.bf16.mxu0 0
      %5601 = vmatpush1.bf16.msra.mxu0 %v5585
      %5602 = vmatprep.subr.bf16.mxu0 0
      %5603 = vmatpush1.bf16.msra.mxu0 %v5584
      %5604 = vmatprep.subr.bf16.mxu0 0
      %5605 = vmatpush1.bf16.msra.mxu0 %v5583
      %5606 = vmatprep.subr.bf16.mxu0 0
      %5607 = vmatpush1.bf16.msra.mxu0 %v5582
      %5608 = vmatprep.subr.bf16.mxu0 0
      %5609 = vmatpush1.bf16.msra.mxu0 %v5581
      %5610 = vmatprep.subr.bf16.mxu0 0
      %5611 = vmatpush1.bf16.msra.mxu0 %v5580
      %5612 = vmatprep.subr.bf16.mxu0 0
      %5613 = vmatpush2.bf16.msra.mxu0 0
      %5614 = vmatprep.subr.bf16.mxu0 0
      %5615 = vmatpush2.bf16.msra.mxu0 0
      %5616 = vmatprep.subr.bf16.mxu0 0
      %5617 = vmatpush2.bf16.msra.mxu0 0
      %5618 = vmatprep.subr.bf16.mxu0 0
      %5619 = vmatpush2.bf16.msra.mxu0 0
      %5620 = vmatprep.subr.bf16.mxu0 0
      %5621 = vmatpush2.bf16.msra.mxu0 0
      %5622 = vmatprep.subr.bf16.mxu0 0
      %5623 = vmatpush2.bf16.msra.mxu0 0
      %5624 = vmatprep.subr.bf16.mxu0 0
      %5625 = vmatpush2.bf16.msra.mxu0 0
      %5626 = vmatprep.subr.bf16.mxu0 0
      %5627 = vmatpush2.bf16.msra.mxu0 0
      %5628 = vmatprep.mubr.bf16.mxu0 0
      %5629 = vmatmul.mubr.bf16.gmra.mxu0 %v5526
      %v5630 = vpop.f32.mrf.mxu0
      %v5631 = vadd.f32 0.0, %v5630
      %v5632 = vpop.f32.mrf.mxu0
      %v5633 = vpop.f32.mrf.mxu0
      %v5634 = vadd.f32 0.0, %v5633
      %v5635 = vpop.f32.mrf.mxu0
      %5636 = vmatprep.mubr.bf16.mxu0 0
      %5637 = vmatmul.mubr.bf16.gmra.mxu0 %v5527
      %v5638 = vpop.f32.mrf.mxu0
      %v5639 = vadd.f32 0.0, %v5638
      %v5640 = vpop.f32.mrf.mxu0
      %v5641 = vpop.f32.mrf.mxu0
      %v5642 = vadd.f32 0.0, %v5641
      %v5643 = vpop.f32.mrf.mxu0
      %5644 = vmatprep.mubr.bf16.mxu0 0
      %5645 = vmatmul.mubr.bf16.gmra.mxu0 %v5528
      %v5646 = vpop.f32.mrf.mxu0
      %v5647 = vadd.f32 0.0, %v5646
      %v5648 = vpop.f32.mrf.mxu0
      %v5649 = vpop.f32.mrf.mxu0
      %v5650 = vadd.f32 0.0, %v5649
      %v5651 = vpop.f32.mrf.mxu0
      %5652 = vmatprep.mubr.bf16.mxu0 0
      %5653 = vmatmul.mubr.bf16.gmra.mxu0 %v5529
      %v5654 = vpop.f32.mrf.mxu0
      %v5655 = vadd.f32 0.0, %v5654
      %v5656 = vpop.f32.mrf.mxu0
      %v5657 = vpop.f32.mrf.mxu0
      %v5658 = vadd.f32 0.0, %v5657
      %v5659 = vpop.f32.mrf.mxu0
      %5660 = vmatprep.mubr.bf16.mxu0 0
      %5661 = vmatmul.mubr.bf16.gmra.mxu0 %v5530
      %v5662 = vpop.f32.mrf.mxu0
      %v5663 = vadd.f32 0.0, %v5662
      %v5664 = vpop.f32.mrf.mxu0
      %v5665 = vpop.f32.mrf.mxu0
      %v5666 = vadd.f32 0.0, %v5665
      %v5667 = vpop.f32.mrf.mxu0
      %5668 = vdwg.mxu0
      %v5669 = vadd.f32 %v5506, %v5631
      %v5670 = vadd.f32 %v5507, %v5634
      %v5671 = vadd.f32 %v5508, %v5639
      %v5672 = vadd.f32 %v5509, %v5642
      %v5673 = vadd.f32 %v5510, %v5647
      %v5674 = vadd.f32 %v5511, %v5650
      %v5675 = vadd.f32 %v5512, %v5655
      %v5676 = vadd.f32 %v5513, %v5658
      %v5677 = vadd.f32 %v5514, %v5663
      %v5678 = vadd.f32 %v5515, %v5666
      %v5679 = vld [vmem:[#allocation3 + $0x15] sm:$0xff]
      %v5680 = vld [vmem:[#allocation3 + $0x1d] sm:$0xff]
      %v5681 = vld [vmem:[#allocation3 + $0x25] sm:$0xff]
      %v5682 = vld [vmem:[#allocation3 + $0x2d] sm:$0xff]
      %v5683 = vld [vmem:[#allocation3 + $0x35] sm:$0xff]
      %v5684 = vld [vmem:[#allocation3 + $0x3d] sm:$0xff]
      %v5685 = vld [vmem:[#allocation3 + $0x45] sm:$0xff]
      %v5686 = vld [vmem:[#allocation3 + $0x4d] sm:$0xff]
      %v5687 = vld [vmem:[#allocation3 + $0x55] sm:$0xff]
      %v5688 = vld [vmem:[#allocation3 + $0x5d] sm:$0x3f]
      %v5689 = vpack.c.bf16 %v5680, %v5679
      %v5690 = vpack.c.bf16 %v5682, %v5681
      %v5691 = vpack.c.bf16 %v5684, %v5683
      %v5692 = vpack.c.bf16 %v5686, %v5685
      %v5693 = vpack.c.bf16 %v5688, %v5687
      %s5694 = scalar_lea.vmem %s3, 448
      %v5695 = vld [vmem:[%s5694] sm:$0xf]
      %v5696 = vld [vmem:[%s5694 + $0x4] sm:$0xf]
      %v5697 = vld [vmem:[%s5694 + $0x8] sm:$0xf]
      %v5698 = vld [vmem:[%s5694 + $0xc] sm:$0xf]
      %v5699 = vld [vmem:[%s5694 + $0x10] sm:$0xf]
      %v5700 = vld [vmem:[%s5694 + $0x14] sm:$0xf]
      %v5701 = vld [vmem:[%s5694 + $0x18] sm:$0xf]
      %v5702 = vld [vmem:[%s5694 + $0x1c] sm:$0xf]
      %v5703 = vld [vmem:[%s5694 + $0x20] sm:$0xf]
      %v5704 = vld [vmem:[%s5694 + $0x24] sm:$0xf]
      %v5705 = vld [vmem:[%s5694 + $0x28] sm:$0xf]
      %v5706 = vld [vmem:[%s5694 + $0x2c] sm:$0xf]
      %v5707 = vld [vmem:[%s5694 + $0x30] sm:$0xf]
      %v5708 = vld [vmem:[%s5694 + $0x34] sm:$0xf]
      %v5709 = vld [vmem:[%s5694 + $0x38] sm:$0xf]
      %v5710 = vld [vmem:[%s5694 + $0x3c] sm:$0xf]
      %v5727 = vunpack.c.l.b16 %v5695
      %v5728 = vunpack.c.l.b16 %v5696
      %v5729 = vunpack.c.l.b16 %v5697
      %v5730 = vunpack.c.l.b16 %v5698
      %v5731 = vunpack.c.l.b16 %v5699
      %v5732 = vunpack.c.l.b16 %v5700
      %v5733 = vunpack.c.l.b16 %v5701
      %v5734 = vunpack.c.l.b16 %v5702
      %v5735 = vunpack.c.l.b16 %v5703
      %v5736 = vunpack.c.l.b16 %v5704
      %v5737 = vunpack.c.l.b16 %v5705
      %v5738 = vunpack.c.l.b16 %v5706
      %v5739 = vunpack.c.l.b16 %v5707
      %v5740 = vunpack.c.l.b16 %v5708
      %v5741 = vunpack.c.l.b16 %v5709
      %v5742 = vunpack.c.l.b16 %v5710
      %v5743 = vpack.c.b16 %v5728, %v5727
      %v5744 = vpack.c.b16 %v5730, %v5729
      %v5745 = vpack.c.b16 %v5732, %v5731
      %v5746 = vpack.c.b16 %v5734, %v5733
      %v5747 = vpack.c.b16 %v5736, %v5735
      %v5748 = vpack.c.b16 %v5738, %v5737
      %v5749 = vpack.c.b16 %v5740, %v5739
      %v5750 = vpack.c.b16 %v5742, %v5741
      %5759 = vmatprep.subr.bf16.mxu0 0
      %5760 = vmatpush1.bf16.msra.mxu0 %v5750
      %5761 = vmatprep.subr.bf16.mxu0 0
      %5762 = vmatpush1.bf16.msra.mxu0 %v5749
      %5763 = vmatprep.subr.bf16.mxu0 0
      %5764 = vmatpush1.bf16.msra.mxu0 %v5748
      %5765 = vmatprep.subr.bf16.mxu0 0
      %5766 = vmatpush1.bf16.msra.mxu0 %v5747
      %5767 = vmatprep.subr.bf16.mxu0 0
      %5768 = vmatpush1.bf16.msra.mxu0 %v5746
      %5769 = vmatprep.subr.bf16.mxu0 0
      %5770 = vmatpush1.bf16.msra.mxu0 %v5745
      %5771 = vmatprep.subr.bf16.mxu0 0
      %5772 = vmatpush1.bf16.msra.mxu0 %v5744
      %5773 = vmatprep.subr.bf16.mxu0 0
      %5774 = vmatpush1.bf16.msra.mxu0 %v5743
      %5775 = vmatprep.subr.bf16.mxu0 0
      %5776 = vmatpush2.bf16.msra.mxu0 0
      %5777 = vmatprep.subr.bf16.mxu0 0
      %5778 = vmatpush2.bf16.msra.mxu0 0
      %5779 = vmatprep.subr.bf16.mxu0 0
      %5780 = vmatpush2.bf16.msra.mxu0 0
      %5781 = vmatprep.subr.bf16.mxu0 0
      %5782 = vmatpush2.bf16.msra.mxu0 0
      %5783 = vmatprep.subr.bf16.mxu0 0
      %5784 = vmatpush2.bf16.msra.mxu0 0
      %5785 = vmatprep.subr.bf16.mxu0 0
      %5786 = vmatpush2.bf16.msra.mxu0 0
      %5787 = vmatprep.subr.bf16.mxu0 0
      %5788 = vmatpush2.bf16.msra.mxu0 0
      %5789 = vmatprep.subr.bf16.mxu0 0
      %5790 = vmatpush2.bf16.msra.mxu0 0
      %5791 = vmatprep.mubr.bf16.mxu0 0
      %5792 = vmatmul.mubr.bf16.gmra.mxu0 %v5689
      %v5793 = vpop.f32.mrf.mxu0
      %v5794 = vadd.f32 0.0, %v5793
      %v5795 = vpop.f32.mrf.mxu0
      %v5796 = vpop.f32.mrf.mxu0
      %v5797 = vadd.f32 0.0, %v5796
      %v5798 = vpop.f32.mrf.mxu0
      %5799 = vmatprep.mubr.bf16.mxu0 0
      %5800 = vmatmul.mubr.bf16.gmra.mxu0 %v5690
      %v5801 = vpop.f32.mrf.mxu0
      %v5802 = vadd.f32 0.0, %v5801
      %v5803 = vpop.f32.mrf.mxu0
      %v5804 = vpop.f32.mrf.mxu0
      %v5805 = vadd.f32 0.0, %v5804
      %v5806 = vpop.f32.mrf.mxu0
      %5807 = vmatprep.mubr.bf16.mxu0 0
      %5808 = vmatmul.mubr.bf16.gmra.mxu0 %v5691
      %v5809 = vpop.f32.mrf.mxu0
      %v5810 = vadd.f32 0.0, %v5809
      %v5811 = vpop.f32.mrf.mxu0
      %v5812 = vpop.f32.mrf.mxu0
      %v5813 = vadd.f32 0.0, %v5812
      %v5814 = vpop.f32.mrf.mxu0
      %5815 = vmatprep.mubr.bf16.mxu0 0
      %5816 = vmatmul.mubr.bf16.gmra.mxu0 %v5692
      %v5817 = vpop.f32.mrf.mxu0
      %v5818 = vadd.f32 0.0, %v5817
      %v5819 = vpop.f32.mrf.mxu0
      %v5820 = vpop.f32.mrf.mxu0
      %v5821 = vadd.f32 0.0, %v5820
      %v5822 = vpop.f32.mrf.mxu0
      %5823 = vmatprep.mubr.bf16.mxu0 0
      %5824 = vmatmul.mubr.bf16.gmra.mxu0 %v5693
      %v5825 = vpop.f32.mrf.mxu0
      %v5826 = vadd.f32 0.0, %v5825
      %v5827 = vpop.f32.mrf.mxu0
      %v5828 = vpop.f32.mrf.mxu0
      %v5829 = vadd.f32 0.0, %v5828
      %v5830 = vpop.f32.mrf.mxu0
      %5831 = vdwg.mxu0
      %v5832 = vadd.f32 %v5669, %v5794
      %v5833 = vadd.f32 %v5670, %v5797
      %v5834 = vadd.f32 %v5671, %v5802
      %v5835 = vadd.f32 %v5672, %v5805
      %v5836 = vadd.f32 %v5673, %v5810
      %v5837 = vadd.f32 %v5674, %v5813
      %v5838 = vadd.f32 %v5675, %v5818
      %v5839 = vadd.f32 %v5676, %v5821
      %v5840 = vadd.f32 %v5677, %v5826
      %v5841 = vadd.f32 %v5678, %v5829
      %v5842 = vld [vmem:[#allocation3 + $0x16] sm:$0xff]
      %v5843 = vld [vmem:[#allocation3 + $0x1e] sm:$0xff]
      %v5844 = vld [vmem:[#allocation3 + $0x26] sm:$0xff]
      %v5845 = vld [vmem:[#allocation3 + $0x2e] sm:$0xff]
      %v5846 = vld [vmem:[#allocation3 + $0x36] sm:$0xff]
      %v5847 = vld [vmem:[#allocation3 + $0x3e] sm:$0xff]
      %v5848 = vld [vmem:[#allocation3 + $0x46] sm:$0xff]
      %v5849 = vld [vmem:[#allocation3 + $0x4e] sm:$0xff]
      %v5850 = vld [vmem:[#allocation3 + $0x56] sm:$0xff]
      %v5851 = vld [vmem:[#allocation3 + $0x5e] sm:$0x3f]
      %v5852 = vpack.c.bf16 %v5843, %v5842
      %v5853 = vpack.c.bf16 %v5845, %v5844
      %v5854 = vpack.c.bf16 %v5847, %v5846
      %v5855 = vpack.c.bf16 %v5849, %v5848
      %v5856 = vpack.c.bf16 %v5851, %v5850
      %s5857 = scalar_lea.vmem %s3, 512
      %v5858 = vld [vmem:[%s5857] sm:$0xf]
      %v5859 = vld [vmem:[%s5857 + $0x4] sm:$0xf]
      %v5860 = vld [vmem:[%s5857 + $0x8] sm:$0xf]
      %v5861 = vld [vmem:[%s5857 + $0xc] sm:$0xf]
      %v5862 = vld [vmem:[%s5857 + $0x10] sm:$0xf]
      %v5863 = vld [vmem:[%s5857 + $0x14] sm:$0xf]
      %v5864 = vld [vmem:[%s5857 + $0x18] sm:$0xf]
      %v5865 = vld [vmem:[%s5857 + $0x1c] sm:$0xf]
      %v5866 = vld [vmem:[%s5857 + $0x20] sm:$0xf]
      %v5867 = vld [vmem:[%s5857 + $0x24] sm:$0xf]
      %v5868 = vld [vmem:[%s5857 + $0x28] sm:$0xf]
      %v5869 = vld [vmem:[%s5857 + $0x2c] sm:$0xf]
      %v5870 = vld [vmem:[%s5857 + $0x30] sm:$0xf]
      %v5871 = vld [vmem:[%s5857 + $0x34] sm:$0xf]
      %v5872 = vld [vmem:[%s5857 + $0x38] sm:$0xf]
      %v5873 = vld [vmem:[%s5857 + $0x3c] sm:$0xf]
      %v5890 = vunpack.c.l.b16 %v5858
      %v5891 = vunpack.c.l.b16 %v5859
      %v5892 = vunpack.c.l.b16 %v5860
      %v5893 = vunpack.c.l.b16 %v5861
      %v5894 = vunpack.c.l.b16 %v5862
      %v5895 = vunpack.c.l.b16 %v5863
      %v5896 = vunpack.c.l.b16 %v5864
      %v5897 = vunpack.c.l.b16 %v5865
      %v5898 = vunpack.c.l.b16 %v5866
      %v5899 = vunpack.c.l.b16 %v5867
      %v5900 = vunpack.c.l.b16 %v5868
      %v5901 = vunpack.c.l.b16 %v5869
      %v5902 = vunpack.c.l.b16 %v5870
      %v5903 = vunpack.c.l.b16 %v5871
      %v5904 = vunpack.c.l.b16 %v5872
      %v5905 = vunpack.c.l.b16 %v5873
      %v5906 = vpack.c.b16 %v5891, %v5890
      %v5907 = vpack.c.b16 %v5893, %v5892
      %v5908 = vpack.c.b16 %v5895, %v5894
      %v5909 = vpack.c.b16 %v5897, %v5896
      %v5910 = vpack.c.b16 %v5899, %v5898
      %v5911 = vpack.c.b16 %v5901, %v5900
      %v5912 = vpack.c.b16 %v5903, %v5902
      %v5913 = vpack.c.b16 %v5905, %v5904
      %5922 = vmatprep.subr.bf16.mxu0 0
      %5923 = vmatpush1.bf16.msra.mxu0 %v5913
      %5924 = vmatprep.subr.bf16.mxu0 0
      %5925 = vmatpush1.bf16.msra.mxu0 %v5912
      %5926 = vmatprep.subr.bf16.mxu0 0
      %5927 = vmatpush1.bf16.msra.mxu0 %v5911
      %5928 = vmatprep.subr.bf16.mxu0 0
      %5929 = vmatpush1.bf16.msra.mxu0 %v5910
      %5930 = vmatprep.subr.bf16.mxu0 0
      %5931 = vmatpush1.bf16.msra.mxu0 %v5909
      %5932 = vmatprep.subr.bf16.mxu0 0
      %5933 = vmatpush1.bf16.msra.mxu0 %v5908
      %5934 = vmatprep.subr.bf16.mxu0 0
      %5935 = vmatpush1.bf16.msra.mxu0 %v5907
      %5936 = vmatprep.subr.bf16.mxu0 0
      %5937 = vmatpush1.bf16.msra.mxu0 %v5906
      %5938 = vmatprep.subr.bf16.mxu0 0
      %5939 = vmatpush2.bf16.msra.mxu0 0
      %5940 = vmatprep.subr.bf16.mxu0 0
      %5941 = vmatpush2.bf16.msra.mxu0 0
      %5942 = vmatprep.subr.bf16.mxu0 0
      %5943 = vmatpush2.bf16.msra.mxu0 0
      %5944 = vmatprep.subr.bf16.mxu0 0
      %5945 = vmatpush2.bf16.msra.mxu0 0
      %5946 = vmatprep.subr.bf16.mxu0 0
      %5947 = vmatpush2.bf16.msra.mxu0 0
      %5948 = vmatprep.subr.bf16.mxu0 0
      %5949 = vmatpush2.bf16.msra.mxu0 0
      %5950 = vmatprep.subr.bf16.mxu0 0
      %5951 = vmatpush2.bf16.msra.mxu0 0
      %5952 = vmatprep.subr.bf16.mxu0 0
      %5953 = vmatpush2.bf16.msra.mxu0 0
      %5954 = vmatprep.mubr.bf16.mxu0 0
      %5955 = vmatmul.mubr.bf16.gmra.mxu0 %v5852
      %v5956 = vpop.f32.mrf.mxu0
      %v5957 = vadd.f32 0.0, %v5956
      %v5958 = vpop.f32.mrf.mxu0
      %v5959 = vpop.f32.mrf.mxu0
      %v5960 = vadd.f32 0.0, %v5959
      %v5961 = vpop.f32.mrf.mxu0
      %5962 = vmatprep.mubr.bf16.mxu0 0
      %5963 = vmatmul.mubr.bf16.gmra.mxu0 %v5853
      %v5964 = vpop.f32.mrf.mxu0
      %v5965 = vadd.f32 0.0, %v5964
      %v5966 = vpop.f32.mrf.mxu0
      %v5967 = vpop.f32.mrf.mxu0
      %v5968 = vadd.f32 0.0, %v5967
      %v5969 = vpop.f32.mrf.mxu0
      %5970 = vmatprep.mubr.bf16.mxu0 0
      %5971 = vmatmul.mubr.bf16.gmra.mxu0 %v5854
      %v5972 = vpop.f32.mrf.mxu0
      %v5973 = vadd.f32 0.0, %v5972
      %v5974 = vpop.f32.mrf.mxu0
      %v5975 = vpop.f32.mrf.mxu0
      %v5976 = vadd.f32 0.0, %v5975
      %v5977 = vpop.f32.mrf.mxu0
      %5978 = vmatprep.mubr.bf16.mxu0 0
      %5979 = vmatmul.mubr.bf16.gmra.mxu0 %v5855
      %v5980 = vpop.f32.mrf.mxu0
      %v5981 = vadd.f32 0.0, %v5980
      %v5982 = vpop.f32.mrf.mxu0
      %v5983 = vpop.f32.mrf.mxu0
      %v5984 = vadd.f32 0.0, %v5983
      %v5985 = vpop.f32.mrf.mxu0
      %5986 = vmatprep.mubr.bf16.mxu0 0
      %5987 = vmatmul.mubr.bf16.gmra.mxu0 %v5856
      %v5988 = vpop.f32.mrf.mxu0
      %v5989 = vadd.f32 0.0, %v5988
      %v5990 = vpop.f32.mrf.mxu0
      %v5991 = vpop.f32.mrf.mxu0
      %v5992 = vadd.f32 0.0, %v5991
      %v5993 = vpop.f32.mrf.mxu0
      %5994 = vdwg.mxu0
      %v5995 = vadd.f32 %v5832, %v5957
      %v5996 = vadd.f32 %v5833, %v5960
      %v5997 = vadd.f32 %v5834, %v5965
      %v5998 = vadd.f32 %v5835, %v5968
      %v5999 = vadd.f32 %v5836, %v5973
      %v6000 = vadd.f32 %v5837, %v5976
      %v6001 = vadd.f32 %v5838, %v5981
      %v6002 = vadd.f32 %v5839, %v5984
      %v6003 = vadd.f32 %v5840, %v5989
      %v6004 = vadd.f32 %v5841, %v5992
      %v6005 = vld [vmem:[%s4] sm:$0x1]
      %v6007 = vlaneseq
      %v6008 = vshrl.u32 %v6007, 7
      %v6009 = vsub.s32 0, %v6008
      %v6010 = vrot.slane %v6005, %v6009
      %v6012 = vadd.f32 %v5995, %v6010
      %v6013 = vadd.f32 %v5996, %v6010
      %v6014 = vadd.f32 %v5997, %v6010
      %v6015 = vadd.f32 %v5998, %v6010
      %v6016 = vadd.f32 %v5999, %v6010
      %v6017 = vadd.f32 %v6000, %v6010
      %v6018 = vadd.f32 %v6001, %v6010
      %v6019 = vadd.f32 %v6002, %v6010
      %v6020 = vadd.f32 %v6003, %v6010
      %v6021 = vadd.f32 %v6004, %v6010
      %v6022 = vmax.f32 %v6012, 0.0
      %v6023 = vmax.f32 %v6013, 0.0
      %v6024 = vmax.f32 %v6014, 0.0
      %v6025 = vmax.f32 %v6015, 0.0
      %v6026 = vmax.f32 %v6016, 0.0
      %v6027 = vmax.f32 %v6017, 0.0
      %v6028 = vmax.f32 %v6018, 0.0
      %v6029 = vmax.f32 %v6019, 0.0
      %v6030 = vmax.f32 %v6020, 0.0
      %v6031 = vmax.f32 %v6021, 0.0
      %6032 = vst [vmem:[#allocation4] sm:$0xff] 0.0
      %6033 = vst [vmem:[#allocation4 + $0x8] sm:$0xff] 0.0
      %6034 = vst [vmem:[#allocation4 + $0x10] sm:$0xff] 0.0
      %6035 = vst [vmem:[#allocation4 + $0x18] sm:$0xff] 0.0
      %6036 = vst [vmem:[#allocation4 + $0x20] sm:$0xff] 0.0
      %6037 = vst [vmem:[#allocation4 + $0x28] sm:$0xff] 0.0
      %6038 = vst [vmem:[#allocation4 + $0x30] sm:$0xff] 0.0
      %6039 = vst [vmem:[#allocation4 + $0x38] sm:$0xff] 0.0
      %6040 = vst [vmem:[#allocation4 + $0x40] sm:$0xff] 0.0
      %6041 = vst [vmem:[#allocation4 + $0x48] sm:$0xff] 0.0
      %6042 = vst [vmem:[#allocation4 + $0x50] sm:$0xff] 0.0
      %6043 = vst [vmem:[#allocation4 + $0x58] sm:$0xff] 0.0
      %6044 = vst [vmem:[#allocation4 + $0x60] sm:$0xf] 0.0
      %6045 = vst [vmem:[#allocation4 + $0xb] sm:$0xff] %v6022
      %6046 = vst [vmem:[#allocation4 + $0x13] sm:$0xff] %v6023
      %6047 = vst [vmem:[#allocation4 + $0x1b] sm:$0xff] %v6024
      %6048 = vst [vmem:[#allocation4 + $0x23] sm:$0xff] %v6025
      %6049 = vst [vmem:[#allocation4 + $0x2b] sm:$0xff] %v6026
      %6050 = vst [vmem:[#allocation4 + $0x33] sm:$0xff] %v6027
      %6051 = vst [vmem:[#allocation4 + $0x3b] sm:$0xff] %v6028
      %6052 = vst [vmem:[#allocation4 + $0x43] sm:$0xff] %v6029
      %6053 = vst [vmem:[#allocation4 + $0x4b] sm:$0xff] %v6030
      %6054 = vst [vmem:[#allocation4 + $0x53] sm:$0x3f] %v6031
      %v6055 = vld [vmem:[%s13] sm:$0xf]
      %v6056 = vld [vmem:[%s13 + $0x4] sm:$0xf]
      %v6057 = vld [vmem:[%s13 + $0x8] sm:$0xf]
      %v6058 = vld [vmem:[%s13 + $0xc] sm:$0xf]
      %v6059 = vld [vmem:[%s13 + $0x10] sm:$0xf]
      %v6060 = vld [vmem:[%s13 + $0x14] sm:$0xf]
      %v6061 = vld [vmem:[%s13 + $0x18] sm:$0xf]
      %v6062 = vld [vmem:[%s13 + $0x1c] sm:$0xf]
      %v6063 = vld [vmem:[#allocation4] sm:$0xff]
      %v6064 = vld [vmem:[#allocation4 + $0x8] sm:$0xff]
      %v6065 = vld [vmem:[#allocation4 + $0x10] sm:$0xff]
      %v6066 = vld [vmem:[#allocation4 + $0x18] sm:$0xff]
      %v6067 = vld [vmem:[#allocation4 + $0x20] sm:$0xff]
      %v6068 = vld [vmem:[#allocation4 + $0x28] sm:$0xff]
      %v6069 = vld [vmem:[#allocation4 + $0x30] sm:$0xff]
      %v6070 = vld [vmem:[#allocation4 + $0x38] sm:$0xff]
      %v6071 = vld [vmem:[#allocation4 + $0x40] sm:$0xff]
      %v6072 = vld [vmem:[#allocation4 + $0x48] sm:$0xff]
      %v6073 = vld [vmem:[#allocation4 + $0x50] sm:$0xff]
      %v6074 = vld [vmem:[#allocation4 + $0x58] sm:$0xff]
      %v6075 = vld [vmem:[#allocation4 + $0x60] sm:$0xf]
      %v6076 = vpack.c.bf16 %v6064, %v6063
      %v6077 = vpack.c.bf16 %v6066, %v6065
      %v6078 = vpack.c.bf16 %v6068, %v6067
      %v6079 = vpack.c.bf16 %v6070, %v6069
      %v6080 = vpack.c.bf16 %v6072, %v6071
      %v6081 = vpack.c.bf16 %v6074, %v6073
      %v6082 = vpack.c.bf16 %v6075, %v6075
      %v6091 = vunpack.c.l.b16 %v6055
      %v6092 = vunpack.c.l.b16 %v6056
      %v6093 = vunpack.c.l.b16 %v6057
      %v6094 = vunpack.c.l.b16 %v6058
      %v6095 = vunpack.c.l.b16 %v6059
      %v6096 = vunpack.c.l.b16 %v6060
      %v6097 = vunpack.c.l.b16 %v6061
      %v6098 = vunpack.c.l.b16 %v6062
      %v6099 = vpack.c.b16 %v6092, %v6091
      %v6100 = vpack.c.b16 %v6094, %v6093
      %v6101 = vpack.c.b16 %v6096, %v6095
      %v6102 = vpack.c.b16 %v6098, %v6097
      %vm6103 = vcmask 818176
      %v6105 = vsel %vm6103, %v6099, 0
      %v6108 = vsel %vm6103, %v6100, 0
      %v6111 = vsel %vm6103, %v6101, 0
      %v6114 = vsel %vm6103, %v6102, 0
      %v6117 = vsel %vm4036, %v6082, 0
      %6119 = vmatprep.subr.bf16.mxu0 0
      %6120 = vmatpush1.bf16.msra.mxu0 0
      %6121 = vmatprep.subr.bf16.mxu0 0
      %6122 = vmatpush1.bf16.msra.mxu0 %v6117
      %6123 = vmatprep.subr.bf16.mxu0 0
      %6124 = vmatpush1.bf16.msra.mxu0 %v6081
      %6125 = vmatprep.subr.bf16.mxu0 0
      %6126 = vmatpush1.bf16.msra.mxu0 %v6080
      %6127 = vmatprep.subr.bf16.mxu0 0
      %6128 = vmatpush1.bf16.msra.mxu0 %v6079
      %6129 = vmatprep.subr.bf16.mxu0 0
      %6130 = vmatpush1.bf16.msra.mxu0 %v6078
      %6131 = vmatprep.subr.bf16.mxu0 0
      %6132 = vmatpush1.bf16.msra.mxu0 %v6077
      %6133 = vmatprep.subr.bf16.mxu0 0
      %6134 = vmatpush1.bf16.msra.mxu0 %v6076
      %6135 = vmatprep.subr.bf16.mxu0 0
      %6136 = vmatpush2.bf16.msra.mxu0 0
      %6137 = vmatprep.subr.bf16.mxu0 0
      %6138 = vmatpush2.bf16.msra.mxu0 0
      %6139 = vmatprep.subr.bf16.mxu0 0
      %6140 = vmatpush2.bf16.msra.mxu0 0
      %6141 = vmatprep.subr.bf16.mxu0 0
      %6142 = vmatpush2.bf16.msra.mxu0 0
      %6143 = vmatprep.subr.bf16.mxu0 0
      %6144 = vmatpush2.bf16.msra.mxu0 0
      %6145 = vmatprep.subr.bf16.mxu0 0
      %6146 = vmatpush2.bf16.msra.mxu0 0
      %6147 = vmatprep.subr.bf16.mxu0 0
      %6148 = vmatpush2.bf16.msra.mxu0 0
      %6149 = vmatprep.subr.bf16.mxu0 0
      %6150 = vmatpush2.bf16.msra.mxu0 0
      %6151 = vmatprep.mubr.bf16.mxu0 0
      %6152 = vmatmul.mubr.bf16.gmra.mxu0 %v6105
      %v6153 = vpop.f32.mrf.mxu0
      %v6154 = vadd.f32 0.0, %v6153
      %v6155 = vpop.f32.mrf.mxu0
      %v6156 = vpop.f32.mrf.mxu0
      %v6157 = vadd.f32 0.0, %v6156
      %v6158 = vpop.f32.mrf.mxu0
      %6159 = vmatprep.mubr.bf16.mxu0 0
      %6160 = vmatmul.mubr.bf16.gmra.mxu0 %v6108
      %v6161 = vpop.f32.mrf.mxu0
      %v6162 = vadd.f32 0.0, %v6161
      %v6163 = vpop.f32.mrf.mxu0
      %v6164 = vpop.f32.mrf.mxu0
      %v6165 = vadd.f32 0.0, %v6164
      %v6166 = vpop.f32.mrf.mxu0
      %6167 = vmatprep.mubr.bf16.mxu0 0
      %6168 = vmatmul.mubr.bf16.gmra.mxu0 %v6111
      %v6169 = vpop.f32.mrf.mxu0
      %v6170 = vadd.f32 0.0, %v6169
      %v6171 = vpop.f32.mrf.mxu0
      %v6172 = vpop.f32.mrf.mxu0
      %v6173 = vadd.f32 0.0, %v6172
      %v6174 = vpop.f32.mrf.mxu0
      %6175 = vmatprep.mubr.bf16.mxu0 0
      %6176 = vmatmul.mubr.bf16.gmra.mxu0 %v6114
      %v6177 = vpop.f32.mrf.mxu0
      %v6178 = vadd.f32 0.0, %v6177
      %v6179 = vpop.f32.mrf.mxu0
      %v6180 = vpop.f32.mrf.mxu0
      %v6181 = vadd.f32 0.0, %v6180
      %v6182 = vpop.f32.mrf.mxu0
      %6183 = vdwg.mxu0
      %v6184 = vmax.f32 %v6154, %v6162
      %v6185 = vmax.f32 %v6157, %v6165
      %v6186 = vmax.f32 %v6170, %v6178
      %v6187 = vmax.f32 %v6173, %v6181
      %v6188 = vmax.f32 %v6184, %v6186
      %v6189 = vmax.f32 %v6185, %v6187
      %v6190 = vld [vmem:[%s14] sm:$0xf]
      %v6191 = vld [vmem:[%s14 + $0x4] sm:$0xf]
      %v6192 = vld [vmem:[%s14 + $0x8] sm:$0xf]
      %v6193 = vld [vmem:[%s14 + $0xc] sm:$0xf]
      %v6194 = vld [vmem:[%s14 + $0x10] sm:$0x3]
      %v6195 = vpack.c.bf16 %v6189, %v6188
      %v6201 = vunpack.c.l.b16 %v6190
      %v6202 = vunpack.c.l.b16 %v6191
      %v6203 = vunpack.c.l.b16 %v6192
      %v6204 = vunpack.c.l.b16 %v6193
      %v6205 = vunpack.c.l.b16 %v6194
      %v6206 = vpack.c.b16 %v6202, %v6201
      %v6207 = vpack.c.b16 %v6204, %v6203
      %v6208 = vpack.c.b16 %v6205, %v6205
      %vm6209 = vcmask 130048
      %v6211 = vsel %vm6209, %v6206, 0
      %v6214 = vsel %vm6209, %v6207, 0
      %v6217 = vsel %vm6209, %v6208, 0
      %6219 = vmatprep.subr.bf16.mxu0 0
      %6220 = vmatpush1.bf16.msra.mxu0 0
      %6221 = vmatprep.subr.bf16.mxu0 0
      %6222 = vmatpush1.bf16.msra.mxu0 0
      %6223 = vmatprep.subr.bf16.mxu0 0
      %6224 = vmatpush1.bf16.msra.mxu0 0
      %6225 = vmatprep.subr.bf16.mxu0 0
      %6226 = vmatpush1.bf16.msra.mxu0 0
      %6227 = vmatprep.subr.bf16.mxu0 0
      %6228 = vmatpush1.bf16.msra.mxu0 0
      %6229 = vmatprep.subr.bf16.mxu0 0
      %6230 = vmatpush1.bf16.msra.mxu0 0
      %6231 = vmatprep.subr.bf16.mxu0 0
      %6232 = vmatpush1.bf16.msra.mxu0 0
      %6233 = vmatprep.subr.bf16.mxu0 0
      %6234 = vmatpush1.bf16.msra.mxu0 %v6195
      %6235 = vmatprep.subr.bf16.mxu0 0
      %6236 = vmatpush2.bf16.msra.mxu0 0
      %6237 = vmatprep.subr.bf16.mxu0 0
      %6238 = vmatpush2.bf16.msra.mxu0 0
      %6239 = vmatprep.subr.bf16.mxu0 0
      %6240 = vmatpush2.bf16.msra.mxu0 0
      %6241 = vmatprep.subr.bf16.mxu0 0
      %6242 = vmatpush2.bf16.msra.mxu0 0
      %6243 = vmatprep.subr.bf16.mxu0 0
      %6244 = vmatpush2.bf16.msra.mxu0 0
      %6245 = vmatprep.subr.bf16.mxu0 0
      %6246 = vmatpush2.bf16.msra.mxu0 0
      %6247 = vmatprep.subr.bf16.mxu0 0
      %6248 = vmatpush2.bf16.msra.mxu0 0
      %6249 = vmatprep.subr.bf16.mxu0 0
      %6250 = vmatpush2.bf16.msra.mxu0 0
      %6251 = vmatprep.mubr.bf16.mxu0 0
      %6252 = vmatmul.mubr.bf16.gmra.mxu0 %v6211
      %v6253 = vpop.f32.mrf.mxu0
      %v6254 = vadd.f32 0.0, %v6253
      %v6255 = vpop.f32.mrf.mxu0
      %v6256 = vpop.f32.mrf.mxu0
      %v6257 = vadd.f32 0.0, %v6256
      %v6258 = vpop.f32.mrf.mxu0
      %6259 = vmatprep.mubr.bf16.mxu0 0
      %6260 = vmatmul.mubr.bf16.gmra.mxu0 %v6214
      %v6261 = vpop.f32.mrf.mxu0
      %v6262 = vadd.f32 0.0, %v6261
      %v6263 = vpop.f32.mrf.mxu0
      %v6264 = vpop.f32.mrf.mxu0
      %v6265 = vadd.f32 0.0, %v6264
      %v6266 = vpop.f32.mrf.mxu0
      %6267 = vmatprep.mubr.bf16.mxu0 0
      %6268 = vmatmul.mubr.bf16.gmra.mxu0 %v6217
      %v6269 = vpop.f32.mrf.mxu0
      %v6270 = vadd.f32 0.0, %v6269
      %v6271 = vpop.f32.mrf.mxu0
      %v6272 = vpop.f32.mrf.mxu0
      %v6273 = vpop.f32.mrf.mxu0
      %6274 = vdwg.mxu0
      %6275 = vst [vmem:[#allocation5] sm:$0xff] %v6254
      %6276 = vst [vmem:[#allocation5 + $0x8] sm:$0xff] %v6257
      %6277 = vst [vmem:[#allocation5 + $0x10] sm:$0xff] %v6262
      %6278 = vst [vmem:[#allocation5 + $0x18] sm:$0xff] %v6265
      %6279 = vst [vmem:[#allocation5 + $0x20] sm:$0xf] %v6270
      %v6280 = vld [vmem:[#allocation5] sm:$0xff]
      %v6281 = vld [vmem:[#allocation5 + $0x8] sm:$0xff]
      %v6282 = vld [vmem:[#allocation5 + $0x10] sm:$0x3f]
      %v6283 = vpack.c.bf16 %v6281, %v6280
      %v6284 = vpack.c.bf16 %v6282, %v6282
      %v6285 = vld [vmem:[%s5] sm:$0xf]
      %v6286 = vld [vmem:[%s5 + $0x4] sm:$0xf]
      %v6287 = vld [vmem:[%s5 + $0x8] sm:$0xf]
      %v6288 = vld [vmem:[%s5 + $0xc] sm:$0xf]
      %v6289 = vld [vmem:[%s5 + $0x10] sm:$0xf]
      %v6290 = vld [vmem:[%s5 + $0x14] sm:$0xf]
      %v6291 = vld [vmem:[%s5 + $0x18] sm:$0xf]
      %v6292 = vld [vmem:[%s5 + $0x1c] sm:$0xf]
      %v6293 = vld [vmem:[%s5 + $0x20] sm:$0xf]
      %v6294 = vld [vmem:[%s5 + $0x24] sm:$0xf]
      %v6295 = vld [vmem:[%s5 + $0x28] sm:$0xf]
      %v6296 = vld [vmem:[%s5 + $0x2c] sm:$0xf]
      %v6297 = vld [vmem:[%s5 + $0x30] sm:$0xf]
      %v6298 = vld [vmem:[%s5 + $0x34] sm:$0xf]
      %v6299 = vld [vmem:[%s5 + $0x38] sm:$0xf]
      %v6300 = vld [vmem:[%s5 + $0x3c] sm:$0xf]
      %v6301 = vld [vmem:[#allocation5 + $0x1] sm:$0xff]
      %v6302 = vld [vmem:[#allocation5 + $0x9] sm:$0xff]
      %v6303 = vld [vmem:[#allocation5 + $0x11] sm:$0x3f]
      %v6304 = vpack.c.bf16 %v6302, %v6301
      %v6305 = vpack.c.bf16 %v6303, %v6303
      %s6306 = scalar_lea.vmem %s5, 64
      %v6307 = vld [vmem:[%s6306] sm:$0xf]
      %v6308 = vld [vmem:[%s6306 + $0x4] sm:$0xf]
      %v6309 = vld [vmem:[%s6306 + $0x8] sm:$0xf]
      %v6310 = vld [vmem:[%s6306 + $0xc] sm:$0xf]
      %v6311 = vld [vmem:[%s6306 + $0x10] sm:$0xf]
      %v6312 = vld [vmem:[%s6306 + $0x14] sm:$0xf]
      %v6313 = vld [vmem:[%s6306 + $0x18] sm:$0xf]
      %v6314 = vld [vmem:[%s6306 + $0x1c] sm:$0xf]
      %v6315 = vld [vmem:[%s6306 + $0x20] sm:$0xf]
      %v6316 = vld [vmem:[%s6306 + $0x24] sm:$0xf]
      %v6317 = vld [vmem:[%s6306 + $0x28] sm:$0xf]
      %v6318 = vld [vmem:[%s6306 + $0x2c] sm:$0xf]
      %v6319 = vld [vmem:[%s6306 + $0x30] sm:$0xf]
      %v6320 = vld [vmem:[%s6306 + $0x34] sm:$0xf]
      %v6321 = vld [vmem:[%s6306 + $0x38] sm:$0xf]
      %v6322 = vld [vmem:[%s6306 + $0x3c] sm:$0xf]
      %v6339 = vunpack.c.l.b16 %v6307
      %v6340 = vunpack.c.l.b16 %v6308
      %v6341 = vunpack.c.l.b16 %v6309
      %v6342 = vunpack.c.l.b16 %v6310
      %v6343 = vunpack.c.l.b16 %v6311
      %v6344 = vunpack.c.l.b16 %v6312
      %v6345 = vunpack.c.l.b16 %v6313
      %v6346 = vunpack.c.l.b16 %v6314
      %v6347 = vunpack.c.l.b16 %v6315
      %v6348 = vunpack.c.l.b16 %v6316
      %v6349 = vunpack.c.l.b16 %v6317
      %v6350 = vunpack.c.l.b16 %v6318
      %v6351 = vunpack.c.l.b16 %v6319
      %v6352 = vunpack.c.l.b16 %v6320
      %v6353 = vunpack.c.l.b16 %v6321
      %v6354 = vunpack.c.l.b16 %v6322
      %v6355 = vpack.c.b16 %v6340, %v6339
      %v6356 = vpack.c.b16 %v6342, %v6341
      %v6357 = vpack.c.b16 %v6344, %v6343
      %v6358 = vpack.c.b16 %v6346, %v6345
      %v6359 = vpack.c.b16 %v6348, %v6347
      %v6360 = vpack.c.b16 %v6350, %v6349
      %v6361 = vpack.c.b16 %v6352, %v6351
      %v6362 = vpack.c.b16 %v6354, %v6353
      %6371 = vmatprep.subr.bf16.mxu0 0
      %6372 = vmatpush1.bf16.msra.mxu0 %v6362
      %6373 = vmatprep.subr.bf16.mxu0 0
      %6374 = vmatpush1.bf16.msra.mxu0 %v6361
      %6375 = vmatprep.subr.bf16.mxu0 0
      %6376 = vmatpush1.bf16.msra.mxu0 %v6360
      %6377 = vmatprep.subr.bf16.mxu0 0
      %6378 = vmatpush1.bf16.msra.mxu0 %v6359
      %6379 = vmatprep.subr.bf16.mxu0 0
      %6380 = vmatpush1.bf16.msra.mxu0 %v6358
      %6381 = vmatprep.subr.bf16.mxu0 0
      %6382 = vmatpush1.bf16.msra.mxu0 %v6357
      %6383 = vmatprep.subr.bf16.mxu0 0
      %6384 = vmatpush1.bf16.msra.mxu0 %v6356
      %6385 = vmatprep.subr.bf16.mxu0 0
      %6386 = vmatpush1.bf16.msra.mxu0 %v6355
      %6387 = vmatprep.subr.bf16.mxu0 0
      %6388 = vmatpush2.bf16.msra.mxu0 0
      %6389 = vmatprep.subr.bf16.mxu0 0
      %6390 = vmatpush2.bf16.msra.mxu0 0
      %6391 = vmatprep.subr.bf16.mxu0 0
      %6392 = vmatpush2.bf16.msra.mxu0 0
      %6393 = vmatprep.subr.bf16.mxu0 0
      %6394 = vmatpush2.bf16.msra.mxu0 0
      %6395 = vmatprep.subr.bf16.mxu0 0
      %6396 = vmatpush2.bf16.msra.mxu0 0
      %6397 = vmatprep.subr.bf16.mxu0 0
      %6398 = vmatpush2.bf16.msra.mxu0 0
      %6399 = vmatprep.subr.bf16.mxu0 0
      %6400 = vmatpush2.bf16.msra.mxu0 0
      %6401 = vmatprep.subr.bf16.mxu0 0
      %6402 = vmatpush2.bf16.msra.mxu0 0
      %6403 = vmatprep.mubr.bf16.mxu0 0
      %6404 = vmatmul.mubr.bf16.gmra.mxu0 %v6304
      %v6405 = vpop.f32.mrf.mxu0
      %v6406 = vadd.f32 0.0, %v6405
      %v6407 = vpop.f32.mrf.mxu0
      %v6408 = vpop.f32.mrf.mxu0
      %v6409 = vadd.f32 0.0, %v6408
      %v6410 = vpop.f32.mrf.mxu0
      %6411 = vmatprep.mubr.bf16.mxu0 0
      %6412 = vmatmul.mubr.bf16.gmra.mxu0 %v6305
      %v6413 = vpop.f32.mrf.mxu0
      %v6414 = vadd.f32 0.0, %v6413
      %v6415 = vpop.f32.mrf.mxu0
      %v6416 = vpop.f32.mrf.mxu0
      %v6417 = vpop.f32.mrf.mxu0
      %6418 = vdwg.mxu0
      %v6435 = vunpack.c.l.b16 %v6285
      %v6436 = vunpack.c.l.b16 %v6286
      %v6437 = vunpack.c.l.b16 %v6287
      %v6438 = vunpack.c.l.b16 %v6288
      %v6439 = vunpack.c.l.b16 %v6289
      %v6440 = vunpack.c.l.b16 %v6290
      %v6441 = vunpack.c.l.b16 %v6291
      %v6442 = vunpack.c.l.b16 %v6292
      %v6443 = vunpack.c.l.b16 %v6293
      %v6444 = vunpack.c.l.b16 %v6294
      %v6445 = vunpack.c.l.b16 %v6295
      %v6446 = vunpack.c.l.b16 %v6296
      %v6447 = vunpack.c.l.b16 %v6297
      %v6448 = vunpack.c.l.b16 %v6298
      %v6449 = vunpack.c.l.b16 %v6299
      %v6450 = vunpack.c.l.b16 %v6300
      %v6451 = vpack.c.b16 %v6436, %v6435
      %v6452 = vpack.c.b16 %v6438, %v6437
      %v6453 = vpack.c.b16 %v6440, %v6439
      %v6454 = vpack.c.b16 %v6442, %v6441
      %v6455 = vpack.c.b16 %v6444, %v6443
      %v6456 = vpack.c.b16 %v6446, %v6445
      %v6457 = vpack.c.b16 %v6448, %v6447
      %v6458 = vpack.c.b16 %v6450, %v6449
      %6467 = vmatprep.subr.bf16.mxu0 0
      %6468 = vmatpush1.bf16.msra.mxu0 %v6458
      %6469 = vmatprep.subr.bf16.mxu0 0
      %6470 = vmatpush1.bf16.msra.mxu0 %v6457
      %6471 = vmatprep.subr.bf16.mxu0 0
      %6472 = vmatpush1.bf16.msra.mxu0 %v6456
      %6473 = vmatprep.subr.bf16.mxu0 0
      %6474 = vmatpush1.bf16.msra.mxu0 %v6455
      %6475 = vmatprep.subr.bf16.mxu0 0
      %6476 = vmatpush1.bf16.msra.mxu0 %v6454
      %6477 = vmatprep.subr.bf16.mxu0 0
      %6478 = vmatpush1.bf16.msra.mxu0 %v6453
      %6479 = vmatprep.subr.bf16.mxu0 0
      %6480 = vmatpush1.bf16.msra.mxu0 %v6452
      %6481 = vmatprep.subr.bf16.mxu0 0
      %6482 = vmatpush1.bf16.msra.mxu0 %v6451
      %6483 = vmatprep.subr.bf16.mxu0 0
      %6484 = vmatpush2.bf16.msra.mxu0 0
      %6485 = vmatprep.subr.bf16.mxu0 0
      %6486 = vmatpush2.bf16.msra.mxu0 0
      %6487 = vmatprep.subr.bf16.mxu0 0
      %6488 = vmatpush2.bf16.msra.mxu0 0
      %6489 = vmatprep.subr.bf16.mxu0 0
      %6490 = vmatpush2.bf16.msra.mxu0 0
      %6491 = vmatprep.subr.bf16.mxu0 0
      %6492 = vmatpush2.bf16.msra.mxu0 0
      %6493 = vmatprep.subr.bf16.mxu0 0
      %6494 = vmatpush2.bf16.msra.mxu0 0
      %6495 = vmatprep.subr.bf16.mxu0 0
      %6496 = vmatpush2.bf16.msra.mxu0 0
      %6497 = vmatprep.subr.bf16.mxu0 0
      %6498 = vmatpush2.bf16.msra.mxu0 0
      %6499 = vmatprep.mubr.bf16.mxu0 0
      %6500 = vmatmul.mubr.bf16.gmra.mxu0 %v6283
      %v6501 = vpop.f32.mrf.mxu0
      %v6502 = vadd.f32 %v6406, %v6501
      %v6503 = vpop.f32.mrf.mxu0
      %v6504 = vpop.f32.mrf.mxu0
      %v6505 = vadd.f32 %v6409, %v6504
      %v6506 = vpop.f32.mrf.mxu0
      %6507 = vmatprep.mubr.bf16.mxu0 0
      %6508 = vmatmul.mubr.bf16.gmra.mxu0 %v6284
      %v6509 = vpop.f32.mrf.mxu0
      %v6510 = vadd.f32 %v6414, %v6509
      %v6511 = vpop.f32.mrf.mxu0
      %v6512 = vpop.f32.mrf.mxu0
      %v6513 = vpop.f32.mrf.mxu0
      %6514 = vdwg.mxu0
      %v6515 = vld [vmem:[#allocation5 + $0x2] sm:$0xff]
      %v6516 = vld [vmem:[#allocation5 + $0xa] sm:$0xff]
      %v6517 = vld [vmem:[#allocation5 + $0x12] sm:$0x3f]
      %v6518 = vpack.c.bf16 %v6516, %v6515
      %v6519 = vpack.c.bf16 %v6517, %v6517
      %s6520 = scalar_lea.vmem %s5, 128
      %v6521 = vld [vmem:[%s6520] sm:$0xf]
      %v6522 = vld [vmem:[%s6520 + $0x4] sm:$0xf]
      %v6523 = vld [vmem:[%s6520 + $0x8] sm:$0xf]
      %v6524 = vld [vmem:[%s6520 + $0xc] sm:$0xf]
      %v6525 = vld [vmem:[%s6520 + $0x10] sm:$0xf]
      %v6526 = vld [vmem:[%s6520 + $0x14] sm:$0xf]
      %v6527 = vld [vmem:[%s6520 + $0x18] sm:$0xf]
      %v6528 = vld [vmem:[%s6520 + $0x1c] sm:$0xf]
      %v6529 = vld [vmem:[%s6520 + $0x20] sm:$0xf]
      %v6530 = vld [vmem:[%s6520 + $0x24] sm:$0xf]
      %v6531 = vld [vmem:[%s6520 + $0x28] sm:$0xf]
      %v6532 = vld [vmem:[%s6520 + $0x2c] sm:$0xf]
      %v6533 = vld [vmem:[%s6520 + $0x30] sm:$0xf]
      %v6534 = vld [vmem:[%s6520 + $0x34] sm:$0xf]
      %v6535 = vld [vmem:[%s6520 + $0x38] sm:$0xf]
      %v6536 = vld [vmem:[%s6520 + $0x3c] sm:$0xf]
      %v6553 = vunpack.c.l.b16 %v6521
      %v6554 = vunpack.c.l.b16 %v6522
      %v6555 = vunpack.c.l.b16 %v6523
      %v6556 = vunpack.c.l.b16 %v6524
      %v6557 = vunpack.c.l.b16 %v6525
      %v6558 = vunpack.c.l.b16 %v6526
      %v6559 = vunpack.c.l.b16 %v6527
      %v6560 = vunpack.c.l.b16 %v6528
      %v6561 = vunpack.c.l.b16 %v6529
      %v6562 = vunpack.c.l.b16 %v6530
      %v6563 = vunpack.c.l.b16 %v6531
      %v6564 = vunpack.c.l.b16 %v6532
      %v6565 = vunpack.c.l.b16 %v6533
      %v6566 = vunpack.c.l.b16 %v6534
      %v6567 = vunpack.c.l.b16 %v6535
      %v6568 = vunpack.c.l.b16 %v6536
      %v6569 = vpack.c.b16 %v6554, %v6553
      %v6570 = vpack.c.b16 %v6556, %v6555
      %v6571 = vpack.c.b16 %v6558, %v6557
      %v6572 = vpack.c.b16 %v6560, %v6559
      %v6573 = vpack.c.b16 %v6562, %v6561
      %v6574 = vpack.c.b16 %v6564, %v6563
      %v6575 = vpack.c.b16 %v6566, %v6565
      %v6576 = vpack.c.b16 %v6568, %v6567
      %6585 = vmatprep.subr.bf16.mxu0 0
      %6586 = vmatpush1.bf16.msra.mxu0 %v6576
      %6587 = vmatprep.subr.bf16.mxu0 0
      %6588 = vmatpush1.bf16.msra.mxu0 %v6575
      %6589 = vmatprep.subr.bf16.mxu0 0
      %6590 = vmatpush1.bf16.msra.mxu0 %v6574
      %6591 = vmatprep.subr.bf16.mxu0 0
      %6592 = vmatpush1.bf16.msra.mxu0 %v6573
      %6593 = vmatprep.subr.bf16.mxu0 0
      %6594 = vmatpush1.bf16.msra.mxu0 %v6572
      %6595 = vmatprep.subr.bf16.mxu0 0
      %6596 = vmatpush1.bf16.msra.mxu0 %v6571
      %6597 = vmatprep.subr.bf16.mxu0 0
      %6598 = vmatpush1.bf16.msra.mxu0 %v6570
      %6599 = vmatprep.subr.bf16.mxu0 0
      %6600 = vmatpush1.bf16.msra.mxu0 %v6569
      %6601 = vmatprep.subr.bf16.mxu0 0
      %6602 = vmatpush2.bf16.msra.mxu0 0
      %6603 = vmatprep.subr.bf16.mxu0 0
      %6604 = vmatpush2.bf16.msra.mxu0 0
      %6605 = vmatprep.subr.bf16.mxu0 0
      %6606 = vmatpush2.bf16.msra.mxu0 0
      %6607 = vmatprep.subr.bf16.mxu0 0
      %6608 = vmatpush2.bf16.msra.mxu0 0
      %6609 = vmatprep.subr.bf16.mxu0 0
      %6610 = vmatpush2.bf16.msra.mxu0 0
      %6611 = vmatprep.subr.bf16.mxu0 0
      %6612 = vmatpush2.bf16.msra.mxu0 0
      %6613 = vmatprep.subr.bf16.mxu0 0
      %6614 = vmatpush2.bf16.msra.mxu0 0
      %6615 = vmatprep.subr.bf16.mxu0 0
      %6616 = vmatpush2.bf16.msra.mxu0 0
      %6617 = vmatprep.mubr.bf16.mxu0 0
      %6618 = vmatmul.mubr.bf16.gmra.mxu0 %v6518
      %v6619 = vpop.f32.mrf.mxu0
      %v6620 = vadd.f32 0.0, %v6619
      %v6621 = vpop.f32.mrf.mxu0
      %v6622 = vpop.f32.mrf.mxu0
      %v6623 = vadd.f32 0.0, %v6622
      %v6624 = vpop.f32.mrf.mxu0
      %6625 = vmatprep.mubr.bf16.mxu0 0
      %6626 = vmatmul.mubr.bf16.gmra.mxu0 %v6519
      %v6627 = vpop.f32.mrf.mxu0
      %v6628 = vadd.f32 0.0, %v6627
      %v6629 = vpop.f32.mrf.mxu0
      %v6630 = vpop.f32.mrf.mxu0
      %v6631 = vpop.f32.mrf.mxu0
      %6632 = vdwg.mxu0
      %v6633 = vadd.f32 %v6502, %v6620
      %v6634 = vadd.f32 %v6505, %v6623
      %v6635 = vadd.f32 %v6510, %v6628
      %v6636 = vld [vmem:[#allocation5 + $0x6] sm:$0xff]
      %v6637 = vld [vmem:[#allocation5 + $0xe] sm:$0xff]
      %v6638 = vld [vmem:[#allocation5 + $0x16] sm:$0x3f]
      %v6639 = vpack.c.bf16 %v6637, %v6636
      %v6640 = vpack.c.bf16 %v6638, %v6638
      %s6641 = scalar_lea.vmem %s5, 192
      %v6642 = vld [vmem:[%s6641] sm:$0xf]
      %v6643 = vld [vmem:[%s6641 + $0x4] sm:$0xf]
      %v6644 = vld [vmem:[%s6641 + $0x8] sm:$0xf]
      %v6645 = vld [vmem:[%s6641 + $0xc] sm:$0xf]
      %v6646 = vld [vmem:[%s6641 + $0x10] sm:$0xf]
      %v6647 = vld [vmem:[%s6641 + $0x14] sm:$0xf]
      %v6648 = vld [vmem:[%s6641 + $0x18] sm:$0xf]
      %v6649 = vld [vmem:[%s6641 + $0x1c] sm:$0xf]
      %v6650 = vld [vmem:[%s6641 + $0x20] sm:$0xf]
      %v6651 = vld [vmem:[%s6641 + $0x24] sm:$0xf]
      %v6652 = vld [vmem:[%s6641 + $0x28] sm:$0xf]
      %v6653 = vld [vmem:[%s6641 + $0x2c] sm:$0xf]
      %v6654 = vld [vmem:[%s6641 + $0x30] sm:$0xf]
      %v6655 = vld [vmem:[%s6641 + $0x34] sm:$0xf]
      %v6656 = vld [vmem:[%s6641 + $0x38] sm:$0xf]
      %v6657 = vld [vmem:[%s6641 + $0x3c] sm:$0xf]
      %v6674 = vunpack.c.l.b16 %v6642
      %v6675 = vunpack.c.l.b16 %v6643
      %v6676 = vunpack.c.l.b16 %v6644
      %v6677 = vunpack.c.l.b16 %v6645
      %v6678 = vunpack.c.l.b16 %v6646
      %v6679 = vunpack.c.l.b16 %v6647
      %v6680 = vunpack.c.l.b16 %v6648
      %v6681 = vunpack.c.l.b16 %v6649
      %v6682 = vunpack.c.l.b16 %v6650
      %v6683 = vunpack.c.l.b16 %v6651
      %v6684 = vunpack.c.l.b16 %v6652
      %v6685 = vunpack.c.l.b16 %v6653
      %v6686 = vunpack.c.l.b16 %v6654
      %v6687 = vunpack.c.l.b16 %v6655
      %v6688 = vunpack.c.l.b16 %v6656
      %v6689 = vunpack.c.l.b16 %v6657
      %v6690 = vpack.c.b16 %v6675, %v6674
      %v6691 = vpack.c.b16 %v6677, %v6676
      %v6692 = vpack.c.b16 %v6679, %v6678
      %v6693 = vpack.c.b16 %v6681, %v6680
      %v6694 = vpack.c.b16 %v6683, %v6682
      %v6695 = vpack.c.b16 %v6685, %v6684
      %v6696 = vpack.c.b16 %v6687, %v6686
      %v6697 = vpack.c.b16 %v6689, %v6688
      %6706 = vmatprep.subr.bf16.mxu0 0
      %6707 = vmatpush1.bf16.msra.mxu0 %v6697
      %6708 = vmatprep.subr.bf16.mxu0 0
      %6709 = vmatpush1.bf16.msra.mxu0 %v6696
      %6710 = vmatprep.subr.bf16.mxu0 0
      %6711 = vmatpush1.bf16.msra.mxu0 %v6695
      %6712 = vmatprep.subr.bf16.mxu0 0
      %6713 = vmatpush1.bf16.msra.mxu0 %v6694
      %6714 = vmatprep.subr.bf16.mxu0 0
      %6715 = vmatpush1.bf16.msra.mxu0 %v6693
      %6716 = vmatprep.subr.bf16.mxu0 0
      %6717 = vmatpush1.bf16.msra.mxu0 %v6692
      %6718 = vmatprep.subr.bf16.mxu0 0
      %6719 = vmatpush1.bf16.msra.mxu0 %v6691
      %6720 = vmatprep.subr.bf16.mxu0 0
      %6721 = vmatpush1.bf16.msra.mxu0 %v6690
      %6722 = vmatprep.subr.bf16.mxu0 0
      %6723 = vmatpush2.bf16.msra.mxu0 0
      %6724 = vmatprep.subr.bf16.mxu0 0
      %6725 = vmatpush2.bf16.msra.mxu0 0
      %6726 = vmatprep.subr.bf16.mxu0 0
      %6727 = vmatpush2.bf16.msra.mxu0 0
      %6728 = vmatprep.subr.bf16.mxu0 0
      %6729 = vmatpush2.bf16.msra.mxu0 0
      %6730 = vmatprep.subr.bf16.mxu0 0
      %6731 = vmatpush2.bf16.msra.mxu0 0
      %6732 = vmatprep.subr.bf16.mxu0 0
      %6733 = vmatpush2.bf16.msra.mxu0 0
      %6734 = vmatprep.subr.bf16.mxu0 0
      %6735 = vmatpush2.bf16.msra.mxu0 0
      %6736 = vmatprep.subr.bf16.mxu0 0
      %6737 = vmatpush2.bf16.msra.mxu0 0
      %6738 = vmatprep.mubr.bf16.mxu0 0
      %6739 = vmatmul.mubr.bf16.gmra.mxu0 %v6639
      %v6740 = vpop.f32.mrf.mxu0
      %v6741 = vadd.f32 0.0, %v6740
      %v6742 = vpop.f32.mrf.mxu0
      %v6743 = vpop.f32.mrf.mxu0
      %v6744 = vadd.f32 0.0, %v6743
      %v6745 = vpop.f32.mrf.mxu0
      %6746 = vmatprep.mubr.bf16.mxu0 0
      %6747 = vmatmul.mubr.bf16.gmra.mxu0 %v6640
      %v6748 = vpop.f32.mrf.mxu0
      %v6749 = vadd.f32 0.0, %v6748
      %v6750 = vpop.f32.mrf.mxu0
      %v6751 = vpop.f32.mrf.mxu0
      %v6752 = vpop.f32.mrf.mxu0
      %6753 = vdwg.mxu0
      %v6754 = vadd.f32 %v6633, %v6741
      %v6755 = vadd.f32 %v6634, %v6744
      %v6756 = vadd.f32 %v6635, %v6749
      %v6757 = vld [vmem:[#allocation5 + $0x7] sm:$0xff]
      %v6758 = vld [vmem:[#allocation5 + $0xf] sm:$0xff]
      %v6759 = vld [vmem:[#allocation5 + $0x17] sm:$0x3f]
      %v6760 = vpack.c.bf16 %v6758, %v6757
      %v6761 = vpack.c.bf16 %v6759, %v6759
      %s6762 = scalar_lea.vmem %s5, 256
      %v6763 = vld [vmem:[%s6762] sm:$0xf]
      %v6764 = vld [vmem:[%s6762 + $0x4] sm:$0xf]
      %v6765 = vld [vmem:[%s6762 + $0x8] sm:$0xf]
      %v6766 = vld [vmem:[%s6762 + $0xc] sm:$0xf]
      %v6767 = vld [vmem:[%s6762 + $0x10] sm:$0xf]
      %v6768 = vld [vmem:[%s6762 + $0x14] sm:$0xf]
      %v6769 = vld [vmem:[%s6762 + $0x18] sm:$0xf]
      %v6770 = vld [vmem:[%s6762 + $0x1c] sm:$0xf]
      %v6771 = vld [vmem:[%s6762 + $0x20] sm:$0xf]
      %v6772 = vld [vmem:[%s6762 + $0x24] sm:$0xf]
      %v6773 = vld [vmem:[%s6762 + $0x28] sm:$0xf]
      %v6774 = vld [vmem:[%s6762 + $0x2c] sm:$0xf]
      %v6775 = vld [vmem:[%s6762 + $0x30] sm:$0xf]
      %v6776 = vld [vmem:[%s6762 + $0x34] sm:$0xf]
      %v6777 = vld [vmem:[%s6762 + $0x38] sm:$0xf]
      %v6778 = vld [vmem:[%s6762 + $0x3c] sm:$0xf]
      %v6795 = vunpack.c.l.b16 %v6763
      %v6796 = vunpack.c.l.b16 %v6764
      %v6797 = vunpack.c.l.b16 %v6765
      %v6798 = vunpack.c.l.b16 %v6766
      %v6799 = vunpack.c.l.b16 %v6767
      %v6800 = vunpack.c.l.b16 %v6768
      %v6801 = vunpack.c.l.b16 %v6769
      %v6802 = vunpack.c.l.b16 %v6770
      %v6803 = vunpack.c.l.b16 %v6771
      %v6804 = vunpack.c.l.b16 %v6772
      %v6805 = vunpack.c.l.b16 %v6773
      %v6806 = vunpack.c.l.b16 %v6774
      %v6807 = vunpack.c.l.b16 %v6775
      %v6808 = vunpack.c.l.b16 %v6776
      %v6809 = vunpack.c.l.b16 %v6777
      %v6810 = vunpack.c.l.b16 %v6778
      %v6811 = vpack.c.b16 %v6796, %v6795
      %v6812 = vpack.c.b16 %v6798, %v6797
      %v6813 = vpack.c.b16 %v6800, %v6799
      %v6814 = vpack.c.b16 %v6802, %v6801
      %v6815 = vpack.c.b16 %v6804, %v6803
      %v6816 = vpack.c.b16 %v6806, %v6805
      %v6817 = vpack.c.b16 %v6808, %v6807
      %v6818 = vpack.c.b16 %v6810, %v6809
      %6827 = vmatprep.subr.bf16.mxu0 0
      %6828 = vmatpush1.bf16.msra.mxu0 %v6818
      %6829 = vmatprep.subr.bf16.mxu0 0
      %6830 = vmatpush1.bf16.msra.mxu0 %v6817
      %6831 = vmatprep.subr.bf16.mxu0 0
      %6832 = vmatpush1.bf16.msra.mxu0 %v6816
      %6833 = vmatprep.subr.bf16.mxu0 0
      %6834 = vmatpush1.bf16.msra.mxu0 %v6815
      %6835 = vmatprep.subr.bf16.mxu0 0
      %6836 = vmatpush1.bf16.msra.mxu0 %v6814
      %6837 = vmatprep.subr.bf16.mxu0 0
      %6838 = vmatpush1.bf16.msra.mxu0 %v6813
      %6839 = vmatprep.subr.bf16.mxu0 0
      %6840 = vmatpush1.bf16.msra.mxu0 %v6812
      %6841 = vmatprep.subr.bf16.mxu0 0
      %6842 = vmatpush1.bf16.msra.mxu0 %v6811
      %6843 = vmatprep.subr.bf16.mxu0 0
      %6844 = vmatpush2.bf16.msra.mxu0 0
      %6845 = vmatprep.subr.bf16.mxu0 0
      %6846 = vmatpush2.bf16.msra.mxu0 0
      %6847 = vmatprep.subr.bf16.mxu0 0
      %6848 = vmatpush2.bf16.msra.mxu0 0
      %6849 = vmatprep.subr.bf16.mxu0 0
      %6850 = vmatpush2.bf16.msra.mxu0 0
      %6851 = vmatprep.subr.bf16.mxu0 0
      %6852 = vmatpush2.bf16.msra.mxu0 0
      %6853 = vmatprep.subr.bf16.mxu0 0
      %6854 = vmatpush2.bf16.msra.mxu0 0
      %6855 = vmatprep.subr.bf16.mxu0 0
      %6856 = vmatpush2.bf16.msra.mxu0 0
      %6857 = vmatprep.subr.bf16.mxu0 0
      %6858 = vmatpush2.bf16.msra.mxu0 0
      %6859 = vmatprep.mubr.bf16.mxu0 0
      %6860 = vmatmul.mubr.bf16.gmra.mxu0 %v6760
      %v6861 = vpop.f32.mrf.mxu0
      %v6862 = vadd.f32 0.0, %v6861
      %v6863 = vpop.f32.mrf.mxu0
      %v6864 = vpop.f32.mrf.mxu0
      %v6865 = vadd.f32 0.0, %v6864
      %v6866 = vpop.f32.mrf.mxu0
      %6867 = vmatprep.mubr.bf16.mxu0 0
      %6868 = vmatmul.mubr.bf16.gmra.mxu0 %v6761
      %v6869 = vpop.f32.mrf.mxu0
      %v6870 = vadd.f32 0.0, %v6869
      %v6871 = vpop.f32.mrf.mxu0
      %v6872 = vpop.f32.mrf.mxu0
      %v6873 = vpop.f32.mrf.mxu0
      %6874 = vdwg.mxu0
      %v6875 = vadd.f32 %v6754, %v6862
      %v6876 = vadd.f32 %v6755, %v6865
      %v6877 = vadd.f32 %v6756, %v6870
      %v6878 = vld [vmem:[#allocation5 + $0x8] sm:$0xff]
      %v6879 = vld [vmem:[#allocation5 + $0x10] sm:$0xff]
      %v6880 = vld [vmem:[#allocation5 + $0x18] sm:$0x3f]
      %v6881 = vpack.c.bf16 %v6879, %v6878
      %v6882 = vpack.c.bf16 %v6880, %v6880
      %s6883 = scalar_lea.vmem %s5, 320
      %v6884 = vld [vmem:[%s6883] sm:$0xf]
      %v6885 = vld [vmem:[%s6883 + $0x4] sm:$0xf]
      %v6886 = vld [vmem:[%s6883 + $0x8] sm:$0xf]
      %v6887 = vld [vmem:[%s6883 + $0xc] sm:$0xf]
      %v6888 = vld [vmem:[%s6883 + $0x10] sm:$0xf]
      %v6889 = vld [vmem:[%s6883 + $0x14] sm:$0xf]
      %v6890 = vld [vmem:[%s6883 + $0x18] sm:$0xf]
      %v6891 = vld [vmem:[%s6883 + $0x1c] sm:$0xf]
      %v6892 = vld [vmem:[%s6883 + $0x20] sm:$0xf]
      %v6893 = vld [vmem:[%s6883 + $0x24] sm:$0xf]
      %v6894 = vld [vmem:[%s6883 + $0x28] sm:$0xf]
      %v6895 = vld [vmem:[%s6883 + $0x2c] sm:$0xf]
      %v6896 = vld [vmem:[%s6883 + $0x30] sm:$0xf]
      %v6897 = vld [vmem:[%s6883 + $0x34] sm:$0xf]
      %v6898 = vld [vmem:[%s6883 + $0x38] sm:$0xf]
      %v6899 = vld [vmem:[%s6883 + $0x3c] sm:$0xf]
      %v6916 = vunpack.c.l.b16 %v6884
      %v6917 = vunpack.c.l.b16 %v6885
      %v6918 = vunpack.c.l.b16 %v6886
      %v6919 = vunpack.c.l.b16 %v6887
      %v6920 = vunpack.c.l.b16 %v6888
      %v6921 = vunpack.c.l.b16 %v6889
      %v6922 = vunpack.c.l.b16 %v6890
      %v6923 = vunpack.c.l.b16 %v6891
      %v6924 = vunpack.c.l.b16 %v6892
      %v6925 = vunpack.c.l.b16 %v6893
      %v6926 = vunpack.c.l.b16 %v6894
      %v6927 = vunpack.c.l.b16 %v6895
      %v6928 = vunpack.c.l.b16 %v6896
      %v6929 = vunpack.c.l.b16 %v6897
      %v6930 = vunpack.c.l.b16 %v6898
      %v6931 = vunpack.c.l.b16 %v6899
      %v6932 = vpack.c.b16 %v6917, %v6916
      %v6933 = vpack.c.b16 %v6919, %v6918
      %v6934 = vpack.c.b16 %v6921, %v6920
      %v6935 = vpack.c.b16 %v6923, %v6922
      %v6936 = vpack.c.b16 %v6925, %v6924
      %v6937 = vpack.c.b16 %v6927, %v6926
      %v6938 = vpack.c.b16 %v6929, %v6928
      %v6939 = vpack.c.b16 %v6931, %v6930
      %6948 = vmatprep.subr.bf16.mxu0 0
      %6949 = vmatpush1.bf16.msra.mxu0 %v6939
      %6950 = vmatprep.subr.bf16.mxu0 0
      %6951 = vmatpush1.bf16.msra.mxu0 %v6938
      %6952 = vmatprep.subr.bf16.mxu0 0
      %6953 = vmatpush1.bf16.msra.mxu0 %v6937
      %6954 = vmatprep.subr.bf16.mxu0 0
      %6955 = vmatpush1.bf16.msra.mxu0 %v6936
      %6956 = vmatprep.subr.bf16.mxu0 0
      %6957 = vmatpush1.bf16.msra.mxu0 %v6935
      %6958 = vmatprep.subr.bf16.mxu0 0
      %6959 = vmatpush1.bf16.msra.mxu0 %v6934
      %6960 = vmatprep.subr.bf16.mxu0 0
      %6961 = vmatpush1.bf16.msra.mxu0 %v6933
      %6962 = vmatprep.subr.bf16.mxu0 0
      %6963 = vmatpush1.bf16.msra.mxu0 %v6932
      %6964 = vmatprep.subr.bf16.mxu0 0
      %6965 = vmatpush2.bf16.msra.mxu0 0
      %6966 = vmatprep.subr.bf16.mxu0 0
      %6967 = vmatpush2.bf16.msra.mxu0 0
      %6968 = vmatprep.subr.bf16.mxu0 0
      %6969 = vmatpush2.bf16.msra.mxu0 0
      %6970 = vmatprep.subr.bf16.mxu0 0
      %6971 = vmatpush2.bf16.msra.mxu0 0
      %6972 = vmatprep.subr.bf16.mxu0 0
      %6973 = vmatpush2.bf16.msra.mxu0 0
      %6974 = vmatprep.subr.bf16.mxu0 0
      %6975 = vmatpush2.bf16.msra.mxu0 0
      %6976 = vmatprep.subr.bf16.mxu0 0
      %6977 = vmatpush2.bf16.msra.mxu0 0
      %6978 = vmatprep.subr.bf16.mxu0 0
      %6979 = vmatpush2.bf16.msra.mxu0 0
      %6980 = vmatprep.mubr.bf16.mxu0 0
      %6981 = vmatmul.mubr.bf16.gmra.mxu0 %v6881
      %v6982 = vpop.f32.mrf.mxu0
      %v6983 = vadd.f32 0.0, %v6982
      %v6984 = vpop.f32.mrf.mxu0
      %v6985 = vpop.f32.mrf.mxu0
      %v6986 = vadd.f32 0.0, %v6985
      %v6987 = vpop.f32.mrf.mxu0
      %6988 = vmatprep.mubr.bf16.mxu0 0
      %6989 = vmatmul.mubr.bf16.gmra.mxu0 %v6882
      %v6990 = vpop.f32.mrf.mxu0
      %v6991 = vadd.f32 0.0, %v6990
      %v6992 = vpop.f32.mrf.mxu0
      %v6993 = vpop.f32.mrf.mxu0
      %v6994 = vpop.f32.mrf.mxu0
      %6995 = vdwg.mxu0
      %v6996 = vadd.f32 %v6875, %v6983
      %v6997 = vadd.f32 %v6876, %v6986
      %v6998 = vadd.f32 %v6877, %v6991
      %v6999 = vld [vmem:[#allocation5 + $0xc] sm:$0xff]
      %v7000 = vld [vmem:[#allocation5 + $0x14] sm:$0xff]
      %v7001 = vld [vmem:[#allocation5 + $0x1c] sm:$0x3f]
      %v7002 = vpack.c.bf16 %v7000, %v6999
      %v7003 = vpack.c.bf16 %v7001, %v7001
      %s7004 = scalar_lea.vmem %s5, 384
      %v7005 = vld [vmem:[%s7004] sm:$0xf]
      %v7006 = vld [vmem:[%s7004 + $0x4] sm:$0xf]
      %v7007 = vld [vmem:[%s7004 + $0x8] sm:$0xf]
      %v7008 = vld [vmem:[%s7004 + $0xc] sm:$0xf]
      %v7009 = vld [vmem:[%s7004 + $0x10] sm:$0xf]
      %v7010 = vld [vmem:[%s7004 + $0x14] sm:$0xf]
      %v7011 = vld [vmem:[%s7004 + $0x18] sm:$0xf]
      %v7012 = vld [vmem:[%s7004 + $0x1c] sm:$0xf]
      %v7013 = vld [vmem:[%s7004 + $0x20] sm:$0xf]
      %v7014 = vld [vmem:[%s7004 + $0x24] sm:$0xf]
      %v7015 = vld [vmem:[%s7004 + $0x28] sm:$0xf]
      %v7016 = vld [vmem:[%s7004 + $0x2c] sm:$0xf]
      %v7017 = vld [vmem:[%s7004 + $0x30] sm:$0xf]
      %v7018 = vld [vmem:[%s7004 + $0x34] sm:$0xf]
      %v7019 = vld [vmem:[%s7004 + $0x38] sm:$0xf]
      %v7020 = vld [vmem:[%s7004 + $0x3c] sm:$0xf]
      %v7037 = vunpack.c.l.b16 %v7005
      %v7038 = vunpack.c.l.b16 %v7006
      %v7039 = vunpack.c.l.b16 %v7007
      %v7040 = vunpack.c.l.b16 %v7008
      %v7041 = vunpack.c.l.b16 %v7009
      %v7042 = vunpack.c.l.b16 %v7010
      %v7043 = vunpack.c.l.b16 %v7011
      %v7044 = vunpack.c.l.b16 %v7012
      %v7045 = vunpack.c.l.b16 %v7013
      %v7046 = vunpack.c.l.b16 %v7014
      %v7047 = vunpack.c.l.b16 %v7015
      %v7048 = vunpack.c.l.b16 %v7016
      %v7049 = vunpack.c.l.b16 %v7017
      %v7050 = vunpack.c.l.b16 %v7018
      %v7051 = vunpack.c.l.b16 %v7019
      %v7052 = vunpack.c.l.b16 %v7020
      %v7053 = vpack.c.b16 %v7038, %v7037
      %v7054 = vpack.c.b16 %v7040, %v7039
      %v7055 = vpack.c.b16 %v7042, %v7041
      %v7056 = vpack.c.b16 %v7044, %v7043
      %v7057 = vpack.c.b16 %v7046, %v7045
      %v7058 = vpack.c.b16 %v7048, %v7047
      %v7059 = vpack.c.b16 %v7050, %v7049
      %v7060 = vpack.c.b16 %v7052, %v7051
      %7069 = vmatprep.subr.bf16.mxu0 0
      %7070 = vmatpush1.bf16.msra.mxu0 %v7060
      %7071 = vmatprep.subr.bf16.mxu0 0
      %7072 = vmatpush1.bf16.msra.mxu0 %v7059
      %7073 = vmatprep.subr.bf16.mxu0 0
      %7074 = vmatpush1.bf16.msra.mxu0 %v7058
      %7075 = vmatprep.subr.bf16.mxu0 0
      %7076 = vmatpush1.bf16.msra.mxu0 %v7057
      %7077 = vmatprep.subr.bf16.mxu0 0
      %7078 = vmatpush1.bf16.msra.mxu0 %v7056
      %7079 = vmatprep.subr.bf16.mxu0 0
      %7080 = vmatpush1.bf16.msra.mxu0 %v7055
      %7081 = vmatprep.subr.bf16.mxu0 0
      %7082 = vmatpush1.bf16.msra.mxu0 %v7054
      %7083 = vmatprep.subr.bf16.mxu0 0
      %7084 = vmatpush1.bf16.msra.mxu0 %v7053
      %7085 = vmatprep.subr.bf16.mxu0 0
      %7086 = vmatpush2.bf16.msra.mxu0 0
      %7087 = vmatprep.subr.bf16.mxu0 0
      %7088 = vmatpush2.bf16.msra.mxu0 0
      %7089 = vmatprep.subr.bf16.mxu0 0
      %7090 = vmatpush2.bf16.msra.mxu0 0
      %7091 = vmatprep.subr.bf16.mxu0 0
      %7092 = vmatpush2.bf16.msra.mxu0 0
      %7093 = vmatprep.subr.bf16.mxu0 0
      %7094 = vmatpush2.bf16.msra.mxu0 0
      %7095 = vmatprep.subr.bf16.mxu0 0
      %7096 = vmatpush2.bf16.msra.mxu0 0
      %7097 = vmatprep.subr.bf16.mxu0 0
      %7098 = vmatpush2.bf16.msra.mxu0 0
      %7099 = vmatprep.subr.bf16.mxu0 0
      %7100 = vmatpush2.bf16.msra.mxu0 0
      %7101 = vmatprep.mubr.bf16.mxu0 0
      %7102 = vmatmul.mubr.bf16.gmra.mxu0 %v7002
      %v7103 = vpop.f32.mrf.mxu0
      %v7104 = vadd.f32 0.0, %v7103
      %v7105 = vpop.f32.mrf.mxu0
      %v7106 = vpop.f32.mrf.mxu0
      %v7107 = vadd.f32 0.0, %v7106
      %v7108 = vpop.f32.mrf.mxu0
      %7109 = vmatprep.mubr.bf16.mxu0 0
      %7110 = vmatmul.mubr.bf16.gmra.mxu0 %v7003
      %v7111 = vpop.f32.mrf.mxu0
      %v7112 = vadd.f32 0.0, %v7111
      %v7113 = vpop.f32.mrf.mxu0
      %v7114 = vpop.f32.mrf.mxu0
      %v7115 = vpop.f32.mrf.mxu0
      %7116 = vdwg.mxu0
      %v7117 = vadd.f32 %v6996, %v7104
      %v7118 = vadd.f32 %v6997, %v7107
      %v7119 = vadd.f32 %v6998, %v7112
      %v7120 = vld [vmem:[#allocation5 + $0xd] sm:$0xff]
      %v7121 = vld [vmem:[#allocation5 + $0x15] sm:$0xff]
      %v7122 = vld [vmem:[#allocation5 + $0x1d] sm:$0x3f]
      %v7123 = vpack.c.bf16 %v7121, %v7120
      %v7124 = vpack.c.bf16 %v7122, %v7122
      %s7125 = scalar_lea.vmem %s5, 448
      %v7126 = vld [vmem:[%s7125] sm:$0xf]
      %v7127 = vld [vmem:[%s7125 + $0x4] sm:$0xf]
      %v7128 = vld [vmem:[%s7125 + $0x8] sm:$0xf]
      %v7129 = vld [vmem:[%s7125 + $0xc] sm:$0xf]
      %v7130 = vld [vmem:[%s7125 + $0x10] sm:$0xf]
      %v7131 = vld [vmem:[%s7125 + $0x14] sm:$0xf]
      %v7132 = vld [vmem:[%s7125 + $0x18] sm:$0xf]
      %v7133 = vld [vmem:[%s7125 + $0x1c] sm:$0xf]
      %v7134 = vld [vmem:[%s7125 + $0x20] sm:$0xf]
      %v7135 = vld [vmem:[%s7125 + $0x24] sm:$0xf]
      %v7136 = vld [vmem:[%s7125 + $0x28] sm:$0xf]
      %v7137 = vld [vmem:[%s7125 + $0x2c] sm:$0xf]
      %v7138 = vld [vmem:[%s7125 + $0x30] sm:$0xf]
      %v7139 = vld [vmem:[%s7125 + $0x34] sm:$0xf]
      %v7140 = vld [vmem:[%s7125 + $0x38] sm:$0xf]
      %v7141 = vld [vmem:[%s7125 + $0x3c] sm:$0xf]
      %v7158 = vunpack.c.l.b16 %v7126
      %v7159 = vunpack.c.l.b16 %v7127
      %v7160 = vunpack.c.l.b16 %v7128
      %v7161 = vunpack.c.l.b16 %v7129
      %v7162 = vunpack.c.l.b16 %v7130
      %v7163 = vunpack.c.l.b16 %v7131
      %v7164 = vunpack.c.l.b16 %v7132
      %v7165 = vunpack.c.l.b16 %v7133
      %v7166 = vunpack.c.l.b16 %v7134
      %v7167 = vunpack.c.l.b16 %v7135
      %v7168 = vunpack.c.l.b16 %v7136
      %v7169 = vunpack.c.l.b16 %v7137
      %v7170 = vunpack.c.l.b16 %v7138
      %v7171 = vunpack.c.l.b16 %v7139
      %v7172 = vunpack.c.l.b16 %v7140
      %v7173 = vunpack.c.l.b16 %v7141
      %v7174 = vpack.c.b16 %v7159, %v7158
      %v7175 = vpack.c.b16 %v7161, %v7160
      %v7176 = vpack.c.b16 %v7163, %v7162
      %v7177 = vpack.c.b16 %v7165, %v7164
      %v7178 = vpack.c.b16 %v7167, %v7166
      %v7179 = vpack.c.b16 %v7169, %v7168
      %v7180 = vpack.c.b16 %v7171, %v7170
      %v7181 = vpack.c.b16 %v7173, %v7172
      %7190 = vmatprep.subr.bf16.mxu0 0
      %7191 = vmatpush1.bf16.msra.mxu0 %v7181
      %7192 = vmatprep.subr.bf16.mxu0 0
      %7193 = vmatpush1.bf16.msra.mxu0 %v7180
      %7194 = vmatprep.subr.bf16.mxu0 0
      %7195 = vmatpush1.bf16.msra.mxu0 %v7179
      %7196 = vmatprep.subr.bf16.mxu0 0
      %7197 = vmatpush1.bf16.msra.mxu0 %v7178
      %7198 = vmatprep.subr.bf16.mxu0 0
      %7199 = vmatpush1.bf16.msra.mxu0 %v7177
      %7200 = vmatprep.subr.bf16.mxu0 0
      %7201 = vmatpush1.bf16.msra.mxu0 %v7176
      %7202 = vmatprep.subr.bf16.mxu0 0
      %7203 = vmatpush1.bf16.msra.mxu0 %v7175
      %7204 = vmatprep.subr.bf16.mxu0 0
      %7205 = vmatpush1.bf16.msra.mxu0 %v7174
      %7206 = vmatprep.subr.bf16.mxu0 0
      %7207 = vmatpush2.bf16.msra.mxu0 0
      %7208 = vmatprep.subr.bf16.mxu0 0
      %7209 = vmatpush2.bf16.msra.mxu0 0
      %7210 = vmatprep.subr.bf16.mxu0 0
      %7211 = vmatpush2.bf16.msra.mxu0 0
      %7212 = vmatprep.subr.bf16.mxu0 0
      %7213 = vmatpush2.bf16.msra.mxu0 0
      %7214 = vmatprep.subr.bf16.mxu0 0
      %7215 = vmatpush2.bf16.msra.mxu0 0
      %7216 = vmatprep.subr.bf16.mxu0 0
      %7217 = vmatpush2.bf16.msra.mxu0 0
      %7218 = vmatprep.subr.bf16.mxu0 0
      %7219 = vmatpush2.bf16.msra.mxu0 0
      %7220 = vmatprep.subr.bf16.mxu0 0
      %7221 = vmatpush2.bf16.msra.mxu0 0
      %7222 = vmatprep.mubr.bf16.mxu0 0
      %7223 = vmatmul.mubr.bf16.gmra.mxu0 %v7123
      %v7224 = vpop.f32.mrf.mxu0
      %v7225 = vadd.f32 0.0, %v7224
      %v7226 = vpop.f32.mrf.mxu0
      %v7227 = vpop.f32.mrf.mxu0
      %v7228 = vadd.f32 0.0, %v7227
      %v7229 = vpop.f32.mrf.mxu0
      %7230 = vmatprep.mubr.bf16.mxu0 0
      %7231 = vmatmul.mubr.bf16.gmra.mxu0 %v7124
      %v7232 = vpop.f32.mrf.mxu0
      %v7233 = vadd.f32 0.0, %v7232
      %v7234 = vpop.f32.mrf.mxu0
      %v7235 = vpop.f32.mrf.mxu0
      %v7236 = vpop.f32.mrf.mxu0
      %7237 = vdwg.mxu0
      %v7238 = vadd.f32 %v7117, %v7225
      %v7239 = vadd.f32 %v7118, %v7228
      %v7240 = vadd.f32 %v7119, %v7233
      %v7241 = vld [vmem:[#allocation5 + $0xe] sm:$0xff]
      %v7242 = vld [vmem:[#allocation5 + $0x16] sm:$0xff]
      %v7243 = vld [vmem:[#allocation5 + $0x1e] sm:$0x3f]
      %v7244 = vpack.c.bf16 %v7242, %v7241
      %v7245 = vpack.c.bf16 %v7243, %v7243
      %s7246 = scalar_lea.vmem %s5, 512
      %v7247 = vld [vmem:[%s7246] sm:$0xf]
      %v7248 = vld [vmem:[%s7246 + $0x4] sm:$0xf]
      %v7249 = vld [vmem:[%s7246 + $0x8] sm:$0xf]
      %v7250 = vld [vmem:[%s7246 + $0xc] sm:$0xf]
      %v7251 = vld [vmem:[%s7246 + $0x10] sm:$0xf]
      %v7252 = vld [vmem:[%s7246 + $0x14] sm:$0xf]
      %v7253 = vld [vmem:[%s7246 + $0x18] sm:$0xf]
      %v7254 = vld [vmem:[%s7246 + $0x1c] sm:$0xf]
      %v7255 = vld [vmem:[%s7246 + $0x20] sm:$0xf]
      %v7256 = vld [vmem:[%s7246 + $0x24] sm:$0xf]
      %v7257 = vld [vmem:[%s7246 + $0x28] sm:$0xf]
      %v7258 = vld [vmem:[%s7246 + $0x2c] sm:$0xf]
      %v7259 = vld [vmem:[%s7246 + $0x30] sm:$0xf]
      %v7260 = vld [vmem:[%s7246 + $0x34] sm:$0xf]
      %v7261 = vld [vmem:[%s7246 + $0x38] sm:$0xf]
      %v7262 = vld [vmem:[%s7246 + $0x3c] sm:$0xf]
      %v7279 = vunpack.c.l.b16 %v7247
      %v7280 = vunpack.c.l.b16 %v7248
      %v7281 = vunpack.c.l.b16 %v7249
      %v7282 = vunpack.c.l.b16 %v7250
      %v7283 = vunpack.c.l.b16 %v7251
      %v7284 = vunpack.c.l.b16 %v7252
      %v7285 = vunpack.c.l.b16 %v7253
      %v7286 = vunpack.c.l.b16 %v7254
      %v7287 = vunpack.c.l.b16 %v7255
      %v7288 = vunpack.c.l.b16 %v7256
      %v7289 = vunpack.c.l.b16 %v7257
      %v7290 = vunpack.c.l.b16 %v7258
      %v7291 = vunpack.c.l.b16 %v7259
      %v7292 = vunpack.c.l.b16 %v7260
      %v7293 = vunpack.c.l.b16 %v7261
      %v7294 = vunpack.c.l.b16 %v7262
      %v7295 = vpack.c.b16 %v7280, %v7279
      %v7296 = vpack.c.b16 %v7282, %v7281
      %v7297 = vpack.c.b16 %v7284, %v7283
      %v7298 = vpack.c.b16 %v7286, %v7285
      %v7299 = vpack.c.b16 %v7288, %v7287
      %v7300 = vpack.c.b16 %v7290, %v7289
      %v7301 = vpack.c.b16 %v7292, %v7291
      %v7302 = vpack.c.b16 %v7294, %v7293
      %7311 = vmatprep.subr.bf16.mxu0 0
      %7312 = vmatpush1.bf16.msra.mxu0 %v7302
      %7313 = vmatprep.subr.bf16.mxu0 0
      %7314 = vmatpush1.bf16.msra.mxu0 %v7301
      %7315 = vmatprep.subr.bf16.mxu0 0
      %7316 = vmatpush1.bf16.msra.mxu0 %v7300
      %7317 = vmatprep.subr.bf16.mxu0 0
      %7318 = vmatpush1.bf16.msra.mxu0 %v7299
      %7319 = vmatprep.subr.bf16.mxu0 0
      %7320 = vmatpush1.bf16.msra.mxu0 %v7298
      %7321 = vmatprep.subr.bf16.mxu0 0
      %7322 = vmatpush1.bf16.msra.mxu0 %v7297
      %7323 = vmatprep.subr.bf16.mxu0 0
      %7324 = vmatpush1.bf16.msra.mxu0 %v7296
      %7325 = vmatprep.subr.bf16.mxu0 0
      %7326 = vmatpush1.bf16.msra.mxu0 %v7295
      %7327 = vmatprep.subr.bf16.mxu0 0
      %7328 = vmatpush2.bf16.msra.mxu0 0
      %7329 = vmatprep.subr.bf16.mxu0 0
      %7330 = vmatpush2.bf16.msra.mxu0 0
      %7331 = vmatprep.subr.bf16.mxu0 0
      %7332 = vmatpush2.bf16.msra.mxu0 0
      %7333 = vmatprep.subr.bf16.mxu0 0
      %7334 = vmatpush2.bf16.msra.mxu0 0
      %7335 = vmatprep.subr.bf16.mxu0 0
      %7336 = vmatpush2.bf16.msra.mxu0 0
      %7337 = vmatprep.subr.bf16.mxu0 0
      %7338 = vmatpush2.bf16.msra.mxu0 0
      %7339 = vmatprep.subr.bf16.mxu0 0
      %7340 = vmatpush2.bf16.msra.mxu0 0
      %7341 = vmatprep.subr.bf16.mxu0 0
      %7342 = vmatpush2.bf16.msra.mxu0 0
      %7343 = vmatprep.mubr.bf16.mxu0 0
      %7344 = vmatmul.mubr.bf16.gmra.mxu0 %v7244
      %v7345 = vpop.f32.mrf.mxu0
      %v7346 = vadd.f32 0.0, %v7345
      %v7347 = vpop.f32.mrf.mxu0
      %v7348 = vpop.f32.mrf.mxu0
      %v7349 = vadd.f32 0.0, %v7348
      %v7350 = vpop.f32.mrf.mxu0
      %7351 = vmatprep.mubr.bf16.mxu0 0
      %7352 = vmatmul.mubr.bf16.gmra.mxu0 %v7245
      %v7353 = vpop.f32.mrf.mxu0
      %v7354 = vadd.f32 0.0, %v7353
      %v7355 = vpop.f32.mrf.mxu0
      %v7356 = vpop.f32.mrf.mxu0
      %v7357 = vpop.f32.mrf.mxu0
      %7358 = vdwg.mxu0
      %v7359 = vadd.f32 %v7238, %v7346
      %v7360 = vadd.f32 %v7239, %v7349
      %v7361 = vadd.f32 %v7240, %v7354
      %v7362 = vld [vmem:[%s6] sm:$0x1]
      %v7364 = vlaneseq
      %v7365 = vshrl.u32 %v7364, 7
      %v7366 = vsub.s32 0, %v7365
      %v7367 = vrot.slane %v7362, %v7366
      %v7369 = vadd.f32 %v7359, %v7367
      %v7370 = vadd.f32 %v7360, %v7367
      %v7371 = vadd.f32 %v7361, %v7367
      %v7372 = vmax.f32 %v7369, 0.0
      %v7373 = vmax.f32 %v7370, 0.0
      %v7374 = vmax.f32 %v7371, 0.0
      %7375 = vst [vmem:[#allocation6] sm:$0xff] 0.0
      %7376 = vst [vmem:[#allocation6 + $0x8] sm:$0xff] 0.0
      %7377 = vst [vmem:[#allocation6 + $0x10] sm:$0xff] 0.0
      %7378 = vst [vmem:[#allocation6 + $0x18] sm:$0xff] 0.0
      %7379 = vst [vmem:[#allocation6 + $0x20] sm:$0xf] 0.0
      %7380 = vst [vmem:[#allocation6 + $0x7] sm:$0xff] %v7372
      %7381 = vst [vmem:[#allocation6 + $0xf] sm:$0xff] %v7373
      %7382 = vst [vmem:[#allocation6 + $0x17] sm:$0x3f] %v7374
      %v7383 = vld [vmem:[%s15] sm:$0xf]
      %v7384 = vld [vmem:[%s15 + $0x4] sm:$0xf]
      %v7385 = vld [vmem:[%s15 + $0x8] sm:$0xf]
      %v7386 = vld [vmem:[%s15 + $0xc] sm:$0xf]
      %v7387 = vld [vmem:[%s15 + $0x10] sm:$0xf]
      %v7388 = vld [vmem:[%s15 + $0x14] sm:$0xf]
      %v7389 = vld [vmem:[%s15 + $0x18] sm:$0xf]
      %v7390 = vld [vmem:[%s15 + $0x1c] sm:$0xf]
      %v7391 = vld [vmem:[%s15 + $0x20] sm:$0xf]
      %v7392 = vld [vmem:[%s15 + $0x24] sm:$0xf]
      %v7393 = vld [vmem:[%s15 + $0x28] sm:$0xf]
      %v7394 = vld [vmem:[%s15 + $0x2c] sm:$0xf]
      %v7395 = vld [vmem:[%s15 + $0x30] sm:$0x3]
      %v7396 = vld [vmem:[#allocation6] sm:$0xff]
      %v7397 = vld [vmem:[#allocation6 + $0x8] sm:$0xff]
      %v7398 = vld [vmem:[#allocation6 + $0x10] sm:$0xff]
      %v7399 = vld [vmem:[#allocation6 + $0x18] sm:$0xff]
      %v7400 = vld [vmem:[#allocation6 + $0x20] sm:$0xf]
      %v7401 = vpack.c.bf16 %v7397, %v7396
      %v7402 = vpack.c.bf16 %v7399, %v7398
      %v7403 = vpack.c.bf16 %v7400, %v7400
      %v7417 = vunpack.c.l.b16 %v7383
      %v7418 = vunpack.c.l.b16 %v7384
      %v7419 = vunpack.c.l.b16 %v7385
      %v7420 = vunpack.c.l.b16 %v7386
      %v7421 = vunpack.c.l.b16 %v7387
      %v7422 = vunpack.c.l.b16 %v7388
      %v7423 = vunpack.c.l.b16 %v7389
      %v7424 = vunpack.c.l.b16 %v7390
      %v7425 = vunpack.c.l.b16 %v7391
      %v7426 = vunpack.c.l.b16 %v7392
      %v7427 = vunpack.c.l.b16 %v7393
      %v7428 = vunpack.c.l.b16 %v7394
      %v7429 = vunpack.c.l.b16 %v7395
      %v7430 = vpack.c.b16 %v7418, %v7417
      %v7431 = vpack.c.b16 %v7420, %v7419
      %v7432 = vpack.c.b16 %v7422, %v7421
      %v7433 = vpack.c.b16 %v7424, %v7423
      %v7434 = vpack.c.b16 %v7426, %v7425
      %v7435 = vpack.c.b16 %v7428, %v7427
      %v7436 = vpack.c.b16 %v7429, %v7429
      %vm7437 = vcmask 293888
      %v7439 = vsel %vm7437, %v7430, 0
      %v7442 = vsel %vm7437, %v7431, 0
      %v7445 = vsel %vm7437, %v7432, 0
      %v7448 = vsel %vm7437, %v7433, 0
      %v7451 = vsel %vm7437, %v7434, 0
      %v7454 = vsel %vm7437, %v7435, 0
      %v7457 = vsel %vm7437, %v7436, 0
      %v7460 = vsel %vm4036, %v7403, 0
      %7462 = vmatprep.subr.bf16.mxu0 0
      %7463 = vmatpush1.bf16.msra.mxu0 0
      %7464 = vmatprep.subr.bf16.mxu0 0
      %7465 = vmatpush1.bf16.msra.mxu0 0
      %7466 = vmatprep.subr.bf16.mxu0 0
      %7467 = vmatpush1.bf16.msra.mxu0 0
      %7468 = vmatprep.subr.bf16.mxu0 0
      %7469 = vmatpush1.bf16.msra.mxu0 0
      %7470 = vmatprep.subr.bf16.mxu0 0
      %7471 = vmatpush1.bf16.msra.mxu0 0
      %7472 = vmatprep.subr.bf16.mxu0 0
      %7473 = vmatpush1.bf16.msra.mxu0 %v7460
      %7474 = vmatprep.subr.bf16.mxu0 0
      %7475 = vmatpush1.bf16.msra.mxu0 %v7402
      %7476 = vmatprep.subr.bf16.mxu0 0
      %7477 = vmatpush1.bf16.msra.mxu0 %v7401
      %7478 = vmatprep.subr.bf16.mxu0 0
      %7479 = vmatpush2.bf16.msra.mxu0 0
      %7480 = vmatprep.subr.bf16.mxu0 0
      %7481 = vmatpush2.bf16.msra.mxu0 0
      %7482 = vmatprep.subr.bf16.mxu0 0
      %7483 = vmatpush2.bf16.msra.mxu0 0
      %7484 = vmatprep.subr.bf16.mxu0 0
      %7485 = vmatpush2.bf16.msra.mxu0 0
      %7486 = vmatprep.subr.bf16.mxu0 0
      %7487 = vmatpush2.bf16.msra.mxu0 0
      %7488 = vmatprep.subr.bf16.mxu0 0
      %7489 = vmatpush2.bf16.msra.mxu0 0
      %7490 = vmatprep.subr.bf16.mxu0 0
      %7491 = vmatpush2.bf16.msra.mxu0 0
      %7492 = vmatprep.subr.bf16.mxu0 0
      %7493 = vmatpush2.bf16.msra.mxu0 0
      %7494 = vmatprep.mubr.bf16.mxu0 0
      %7495 = vmatmul.mubr.bf16.gmra.mxu0 %v7439
      %v7496 = vpop.f32.mrf.mxu0
      %v7497 = vadd.f32 0.0, %v7496
      %v7498 = vpop.f32.mrf.mxu0
      %v7499 = vpop.f32.mrf.mxu0
      %v7500 = vadd.f32 0.0, %v7499
      %v7501 = vpop.f32.mrf.mxu0
      %7502 = vmatprep.mubr.bf16.mxu0 0
      %7503 = vmatmul.mubr.bf16.gmra.mxu0 %v7442
      %v7504 = vpop.f32.mrf.mxu0
      %v7505 = vadd.f32 0.0, %v7504
      %v7506 = vpop.f32.mrf.mxu0
      %v7507 = vpop.f32.mrf.mxu0
      %v7508 = vadd.f32 0.0, %v7507
      %v7509 = vpop.f32.mrf.mxu0
      %7510 = vmatprep.mubr.bf16.mxu0 0
      %7511 = vmatmul.mubr.bf16.gmra.mxu0 %v7445
      %v7512 = vpop.f32.mrf.mxu0
      %v7513 = vadd.f32 0.0, %v7512
      %v7514 = vpop.f32.mrf.mxu0
      %v7515 = vpop.f32.mrf.mxu0
      %v7516 = vadd.f32 0.0, %v7515
      %v7517 = vpop.f32.mrf.mxu0
      %7518 = vmatprep.mubr.bf16.mxu0 0
      %7519 = vmatmul.mubr.bf16.gmra.mxu0 %v7448
      %v7520 = vpop.f32.mrf.mxu0
      %v7521 = vadd.f32 0.0, %v7520
      %v7522 = vpop.f32.mrf.mxu0
      %v7523 = vpop.f32.mrf.mxu0
      %v7524 = vadd.f32 0.0, %v7523
      %v7525 = vpop.f32.mrf.mxu0
      %7526 = vmatprep.mubr.bf16.mxu0 0
      %7527 = vmatmul.mubr.bf16.gmra.mxu0 %v7451
      %v7528 = vpop.f32.mrf.mxu0
      %v7529 = vadd.f32 0.0, %v7528
      %v7530 = vpop.f32.mrf.mxu0
      %v7531 = vpop.f32.mrf.mxu0
      %v7532 = vadd.f32 0.0, %v7531
      %v7533 = vpop.f32.mrf.mxu0
      %7534 = vmatprep.mubr.bf16.mxu0 0
      %7535 = vmatmul.mubr.bf16.gmra.mxu0 %v7454
      %v7536 = vpop.f32.mrf.mxu0
      %v7537 = vadd.f32 0.0, %v7536
      %v7538 = vpop.f32.mrf.mxu0
      %v7539 = vpop.f32.mrf.mxu0
      %v7540 = vadd.f32 0.0, %v7539
      %v7541 = vpop.f32.mrf.mxu0
      %7542 = vmatprep.mubr.bf16.mxu0 0
      %7543 = vmatmul.mubr.bf16.gmra.mxu0 %v7457
      %v7544 = vpop.f32.mrf.mxu0
      %v7545 = vadd.f32 0.0, %v7544
      %v7546 = vpop.f32.mrf.mxu0
      %v7547 = vpop.f32.mrf.mxu0
      %v7548 = vpop.f32.mrf.mxu0
      %7549 = vdwg.mxu0
      %7550 = vst [vmem:[#allocation7] sm:$0xff] %v7497
      %7551 = vst [vmem:[#allocation7 + $0x8] sm:$0xff] %v7500
      %7552 = vst [vmem:[#allocation7 + $0x10] sm:$0xff] %v7505
      %7553 = vst [vmem:[#allocation7 + $0x18] sm:$0xff] %v7508
      %7554 = vst [vmem:[#allocation7 + $0x20] sm:$0xff] %v7513
      %7555 = vst [vmem:[#allocation7 + $0x28] sm:$0xff] %v7516
      %7556 = vst [vmem:[#allocation7 + $0x30] sm:$0xff] %v7521
      %7557 = vst [vmem:[#allocation7 + $0x38] sm:$0xff] %v7524
      %7558 = vst [vmem:[#allocation7 + $0x40] sm:$0xff] %v7529
      %7559 = vst [vmem:[#allocation7 + $0x48] sm:$0xff] %v7532
      %7560 = vst [vmem:[#allocation7 + $0x50] sm:$0xff] %v7537
      %7561 = vst [vmem:[#allocation7 + $0x58] sm:$0xff] %v7540
      %7562 = vst [vmem:[#allocation7 + $0x60] sm:$0xf] %v7545
      %v7563 = vld [vmem:[#allocation7] sm:$0xff]
      %v7564 = vld [vmem:[#allocation7 + $0x8] sm:$0xff]
      %v7565 = vld [vmem:[#allocation7 + $0x10] sm:$0xff]
      %v7566 = vld [vmem:[#allocation7 + $0x18] sm:$0xff]
      %v7567 = vld [vmem:[#allocation7 + $0x20] sm:$0xff]
      %v7568 = vld [vmem:[#allocation7 + $0x28] sm:$0xff]
      %v7569 = vld [vmem:[#allocation7 + $0x30] sm:$0xff]
      %v7570 = vld [vmem:[#allocation7 + $0x38] sm:$0xff]
      %v7571 = vld [vmem:[#allocation7 + $0x40] sm:$0xff]
      %v7572 = vld [vmem:[#allocation7 + $0x48] sm:$0x3f]
      %v7573 = vpack.c.bf16 %v7564, %v7563
      %v7574 = vpack.c.bf16 %v7566, %v7565
      %v7575 = vpack.c.bf16 %v7568, %v7567
      %v7576 = vpack.c.bf16 %v7570, %v7569
      %v7577 = vpack.c.bf16 %v7572, %v7571
      %v7578 = vld [vmem:[%s7] sm:$0xf]
      %v7579 = vld [vmem:[%s7 + $0x4] sm:$0xf]
      %v7580 = vld [vmem:[%s7 + $0x8] sm:$0xf]
      %v7581 = vld [vmem:[%s7 + $0xc] sm:$0xf]
      %v7582 = vld [vmem:[%s7 + $0x10] sm:$0xf]
      %v7583 = vld [vmem:[%s7 + $0x14] sm:$0xf]
      %v7584 = vld [vmem:[%s7 + $0x18] sm:$0xf]
      %v7585 = vld [vmem:[%s7 + $0x1c] sm:$0xf]
      %v7586 = vld [vmem:[%s7 + $0x20] sm:$0xf]
      %v7587 = vld [vmem:[%s7 + $0x24] sm:$0xf]
      %v7588 = vld [vmem:[%s7 + $0x28] sm:$0xf]
      %v7589 = vld [vmem:[%s7 + $0x2c] sm:$0xf]
      %v7590 = vld [vmem:[%s7 + $0x30] sm:$0xf]
      %v7591 = vld [vmem:[%s7 + $0x34] sm:$0xf]
      %v7592 = vld [vmem:[%s7 + $0x38] sm:$0xf]
      %v7593 = vld [vmem:[%s7 + $0x3c] sm:$0xf]
      %v7594 = vld [vmem:[#allocation7 + $0x1] sm:$0xff]
      %v7595 = vld [vmem:[#allocation7 + $0x9] sm:$0xff]
      %v7596 = vld [vmem:[#allocation7 + $0x11] sm:$0xff]
      %v7597 = vld [vmem:[#allocation7 + $0x19] sm:$0xff]
      %v7598 = vld [vmem:[#allocation7 + $0x21] sm:$0xff]
      %v7599 = vld [vmem:[#allocation7 + $0x29] sm:$0xff]
      %v7600 = vld [vmem:[#allocation7 + $0x31] sm:$0xff]
      %v7601 = vld [vmem:[#allocation7 + $0x39] sm:$0xff]
      %v7602 = vld [vmem:[#allocation7 + $0x41] sm:$0xff]
      %v7603 = vld [vmem:[#allocation7 + $0x49] sm:$0x3f]
      %v7604 = vpack.c.bf16 %v7595, %v7594
      %v7605 = vpack.c.bf16 %v7597, %v7596
      %v7606 = vpack.c.bf16 %v7599, %v7598
      %v7607 = vpack.c.bf16 %v7601, %v7600
      %v7608 = vpack.c.bf16 %v7603, %v7602
      %s7609 = scalar_lea.vmem %s7, 64
      %v7610 = vld [vmem:[%s7609] sm:$0xf]
      %v7611 = vld [vmem:[%s7609 + $0x4] sm:$0xf]
      %v7612 = vld [vmem:[%s7609 + $0x8] sm:$0xf]
      %v7613 = vld [vmem:[%s7609 + $0xc] sm:$0xf]
      %v7614 = vld [vmem:[%s7609 + $0x10] sm:$0xf]
      %v7615 = vld [vmem:[%s7609 + $0x14] sm:$0xf]
      %v7616 = vld [vmem:[%s7609 + $0x18] sm:$0xf]
      %v7617 = vld [vmem:[%s7609 + $0x1c] sm:$0xf]
      %v7618 = vld [vmem:[%s7609 + $0x20] sm:$0xf]
      %v7619 = vld [vmem:[%s7609 + $0x24] sm:$0xf]
      %v7620 = vld [vmem:[%s7609 + $0x28] sm:$0xf]
      %v7621 = vld [vmem:[%s7609 + $0x2c] sm:$0xf]
      %v7622 = vld [vmem:[%s7609 + $0x30] sm:$0xf]
      %v7623 = vld [vmem:[%s7609 + $0x34] sm:$0xf]
      %v7624 = vld [vmem:[%s7609 + $0x38] sm:$0xf]
      %v7625 = vld [vmem:[%s7609 + $0x3c] sm:$0xf]
      %v7642 = vunpack.c.l.b16 %v7610
      %v7643 = vunpack.c.l.b16 %v7611
      %v7644 = vunpack.c.l.b16 %v7612
      %v7645 = vunpack.c.l.b16 %v7613
      %v7646 = vunpack.c.l.b16 %v7614
      %v7647 = vunpack.c.l.b16 %v7615
      %v7648 = vunpack.c.l.b16 %v7616
      %v7649 = vunpack.c.l.b16 %v7617
      %v7650 = vunpack.c.l.b16 %v7618
      %v7651 = vunpack.c.l.b16 %v7619
      %v7652 = vunpack.c.l.b16 %v7620
      %v7653 = vunpack.c.l.b16 %v7621
      %v7654 = vunpack.c.l.b16 %v7622
      %v7655 = vunpack.c.l.b16 %v7623
      %v7656 = vunpack.c.l.b16 %v7624
      %v7657 = vunpack.c.l.b16 %v7625
      %v7658 = vpack.c.b16 %v7643, %v7642
      %v7659 = vpack.c.b16 %v7645, %v7644
      %v7660 = vpack.c.b16 %v7647, %v7646
      %v7661 = vpack.c.b16 %v7649, %v7648
      %v7662 = vpack.c.b16 %v7651, %v7650
      %v7663 = vpack.c.b16 %v7653, %v7652
      %v7664 = vpack.c.b16 %v7655, %v7654
      %v7665 = vpack.c.b16 %v7657, %v7656
      %7674 = vmatprep.subr.bf16.mxu0 0
      %7675 = vmatpush1.bf16.msra.mxu0 %v7665
      %7676 = vmatprep.subr.bf16.mxu0 0
      %7677 = vmatpush1.bf16.msra.mxu0 %v7664
      %7678 = vmatprep.subr.bf16.mxu0 0
      %7679 = vmatpush1.bf16.msra.mxu0 %v7663
      %7680 = vmatprep.subr.bf16.mxu0 0
      %7681 = vmatpush1.bf16.msra.mxu0 %v7662
      %7682 = vmatprep.subr.bf16.mxu0 0
      %7683 = vmatpush1.bf16.msra.mxu0 %v7661
      %7684 = vmatprep.subr.bf16.mxu0 0
      %7685 = vmatpush1.bf16.msra.mxu0 %v7660
      %7686 = vmatprep.subr.bf16.mxu0 0
      %7687 = vmatpush1.bf16.msra.mxu0 %v7659
      %7688 = vmatprep.subr.bf16.mxu0 0
      %7689 = vmatpush1.bf16.msra.mxu0 %v7658
      %7690 = vmatprep.subr.bf16.mxu0 0
      %7691 = vmatpush2.bf16.msra.mxu0 0
      %7692 = vmatprep.subr.bf16.mxu0 0
      %7693 = vmatpush2.bf16.msra.mxu0 0
      %7694 = vmatprep.subr.bf16.mxu0 0
      %7695 = vmatpush2.bf16.msra.mxu0 0
      %7696 = vmatprep.subr.bf16.mxu0 0
      %7697 = vmatpush2.bf16.msra.mxu0 0
      %7698 = vmatprep.subr.bf16.mxu0 0
      %7699 = vmatpush2.bf16.msra.mxu0 0
      %7700 = vmatprep.subr.bf16.mxu0 0
      %7701 = vmatpush2.bf16.msra.mxu0 0
      %7702 = vmatprep.subr.bf16.mxu0 0
      %7703 = vmatpush2.bf16.msra.mxu0 0
      %7704 = vmatprep.subr.bf16.mxu0 0
      %7705 = vmatpush2.bf16.msra.mxu0 0
      %7706 = vmatprep.mubr.bf16.mxu0 0
      %7707 = vmatmul.mubr.bf16.gmra.mxu0 %v7604
      %v7708 = vpop.f32.mrf.mxu0
      %v7709 = vadd.f32 0.0, %v7708
      %v7710 = vpop.f32.mrf.mxu0
      %v7711 = vpop.f32.mrf.mxu0
      %v7712 = vadd.f32 0.0, %v7711
      %v7713 = vpop.f32.mrf.mxu0
      %7714 = vmatprep.mubr.bf16.mxu0 0
      %7715 = vmatmul.mubr.bf16.gmra.mxu0 %v7605
      %v7716 = vpop.f32.mrf.mxu0
      %v7717 = vadd.f32 0.0, %v7716
      %v7718 = vpop.f32.mrf.mxu0
      %v7719 = vpop.f32.mrf.mxu0
      %v7720 = vadd.f32 0.0, %v7719
      %v7721 = vpop.f32.mrf.mxu0
      %7722 = vmatprep.mubr.bf16.mxu0 0
      %7723 = vmatmul.mubr.bf16.gmra.mxu0 %v7606
      %v7724 = vpop.f32.mrf.mxu0
      %v7725 = vadd.f32 0.0, %v7724
      %v7726 = vpop.f32.mrf.mxu0
      %v7727 = vpop.f32.mrf.mxu0
      %v7728 = vadd.f32 0.0, %v7727
      %v7729 = vpop.f32.mrf.mxu0
      %7730 = vmatprep.mubr.bf16.mxu0 0
      %7731 = vmatmul.mubr.bf16.gmra.mxu0 %v7607
      %v7732 = vpop.f32.mrf.mxu0
      %v7733 = vadd.f32 0.0, %v7732
      %v7734 = vpop.f32.mrf.mxu0
      %v7735 = vpop.f32.mrf.mxu0
      %v7736 = vadd.f32 0.0, %v7735
      %v7737 = vpop.f32.mrf.mxu0
      %7738 = vmatprep.mubr.bf16.mxu0 0
      %7739 = vmatmul.mubr.bf16.gmra.mxu0 %v7608
      %v7740 = vpop.f32.mrf.mxu0
      %v7741 = vadd.f32 0.0, %v7740
      %v7742 = vpop.f32.mrf.mxu0
      %v7743 = vpop.f32.mrf.mxu0
      %v7744 = vadd.f32 0.0, %v7743
      %v7745 = vpop.f32.mrf.mxu0
      %7746 = vdwg.mxu0
      %v7763 = vunpack.c.l.b16 %v7578
      %v7764 = vunpack.c.l.b16 %v7579
      %v7765 = vunpack.c.l.b16 %v7580
      %v7766 = vunpack.c.l.b16 %v7581
      %v7767 = vunpack.c.l.b16 %v7582
      %v7768 = vunpack.c.l.b16 %v7583
      %v7769 = vunpack.c.l.b16 %v7584
      %v7770 = vunpack.c.l.b16 %v7585
      %v7771 = vunpack.c.l.b16 %v7586
      %v7772 = vunpack.c.l.b16 %v7587
      %v7773 = vunpack.c.l.b16 %v7588
      %v7774 = vunpack.c.l.b16 %v7589
      %v7775 = vunpack.c.l.b16 %v7590
      %v7776 = vunpack.c.l.b16 %v7591
      %v7777 = vunpack.c.l.b16 %v7592
      %v7778 = vunpack.c.l.b16 %v7593
      %v7779 = vpack.c.b16 %v7764, %v7763
      %v7780 = vpack.c.b16 %v7766, %v7765
      %v7781 = vpack.c.b16 %v7768, %v7767
      %v7782 = vpack.c.b16 %v7770, %v7769
      %v7783 = vpack.c.b16 %v7772, %v7771
      %v7784 = vpack.c.b16 %v7774, %v7773
      %v7785 = vpack.c.b16 %v7776, %v7775
      %v7786 = vpack.c.b16 %v7778, %v7777
      %7795 = vmatprep.subr.bf16.mxu0 0
      %7796 = vmatpush1.bf16.msra.mxu0 %v7786
      %7797 = vmatprep.subr.bf16.mxu0 0
      %7798 = vmatpush1.bf16.msra.mxu0 %v7785
      %7799 = vmatprep.subr.bf16.mxu0 0
      %7800 = vmatpush1.bf16.msra.mxu0 %v7784
      %7801 = vmatprep.subr.bf16.mxu0 0
      %7802 = vmatpush1.bf16.msra.mxu0 %v7783
      %7803 = vmatprep.subr.bf16.mxu0 0
      %7804 = vmatpush1.bf16.msra.mxu0 %v7782
      %7805 = vmatprep.subr.bf16.mxu0 0
      %7806 = vmatpush1.bf16.msra.mxu0 %v7781
      %7807 = vmatprep.subr.bf16.mxu0 0
      %7808 = vmatpush1.bf16.msra.mxu0 %v7780
      %7809 = vmatprep.subr.bf16.mxu0 0
      %7810 = vmatpush1.bf16.msra.mxu0 %v7779
      %7811 = vmatprep.subr.bf16.mxu0 0
      %7812 = vmatpush2.bf16.msra.mxu0 0
      %7813 = vmatprep.subr.bf16.mxu0 0
      %7814 = vmatpush2.bf16.msra.mxu0 0
      %7815 = vmatprep.subr.bf16.mxu0 0
      %7816 = vmatpush2.bf16.msra.mxu0 0
      %7817 = vmatprep.subr.bf16.mxu0 0
      %7818 = vmatpush2.bf16.msra.mxu0 0
      %7819 = vmatprep.subr.bf16.mxu0 0
      %7820 = vmatpush2.bf16.msra.mxu0 0
      %7821 = vmatprep.subr.bf16.mxu0 0
      %7822 = vmatpush2.bf16.msra.mxu0 0
      %7823 = vmatprep.subr.bf16.mxu0 0
      %7824 = vmatpush2.bf16.msra.mxu0 0
      %7825 = vmatprep.subr.bf16.mxu0 0
      %7826 = vmatpush2.bf16.msra.mxu0 0
      %7827 = vmatprep.mubr.bf16.mxu0 0
      %7828 = vmatmul.mubr.bf16.gmra.mxu0 %v7573
      %v7829 = vpop.f32.mrf.mxu0
      %v7830 = vadd.f32 %v7709, %v7829
      %v7831 = vpop.f32.mrf.mxu0
      %v7832 = vpop.f32.mrf.mxu0
      %v7833 = vadd.f32 %v7712, %v7832
      %v7834 = vpop.f32.mrf.mxu0
      %7835 = vmatprep.mubr.bf16.mxu0 0
      %7836 = vmatmul.mubr.bf16.gmra.mxu0 %v7574
      %v7837 = vpop.f32.mrf.mxu0
      %v7838 = vadd.f32 %v7717, %v7837
      %v7839 = vpop.f32.mrf.mxu0
      %v7840 = vpop.f32.mrf.mxu0
      %v7841 = vadd.f32 %v7720, %v7840
      %v7842 = vpop.f32.mrf.mxu0
      %7843 = vmatprep.mubr.bf16.mxu0 0
      %7844 = vmatmul.mubr.bf16.gmra.mxu0 %v7575
      %v7845 = vpop.f32.mrf.mxu0
      %v7846 = vadd.f32 %v7725, %v7845
      %v7847 = vpop.f32.mrf.mxu0
      %v7848 = vpop.f32.mrf.mxu0
      %v7849 = vadd.f32 %v7728, %v7848
      %v7850 = vpop.f32.mrf.mxu0
      %7851 = vmatprep.mubr.bf16.mxu0 0
      %7852 = vmatmul.mubr.bf16.gmra.mxu0 %v7576
      %v7853 = vpop.f32.mrf.mxu0
      %v7854 = vadd.f32 %v7733, %v7853
      %v7855 = vpop.f32.mrf.mxu0
      %v7856 = vpop.f32.mrf.mxu0
      %v7857 = vadd.f32 %v7736, %v7856
      %v7858 = vpop.f32.mrf.mxu0
      %7859 = vmatprep.mubr.bf16.mxu0 0
      %7860 = vmatmul.mubr.bf16.gmra.mxu0 %v7577
      %v7861 = vpop.f32.mrf.mxu0
      %v7862 = vadd.f32 %v7741, %v7861
      %v7863 = vpop.f32.mrf.mxu0
      %v7864 = vpop.f32.mrf.mxu0
      %v7865 = vadd.f32 %v7744, %v7864
      %v7866 = vpop.f32.mrf.mxu0
      %7867 = vdwg.mxu0
      %v7868 = vld [vmem:[#allocation7 + $0x2] sm:$0xff]
      %v7869 = vld [vmem:[#allocation7 + $0xa] sm:$0xff]
      %v7870 = vld [vmem:[#allocation7 + $0x12] sm:$0xff]
      %v7871 = vld [vmem:[#allocation7 + $0x1a] sm:$0xff]
      %v7872 = vld [vmem:[#allocation7 + $0x22] sm:$0xff]
      %v7873 = vld [vmem:[#allocation7 + $0x2a] sm:$0xff]
      %v7874 = vld [vmem:[#allocation7 + $0x32] sm:$0xff]
      %v7875 = vld [vmem:[#allocation7 + $0x3a] sm:$0xff]
      %v7876 = vld [vmem:[#allocation7 + $0x42] sm:$0xff]
      %v7877 = vld [vmem:[#allocation7 + $0x4a] sm:$0x3f]
      %v7878 = vpack.c.bf16 %v7869, %v7868
      %v7879 = vpack.c.bf16 %v7871, %v7870
      %v7880 = vpack.c.bf16 %v7873, %v7872
      %v7881 = vpack.c.bf16 %v7875, %v7874
      %v7882 = vpack.c.bf16 %v7877, %v7876
      %s7883 = scalar_lea.vmem %s7, 128
      %v7884 = vld [vmem:[%s7883] sm:$0xf]
      %v7885 = vld [vmem:[%s7883 + $0x4] sm:$0xf]
      %v7886 = vld [vmem:[%s7883 + $0x8] sm:$0xf]
      %v7887 = vld [vmem:[%s7883 + $0xc] sm:$0xf]
      %v7888 = vld [vmem:[%s7883 + $0x10] sm:$0xf]
      %v7889 = vld [vmem:[%s7883 + $0x14] sm:$0xf]
      %v7890 = vld [vmem:[%s7883 + $0x18] sm:$0xf]
      %v7891 = vld [vmem:[%s7883 + $0x1c] sm:$0xf]
      %v7892 = vld [vmem:[%s7883 + $0x20] sm:$0xf]
      %v7893 = vld [vmem:[%s7883 + $0x24] sm:$0xf]
      %v7894 = vld [vmem:[%s7883 + $0x28] sm:$0xf]
      %v7895 = vld [vmem:[%s7883 + $0x2c] sm:$0xf]
      %v7896 = vld [vmem:[%s7883 + $0x30] sm:$0xf]
      %v7897 = vld [vmem:[%s7883 + $0x34] sm:$0xf]
      %v7898 = vld [vmem:[%s7883 + $0x38] sm:$0xf]
      %v7899 = vld [vmem:[%s7883 + $0x3c] sm:$0xf]
      %v7916 = vunpack.c.l.b16 %v7884
      %v7917 = vunpack.c.l.b16 %v7885
      %v7918 = vunpack.c.l.b16 %v7886
      %v7919 = vunpack.c.l.b16 %v7887
      %v7920 = vunpack.c.l.b16 %v7888
      %v7921 = vunpack.c.l.b16 %v7889
      %v7922 = vunpack.c.l.b16 %v7890
      %v7923 = vunpack.c.l.b16 %v7891
      %v7924 = vunpack.c.l.b16 %v7892
      %v7925 = vunpack.c.l.b16 %v7893
      %v7926 = vunpack.c.l.b16 %v7894
      %v7927 = vunpack.c.l.b16 %v7895
      %v7928 = vunpack.c.l.b16 %v7896
      %v7929 = vunpack.c.l.b16 %v7897
      %v7930 = vunpack.c.l.b16 %v7898
      %v7931 = vunpack.c.l.b16 %v7899
      %v7932 = vpack.c.b16 %v7917, %v7916
      %v7933 = vpack.c.b16 %v7919, %v7918
      %v7934 = vpack.c.b16 %v7921, %v7920
      %v7935 = vpack.c.b16 %v7923, %v7922
      %v7936 = vpack.c.b16 %v7925, %v7924
      %v7937 = vpack.c.b16 %v7927, %v7926
      %v7938 = vpack.c.b16 %v7929, %v7928
      %v7939 = vpack.c.b16 %v7931, %v7930
      %7948 = vmatprep.subr.bf16.mxu0 0
      %7949 = vmatpush1.bf16.msra.mxu0 %v7939
      %7950 = vmatprep.subr.bf16.mxu0 0
      %7951 = vmatpush1.bf16.msra.mxu0 %v7938
      %7952 = vmatprep.subr.bf16.mxu0 0
      %7953 = vmatpush1.bf16.msra.mxu0 %v7937
      %7954 = vmatprep.subr.bf16.mxu0 0
      %7955 = vmatpush1.bf16.msra.mxu0 %v7936
      %7956 = vmatprep.subr.bf16.mxu0 0
      %7957 = vmatpush1.bf16.msra.mxu0 %v7935
      %7958 = vmatprep.subr.bf16.mxu0 0
      %7959 = vmatpush1.bf16.msra.mxu0 %v7934
      %7960 = vmatprep.subr.bf16.mxu0 0
      %7961 = vmatpush1.bf16.msra.mxu0 %v7933
      %7962 = vmatprep.subr.bf16.mxu0 0
      %7963 = vmatpush1.bf16.msra.mxu0 %v7932
      %7964 = vmatprep.subr.bf16.mxu0 0
      %7965 = vmatpush2.bf16.msra.mxu0 0
      %7966 = vmatprep.subr.bf16.mxu0 0
      %7967 = vmatpush2.bf16.msra.mxu0 0
      %7968 = vmatprep.subr.bf16.mxu0 0
      %7969 = vmatpush2.bf16.msra.mxu0 0
      %7970 = vmatprep.subr.bf16.mxu0 0
      %7971 = vmatpush2.bf16.msra.mxu0 0
      %7972 = vmatprep.subr.bf16.mxu0 0
      %7973 = vmatpush2.bf16.msra.mxu0 0
      %7974 = vmatprep.subr.bf16.mxu0 0
      %7975 = vmatpush2.bf16.msra.mxu0 0
      %7976 = vmatprep.subr.bf16.mxu0 0
      %7977 = vmatpush2.bf16.msra.mxu0 0
      %7978 = vmatprep.subr.bf16.mxu0 0
      %7979 = vmatpush2.bf16.msra.mxu0 0
      %7980 = vmatprep.mubr.bf16.mxu0 0
      %7981 = vmatmul.mubr.bf16.gmra.mxu0 %v7878
      %v7982 = vpop.f32.mrf.mxu0
      %v7983 = vadd.f32 0.0, %v7982
      %v7984 = vpop.f32.mrf.mxu0
      %v7985 = vpop.f32.mrf.mxu0
      %v7986 = vadd.f32 0.0, %v7985
      %v7987 = vpop.f32.mrf.mxu0
      %7988 = vmatprep.mubr.bf16.mxu0 0
      %7989 = vmatmul.mubr.bf16.gmra.mxu0 %v7879
      %v7990 = vpop.f32.mrf.mxu0
      %v7991 = vadd.f32 0.0, %v7990
      %v7992 = vpop.f32.mrf.mxu0
      %v7993 = vpop.f32.mrf.mxu0
      %v7994 = vadd.f32 0.0, %v7993
      %v7995 = vpop.f32.mrf.mxu0
      %7996 = vmatprep.mubr.bf16.mxu0 0
      %7997 = vmatmul.mubr.bf16.gmra.mxu0 %v7880
      %v7998 = vpop.f32.mrf.mxu0
      %v7999 = vadd.f32 0.0, %v7998
      %v8000 = vpop.f32.mrf.mxu0
      %v8001 = vpop.f32.mrf.mxu0
      %v8002 = vadd.f32 0.0, %v8001
      %v8003 = vpop.f32.mrf.mxu0
      %8004 = vmatprep.mubr.bf16.mxu0 0
      %8005 = vmatmul.mubr.bf16.gmra.mxu0 %v7881
      %v8006 = vpop.f32.mrf.mxu0
      %v8007 = vadd.f32 0.0, %v8006
      %v8008 = vpop.f32.mrf.mxu0
      %v8009 = vpop.f32.mrf.mxu0
      %v8010 = vadd.f32 0.0, %v8009
      %v8011 = vpop.f32.mrf.mxu0
      %8012 = vmatprep.mubr.bf16.mxu0 0
      %8013 = vmatmul.mubr.bf16.gmra.mxu0 %v7882
      %v8014 = vpop.f32.mrf.mxu0
      %v8015 = vadd.f32 0.0, %v8014
      %v8016 = vpop.f32.mrf.mxu0
      %v8017 = vpop.f32.mrf.mxu0
      %v8018 = vadd.f32 0.0, %v8017
      %v8019 = vpop.f32.mrf.mxu0
      %8020 = vdwg.mxu0
      %v8021 = vadd.f32 %v7830, %v7983
      %v8022 = vadd.f32 %v7833, %v7986
      %v8023 = vadd.f32 %v7838, %v7991
      %v8024 = vadd.f32 %v7841, %v7994
      %v8025 = vadd.f32 %v7846, %v7999
      %v8026 = vadd.f32 %v7849, %v8002
      %v8027 = vadd.f32 %v7854, %v8007
      %v8028 = vadd.f32 %v7857, %v8010
      %v8029 = vadd.f32 %v7862, %v8015
      %v8030 = vadd.f32 %v7865, %v8018
      %v8031 = vld [vmem:[#allocation7 + $0xa] sm:$0xff]
      %v8032 = vld [vmem:[#allocation7 + $0x12] sm:$0xff]
      %v8033 = vld [vmem:[#allocation7 + $0x1a] sm:$0xff]
      %v8034 = vld [vmem:[#allocation7 + $0x22] sm:$0xff]
      %v8035 = vld [vmem:[#allocation7 + $0x2a] sm:$0xff]
      %v8036 = vld [vmem:[#allocation7 + $0x32] sm:$0xff]
      %v8037 = vld [vmem:[#allocation7 + $0x3a] sm:$0xff]
      %v8038 = vld [vmem:[#allocation7 + $0x42] sm:$0xff]
      %v8039 = vld [vmem:[#allocation7 + $0x4a] sm:$0xff]
      %v8040 = vld [vmem:[#allocation7 + $0x52] sm:$0x3f]
      %v8041 = vpack.c.bf16 %v8032, %v8031
      %v8042 = vpack.c.bf16 %v8034, %v8033
      %v8043 = vpack.c.bf16 %v8036, %v8035
      %v8044 = vpack.c.bf16 %v8038, %v8037
      %v8045 = vpack.c.bf16 %v8040, %v8039
      %s8046 = scalar_lea.vmem %s7, 192
      %v8047 = vld [vmem:[%s8046] sm:$0xf]
      %v8048 = vld [vmem:[%s8046 + $0x4] sm:$0xf]
      %v8049 = vld [vmem:[%s8046 + $0x8] sm:$0xf]
      %v8050 = vld [vmem:[%s8046 + $0xc] sm:$0xf]
      %v8051 = vld [vmem:[%s8046 + $0x10] sm:$0xf]
      %v8052 = vld [vmem:[%s8046 + $0x14] sm:$0xf]
      %v8053 = vld [vmem:[%s8046 + $0x18] sm:$0xf]
      %v8054 = vld [vmem:[%s8046 + $0x1c] sm:$0xf]
      %v8055 = vld [vmem:[%s8046 + $0x20] sm:$0xf]
      %v8056 = vld [vmem:[%s8046 + $0x24] sm:$0xf]
      %v8057 = vld [vmem:[%s8046 + $0x28] sm:$0xf]
      %v8058 = vld [vmem:[%s8046 + $0x2c] sm:$0xf]
      %v8059 = vld [vmem:[%s8046 + $0x30] sm:$0xf]
      %v8060 = vld [vmem:[%s8046 + $0x34] sm:$0xf]
      %v8061 = vld [vmem:[%s8046 + $0x38] sm:$0xf]
      %v8062 = vld [vmem:[%s8046 + $0x3c] sm:$0xf]
      %v8079 = vunpack.c.l.b16 %v8047
      %v8080 = vunpack.c.l.b16 %v8048
      %v8081 = vunpack.c.l.b16 %v8049
      %v8082 = vunpack.c.l.b16 %v8050
      %v8083 = vunpack.c.l.b16 %v8051
      %v8084 = vunpack.c.l.b16 %v8052
      %v8085 = vunpack.c.l.b16 %v8053
      %v8086 = vunpack.c.l.b16 %v8054
      %v8087 = vunpack.c.l.b16 %v8055
      %v8088 = vunpack.c.l.b16 %v8056
      %v8089 = vunpack.c.l.b16 %v8057
      %v8090 = vunpack.c.l.b16 %v8058
      %v8091 = vunpack.c.l.b16 %v8059
      %v8092 = vunpack.c.l.b16 %v8060
      %v8093 = vunpack.c.l.b16 %v8061
      %v8094 = vunpack.c.l.b16 %v8062
      %v8095 = vpack.c.b16 %v8080, %v8079
      %v8096 = vpack.c.b16 %v8082, %v8081
      %v8097 = vpack.c.b16 %v8084, %v8083
      %v8098 = vpack.c.b16 %v8086, %v8085
      %v8099 = vpack.c.b16 %v8088, %v8087
      %v8100 = vpack.c.b16 %v8090, %v8089
      %v8101 = vpack.c.b16 %v8092, %v8091
      %v8102 = vpack.c.b16 %v8094, %v8093
      %8111 = vmatprep.subr.bf16.mxu0 0
      %8112 = vmatpush1.bf16.msra.mxu0 %v8102
      %8113 = vmatprep.subr.bf16.mxu0 0
      %8114 = vmatpush1.bf16.msra.mxu0 %v8101
      %8115 = vmatprep.subr.bf16.mxu0 0
      %8116 = vmatpush1.bf16.msra.mxu0 %v8100
      %8117 = vmatprep.subr.bf16.mxu0 0
      %8118 = vmatpush1.bf16.msra.mxu0 %v8099
      %8119 = vmatprep.subr.bf16.mxu0 0
      %8120 = vmatpush1.bf16.msra.mxu0 %v8098
      %8121 = vmatprep.subr.bf16.mxu0 0
      %8122 = vmatpush1.bf16.msra.mxu0 %v8097
      %8123 = vmatprep.subr.bf16.mxu0 0
      %8124 = vmatpush1.bf16.msra.mxu0 %v8096
      %8125 = vmatprep.subr.bf16.mxu0 0
      %8126 = vmatpush1.bf16.msra.mxu0 %v8095
      %8127 = vmatprep.subr.bf16.mxu0 0
      %8128 = vmatpush2.bf16.msra.mxu0 0
      %8129 = vmatprep.subr.bf16.mxu0 0
      %8130 = vmatpush2.bf16.msra.mxu0 0
      %8131 = vmatprep.subr.bf16.mxu0 0
      %8132 = vmatpush2.bf16.msra.mxu0 0
      %8133 = vmatprep.subr.bf16.mxu0 0
      %8134 = vmatpush2.bf16.msra.mxu0 0
      %8135 = vmatprep.subr.bf16.mxu0 0
      %8136 = vmatpush2.bf16.msra.mxu0 0
      %8137 = vmatprep.subr.bf16.mxu0 0
      %8138 = vmatpush2.bf16.msra.mxu0 0
      %8139 = vmatprep.subr.bf16.mxu0 0
      %8140 = vmatpush2.bf16.msra.mxu0 0
      %8141 = vmatprep.subr.bf16.mxu0 0
      %8142 = vmatpush2.bf16.msra.mxu0 0
      %8143 = vmatprep.mubr.bf16.mxu0 0
      %8144 = vmatmul.mubr.bf16.gmra.mxu0 %v8041
      %v8145 = vpop.f32.mrf.mxu0
      %v8146 = vadd.f32 0.0, %v8145
      %v8147 = vpop.f32.mrf.mxu0
      %v8148 = vpop.f32.mrf.mxu0
      %v8149 = vadd.f32 0.0, %v8148
      %v8150 = vpop.f32.mrf.mxu0
      %8151 = vmatprep.mubr.bf16.mxu0 0
      %8152 = vmatmul.mubr.bf16.gmra.mxu0 %v8042
      %v8153 = vpop.f32.mrf.mxu0
      %v8154 = vadd.f32 0.0, %v8153
      %v8155 = vpop.f32.mrf.mxu0
      %v8156 = vpop.f32.mrf.mxu0
      %v8157 = vadd.f32 0.0, %v8156
      %v8158 = vpop.f32.mrf.mxu0
      %8159 = vmatprep.mubr.bf16.mxu0 0
      %8160 = vmatmul.mubr.bf16.gmra.mxu0 %v8043
      %v8161 = vpop.f32.mrf.mxu0
      %v8162 = vadd.f32 0.0, %v8161
      %v8163 = vpop.f32.mrf.mxu0
      %v8164 = vpop.f32.mrf.mxu0
      %v8165 = vadd.f32 0.0, %v8164
      %v8166 = vpop.f32.mrf.mxu0
      %8167 = vmatprep.mubr.bf16.mxu0 0
      %8168 = vmatmul.mubr.bf16.gmra.mxu0 %v8044
      %v8169 = vpop.f32.mrf.mxu0
      %v8170 = vadd.f32 0.0, %v8169
      %v8171 = vpop.f32.mrf.mxu0
      %v8172 = vpop.f32.mrf.mxu0
      %v8173 = vadd.f32 0.0, %v8172
      %v8174 = vpop.f32.mrf.mxu0
      %8175 = vmatprep.mubr.bf16.mxu0 0
      %8176 = vmatmul.mubr.bf16.gmra.mxu0 %v8045
      %v8177 = vpop.f32.mrf.mxu0
      %v8178 = vadd.f32 0.0, %v8177
      %v8179 = vpop.f32.mrf.mxu0
      %v8180 = vpop.f32.mrf.mxu0
      %v8181 = vadd.f32 0.0, %v8180
      %v8182 = vpop.f32.mrf.mxu0
      %8183 = vdwg.mxu0
      %v8184 = vadd.f32 %v8021, %v8146
      %v8185 = vadd.f32 %v8022, %v8149
      %v8186 = vadd.f32 %v8023, %v8154
      %v8187 = vadd.f32 %v8024, %v8157
      %v8188 = vadd.f32 %v8025, %v8162
      %v8189 = vadd.f32 %v8026, %v8165
      %v8190 = vadd.f32 %v8027, %v8170
      %v8191 = vadd.f32 %v8028, %v8173
      %v8192 = vadd.f32 %v8029, %v8178
      %v8193 = vadd.f32 %v8030, %v8181
      %v8194 = vld [vmem:[#allocation7 + $0xb] sm:$0xff]
      %v8195 = vld [vmem:[#allocation7 + $0x13] sm:$0xff]
      %v8196 = vld [vmem:[#allocation7 + $0x1b] sm:$0xff]
      %v8197 = vld [vmem:[#allocation7 + $0x23] sm:$0xff]
      %v8198 = vld [vmem:[#allocation7 + $0x2b] sm:$0xff]
      %v8199 = vld [vmem:[#allocation7 + $0x33] sm:$0xff]
      %v8200 = vld [vmem:[#allocation7 + $0x3b] sm:$0xff]
      %v8201 = vld [vmem:[#allocation7 + $0x43] sm:$0xff]
      %v8202 = vld [vmem:[#allocation7 + $0x4b] sm:$0xff]
      %v8203 = vld [vmem:[#allocation7 + $0x53] sm:$0x3f]
      %v8204 = vpack.c.bf16 %v8195, %v8194
      %v8205 = vpack.c.bf16 %v8197, %v8196
      %v8206 = vpack.c.bf16 %v8199, %v8198
      %v8207 = vpack.c.bf16 %v8201, %v8200
      %v8208 = vpack.c.bf16 %v8203, %v8202
      %s8209 = scalar_lea.vmem %s7, 256
      %v8210 = vld [vmem:[%s8209] sm:$0xf]
      %v8211 = vld [vmem:[%s8209 + $0x4] sm:$0xf]
      %v8212 = vld [vmem:[%s8209 + $0x8] sm:$0xf]
      %v8213 = vld [vmem:[%s8209 + $0xc] sm:$0xf]
      %v8214 = vld [vmem:[%s8209 + $0x10] sm:$0xf]
      %v8215 = vld [vmem:[%s8209 + $0x14] sm:$0xf]
      %v8216 = vld [vmem:[%s8209 + $0x18] sm:$0xf]
      %v8217 = vld [vmem:[%s8209 + $0x1c] sm:$0xf]
      %v8218 = vld [vmem:[%s8209 + $0x20] sm:$0xf]
      %v8219 = vld [vmem:[%s8209 + $0x24] sm:$0xf]
      %v8220 = vld [vmem:[%s8209 + $0x28] sm:$0xf]
      %v8221 = vld [vmem:[%s8209 + $0x2c] sm:$0xf]
      %v8222 = vld [vmem:[%s8209 + $0x30] sm:$0xf]
      %v8223 = vld [vmem:[%s8209 + $0x34] sm:$0xf]
      %v8224 = vld [vmem:[%s8209 + $0x38] sm:$0xf]
      %v8225 = vld [vmem:[%s8209 + $0x3c] sm:$0xf]
      %v8242 = vunpack.c.l.b16 %v8210
      %v8243 = vunpack.c.l.b16 %v8211
      %v8244 = vunpack.c.l.b16 %v8212
      %v8245 = vunpack.c.l.b16 %v8213
      %v8246 = vunpack.c.l.b16 %v8214
      %v8247 = vunpack.c.l.b16 %v8215
      %v8248 = vunpack.c.l.b16 %v8216
      %v8249 = vunpack.c.l.b16 %v8217
      %v8250 = vunpack.c.l.b16 %v8218
      %v8251 = vunpack.c.l.b16 %v8219
      %v8252 = vunpack.c.l.b16 %v8220
      %v8253 = vunpack.c.l.b16 %v8221
      %v8254 = vunpack.c.l.b16 %v8222
      %v8255 = vunpack.c.l.b16 %v8223
      %v8256 = vunpack.c.l.b16 %v8224
      %v8257 = vunpack.c.l.b16 %v8225
      %v8258 = vpack.c.b16 %v8243, %v8242
      %v8259 = vpack.c.b16 %v8245, %v8244
      %v8260 = vpack.c.b16 %v8247, %v8246
      %v8261 = vpack.c.b16 %v8249, %v8248
      %v8262 = vpack.c.b16 %v8251, %v8250
      %v8263 = vpack.c.b16 %v8253, %v8252
      %v8264 = vpack.c.b16 %v8255, %v8254
      %v8265 = vpack.c.b16 %v8257, %v8256
      %8274 = vmatprep.subr.bf16.mxu0 0
      %8275 = vmatpush1.bf16.msra.mxu0 %v8265
      %8276 = vmatprep.subr.bf16.mxu0 0
      %8277 = vmatpush1.bf16.msra.mxu0 %v8264
      %8278 = vmatprep.subr.bf16.mxu0 0
      %8279 = vmatpush1.bf16.msra.mxu0 %v8263
      %8280 = vmatprep.subr.bf16.mxu0 0
      %8281 = vmatpush1.bf16.msra.mxu0 %v8262
      %8282 = vmatprep.subr.bf16.mxu0 0
      %8283 = vmatpush1.bf16.msra.mxu0 %v8261
      %8284 = vmatprep.subr.bf16.mxu0 0
      %8285 = vmatpush1.bf16.msra.mxu0 %v8260
      %8286 = vmatprep.subr.bf16.mxu0 0
      %8287 = vmatpush1.bf16.msra.mxu0 %v8259
      %8288 = vmatprep.subr.bf16.mxu0 0
      %8289 = vmatpush1.bf16.msra.mxu0 %v8258
      %8290 = vmatprep.subr.bf16.mxu0 0
      %8291 = vmatpush2.bf16.msra.mxu0 0
      %8292 = vmatprep.subr.bf16.mxu0 0
      %8293 = vmatpush2.bf16.msra.mxu0 0
      %8294 = vmatprep.subr.bf16.mxu0 0
      %8295 = vmatpush2.bf16.msra.mxu0 0
      %8296 = vmatprep.subr.bf16.mxu0 0
      %8297 = vmatpush2.bf16.msra.mxu0 0
      %8298 = vmatprep.subr.bf16.mxu0 0
      %8299 = vmatpush2.bf16.msra.mxu0 0
      %8300 = vmatprep.subr.bf16.mxu0 0
      %8301 = vmatpush2.bf16.msra.mxu0 0
      %8302 = vmatprep.subr.bf16.mxu0 0
      %8303 = vmatpush2.bf16.msra.mxu0 0
      %8304 = vmatprep.subr.bf16.mxu0 0
      %8305 = vmatpush2.bf16.msra.mxu0 0
      %8306 = vmatprep.mubr.bf16.mxu0 0
      %8307 = vmatmul.mubr.bf16.gmra.mxu0 %v8204
      %v8308 = vpop.f32.mrf.mxu0
      %v8309 = vadd.f32 0.0, %v8308
      %v8310 = vpop.f32.mrf.mxu0
      %v8311 = vpop.f32.mrf.mxu0
      %v8312 = vadd.f32 0.0, %v8311
      %v8313 = vpop.f32.mrf.mxu0
      %8314 = vmatprep.mubr.bf16.mxu0 0
      %8315 = vmatmul.mubr.bf16.gmra.mxu0 %v8205
      %v8316 = vpop.f32.mrf.mxu0
      %v8317 = vadd.f32 0.0, %v8316
      %v8318 = vpop.f32.mrf.mxu0
      %v8319 = vpop.f32.mrf.mxu0
      %v8320 = vadd.f32 0.0, %v8319
      %v8321 = vpop.f32.mrf.mxu0
      %8322 = vmatprep.mubr.bf16.mxu0 0
      %8323 = vmatmul.mubr.bf16.gmra.mxu0 %v8206
      %v8324 = vpop.f32.mrf.mxu0
      %v8325 = vadd.f32 0.0, %v8324
      %v8326 = vpop.f32.mrf.mxu0
      %v8327 = vpop.f32.mrf.mxu0
      %v8328 = vadd.f32 0.0, %v8327
      %v8329 = vpop.f32.mrf.mxu0
      %8330 = vmatprep.mubr.bf16.mxu0 0
      %8331 = vmatmul.mubr.bf16.gmra.mxu0 %v8207
      %v8332 = vpop.f32.mrf.mxu0
      %v8333 = vadd.f32 0.0, %v8332
      %v8334 = vpop.f32.mrf.mxu0
      %v8335 = vpop.f32.mrf.mxu0
      %v8336 = vadd.f32 0.0, %v8335
      %v8337 = vpop.f32.mrf.mxu0
      %8338 = vmatprep.mubr.bf16.mxu0 0
      %8339 = vmatmul.mubr.bf16.gmra.mxu0 %v8208
      %v8340 = vpop.f32.mrf.mxu0
      %v8341 = vadd.f32 0.0, %v8340
      %v8342 = vpop.f32.mrf.mxu0
      %v8343 = vpop.f32.mrf.mxu0
      %v8344 = vadd.f32 0.0, %v8343
      %v8345 = vpop.f32.mrf.mxu0
      %8346 = vdwg.mxu0
      %v8347 = vadd.f32 %v8184, %v8309
      %v8348 = vadd.f32 %v8185, %v8312
      %v8349 = vadd.f32 %v8186, %v8317
      %v8350 = vadd.f32 %v8187, %v8320
      %v8351 = vadd.f32 %v8188, %v8325
      %v8352 = vadd.f32 %v8189, %v8328
      %v8353 = vadd.f32 %v8190, %v8333
      %v8354 = vadd.f32 %v8191, %v8336
      %v8355 = vadd.f32 %v8192, %v8341
      %v8356 = vadd.f32 %v8193, %v8344
      %v8357 = vld [vmem:[#allocation7 + $0xc] sm:$0xff]
      %v8358 = vld [vmem:[#allocation7 + $0x14] sm:$0xff]
      %v8359 = vld [vmem:[#allocation7 + $0x1c] sm:$0xff]
      %v8360 = vld [vmem:[#allocation7 + $0x24] sm:$0xff]
      %v8361 = vld [vmem:[#allocation7 + $0x2c] sm:$0xff]
      %v8362 = vld [vmem:[#allocation7 + $0x34] sm:$0xff]
      %v8363 = vld [vmem:[#allocation7 + $0x3c] sm:$0xff]
      %v8364 = vld [vmem:[#allocation7 + $0x44] sm:$0xff]
      %v8365 = vld [vmem:[#allocation7 + $0x4c] sm:$0xff]
      %v8366 = vld [vmem:[#allocation7 + $0x54] sm:$0x3f]
      %v8367 = vpack.c.bf16 %v8358, %v8357
      %v8368 = vpack.c.bf16 %v8360, %v8359
      %v8369 = vpack.c.bf16 %v8362, %v8361
      %v8370 = vpack.c.bf16 %v8364, %v8363
      %v8371 = vpack.c.bf16 %v8366, %v8365
      %s8372 = scalar_lea.vmem %s7, 320
      %v8373 = vld [vmem:[%s8372] sm:$0xf]
      %v8374 = vld [vmem:[%s8372 + $0x4] sm:$0xf]
      %v8375 = vld [vmem:[%s8372 + $0x8] sm:$0xf]
      %v8376 = vld [vmem:[%s8372 + $0xc] sm:$0xf]
      %v8377 = vld [vmem:[%s8372 + $0x10] sm:$0xf]
      %v8378 = vld [vmem:[%s8372 + $0x14] sm:$0xf]
      %v8379 = vld [vmem:[%s8372 + $0x18] sm:$0xf]
      %v8380 = vld [vmem:[%s8372 + $0x1c] sm:$0xf]
      %v8381 = vld [vmem:[%s8372 + $0x20] sm:$0xf]
      %v8382 = vld [vmem:[%s8372 + $0x24] sm:$0xf]
      %v8383 = vld [vmem:[%s8372 + $0x28] sm:$0xf]
      %v8384 = vld [vmem:[%s8372 + $0x2c] sm:$0xf]
      %v8385 = vld [vmem:[%s8372 + $0x30] sm:$0xf]
      %v8386 = vld [vmem:[%s8372 + $0x34] sm:$0xf]
      %v8387 = vld [vmem:[%s8372 + $0x38] sm:$0xf]
      %v8388 = vld [vmem:[%s8372 + $0x3c] sm:$0xf]
      %v8405 = vunpack.c.l.b16 %v8373
      %v8406 = vunpack.c.l.b16 %v8374
      %v8407 = vunpack.c.l.b16 %v8375
      %v8408 = vunpack.c.l.b16 %v8376
      %v8409 = vunpack.c.l.b16 %v8377
      %v8410 = vunpack.c.l.b16 %v8378
      %v8411 = vunpack.c.l.b16 %v8379
      %v8412 = vunpack.c.l.b16 %v8380
      %v8413 = vunpack.c.l.b16 %v8381
      %v8414 = vunpack.c.l.b16 %v8382
      %v8415 = vunpack.c.l.b16 %v8383
      %v8416 = vunpack.c.l.b16 %v8384
      %v8417 = vunpack.c.l.b16 %v8385
      %v8418 = vunpack.c.l.b16 %v8386
      %v8419 = vunpack.c.l.b16 %v8387
      %v8420 = vunpack.c.l.b16 %v8388
      %v8421 = vpack.c.b16 %v8406, %v8405
      %v8422 = vpack.c.b16 %v8408, %v8407
      %v8423 = vpack.c.b16 %v8410, %v8409
      %v8424 = vpack.c.b16 %v8412, %v8411
      %v8425 = vpack.c.b16 %v8414, %v8413
      %v8426 = vpack.c.b16 %v8416, %v8415
      %v8427 = vpack.c.b16 %v8418, %v8417
      %v8428 = vpack.c.b16 %v8420, %v8419
      %8437 = vmatprep.subr.bf16.mxu0 0
      %8438 = vmatpush1.bf16.msra.mxu0 %v8428
      %8439 = vmatprep.subr.bf16.mxu0 0
      %8440 = vmatpush1.bf16.msra.mxu0 %v8427
      %8441 = vmatprep.subr.bf16.mxu0 0
      %8442 = vmatpush1.bf16.msra.mxu0 %v8426
      %8443 = vmatprep.subr.bf16.mxu0 0
      %8444 = vmatpush1.bf16.msra.mxu0 %v8425
      %8445 = vmatprep.subr.bf16.mxu0 0
      %8446 = vmatpush1.bf16.msra.mxu0 %v8424
      %8447 = vmatprep.subr.bf16.mxu0 0
      %8448 = vmatpush1.bf16.msra.mxu0 %v8423
      %8449 = vmatprep.subr.bf16.mxu0 0
      %8450 = vmatpush1.bf16.msra.mxu0 %v8422
      %8451 = vmatprep.subr.bf16.mxu0 0
      %8452 = vmatpush1.bf16.msra.mxu0 %v8421
      %8453 = vmatprep.subr.bf16.mxu0 0
      %8454 = vmatpush2.bf16.msra.mxu0 0
      %8455 = vmatprep.subr.bf16.mxu0 0
      %8456 = vmatpush2.bf16.msra.mxu0 0
      %8457 = vmatprep.subr.bf16.mxu0 0
      %8458 = vmatpush2.bf16.msra.mxu0 0
      %8459 = vmatprep.subr.bf16.mxu0 0
      %8460 = vmatpush2.bf16.msra.mxu0 0
      %8461 = vmatprep.subr.bf16.mxu0 0
      %8462 = vmatpush2.bf16.msra.mxu0 0
      %8463 = vmatprep.subr.bf16.mxu0 0
      %8464 = vmatpush2.bf16.msra.mxu0 0
      %8465 = vmatprep.subr.bf16.mxu0 0
      %8466 = vmatpush2.bf16.msra.mxu0 0
      %8467 = vmatprep.subr.bf16.mxu0 0
      %8468 = vmatpush2.bf16.msra.mxu0 0
      %8469 = vmatprep.mubr.bf16.mxu0 0
      %8470 = vmatmul.mubr.bf16.gmra.mxu0 %v8367
      %v8471 = vpop.f32.mrf.mxu0
      %v8472 = vadd.f32 0.0, %v8471
      %v8473 = vpop.f32.mrf.mxu0
      %v8474 = vpop.f32.mrf.mxu0
      %v8475 = vadd.f32 0.0, %v8474
      %v8476 = vpop.f32.mrf.mxu0
      %8477 = vmatprep.mubr.bf16.mxu0 0
      %8478 = vmatmul.mubr.bf16.gmra.mxu0 %v8368
      %v8479 = vpop.f32.mrf.mxu0
      %v8480 = vadd.f32 0.0, %v8479
      %v8481 = vpop.f32.mrf.mxu0
      %v8482 = vpop.f32.mrf.mxu0
      %v8483 = vadd.f32 0.0, %v8482
      %v8484 = vpop.f32.mrf.mxu0
      %8485 = vmatprep.mubr.bf16.mxu0 0
      %8486 = vmatmul.mubr.bf16.gmra.mxu0 %v8369
      %v8487 = vpop.f32.mrf.mxu0
      %v8488 = vadd.f32 0.0, %v8487
      %v8489 = vpop.f32.mrf.mxu0
      %v8490 = vpop.f32.mrf.mxu0
      %v8491 = vadd.f32 0.0, %v8490
      %v8492 = vpop.f32.mrf.mxu0
      %8493 = vmatprep.mubr.bf16.mxu0 0
      %8494 = vmatmul.mubr.bf16.gmra.mxu0 %v8370
      %v8495 = vpop.f32.mrf.mxu0
      %v8496 = vadd.f32 0.0, %v8495
      %v8497 = vpop.f32.mrf.mxu0
      %v8498 = vpop.f32.mrf.mxu0
      %v8499 = vadd.f32 0.0, %v8498
      %v8500 = vpop.f32.mrf.mxu0
      %8501 = vmatprep.mubr.bf16.mxu0 0
      %8502 = vmatmul.mubr.bf16.gmra.mxu0 %v8371
      %v8503 = vpop.f32.mrf.mxu0
      %v8504 = vadd.f32 0.0, %v8503
      %v8505 = vpop.f32.mrf.mxu0
      %v8506 = vpop.f32.mrf.mxu0
      %v8507 = vadd.f32 0.0, %v8506
      %v8508 = vpop.f32.mrf.mxu0
      %8509 = vdwg.mxu0
      %v8510 = vadd.f32 %v8347, %v8472
      %v8511 = vadd.f32 %v8348, %v8475
      %v8512 = vadd.f32 %v8349, %v8480
      %v8513 = vadd.f32 %v8350, %v8483
      %v8514 = vadd.f32 %v8351, %v8488
      %v8515 = vadd.f32 %v8352, %v8491
      %v8516 = vadd.f32 %v8353, %v8496
      %v8517 = vadd.f32 %v8354, %v8499
      %v8518 = vadd.f32 %v8355, %v8504
      %v8519 = vadd.f32 %v8356, %v8507
      %v8520 = vld [vmem:[#allocation7 + $0x14] sm:$0xff]
      %v8521 = vld [vmem:[#allocation7 + $0x1c] sm:$0xff]
      %v8522 = vld [vmem:[#allocation7 + $0x24] sm:$0xff]
      %v8523 = vld [vmem:[#allocation7 + $0x2c] sm:$0xff]
      %v8524 = vld [vmem:[#allocation7 + $0x34] sm:$0xff]
      %v8525 = vld [vmem:[#allocation7 + $0x3c] sm:$0xff]
      %v8526 = vld [vmem:[#allocation7 + $0x44] sm:$0xff]
      %v8527 = vld [vmem:[#allocation7 + $0x4c] sm:$0xff]
      %v8528 = vld [vmem:[#allocation7 + $0x54] sm:$0xff]
      %v8529 = vld [vmem:[#allocation7 + $0x5c] sm:$0x3f]
      %v8530 = vpack.c.bf16 %v8521, %v8520
      %v8531 = vpack.c.bf16 %v8523, %v8522
      %v8532 = vpack.c.bf16 %v8525, %v8524
      %v8533 = vpack.c.bf16 %v8527, %v8526
      %v8534 = vpack.c.bf16 %v8529, %v8528
      %s8535 = scalar_lea.vmem %s7, 384
      %v8536 = vld [vmem:[%s8535] sm:$0xf]
      %v8537 = vld [vmem:[%s8535 + $0x4] sm:$0xf]
      %v8538 = vld [vmem:[%s8535 + $0x8] sm:$0xf]
      %v8539 = vld [vmem:[%s8535 + $0xc] sm:$0xf]
      %v8540 = vld [vmem:[%s8535 + $0x10] sm:$0xf]
      %v8541 = vld [vmem:[%s8535 + $0x14] sm:$0xf]
      %v8542 = vld [vmem:[%s8535 + $0x18] sm:$0xf]
      %v8543 = vld [vmem:[%s8535 + $0x1c] sm:$0xf]
      %v8544 = vld [vmem:[%s8535 + $0x20] sm:$0xf]
      %v8545 = vld [vmem:[%s8535 + $0x24] sm:$0xf]
      %v8546 = vld [vmem:[%s8535 + $0x28] sm:$0xf]
      %v8547 = vld [vmem:[%s8535 + $0x2c] sm:$0xf]
      %v8548 = vld [vmem:[%s8535 + $0x30] sm:$0xf]
      %v8549 = vld [vmem:[%s8535 + $0x34] sm:$0xf]
      %v8550 = vld [vmem:[%s8535 + $0x38] sm:$0xf]
      %v8551 = vld [vmem:[%s8535 + $0x3c] sm:$0xf]
      %v8568 = vunpack.c.l.b16 %v8536
      %v8569 = vunpack.c.l.b16 %v8537
      %v8570 = vunpack.c.l.b16 %v8538
      %v8571 = vunpack.c.l.b16 %v8539
      %v8572 = vunpack.c.l.b16 %v8540
      %v8573 = vunpack.c.l.b16 %v8541
      %v8574 = vunpack.c.l.b16 %v8542
      %v8575 = vunpack.c.l.b16 %v8543
      %v8576 = vunpack.c.l.b16 %v8544
      %v8577 = vunpack.c.l.b16 %v8545
      %v8578 = vunpack.c.l.b16 %v8546
      %v8579 = vunpack.c.l.b16 %v8547
      %v8580 = vunpack.c.l.b16 %v8548
      %v8581 = vunpack.c.l.b16 %v8549
      %v8582 = vunpack.c.l.b16 %v8550
      %v8583 = vunpack.c.l.b16 %v8551
      %v8584 = vpack.c.b16 %v8569, %v8568
      %v8585 = vpack.c.b16 %v8571, %v8570
      %v8586 = vpack.c.b16 %v8573, %v8572
      %v8587 = vpack.c.b16 %v8575, %v8574
      %v8588 = vpack.c.b16 %v8577, %v8576
      %v8589 = vpack.c.b16 %v8579, %v8578
      %v8590 = vpack.c.b16 %v8581, %v8580
      %v8591 = vpack.c.b16 %v8583, %v8582
      %8600 = vmatprep.subr.bf16.mxu0 0
      %8601 = vmatpush1.bf16.msra.mxu0 %v8591
      %8602 = vmatprep.subr.bf16.mxu0 0
      %8603 = vmatpush1.bf16.msra.mxu0 %v8590
      %8604 = vmatprep.subr.bf16.mxu0 0
      %8605 = vmatpush1.bf16.msra.mxu0 %v8589
      %8606 = vmatprep.subr.bf16.mxu0 0
      %8607 = vmatpush1.bf16.msra.mxu0 %v8588
      %8608 = vmatprep.subr.bf16.mxu0 0
      %8609 = vmatpush1.bf16.msra.mxu0 %v8587
      %8610 = vmatprep.subr.bf16.mxu0 0
      %8611 = vmatpush1.bf16.msra.mxu0 %v8586
      %8612 = vmatprep.subr.bf16.mxu0 0
      %8613 = vmatpush1.bf16.msra.mxu0 %v8585
      %8614 = vmatprep.subr.bf16.mxu0 0
      %8615 = vmatpush1.bf16.msra.mxu0 %v8584
      %8616 = vmatprep.subr.bf16.mxu0 0
      %8617 = vmatpush2.bf16.msra.mxu0 0
      %8618 = vmatprep.subr.bf16.mxu0 0
      %8619 = vmatpush2.bf16.msra.mxu0 0
      %8620 = vmatprep.subr.bf16.mxu0 0
      %8621 = vmatpush2.bf16.msra.mxu0 0
      %8622 = vmatprep.subr.bf16.mxu0 0
      %8623 = vmatpush2.bf16.msra.mxu0 0
      %8624 = vmatprep.subr.bf16.mxu0 0
      %8625 = vmatpush2.bf16.msra.mxu0 0
      %8626 = vmatprep.subr.bf16.mxu0 0
      %8627 = vmatpush2.bf16.msra.mxu0 0
      %8628 = vmatprep.subr.bf16.mxu0 0
      %8629 = vmatpush2.bf16.msra.mxu0 0
      %8630 = vmatprep.subr.bf16.mxu0 0
      %8631 = vmatpush2.bf16.msra.mxu0 0
      %8632 = vmatprep.mubr.bf16.mxu0 0
      %8633 = vmatmul.mubr.bf16.gmra.mxu0 %v8530
      %v8634 = vpop.f32.mrf.mxu0
      %v8635 = vadd.f32 0.0, %v8634
      %v8636 = vpop.f32.mrf.mxu0
      %v8637 = vpop.f32.mrf.mxu0
      %v8638 = vadd.f32 0.0, %v8637
      %v8639 = vpop.f32.mrf.mxu0
      %8640 = vmatprep.mubr.bf16.mxu0 0
      %8641 = vmatmul.mubr.bf16.gmra.mxu0 %v8531
      %v8642 = vpop.f32.mrf.mxu0
      %v8643 = vadd.f32 0.0, %v8642
      %v8644 = vpop.f32.mrf.mxu0
      %v8645 = vpop.f32.mrf.mxu0
      %v8646 = vadd.f32 0.0, %v8645
      %v8647 = vpop.f32.mrf.mxu0
      %8648 = vmatprep.mubr.bf16.mxu0 0
      %8649 = vmatmul.mubr.bf16.gmra.mxu0 %v8532
      %v8650 = vpop.f32.mrf.mxu0
      %v8651 = vadd.f32 0.0, %v8650
      %v8652 = vpop.f32.mrf.mxu0
      %v8653 = vpop.f32.mrf.mxu0
      %v8654 = vadd.f32 0.0, %v8653
      %v8655 = vpop.f32.mrf.mxu0
      %8656 = vmatprep.mubr.bf16.mxu0 0
      %8657 = vmatmul.mubr.bf16.gmra.mxu0 %v8533
      %v8658 = vpop.f32.mrf.mxu0
      %v8659 = vadd.f32 0.0, %v8658
      %v8660 = vpop.f32.mrf.mxu0
      %v8661 = vpop.f32.mrf.mxu0
      %v8662 = vadd.f32 0.0, %v8661
      %v8663 = vpop.f32.mrf.mxu0
      %8664 = vmatprep.mubr.bf16.mxu0 0
      %8665 = vmatmul.mubr.bf16.gmra.mxu0 %v8534
      %v8666 = vpop.f32.mrf.mxu0
      %v8667 = vadd.f32 0.0, %v8666
      %v8668 = vpop.f32.mrf.mxu0
      %v8669 = vpop.f32.mrf.mxu0
      %v8670 = vadd.f32 0.0, %v8669
      %v8671 = vpop.f32.mrf.mxu0
      %8672 = vdwg.mxu0
      %v8673 = vadd.f32 %v8510, %v8635
      %v8674 = vadd.f32 %v8511, %v8638
      %v8675 = vadd.f32 %v8512, %v8643
      %v8676 = vadd.f32 %v8513, %v8646
      %v8677 = vadd.f32 %v8514, %v8651
      %v8678 = vadd.f32 %v8515, %v8654
      %v8679 = vadd.f32 %v8516, %v8659
      %v8680 = vadd.f32 %v8517, %v8662
      %v8681 = vadd.f32 %v8518, %v8667
      %v8682 = vadd.f32 %v8519, %v8670
      %v8683 = vld [vmem:[#allocation7 + $0x15] sm:$0xff]
      %v8684 = vld [vmem:[#allocation7 + $0x1d] sm:$0xff]
      %v8685 = vld [vmem:[#allocation7 + $0x25] sm:$0xff]
      %v8686 = vld [vmem:[#allocation7 + $0x2d] sm:$0xff]
      %v8687 = vld [vmem:[#allocation7 + $0x35] sm:$0xff]
      %v8688 = vld [vmem:[#allocation7 + $0x3d] sm:$0xff]
      %v8689 = vld [vmem:[#allocation7 + $0x45] sm:$0xff]
      %v8690 = vld [vmem:[#allocation7 + $0x4d] sm:$0xff]
      %v8691 = vld [vmem:[#allocation7 + $0x55] sm:$0xff]
      %v8692 = vld [vmem:[#allocation7 + $0x5d] sm:$0x3f]
      %v8693 = vpack.c.bf16 %v8684, %v8683
      %v8694 = vpack.c.bf16 %v8686, %v8685
      %v8695 = vpack.c.bf16 %v8688, %v8687
      %v8696 = vpack.c.bf16 %v8690, %v8689
      %v8697 = vpack.c.bf16 %v8692, %v8691
      %s8698 = scalar_lea.vmem %s7, 448
      %v8699 = vld [vmem:[%s8698] sm:$0xf]
      %v8700 = vld [vmem:[%s8698 + $0x4] sm:$0xf]
      %v8701 = vld [vmem:[%s8698 + $0x8] sm:$0xf]
      %v8702 = vld [vmem:[%s8698 + $0xc] sm:$0xf]
      %v8703 = vld [vmem:[%s8698 + $0x10] sm:$0xf]
      %v8704 = vld [vmem:[%s8698 + $0x14] sm:$0xf]
      %v8705 = vld [vmem:[%s8698 + $0x18] sm:$0xf]
      %v8706 = vld [vmem:[%s8698 + $0x1c] sm:$0xf]
      %v8707 = vld [vmem:[%s8698 + $0x20] sm:$0xf]
      %v8708 = vld [vmem:[%s8698 + $0x24] sm:$0xf]
      %v8709 = vld [vmem:[%s8698 + $0x28] sm:$0xf]
      %v8710 = vld [vmem:[%s8698 + $0x2c] sm:$0xf]
      %v8711 = vld [vmem:[%s8698 + $0x30] sm:$0xf]
      %v8712 = vld [vmem:[%s8698 + $0x34] sm:$0xf]
      %v8713 = vld [vmem:[%s8698 + $0x38] sm:$0xf]
      %v8714 = vld [vmem:[%s8698 + $0x3c] sm:$0xf]
      %v8731 = vunpack.c.l.b16 %v8699
      %v8732 = vunpack.c.l.b16 %v8700
      %v8733 = vunpack.c.l.b16 %v8701
      %v8734 = vunpack.c.l.b16 %v8702
      %v8735 = vunpack.c.l.b16 %v8703
      %v8736 = vunpack.c.l.b16 %v8704
      %v8737 = vunpack.c.l.b16 %v8705
      %v8738 = vunpack.c.l.b16 %v8706
      %v8739 = vunpack.c.l.b16 %v8707
      %v8740 = vunpack.c.l.b16 %v8708
      %v8741 = vunpack.c.l.b16 %v8709
      %v8742 = vunpack.c.l.b16 %v8710
      %v8743 = vunpack.c.l.b16 %v8711
      %v8744 = vunpack.c.l.b16 %v8712
      %v8745 = vunpack.c.l.b16 %v8713
      %v8746 = vunpack.c.l.b16 %v8714
      %v8747 = vpack.c.b16 %v8732, %v8731
      %v8748 = vpack.c.b16 %v8734, %v8733
      %v8749 = vpack.c.b16 %v8736, %v8735
      %v8750 = vpack.c.b16 %v8738, %v8737
      %v8751 = vpack.c.b16 %v8740, %v8739
      %v8752 = vpack.c.b16 %v8742, %v8741
      %v8753 = vpack.c.b16 %v8744, %v8743
      %v8754 = vpack.c.b16 %v8746, %v8745
      %8763 = vmatprep.subr.bf16.mxu0 0
      %8764 = vmatpush1.bf16.msra.mxu0 %v8754
      %8765 = vmatprep.subr.bf16.mxu0 0
      %8766 = vmatpush1.bf16.msra.mxu0 %v8753
      %8767 = vmatprep.subr.bf16.mxu0 0
      %8768 = vmatpush1.bf16.msra.mxu0 %v8752
      %8769 = vmatprep.subr.bf16.mxu0 0
      %8770 = vmatpush1.bf16.msra.mxu0 %v8751
      %8771 = vmatprep.subr.bf16.mxu0 0
      %8772 = vmatpush1.bf16.msra.mxu0 %v8750
      %8773 = vmatprep.subr.bf16.mxu0 0
      %8774 = vmatpush1.bf16.msra.mxu0 %v8749
      %8775 = vmatprep.subr.bf16.mxu0 0
      %8776 = vmatpush1.bf16.msra.mxu0 %v8748
      %8777 = vmatprep.subr.bf16.mxu0 0
      %8778 = vmatpush1.bf16.msra.mxu0 %v8747
      %8779 = vmatprep.subr.bf16.mxu0 0
      %8780 = vmatpush2.bf16.msra.mxu0 0
      %8781 = vmatprep.subr.bf16.mxu0 0
      %8782 = vmatpush2.bf16.msra.mxu0 0
      %8783 = vmatprep.subr.bf16.mxu0 0
      %8784 = vmatpush2.bf16.msra.mxu0 0
      %8785 = vmatprep.subr.bf16.mxu0 0
      %8786 = vmatpush2.bf16.msra.mxu0 0
      %8787 = vmatprep.subr.bf16.mxu0 0
      %8788 = vmatpush2.bf16.msra.mxu0 0
      %8789 = vmatprep.subr.bf16.mxu0 0
      %8790 = vmatpush2.bf16.msra.mxu0 0
      %8791 = vmatprep.subr.bf16.mxu0 0
      %8792 = vmatpush2.bf16.msra.mxu0 0
      %8793 = vmatprep.subr.bf16.mxu0 0
      %8794 = vmatpush2.bf16.msra.mxu0 0
      %8795 = vmatprep.mubr.bf16.mxu0 0
      %8796 = vmatmul.mubr.bf16.gmra.mxu0 %v8693
      %v8797 = vpop.f32.mrf.mxu0
      %v8798 = vadd.f32 0.0, %v8797
      %v8799 = vpop.f32.mrf.mxu0
      %v8800 = vpop.f32.mrf.mxu0
      %v8801 = vadd.f32 0.0, %v8800
      %v8802 = vpop.f32.mrf.mxu0
      %8803 = vmatprep.mubr.bf16.mxu0 0
      %8804 = vmatmul.mubr.bf16.gmra.mxu0 %v8694
      %v8805 = vpop.f32.mrf.mxu0
      %v8806 = vadd.f32 0.0, %v8805
      %v8807 = vpop.f32.mrf.mxu0
      %v8808 = vpop.f32.mrf.mxu0
      %v8809 = vadd.f32 0.0, %v8808
      %v8810 = vpop.f32.mrf.mxu0
      %8811 = vmatprep.mubr.bf16.mxu0 0
      %8812 = vmatmul.mubr.bf16.gmra.mxu0 %v8695
      %v8813 = vpop.f32.mrf.mxu0
      %v8814 = vadd.f32 0.0, %v8813
      %v8815 = vpop.f32.mrf.mxu0
      %v8816 = vpop.f32.mrf.mxu0
      %v8817 = vadd.f32 0.0, %v8816
      %v8818 = vpop.f32.mrf.mxu0
      %8819 = vmatprep.mubr.bf16.mxu0 0
      %8820 = vmatmul.mubr.bf16.gmra.mxu0 %v8696
      %v8821 = vpop.f32.mrf.mxu0
      %v8822 = vadd.f32 0.0, %v8821
      %v8823 = vpop.f32.mrf.mxu0
      %v8824 = vpop.f32.mrf.mxu0
      %v8825 = vadd.f32 0.0, %v8824
      %v8826 = vpop.f32.mrf.mxu0
      %8827 = vmatprep.mubr.bf16.mxu0 0
      %8828 = vmatmul.mubr.bf16.gmra.mxu0 %v8697
      %v8829 = vpop.f32.mrf.mxu0
      %v8830 = vadd.f32 0.0, %v8829
      %v8831 = vpop.f32.mrf.mxu0
      %v8832 = vpop.f32.mrf.mxu0
      %v8833 = vadd.f32 0.0, %v8832
      %v8834 = vpop.f32.mrf.mxu0
      %8835 = vdwg.mxu0
      %v8836 = vadd.f32 %v8673, %v8798
      %v8837 = vadd.f32 %v8674, %v8801
      %v8838 = vadd.f32 %v8675, %v8806
      %v8839 = vadd.f32 %v8676, %v8809
      %v8840 = vadd.f32 %v8677, %v8814
      %v8841 = vadd.f32 %v8678, %v8817
      %v8842 = vadd.f32 %v8679, %v8822
      %v8843 = vadd.f32 %v8680, %v8825
      %v8844 = vadd.f32 %v8681, %v8830
      %v8845 = vadd.f32 %v8682, %v8833
      %v8846 = vld [vmem:[#allocation7 + $0x16] sm:$0xff]
      %v8847 = vld [vmem:[#allocation7 + $0x1e] sm:$0xff]
      %v8848 = vld [vmem:[#allocation7 + $0x26] sm:$0xff]
      %v8849 = vld [vmem:[#allocation7 + $0x2e] sm:$0xff]
      %v8850 = vld [vmem:[#allocation7 + $0x36] sm:$0xff]
      %v8851 = vld [vmem:[#allocation7 + $0x3e] sm:$0xff]
      %v8852 = vld [vmem:[#allocation7 + $0x46] sm:$0xff]
      %v8853 = vld [vmem:[#allocation7 + $0x4e] sm:$0xff]
      %v8854 = vld [vmem:[#allocation7 + $0x56] sm:$0xff]
      %v8855 = vld [vmem:[#allocation7 + $0x5e] sm:$0x3f]
      %v8856 = vpack.c.bf16 %v8847, %v8846
      %v8857 = vpack.c.bf16 %v8849, %v8848
      %v8858 = vpack.c.bf16 %v8851, %v8850
      %v8859 = vpack.c.bf16 %v8853, %v8852
      %v8860 = vpack.c.bf16 %v8855, %v8854
      %s8861 = scalar_lea.vmem %s7, 512
      %v8862 = vld [vmem:[%s8861] sm:$0xf]
      %v8863 = vld [vmem:[%s8861 + $0x4] sm:$0xf]
      %v8864 = vld [vmem:[%s8861 + $0x8] sm:$0xf]
      %v8865 = vld [vmem:[%s8861 + $0xc] sm:$0xf]
      %v8866 = vld [vmem:[%s8861 + $0x10] sm:$0xf]
      %v8867 = vld [vmem:[%s8861 + $0x14] sm:$0xf]
      %v8868 = vld [vmem:[%s8861 + $0x18] sm:$0xf]
      %v8869 = vld [vmem:[%s8861 + $0x1c] sm:$0xf]
      %v8870 = vld [vmem:[%s8861 + $0x20] sm:$0xf]
      %v8871 = vld [vmem:[%s8861 + $0x24] sm:$0xf]
      %v8872 = vld [vmem:[%s8861 + $0x28] sm:$0xf]
      %v8873 = vld [vmem:[%s8861 + $0x2c] sm:$0xf]
      %v8874 = vld [vmem:[%s8861 + $0x30] sm:$0xf]
      %v8875 = vld [vmem:[%s8861 + $0x34] sm:$0xf]
      %v8876 = vld [vmem:[%s8861 + $0x38] sm:$0xf]
      %v8877 = vld [vmem:[%s8861 + $0x3c] sm:$0xf]
      %v8894 = vunpack.c.l.b16 %v8862
      %v8895 = vunpack.c.l.b16 %v8863
      %v8896 = vunpack.c.l.b16 %v8864
      %v8897 = vunpack.c.l.b16 %v8865
      %v8898 = vunpack.c.l.b16 %v8866
      %v8899 = vunpack.c.l.b16 %v8867
      %v8900 = vunpack.c.l.b16 %v8868
      %v8901 = vunpack.c.l.b16 %v8869
      %v8902 = vunpack.c.l.b16 %v8870
      %v8903 = vunpack.c.l.b16 %v8871
      %v8904 = vunpack.c.l.b16 %v8872
      %v8905 = vunpack.c.l.b16 %v8873
      %v8906 = vunpack.c.l.b16 %v8874
      %v8907 = vunpack.c.l.b16 %v8875
      %v8908 = vunpack.c.l.b16 %v8876
      %v8909 = vunpack.c.l.b16 %v8877
      %v8910 = vpack.c.b16 %v8895, %v8894
      %v8911 = vpack.c.b16 %v8897, %v8896
      %v8912 = vpack.c.b16 %v8899, %v8898
      %v8913 = vpack.c.b16 %v8901, %v8900
      %v8914 = vpack.c.b16 %v8903, %v8902
      %v8915 = vpack.c.b16 %v8905, %v8904
      %v8916 = vpack.c.b16 %v8907, %v8906
      %v8917 = vpack.c.b16 %v8909, %v8908
      %8926 = vmatprep.subr.bf16.mxu0 0
      %8927 = vmatpush1.bf16.msra.mxu0 %v8917
      %8928 = vmatprep.subr.bf16.mxu0 0
      %8929 = vmatpush1.bf16.msra.mxu0 %v8916
      %8930 = vmatprep.subr.bf16.mxu0 0
      %8931 = vmatpush1.bf16.msra.mxu0 %v8915
      %8932 = vmatprep.subr.bf16.mxu0 0
      %8933 = vmatpush1.bf16.msra.mxu0 %v8914
      %8934 = vmatprep.subr.bf16.mxu0 0
      %8935 = vmatpush1.bf16.msra.mxu0 %v8913
      %8936 = vmatprep.subr.bf16.mxu0 0
      %8937 = vmatpush1.bf16.msra.mxu0 %v8912
      %8938 = vmatprep.subr.bf16.mxu0 0
      %8939 = vmatpush1.bf16.msra.mxu0 %v8911
      %8940 = vmatprep.subr.bf16.mxu0 0
      %8941 = vmatpush1.bf16.msra.mxu0 %v8910
      %8942 = vmatprep.subr.bf16.mxu0 0
      %8943 = vmatpush2.bf16.msra.mxu0 0
      %8944 = vmatprep.subr.bf16.mxu0 0
      %8945 = vmatpush2.bf16.msra.mxu0 0
      %8946 = vmatprep.subr.bf16.mxu0 0
      %8947 = vmatpush2.bf16.msra.mxu0 0
      %8948 = vmatprep.subr.bf16.mxu0 0
      %8949 = vmatpush2.bf16.msra.mxu0 0
      %8950 = vmatprep.subr.bf16.mxu0 0
      %8951 = vmatpush2.bf16.msra.mxu0 0
      %8952 = vmatprep.subr.bf16.mxu0 0
      %8953 = vmatpush2.bf16.msra.mxu0 0
      %8954 = vmatprep.subr.bf16.mxu0 0
      %8955 = vmatpush2.bf16.msra.mxu0 0
      %8956 = vmatprep.subr.bf16.mxu0 0
      %8957 = vmatpush2.bf16.msra.mxu0 0
      %8958 = vmatprep.mubr.bf16.mxu0 0
      %8959 = vmatmul.mubr.bf16.gmra.mxu0 %v8856
      %v8960 = vpop.f32.mrf.mxu0
      %v8961 = vadd.f32 0.0, %v8960
      %v8962 = vpop.f32.mrf.mxu0
      %v8963 = vpop.f32.mrf.mxu0
      %v8964 = vadd.f32 0.0, %v8963
      %v8965 = vpop.f32.mrf.mxu0
      %8966 = vmatprep.mubr.bf16.mxu0 0
      %8967 = vmatmul.mubr.bf16.gmra.mxu0 %v8857
      %v8968 = vpop.f32.mrf.mxu0
      %v8969 = vadd.f32 0.0, %v8968
      %v8970 = vpop.f32.mrf.mxu0
      %v8971 = vpop.f32.mrf.mxu0
      %v8972 = vadd.f32 0.0, %v8971
      %v8973 = vpop.f32.mrf.mxu0
      %8974 = vmatprep.mubr.bf16.mxu0 0
      %8975 = vmatmul.mubr.bf16.gmra.mxu0 %v8858
      %v8976 = vpop.f32.mrf.mxu0
      %v8977 = vadd.f32 0.0, %v8976
      %v8978 = vpop.f32.mrf.mxu0
      %v8979 = vpop.f32.mrf.mxu0
      %v8980 = vadd.f32 0.0, %v8979
      %v8981 = vpop.f32.mrf.mxu0
      %8982 = vmatprep.mubr.bf16.mxu0 0
      %8983 = vmatmul.mubr.bf16.gmra.mxu0 %v8859
      %v8984 = vpop.f32.mrf.mxu0
      %v8985 = vadd.f32 0.0, %v8984
      %v8986 = vpop.f32.mrf.mxu0
      %v8987 = vpop.f32.mrf.mxu0
      %v8988 = vadd.f32 0.0, %v8987
      %v8989 = vpop.f32.mrf.mxu0
      %8990 = vmatprep.mubr.bf16.mxu0 0
      %8991 = vmatmul.mubr.bf16.gmra.mxu0 %v8860
      %v8992 = vpop.f32.mrf.mxu0
      %v8993 = vadd.f32 0.0, %v8992
      %v8994 = vpop.f32.mrf.mxu0
      %v8995 = vpop.f32.mrf.mxu0
      %v8996 = vadd.f32 0.0, %v8995
      %v8997 = vpop.f32.mrf.mxu0
      %8998 = vdwg.mxu0
      %v8999 = vadd.f32 %v8836, %v8961
      %v9000 = vadd.f32 %v8837, %v8964
      %v9001 = vadd.f32 %v8838, %v8969
      %v9002 = vadd.f32 %v8839, %v8972
      %v9003 = vadd.f32 %v8840, %v8977
      %v9004 = vadd.f32 %v8841, %v8980
      %v9005 = vadd.f32 %v8842, %v8985
      %v9006 = vadd.f32 %v8843, %v8988
      %v9007 = vadd.f32 %v8844, %v8993
      %v9008 = vadd.f32 %v8845, %v8996
      %v9009 = vld [vmem:[%s8] sm:$0x1]
      %v9011 = vlaneseq
      %v9012 = vshrl.u32 %v9011, 7
      %v9013 = vsub.s32 0, %v9012
      %v9014 = vrot.slane %v9009, %v9013
      %v9016 = vadd.f32 %v8999, %v9014
      %v9017 = vadd.f32 %v9000, %v9014
      %v9018 = vadd.f32 %v9001, %v9014
      %v9019 = vadd.f32 %v9002, %v9014
      %v9020 = vadd.f32 %v9003, %v9014
      %v9021 = vadd.f32 %v9004, %v9014
      %v9022 = vadd.f32 %v9005, %v9014
      %v9023 = vadd.f32 %v9006, %v9014
      %v9024 = vadd.f32 %v9007, %v9014
      %v9025 = vadd.f32 %v9008, %v9014
      %v9026 = vmax.f32 %v9016, 0.0
      %v9027 = vmax.f32 %v9017, 0.0
      %v9028 = vmax.f32 %v9018, 0.0
      %v9029 = vmax.f32 %v9019, 0.0
      %v9030 = vmax.f32 %v9020, 0.0
      %v9031 = vmax.f32 %v9021, 0.0
      %v9032 = vmax.f32 %v9022, 0.0
      %v9033 = vmax.f32 %v9023, 0.0
      %v9034 = vmax.f32 %v9024, 0.0
      %v9035 = vmax.f32 %v9025, 0.0
      %9036 = vst [vmem:[#allocation8] sm:$0xff] 0.0
      %9037 = vst [vmem:[#allocation8 + $0x8] sm:$0xff] 0.0
      %9038 = vst [vmem:[#allocation8 + $0x10] sm:$0xff] 0.0
      %9039 = vst [vmem:[#allocation8 + $0x18] sm:$0xff] 0.0
      %9040 = vst [vmem:[#allocation8 + $0x20] sm:$0xff] 0.0
      %9041 = vst [vmem:[#allocation8 + $0x28] sm:$0xff] 0.0
      %9042 = vst [vmem:[#allocation8 + $0x30] sm:$0xff] 0.0
      %9043 = vst [vmem:[#allocation8 + $0x38] sm:$0xff] 0.0
      %9044 = vst [vmem:[#allocation8 + $0x40] sm:$0xff] 0.0
      %9045 = vst [vmem:[#allocation8 + $0x48] sm:$0xff] 0.0
      %9046 = vst [vmem:[#allocation8 + $0x50] sm:$0xff] 0.0
      %9047 = vst [vmem:[#allocation8 + $0x58] sm:$0xff] 0.0
      %9048 = vst [vmem:[#allocation8 + $0x60] sm:$0xf] 0.0
      %9049 = vst [vmem:[#allocation8 + $0xb] sm:$0xff] %v9026
      %9050 = vst [vmem:[#allocation8 + $0x13] sm:$0xff] %v9027
      %9051 = vst [vmem:[#allocation8 + $0x1b] sm:$0xff] %v9028
      %9052 = vst [vmem:[#allocation8 + $0x23] sm:$0xff] %v9029
      %9053 = vst [vmem:[#allocation8 + $0x2b] sm:$0xff] %v9030
      %9054 = vst [vmem:[#allocation8 + $0x33] sm:$0xff] %v9031
      %9055 = vst [vmem:[#allocation8 + $0x3b] sm:$0xff] %v9032
      %9056 = vst [vmem:[#allocation8 + $0x43] sm:$0xff] %v9033
      %9057 = vst [vmem:[#allocation8 + $0x4b] sm:$0xff] %v9034
      %9058 = vst [vmem:[#allocation8 + $0x53] sm:$0x3f] %v9035
      %v9059 = vld [vmem:[%s16] sm:$0xf]
      %v9060 = vld [vmem:[%s16 + $0x4] sm:$0xf]
      %v9061 = vld [vmem:[%s16 + $0x8] sm:$0xf]
      %v9062 = vld [vmem:[%s16 + $0xc] sm:$0xf]
      %v9063 = vld [vmem:[%s16 + $0x10] sm:$0xf]
      %v9064 = vld [vmem:[%s16 + $0x14] sm:$0xf]
      %v9065 = vld [vmem:[%s16 + $0x18] sm:$0xf]
      %v9066 = vld [vmem:[%s16 + $0x1c] sm:$0xf]
      %v9067 = vld [vmem:[%s16 + $0x20] sm:$0xf]
      %v9068 = vld [vmem:[%s16 + $0x24] sm:$0xf]
      %v9069 = vld [vmem:[%s16 + $0x28] sm:$0xf]
      %v9070 = vld [vmem:[%s16 + $0x2c] sm:$0xf]
      %v9071 = vld [vmem:[%s16 + $0x30] sm:$0xf]
      %v9072 = vld [vmem:[%s16 + $0x34] sm:$0xf]
      %v9073 = vld [vmem:[%s16 + $0x38] sm:$0xf]
      %v9074 = vld [vmem:[%s16 + $0x3c] sm:$0xf]
      %v9075 = vld [vmem:[%s16 + $0x40] sm:$0xf]
      %v9076 = vld [vmem:[%s16 + $0x44] sm:$0xf]
      %v9077 = vld [vmem:[%s16 + $0x48] sm:$0xf]
      %v9078 = vld [vmem:[%s16 + $0x4c] sm:$0xf]
      %v9079 = vld [vmem:[%s16 + $0x50] sm:$0xf]
      %v9080 = vld [vmem:[%s16 + $0x54] sm:$0xf]
      %v9081 = vld [vmem:[%s16 + $0x58] sm:$0xf]
      %v9082 = vld [vmem:[%s16 + $0x5c] sm:$0xf]
      %v9083 = vld [vmem:[%s16 + $0x60] sm:$0xf]
      %v9084 = vld [vmem:[%s16 + $0x64] sm:$0xf]
      %v9085 = vld [vmem:[%s16 + $0x68] sm:$0xf]
      %v9086 = vld [vmem:[%s16 + $0x6c] sm:$0xf]
      %v9087 = vld [vmem:[%s16 + $0x70] sm:$0xf]
      %v9088 = vld [vmem:[%s16 + $0x74] sm:$0xf]
      %v9089 = vld [vmem:[%s16 + $0x78] sm:$0xf]
      %v9090 = vld [vmem:[%s16 + $0x7c] sm:$0xf]
      %v9091 = vld [vmem:[#allocation8] sm:$0xff]
      %v9092 = vld [vmem:[#allocation8 + $0x8] sm:$0xff]
      %v9093 = vld [vmem:[#allocation8 + $0x10] sm:$0xff]
      %v9094 = vld [vmem:[#allocation8 + $0x18] sm:$0xff]
      %v9095 = vld [vmem:[#allocation8 + $0x20] sm:$0xff]
      %v9096 = vld [vmem:[#allocation8 + $0x28] sm:$0xff]
      %v9097 = vld [vmem:[#allocation8 + $0x30] sm:$0xff]
      %v9098 = vld [vmem:[#allocation8 + $0x38] sm:$0xff]
      %v9099 = vld [vmem:[#allocation8 + $0x40] sm:$0xff]
      %v9100 = vld [vmem:[#allocation8 + $0x48] sm:$0xff]
      %v9101 = vld [vmem:[#allocation8 + $0x50] sm:$0xff]
      %v9102 = vld [vmem:[#allocation8 + $0x58] sm:$0xff]
      %v9103 = vld [vmem:[#allocation8 + $0x60] sm:$0xf]
      %v9104 = vpack.c.bf16 %v9092, %v9091
      %v9105 = vpack.c.bf16 %v9094, %v9093
      %v9106 = vpack.c.bf16 %v9096, %v9095
      %v9107 = vpack.c.bf16 %v9098, %v9097
      %v9108 = vpack.c.bf16 %v9100, %v9099
      %v9109 = vpack.c.bf16 %v9102, %v9101
      %v9110 = vpack.c.bf16 %v9103, %v9103
      %v9143 = vunpack.c.l.b16 %v9059
      %v9144 = vunpack.c.l.b16 %v9060
      %v9145 = vunpack.c.l.b16 %v9061
      %v9146 = vunpack.c.l.b16 %v9062
      %v9147 = vunpack.c.l.b16 %v9063
      %v9148 = vunpack.c.l.b16 %v9064
      %v9149 = vunpack.c.l.b16 %v9065
      %v9150 = vunpack.c.l.b16 %v9066
      %v9151 = vunpack.c.l.b16 %v9067
      %v9152 = vunpack.c.l.b16 %v9068
      %v9153 = vunpack.c.l.b16 %v9069
      %v9154 = vunpack.c.l.b16 %v9070
      %v9155 = vunpack.c.l.b16 %v9071
      %v9156 = vunpack.c.l.b16 %v9072
      %v9157 = vunpack.c.l.b16 %v9073
      %v9158 = vunpack.c.l.b16 %v9074
      %v9159 = vunpack.c.l.b16 %v9075
      %v9160 = vunpack.c.l.b16 %v9076
      %v9161 = vunpack.c.l.b16 %v9077
      %v9162 = vunpack.c.l.b16 %v9078
      %v9163 = vunpack.c.l.b16 %v9079
      %v9164 = vunpack.c.l.b16 %v9080
      %v9165 = vunpack.c.l.b16 %v9081
      %v9166 = vunpack.c.l.b16 %v9082
      %v9167 = vunpack.c.l.b16 %v9083
      %v9168 = vunpack.c.l.b16 %v9084
      %v9169 = vunpack.c.l.b16 %v9085
      %v9170 = vunpack.c.l.b16 %v9086
      %v9171 = vunpack.c.l.b16 %v9087
      %v9172 = vunpack.c.l.b16 %v9088
      %v9173 = vunpack.c.l.b16 %v9089
      %v9174 = vunpack.c.l.b16 %v9090
      %v9175 = vpack.c.b16 %v9144, %v9143
      %v9176 = vpack.c.b16 %v9146, %v9145
      %v9177 = vpack.c.b16 %v9148, %v9147
      %v9178 = vpack.c.b16 %v9150, %v9149
      %v9179 = vpack.c.b16 %v9152, %v9151
      %v9180 = vpack.c.b16 %v9154, %v9153
      %v9181 = vpack.c.b16 %v9156, %v9155
      %v9182 = vpack.c.b16 %v9158, %v9157
      %v9183 = vpack.c.b16 %v9160, %v9159
      %v9184 = vpack.c.b16 %v9162, %v9161
      %v9185 = vpack.c.b16 %v9164, %v9163
      %v9186 = vpack.c.b16 %v9166, %v9165
      %v9187 = vpack.c.b16 %v9168, %v9167
      %v9188 = vpack.c.b16 %v9170, %v9169
      %v9189 = vpack.c.b16 %v9172, %v9171
      %v9190 = vpack.c.b16 %v9174, %v9173
      %v9192 = vsel %vm6103, %v9175, 0
      %v9195 = vsel %vm6103, %v9176, 0
      %v9198 = vsel %vm6103, %v9177, 0
      %v9201 = vsel %vm6103, %v9178, 0
      %v9204 = vsel %vm6103, %v9179, 0
      %v9207 = vsel %vm6103, %v9180, 0
      %v9210 = vsel %vm6103, %v9181, 0
      %v9213 = vsel %vm6103, %v9182, 0
      %v9216 = vsel %vm6103, %v9183, 0
      %v9219 = vsel %vm6103, %v9184, 0
      %v9222 = vsel %vm6103, %v9185, 0
      %v9225 = vsel %vm6103, %v9186, 0
      %v9228 = vsel %vm6103, %v9187, 0
      %v9231 = vsel %vm6103, %v9188, 0
      %v9234 = vsel %vm6103, %v9189, 0
      %v9237 = vsel %vm6103, %v9190, 0
      %v9240 = vsel %vm4036, %v9110, 0
      %9242 = vmatprep.subr.bf16.mxu0 0
      %9243 = vmatpush1.bf16.msra.mxu0 0
      %9244 = vmatprep.subr.bf16.mxu0 0
      %9245 = vmatpush1.bf16.msra.mxu0 %v9240
      %9246 = vmatprep.subr.bf16.mxu0 0
      %9247 = vmatpush1.bf16.msra.mxu0 %v9109
      %9248 = vmatprep.subr.bf16.mxu0 0
      %9249 = vmatpush1.bf16.msra.mxu0 %v9108
      %9250 = vmatprep.subr.bf16.mxu0 0
      %9251 = vmatpush1.bf16.msra.mxu0 %v9107
      %9252 = vmatprep.subr.bf16.mxu0 0
      %9253 = vmatpush1.bf16.msra.mxu0 %v9106
      %9254 = vmatprep.subr.bf16.mxu0 0
      %9255 = vmatpush1.bf16.msra.mxu0 %v9105
      %9256 = vmatprep.subr.bf16.mxu0 0
      %9257 = vmatpush1.bf16.msra.mxu0 %v9104
      %9258 = vmatprep.subr.bf16.mxu0 0
      %9259 = vmatpush2.bf16.msra.mxu0 0
      %9260 = vmatprep.subr.bf16.mxu0 0
      %9261 = vmatpush2.bf16.msra.mxu0 0
      %9262 = vmatprep.subr.bf16.mxu0 0
      %9263 = vmatpush2.bf16.msra.mxu0 0
      %9264 = vmatprep.subr.bf16.mxu0 0
      %9265 = vmatpush2.bf16.msra.mxu0 0
      %9266 = vmatprep.subr.bf16.mxu0 0
      %9267 = vmatpush2.bf16.msra.mxu0 0
      %9268 = vmatprep.subr.bf16.mxu0 0
      %9269 = vmatpush2.bf16.msra.mxu0 0
      %9270 = vmatprep.subr.bf16.mxu0 0
      %9271 = vmatpush2.bf16.msra.mxu0 0
      %9272 = vmatprep.subr.bf16.mxu0 0
      %9273 = vmatpush2.bf16.msra.mxu0 0
      %9274 = vmatprep.mubr.bf16.mxu0 0
      %9275 = vmatmul.mubr.bf16.gmra.mxu0 %v9192
      %v9276 = vpop.f32.mrf.mxu0
      %v9277 = vadd.f32 0.0, %v9276
      %v9278 = vpop.f32.mrf.mxu0
      %v9279 = vpop.f32.mrf.mxu0
      %v9280 = vadd.f32 0.0, %v9279
      %v9281 = vpop.f32.mrf.mxu0
      %9282 = vmatprep.mubr.bf16.mxu0 0
      %9283 = vmatmul.mubr.bf16.gmra.mxu0 %v9195
      %v9284 = vpop.f32.mrf.mxu0
      %v9285 = vadd.f32 0.0, %v9284
      %v9286 = vpop.f32.mrf.mxu0
      %v9287 = vpop.f32.mrf.mxu0
      %v9288 = vadd.f32 0.0, %v9287
      %v9289 = vpop.f32.mrf.mxu0
      %9290 = vmatprep.mubr.bf16.mxu0 0
      %9291 = vmatmul.mubr.bf16.gmra.mxu0 %v9198
      %v9292 = vpop.f32.mrf.mxu0
      %v9293 = vadd.f32 0.0, %v9292
      %v9294 = vpop.f32.mrf.mxu0
      %v9295 = vpop.f32.mrf.mxu0
      %v9296 = vadd.f32 0.0, %v9295
      %v9297 = vpop.f32.mrf.mxu0
      %9298 = vmatprep.mubr.bf16.mxu0 0
      %9299 = vmatmul.mubr.bf16.gmra.mxu0 %v9201
      %v9300 = vpop.f32.mrf.mxu0
      %v9301 = vadd.f32 0.0, %v9300
      %v9302 = vpop.f32.mrf.mxu0
      %v9303 = vpop.f32.mrf.mxu0
      %v9304 = vadd.f32 0.0, %v9303
      %v9305 = vpop.f32.mrf.mxu0
      %9306 = vmatprep.mubr.bf16.mxu0 0
      %9307 = vmatmul.mubr.bf16.gmra.mxu0 %v9204
      %v9308 = vpop.f32.mrf.mxu0
      %v9309 = vadd.f32 0.0, %v9308
      %v9310 = vpop.f32.mrf.mxu0
      %v9311 = vpop.f32.mrf.mxu0
      %v9312 = vadd.f32 0.0, %v9311
      %v9313 = vpop.f32.mrf.mxu0
      %9314 = vmatprep.mubr.bf16.mxu0 0
      %9315 = vmatmul.mubr.bf16.gmra.mxu0 %v9207
      %v9316 = vpop.f32.mrf.mxu0
      %v9317 = vadd.f32 0.0, %v9316
      %v9318 = vpop.f32.mrf.mxu0
      %v9319 = vpop.f32.mrf.mxu0
      %v9320 = vadd.f32 0.0, %v9319
      %v9321 = vpop.f32.mrf.mxu0
      %9322 = vmatprep.mubr.bf16.mxu0 0
      %9323 = vmatmul.mubr.bf16.gmra.mxu0 %v9210
      %v9324 = vpop.f32.mrf.mxu0
      %v9325 = vadd.f32 0.0, %v9324
      %v9326 = vpop.f32.mrf.mxu0
      %v9327 = vpop.f32.mrf.mxu0
      %v9328 = vadd.f32 0.0, %v9327
      %v9329 = vpop.f32.mrf.mxu0
      %9330 = vmatprep.mubr.bf16.mxu0 0
      %9331 = vmatmul.mubr.bf16.gmra.mxu0 %v9213
      %v9332 = vpop.f32.mrf.mxu0
      %v9333 = vadd.f32 0.0, %v9332
      %v9334 = vpop.f32.mrf.mxu0
      %v9335 = vpop.f32.mrf.mxu0
      %v9336 = vadd.f32 0.0, %v9335
      %v9337 = vpop.f32.mrf.mxu0
      %9338 = vmatprep.mubr.bf16.mxu0 0
      %9339 = vmatmul.mubr.bf16.gmra.mxu0 %v9216
      %v9340 = vpop.f32.mrf.mxu0
      %v9341 = vadd.f32 0.0, %v9340
      %v9342 = vpop.f32.mrf.mxu0
      %v9343 = vpop.f32.mrf.mxu0
      %v9344 = vadd.f32 0.0, %v9343
      %v9345 = vpop.f32.mrf.mxu0
      %9346 = vmatprep.mubr.bf16.mxu0 0
      %9347 = vmatmul.mubr.bf16.gmra.mxu0 %v9219
      %v9348 = vpop.f32.mrf.mxu0
      %v9349 = vadd.f32 0.0, %v9348
      %v9350 = vpop.f32.mrf.mxu0
      %v9351 = vpop.f32.mrf.mxu0
      %v9352 = vadd.f32 0.0, %v9351
      %v9353 = vpop.f32.mrf.mxu0
      %9354 = vmatprep.mubr.bf16.mxu0 0
      %9355 = vmatmul.mubr.bf16.gmra.mxu0 %v9222
      %v9356 = vpop.f32.mrf.mxu0
      %v9357 = vadd.f32 0.0, %v9356
      %v9358 = vpop.f32.mrf.mxu0
      %v9359 = vpop.f32.mrf.mxu0
      %v9360 = vadd.f32 0.0, %v9359
      %v9361 = vpop.f32.mrf.mxu0
      %9362 = vmatprep.mubr.bf16.mxu0 0
      %9363 = vmatmul.mubr.bf16.gmra.mxu0 %v9225
      %v9364 = vpop.f32.mrf.mxu0
      %v9365 = vadd.f32 0.0, %v9364
      %v9366 = vpop.f32.mrf.mxu0
      %v9367 = vpop.f32.mrf.mxu0
      %v9368 = vadd.f32 0.0, %v9367
      %v9369 = vpop.f32.mrf.mxu0
      %9370 = vmatprep.mubr.bf16.mxu0 0
      %9371 = vmatmul.mubr.bf16.gmra.mxu0 %v9228
      %v9372 = vpop.f32.mrf.mxu0
      %v9373 = vadd.f32 0.0, %v9372
      %v9374 = vpop.f32.mrf.mxu0
      %v9375 = vpop.f32.mrf.mxu0
      %v9376 = vadd.f32 0.0, %v9375
      %v9377 = vpop.f32.mrf.mxu0
      %9378 = vmatprep.mubr.bf16.mxu0 0
      %9379 = vmatmul.mubr.bf16.gmra.mxu0 %v9231
      %v9380 = vpop.f32.mrf.mxu0
      %v9381 = vadd.f32 0.0, %v9380
      %v9382 = vpop.f32.mrf.mxu0
      %v9383 = vpop.f32.mrf.mxu0
      %v9384 = vadd.f32 0.0, %v9383
      %v9385 = vpop.f32.mrf.mxu0
      %9386 = vmatprep.mubr.bf16.mxu0 0
      %9387 = vmatmul.mubr.bf16.gmra.mxu0 %v9234
      %v9388 = vpop.f32.mrf.mxu0
      %v9389 = vadd.f32 0.0, %v9388
      %v9390 = vpop.f32.mrf.mxu0
      %v9391 = vpop.f32.mrf.mxu0
      %v9392 = vadd.f32 0.0, %v9391
      %v9393 = vpop.f32.mrf.mxu0
      %9394 = vmatprep.mubr.bf16.mxu0 0
      %9395 = vmatmul.mubr.bf16.gmra.mxu0 %v9237
      %v9396 = vpop.f32.mrf.mxu0
      %v9397 = vadd.f32 0.0, %v9396
      %v9398 = vpop.f32.mrf.mxu0
      %v9399 = vpop.f32.mrf.mxu0
      %v9400 = vadd.f32 0.0, %v9399
      %v9401 = vpop.f32.mrf.mxu0
      %9402 = vdwg.mxu0
      %v9403 = vpack.c.bf16 %v9280, %v9277
      %v9404 = vpack.c.bf16 %v9288, %v9285
      %v9405 = vpack.c.bf16 %v9296, %v9293
      %v9406 = vpack.c.bf16 %v9304, %v9301
      %v9407 = vpack.c.bf16 %v9312, %v9309
      %v9408 = vpack.c.bf16 %v9320, %v9317
      %v9409 = vpack.c.bf16 %v9328, %v9325
      %v9410 = vpack.c.bf16 %v9336, %v9333
      %v9411 = vpack.c.bf16 %v9344, %v9341
      %v9412 = vpack.c.bf16 %v9352, %v9349
      %v9413 = vpack.c.bf16 %v9360, %v9357
      %v9414 = vpack.c.bf16 %v9368, %v9365
      %v9415 = vpack.c.bf16 %v9376, %v9373
      %v9416 = vpack.c.bf16 %v9384, %v9381
      %v9417 = vpack.c.bf16 %v9392, %v9389
      %v9418 = vpack.c.bf16 %v9400, %v9397
      %v9419 = vld [vmem:[%s9] sm:$0xf]
      %v9420 = vld [vmem:[%s9 + $0x4] sm:$0xf]
      %v9421 = vld [vmem:[%s9 + $0x8] sm:$0xf]
      %v9422 = vld [vmem:[%s9 + $0xc] sm:$0xf]
      %v9423 = vld [vmem:[%s9 + $0x10] sm:$0xf]
      %v9424 = vld [vmem:[%s9 + $0x14] sm:$0xf]
      %v9425 = vld [vmem:[%s9 + $0x18] sm:$0xf]
      %v9426 = vld [vmem:[%s9 + $0x1c] sm:$0xf]
      %v9427 = vld [vmem:[%s9 + $0x20] sm:$0xf]
      %v9428 = vld [vmem:[%s9 + $0x24] sm:$0xf]
      %v9429 = vld [vmem:[%s9 + $0x28] sm:$0xf]
      %v9430 = vld [vmem:[%s9 + $0x2c] sm:$0xf]
      %v9431 = vld [vmem:[%s9 + $0x30] sm:$0xf]
      %v9432 = vld [vmem:[%s9 + $0x34] sm:$0xf]
      %v9433 = vld [vmem:[%s9 + $0x38] sm:$0xf]
      %v9434 = vld [vmem:[%s9 + $0x3c] sm:$0xf]
      %v9435 = vld [vmem:[%s10] sm:$0x1]
      %v9437 = vlaneseq
      %v9438 = vshrl.u32 %v9437, 7
      %v9439 = vsub.s32 0, %v9438
      %v9440 = vrot.slane %v9435, %v9439
      %v9458 = vunpack.c.l.b16 %v9419
      %v9459 = vunpack.c.l.b16 %v9420
      %v9460 = vunpack.c.l.b16 %v9421
      %v9461 = vunpack.c.l.b16 %v9422
      %v9462 = vunpack.c.l.b16 %v9423
      %v9463 = vunpack.c.l.b16 %v9424
      %v9464 = vunpack.c.l.b16 %v9425
      %v9465 = vunpack.c.l.b16 %v9426
      %v9466 = vunpack.c.l.b16 %v9427
      %v9467 = vunpack.c.l.b16 %v9428
      %v9468 = vunpack.c.l.b16 %v9429
      %v9469 = vunpack.c.l.b16 %v9430
      %v9470 = vunpack.c.l.b16 %v9431
      %v9471 = vunpack.c.l.b16 %v9432
      %v9472 = vunpack.c.l.b16 %v9433
      %v9473 = vunpack.c.l.b16 %v9434
      %v9474 = vpack.c.b16 %v9459, %v9458
      %v9475 = vpack.c.b16 %v9461, %v9460
      %v9476 = vpack.c.b16 %v9463, %v9462
      %v9477 = vpack.c.b16 %v9465, %v9464
      %v9478 = vpack.c.b16 %v9467, %v9466
      %v9479 = vpack.c.b16 %v9469, %v9468
      %v9480 = vpack.c.b16 %v9471, %v9470
      %v9481 = vpack.c.b16 %v9473, %v9472
      %9490 = vmatprep.subr.bf16.mxu0 0
      %9491 = vmatpush1.bf16.msra.mxu0 %v9481
      %9492 = vmatprep.subr.bf16.mxu0 0
      %9493 = vmatpush1.bf16.msra.mxu0 %v9480
      %9494 = vmatprep.subr.bf16.mxu0 0
      %9495 = vmatpush1.bf16.msra.mxu0 %v9479
      %9496 = vmatprep.subr.bf16.mxu0 0
      %9497 = vmatpush1.bf16.msra.mxu0 %v9478
      %9498 = vmatprep.subr.bf16.mxu0 0
      %9499 = vmatpush1.bf16.msra.mxu0 %v9477
      %9500 = vmatprep.subr.bf16.mxu0 0
      %9501 = vmatpush1.bf16.msra.mxu0 %v9476
      %9502 = vmatprep.subr.bf16.mxu0 0
      %9503 = vmatpush1.bf16.msra.mxu0 %v9475
      %9504 = vmatprep.subr.bf16.mxu0 0
      %9505 = vmatpush1.bf16.msra.mxu0 %v9474
      %9506 = vmatprep.subr.bf16.mxu0 0
      %9507 = vmatpush2.bf16.msra.mxu0 0
      %9508 = vmatprep.subr.bf16.mxu0 0
      %9509 = vmatpush2.bf16.msra.mxu0 0
      %9510 = vmatprep.subr.bf16.mxu0 0
      %9511 = vmatpush2.bf16.msra.mxu0 0
      %9512 = vmatprep.subr.bf16.mxu0 0
      %9513 = vmatpush2.bf16.msra.mxu0 0
      %9514 = vmatprep.subr.bf16.mxu0 0
      %9515 = vmatpush2.bf16.msra.mxu0 0
      %9516 = vmatprep.subr.bf16.mxu0 0
      %9517 = vmatpush2.bf16.msra.mxu0 0
      %9518 = vmatprep.subr.bf16.mxu0 0
      %9519 = vmatpush2.bf16.msra.mxu0 0
      %9520 = vmatprep.subr.bf16.mxu0 0
      %9521 = vmatpush2.bf16.msra.mxu0 0
      %9522 = vmatprep.mubr.bf16.mxu0 0
      %9523 = vmatmul.mubr.bf16.gmra.mxu0 %v9403
      %v9524 = vpop.f32.mrf.mxu0
      %v9525 = vadd.f32 %v9440, %v9524
      %v9526 = vpop.f32.mrf.mxu0
      %v9527 = vpop.f32.mrf.mxu0
      %v9528 = vadd.f32 %v9440, %v9527
      %v9529 = vpop.f32.mrf.mxu0
      %9530 = vmatprep.mubr.bf16.mxu0 0
      %9531 = vmatmul.mubr.bf16.gmra.mxu0 %v9404
      %v9532 = vpop.f32.mrf.mxu0
      %v9533 = vadd.f32 %v9440, %v9532
      %v9534 = vpop.f32.mrf.mxu0
      %v9535 = vpop.f32.mrf.mxu0
      %v9536 = vadd.f32 %v9440, %v9535
      %v9537 = vpop.f32.mrf.mxu0
      %9538 = vmatprep.mubr.bf16.mxu0 0
      %9539 = vmatmul.mubr.bf16.gmra.mxu0 %v9405
      %v9540 = vpop.f32.mrf.mxu0
      %v9541 = vadd.f32 %v9440, %v9540
      %v9542 = vpop.f32.mrf.mxu0
      %v9543 = vpop.f32.mrf.mxu0
      %v9544 = vadd.f32 %v9440, %v9543
      %v9545 = vpop.f32.mrf.mxu0
      %9546 = vmatprep.mubr.bf16.mxu0 0
      %9547 = vmatmul.mubr.bf16.gmra.mxu0 %v9406
      %v9548 = vpop.f32.mrf.mxu0
      %v9549 = vadd.f32 %v9440, %v9548
      %v9550 = vpop.f32.mrf.mxu0
      %v9551 = vpop.f32.mrf.mxu0
      %v9552 = vadd.f32 %v9440, %v9551
      %v9553 = vpop.f32.mrf.mxu0
      %9554 = vmatprep.mubr.bf16.mxu0 0
      %9555 = vmatmul.mubr.bf16.gmra.mxu0 %v9407
      %v9556 = vpop.f32.mrf.mxu0
      %v9557 = vadd.f32 %v9440, %v9556
      %v9558 = vpop.f32.mrf.mxu0
      %v9559 = vpop.f32.mrf.mxu0
      %v9560 = vadd.f32 %v9440, %v9559
      %v9561 = vpop.f32.mrf.mxu0
      %9562 = vmatprep.mubr.bf16.mxu0 0
      %9563 = vmatmul.mubr.bf16.gmra.mxu0 %v9408
      %v9564 = vpop.f32.mrf.mxu0
      %v9565 = vadd.f32 %v9440, %v9564
      %v9566 = vpop.f32.mrf.mxu0
      %v9567 = vpop.f32.mrf.mxu0
      %v9568 = vadd.f32 %v9440, %v9567
      %v9569 = vpop.f32.mrf.mxu0
      %9570 = vmatprep.mubr.bf16.mxu0 0
      %9571 = vmatmul.mubr.bf16.gmra.mxu0 %v9409
      %v9572 = vpop.f32.mrf.mxu0
      %v9573 = vadd.f32 %v9440, %v9572
      %v9574 = vpop.f32.mrf.mxu0
      %v9575 = vpop.f32.mrf.mxu0
      %v9576 = vadd.f32 %v9440, %v9575
      %v9577 = vpop.f32.mrf.mxu0
      %9578 = vmatprep.mubr.bf16.mxu0 0
      %9579 = vmatmul.mubr.bf16.gmra.mxu0 %v9410
      %v9580 = vpop.f32.mrf.mxu0
      %v9581 = vadd.f32 %v9440, %v9580
      %v9582 = vpop.f32.mrf.mxu0
      %v9583 = vpop.f32.mrf.mxu0
      %v9584 = vadd.f32 %v9440, %v9583
      %v9585 = vpop.f32.mrf.mxu0
      %9586 = vmatprep.mubr.bf16.mxu0 0
      %9587 = vmatmul.mubr.bf16.gmra.mxu0 %v9411
      %v9588 = vpop.f32.mrf.mxu0
      %v9589 = vadd.f32 %v9440, %v9588
      %v9590 = vpop.f32.mrf.mxu0
      %v9591 = vpop.f32.mrf.mxu0
      %v9592 = vadd.f32 %v9440, %v9591
      %v9593 = vpop.f32.mrf.mxu0
      %9594 = vmatprep.mubr.bf16.mxu0 0
      %9595 = vmatmul.mubr.bf16.gmra.mxu0 %v9412
      %v9596 = vpop.f32.mrf.mxu0
      %v9597 = vadd.f32 %v9440, %v9596
      %v9598 = vpop.f32.mrf.mxu0
      %v9599 = vpop.f32.mrf.mxu0
      %v9600 = vadd.f32 %v9440, %v9599
      %v9601 = vpop.f32.mrf.mxu0
      %9602 = vmatprep.mubr.bf16.mxu0 0
      %9603 = vmatmul.mubr.bf16.gmra.mxu0 %v9413
      %v9604 = vpop.f32.mrf.mxu0
      %v9605 = vadd.f32 %v9440, %v9604
      %v9606 = vpop.f32.mrf.mxu0
      %v9607 = vpop.f32.mrf.mxu0
      %v9608 = vadd.f32 %v9440, %v9607
      %v9609 = vpop.f32.mrf.mxu0
      %9610 = vmatprep.mubr.bf16.mxu0 0
      %9611 = vmatmul.mubr.bf16.gmra.mxu0 %v9414
      %v9612 = vpop.f32.mrf.mxu0
      %v9613 = vadd.f32 %v9440, %v9612
      %v9614 = vpop.f32.mrf.mxu0
      %v9615 = vpop.f32.mrf.mxu0
      %v9616 = vadd.f32 %v9440, %v9615
      %v9617 = vpop.f32.mrf.mxu0
      %9618 = vmatprep.mubr.bf16.mxu0 0
      %9619 = vmatmul.mubr.bf16.gmra.mxu0 %v9415
      %v9620 = vpop.f32.mrf.mxu0
      %v9621 = vadd.f32 %v9440, %v9620
      %v9622 = vpop.f32.mrf.mxu0
      %v9623 = vpop.f32.mrf.mxu0
      %v9624 = vadd.f32 %v9440, %v9623
      %v9625 = vpop.f32.mrf.mxu0
      %9626 = vmatprep.mubr.bf16.mxu0 0
      %9627 = vmatmul.mubr.bf16.gmra.mxu0 %v9416
      %v9628 = vpop.f32.mrf.mxu0
      %v9629 = vadd.f32 %v9440, %v9628
      %v9630 = vpop.f32.mrf.mxu0
      %v9631 = vpop.f32.mrf.mxu0
      %v9632 = vadd.f32 %v9440, %v9631
      %v9633 = vpop.f32.mrf.mxu0
      %9634 = vmatprep.mubr.bf16.mxu0 0
      %9635 = vmatmul.mubr.bf16.gmra.mxu0 %v9417
      %v9636 = vpop.f32.mrf.mxu0
      %v9637 = vadd.f32 %v9440, %v9636
      %v9638 = vpop.f32.mrf.mxu0
      %v9639 = vpop.f32.mrf.mxu0
      %v9640 = vadd.f32 %v9440, %v9639
      %v9641 = vpop.f32.mrf.mxu0
      %9642 = vmatprep.mubr.bf16.mxu0 0
      %9643 = vmatmul.mubr.bf16.gmra.mxu0 %v9418
      %v9644 = vpop.f32.mrf.mxu0
      %v9645 = vadd.f32 %v9440, %v9644
      %v9646 = vpop.f32.mrf.mxu0
      %v9647 = vpop.f32.mrf.mxu0
      %v9648 = vadd.f32 %v9440, %v9647
      %v9649 = vpop.f32.mrf.mxu0
      %9650 = vdwg.mxu0
      %v9651 = vsub.f32 0.0, %v9525
      %v9652 = vsub.f32 0.0, %v9528
      %v9653 = vsub.f32 0.0, %v9533
      %v9654 = vsub.f32 0.0, %v9536
      %v9655 = vsub.f32 0.0, %v9541
      %v9656 = vsub.f32 0.0, %v9544
      %v9657 = vsub.f32 0.0, %v9549
      %v9658 = vsub.f32 0.0, %v9552
      %v9659 = vsub.f32 0.0, %v9557
      %v9660 = vsub.f32 0.0, %v9560
      %v9661 = vsub.f32 0.0, %v9565
      %v9662 = vsub.f32 0.0, %v9568
      %v9663 = vsub.f32 0.0, %v9573
      %v9664 = vsub.f32 0.0, %v9576
      %v9665 = vsub.f32 0.0, %v9581
      %v9666 = vsub.f32 0.0, %v9584
      %v9667 = vsub.f32 0.0, %v9589
      %v9668 = vsub.f32 0.0, %v9592
      %v9669 = vsub.f32 0.0, %v9597
      %v9670 = vsub.f32 0.0, %v9600
      %v9671 = vsub.f32 0.0, %v9605
      %v9672 = vsub.f32 0.0, %v9608
      %v9673 = vsub.f32 0.0, %v9613
      %v9674 = vsub.f32 0.0, %v9616
      %v9675 = vsub.f32 0.0, %v9621
      %v9676 = vsub.f32 0.0, %v9624
      %v9677 = vsub.f32 0.0, %v9629
      %v9678 = vsub.f32 0.0, %v9632
      %v9679 = vsub.f32 0.0, %v9637
      %v9680 = vsub.f32 0.0, %v9640
      %v9681 = vsub.f32 0.0, %v9645
      %v9682 = vsub.f32 0.0, %v9648
      %v9683 = vmul.f32 %v9651, 1.442695
      %v9684 = vpow.pop %v9683
      %v9685 = vmul.f32 %v9652, 1.442695
      %v9686 = vpow.pop %v9685
      %v9687 = vmul.f32 %v9653, 1.442695
      %v9688 = vpow.pop %v9687
      %v9689 = vmul.f32 %v9654, 1.442695
      %v9690 = vpow.pop %v9689
      %v9691 = vmul.f32 %v9655, 1.442695
      %v9692 = vpow.pop %v9691
      %v9693 = vmul.f32 %v9656, 1.442695
      %v9694 = vpow.pop %v9693
      %v9695 = vmul.f32 %v9657, 1.442695
      %v9696 = vpow.pop %v9695
      %v9697 = vmul.f32 %v9658, 1.442695
      %v9698 = vpow.pop %v9697
      %v9699 = vmul.f32 %v9659, 1.442695
      %v9700 = vpow.pop %v9699
      %v9701 = vmul.f32 %v9660, 1.442695
      %v9702 = vpow.pop %v9701
      %v9703 = vmul.f32 %v9661, 1.442695
      %v9704 = vpow.pop %v9703
      %v9705 = vmul.f32 %v9662, 1.442695
      %v9706 = vpow.pop %v9705
      %v9707 = vmul.f32 %v9663, 1.442695
      %v9708 = vpow.pop %v9707
      %v9709 = vmul.f32 %v9664, 1.442695
      %v9710 = vpow.pop %v9709
      %v9711 = vmul.f32 %v9665, 1.442695
      %v9712 = vpow.pop %v9711
      %v9713 = vmul.f32 %v9666, 1.442695
      %v9714 = vpow.pop %v9713
      %v9715 = vmul.f32 %v9667, 1.442695
      %v9716 = vpow.pop %v9715
      %v9717 = vmul.f32 %v9668, 1.442695
      %v9718 = vpow.pop %v9717
      %v9719 = vmul.f32 %v9669, 1.442695
      %v9720 = vpow.pop %v9719
      %v9721 = vmul.f32 %v9670, 1.442695
      %v9722 = vpow.pop %v9721
      %v9723 = vmul.f32 %v9671, 1.442695
      %v9724 = vpow.pop %v9723
      %v9725 = vmul.f32 %v9672, 1.442695
      %v9726 = vpow.pop %v9725
      %v9727 = vmul.f32 %v9673, 1.442695
      %v9728 = vpow.pop %v9727
      %v9729 = vmul.f32 %v9674, 1.442695
      %v9730 = vpow.pop %v9729
      %v9731 = vmul.f32 %v9675, 1.442695
      %v9732 = vpow.pop %v9731
      %v9733 = vmul.f32 %v9676, 1.442695
      %v9734 = vpow.pop %v9733
      %v9735 = vmul.f32 %v9677, 1.442695
      %v9736 = vpow.pop %v9735
      %v9737 = vmul.f32 %v9678, 1.442695
      %v9738 = vpow.pop %v9737
      %v9739 = vmul.f32 %v9679, 1.442695
      %v9740 = vpow.pop %v9739
      %v9741 = vmul.f32 %v9680, 1.442695
      %v9742 = vpow.pop %v9741
      %v9743 = vmul.f32 %v9681, 1.442695
      %v9744 = vpow.pop %v9743
      %v9745 = vmul.f32 %v9682, 1.442695
      %v9746 = vpow.pop %v9745
      %v9747 = vadd.f32 %v9684, 1.0
      %v9748 = vadd.f32 %v9686, 1.0
      %v9749 = vadd.f32 %v9688, 1.0
      %v9750 = vadd.f32 %v9690, 1.0
      %v9751 = vadd.f32 %v9692, 1.0
      %v9752 = vadd.f32 %v9694, 1.0
      %v9753 = vadd.f32 %v9696, 1.0
      %v9754 = vadd.f32 %v9698, 1.0
      %v9755 = vadd.f32 %v9700, 1.0
      %v9756 = vadd.f32 %v9702, 1.0
      %v9757 = vadd.f32 %v9704, 1.0
      %v9758 = vadd.f32 %v9706, 1.0
      %v9759 = vadd.f32 %v9708, 1.0
      %v9760 = vadd.f32 %v9710, 1.0
      %v9761 = vadd.f32 %v9712, 1.0
      %v9762 = vadd.f32 %v9714, 1.0
      %v9763 = vadd.f32 %v9716, 1.0
      %v9764 = vadd.f32 %v9718, 1.0
      %v9765 = vadd.f32 %v9720, 1.0
      %v9766 = vadd.f32 %v9722, 1.0
      %v9767 = vadd.f32 %v9724, 1.0
      %v9768 = vadd.f32 %v9726, 1.0
      %v9769 = vadd.f32 %v9728, 1.0
      %v9770 = vadd.f32 %v9730, 1.0
      %v9771 = vadd.f32 %v9732, 1.0
      %v9772 = vadd.f32 %v9734, 1.0
      %v9773 = vadd.f32 %v9736, 1.0
      %v9774 = vadd.f32 %v9738, 1.0
      %v9775 = vadd.f32 %v9740, 1.0
      %v9776 = vadd.f32 %v9742, 1.0
      %v9777 = vadd.f32 %v9744, 1.0
      %v9778 = vadd.f32 %v9746, 1.0
      %v9779 = vrcp.pop %v9747
      %v9780 = vmul.f32 1.0, %v9779
      %v9781 = vrcp.pop %v9748
      %v9782 = vmul.f32 1.0, %v9781
      %v9783 = vrcp.pop %v9749
      %v9784 = vmul.f32 1.0, %v9783
      %v9785 = vrcp.pop %v9750
      %v9786 = vmul.f32 1.0, %v9785
      %v9787 = vrcp.pop %v9751
      %v9788 = vmul.f32 1.0, %v9787
      %v9789 = vrcp.pop %v9752
      %v9790 = vmul.f32 1.0, %v9789
      %v9791 = vrcp.pop %v9753
      %v9792 = vmul.f32 1.0, %v9791
      %v9793 = vrcp.pop %v9754
      %v9794 = vmul.f32 1.0, %v9793
      %v9795 = vrcp.pop %v9755
      %v9796 = vmul.f32 1.0, %v9795
      %v9797 = vrcp.pop %v9756
      %v9798 = vmul.f32 1.0, %v9797
      %v9799 = vrcp.pop %v9757
      %v9800 = vmul.f32 1.0, %v9799
      %v9801 = vrcp.pop %v9758
      %v9802 = vmul.f32 1.0, %v9801
      %v9803 = vrcp.pop %v9759
      %v9804 = vmul.f32 1.0, %v9803
      %v9805 = vrcp.pop %v9760
      %v9806 = vmul.f32 1.0, %v9805
      %v9807 = vrcp.pop %v9761
      %v9808 = vmul.f32 1.0, %v9807
      %v9809 = vrcp.pop %v9762
      %v9810 = vmul.f32 1.0, %v9809
      %v9811 = vrcp.pop %v9763
      %v9812 = vmul.f32 1.0, %v9811
      %v9813 = vrcp.pop %v9764
      %v9814 = vmul.f32 1.0, %v9813
      %v9815 = vrcp.pop %v9765
      %v9816 = vmul.f32 1.0, %v9815
      %v9817 = vrcp.pop %v9766
      %v9818 = vmul.f32 1.0, %v9817
      %v9819 = vrcp.pop %v9767
      %v9820 = vmul.f32 1.0, %v9819
      %v9821 = vrcp.pop %v9768
      %v9822 = vmul.f32 1.0, %v9821
      %v9823 = vrcp.pop %v9769
      %v9824 = vmul.f32 1.0, %v9823
      %v9825 = vrcp.pop %v9770
      %v9826 = vmul.f32 1.0, %v9825
      %v9827 = vrcp.pop %v9771
      %v9828 = vmul.f32 1.0, %v9827
      %v9829 = vrcp.pop %v9772
      %v9830 = vmul.f32 1.0, %v9829
      %v9831 = vrcp.pop %v9773
      %v9832 = vmul.f32 1.0, %v9831
      %v9833 = vrcp.pop %v9774
      %v9834 = vmul.f32 1.0, %v9833
      %v9835 = vrcp.pop %v9775
      %v9836 = vmul.f32 1.0, %v9835
      %v9837 = vrcp.pop %v9776
      %v9838 = vmul.f32 1.0, %v9837
      %v9839 = vrcp.pop %v9777
      %v9840 = vmul.f32 1.0, %v9839
      %v9841 = vrcp.pop %v9778
      %v9842 = vmul.f32 1.0, %v9841
      %9843 = vst [vmem:[%s548] sm:$0xff] %v9780
      %9844 = vst [vmem:[%s548 + $0x8] sm:$0xff] %v9782
      %9845 = vst [vmem:[%s548 + $0x10] sm:$0xff] %v9784
      %9846 = vst [vmem:[%s548 + $0x18] sm:$0xff] %v9786
      %9847 = vst [vmem:[%s548 + $0x20] sm:$0xff] %v9788
      %9848 = vst [vmem:[%s548 + $0x28] sm:$0xff] %v9790
      %9849 = vst [vmem:[%s548 + $0x30] sm:$0xff] %v9792
      %9850 = vst [vmem:[%s548 + $0x38] sm:$0xff] %v9794
      %9851 = vst [vmem:[%s548 + $0x40] sm:$0xff] %v9796
      %9852 = vst [vmem:[%s548 + $0x48] sm:$0xff] %v9798
      %9853 = vst [vmem:[%s548 + $0x50] sm:$0xff] %v9800
      %9854 = vst [vmem:[%s548 + $0x58] sm:$0xff] %v9802
      %9855 = vst [vmem:[%s548 + $0x60] sm:$0xff] %v9804
      %9856 = vst [vmem:[%s548 + $0x68] sm:$0xff] %v9806
      %9857 = vst [vmem:[%s548 + $0x70] sm:$0xff] %v9808
      %9858 = vst [vmem:[%s548 + $0x78] sm:$0xff] %v9810
      %9859 = vst [vmem:[%s548 + $0x80] sm:$0xff] %v9812
      %9860 = vst [vmem:[%s548 + $0x88] sm:$0xff] %v9814
      %9861 = vst [vmem:[%s548 + $0x90] sm:$0xff] %v9816
      %9862 = vst [vmem:[%s548 + $0x98] sm:$0xff] %v9818
      %9863 = vst [vmem:[%s548 + $0xa0] sm:$0xff] %v9820
      %9864 = vst [vmem:[%s548 + $0xa8] sm:$0xff] %v9822
      %9865 = vst [vmem:[%s548 + $0xb0] sm:$0xff] %v9824
      %9866 = vst [vmem:[%s548 + $0xb8] sm:$0xff] %v9826
      %9867 = vst [vmem:[%s548 + $0xc0] sm:$0xff] %v9828
      %9868 = vst [vmem:[%s548 + $0xc8] sm:$0xff] %v9830
      %9869 = vst [vmem:[%s548 + $0xd0] sm:$0xff] %v9832
      %9870 = vst [vmem:[%s548 + $0xd8] sm:$0xff] %v9834
      %9871 = vst [vmem:[%s548 + $0xe0] sm:$0xff] %v9836
      %9872 = vst [vmem:[%s548 + $0xe8] sm:$0xff] %v9838
      %9873 = vst [vmem:[%s548 + $0xf0] sm:$0xff] %v9840
      %9874 = vst [vmem:[%s548 + $0xf8] sm:$0xff] %v9842
      %p9875 = scmp.lt.s32.totalorder %s28, 1
      %s9876 = scalar_select %p9875, %s28, 1
      %s9877 = smul.addr %s9876, 32
      %s9878 = smul.addr %s9877, 8
      %s9879 = scalar_lea.vmem %s17, %s9878
      // Predicated region
      $region89: #{suimnet_forward.1} parent=87 // pred_check
        %p9880 = pneg %p408
      $region90: #{suimnet_forward.1} parent=87 // pred_check_branch
        %9882 = sbr.rel (%p9880) target = $region92
      $region91: #{suimnet_forward.1} parent=87 // pred_region
        _
      $region92: #{suimnet_forward.1} parent=87 // pred_fallthru
        _
    $region88: #{suimnet_forward.1} parent=5 // pred_fallthru
      _
    %p9883 = scmp.le.s32.totalorder 2, %s23
    // Predicated region
    $region93: #{suimnet_forward.1} parent=5 // pred_check
      %p9884 = pneg %p9883
    $region94: #{suimnet_forward.1} parent=5 // pred_check_branch
      %9886 = sbr.rel (%p9884) target = $region96
    $region95: #{suimnet_forward.1} parent=5 // pred_region
      %s9887 = ssub.s32 %s23, 2
      // Predicated region
      $region97: #{suimnet_forward.1} parent=95 // pred_check
        %p9888 = pneg %p414
      $region98: #{suimnet_forward.1} parent=95 // pred_check_branch
        %9890 = sbr.rel (%p9888) target = $region100
      $region99: #{suimnet_forward.1} parent=95 // pred_region
        %p9891 = scmp.lt.s32.totalorder %s29, 1
        %s9892 = scalar_select %p9891, %s29, 1
        %s9893 = smul.addr %s9892, 32
        %s9894 = smul.addr %s9893, 8
        %s9895 = scalar_lea.vmem %s17, %s9894
      $region100: #{suimnet_forward.1} parent=95 // pred_fallthru
        _
    $region96: #{suimnet_forward.1} parent=5 // pred_fallthru
      _
  $region6: #{suimnet_forward.1} parent=0 // loop_footer
    %s27 = sadd.s32 1, %s23
  $region7: #{suimnet_forward.1} parent=0 // loop_footer_branch
    %22 = sbr.rel target = $region3
  $region8: #{suimnet_forward.1} parent=0 // loop_exit
    _

</llo_original>
